<compile_context>
chip_gen: v7x
topology: tpu7x:2x2x1
jax: 0.10.0
libtpu: 0.0.40
codegen_flags: <defaults>
</compile_context>

<pallas_src>
import jax
import jax.numpy as jnp
from jax.experimental import pallas as pl
from jax.experimental.pallas import tpu as pltpu

ZSIZE = 100
ZSIZE_PAD = 128            # K of the first matmul padded to a lane multiple
H1, H2, H3 = 256, 512, 1024
IN_FEATURES = 1 * 28 * 28  # 784
OUT_PAD = 896              # 7 * 128 -> unmasked, lane-dense output stores

_WEIGHT_SHAPES = ((ZSIZE_PAD, H1), (H1, H2), (H2, H3), (H3, OUT_PAD))


def _round_up(x, m):
    return (x + m - 1) // m * m


def _chip_defaults():
    """Returns (batch_tile, vmem_limit_bytes, multi_tc) tuned per generation."""
    vmem_bytes = 128 * 1024 * 1024
    try:
        info = pltpu.get_tpu_info()
        vmem_bytes = int(getattr(info, "vmem_capacity_bytes", vmem_bytes))
    except Exception:
        pass  # fall back to v6e-style defaults (safe on every chip)
    if vmem_bytes <= 64 * 1024 * 1024:
        # v7x-class: 64 MiB VMEM per TensorCore, 2 TCs per chip.
        return 256, 48 * 1024 * 1024, True
    # v5e / v6e: 128 MiB VMEM, single TensorCore -> big tiles, no forced split.
    return 512, 64 * 1024 * 1024, False


def generator_kernel(x_ref, w1_ref, w2_ref, w3_ref, w4_ref, o_ref):
    # Four MXU matmuls, bf16 operands / f32 accumulation, fused ReLU / tanh
    # epilogues kept in f32 (v5e's VPU/EUP have no bf16 path).
    h = jnp.dot(x_ref[...], w1_ref[...], preferred_element_type=jnp.float32)
    h = jnp.maximum(h, 0.0).astype(jnp.bfloat16)
    h = jnp.dot(h, w2_ref[...], preferred_element_type=jnp.float32)
    h = jnp.maximum(h, 0.0).astype(jnp.bfloat16)
    h = jnp.dot(h, w3_ref[...], preferred_element_type=jnp.float32)
    h = jnp.maximum(h, 0.0).astype(jnp.bfloat16)
    h = jnp.dot(h, w4_ref[...], preferred_element_type=jnp.float32)
    o_ref[...] = jnp.tanh(h).astype(o_ref.dtype)


def prepare_weights(w1, w2, w3, w4):
    """Pad + cast the weights ONCE (bf16, HBM-resident). Call outside the hot path."""
    w1p = jnp.pad(w1, ((0, ZSIZE_PAD - ZSIZE), (0, 0))).astype(jnp.bfloat16)
    w2p = w2.astype(jnp.bfloat16)
    w3p = w3.astype(jnp.bfloat16)
    w4p = jnp.pad(w4, ((0, 0), (0, OUT_PAD - IN_FEATURES))).astype(jnp.bfloat16)
    return jax.block_until_ready((w1p, w2p, w3p, w4p))


def generator_forward(z, prepared_weights, *, batch_tile=None, out_dtype=jnp.float32):
    """z: (B, 100) f32; prepared_weights: output of prepare_weights(); -> (B, 784)."""
    B = z.shape[0]
    assert z.shape[1] == ZSIZE
    w1p, w2p, w3p, w4p = prepared_weights

    default_tile, vmem_limit, multi_tc = _chip_defaults()
    if batch_tile is None:
        batch_tile = default_tile

    # bf16 activations: native sublane tile is (16, 128) -> round rows to 16.
    b16 = _round_up(B, 16)
    tile = min(_round_up(batch_tile, 16), b16)
    # Only split the batch into >=2 grid steps on dual-TensorCore chips (v7x),
    # and only when each step still fills the MXU M dimension (>=128 rows).
    # On v5e/v6e the grid is a serial loop, so splitting small batches only
    # adds per-step overhead.
    if multi_tc and b16 // tile < 2:
        half = _round_up(-(-b16 // 2), 16)
        if half >= 128:
            tile = half
    Bp = _round_up(b16, tile)
    grid = (Bp // tile,)

    # Per-call plumbing is now just the (small) latent pad + cast.
    zp = jnp.pad(z, ((0, Bp - B), (0, ZSIZE_PAD - ZSIZE))).astype(jnp.bfloat16)

    weight_bytes = 2 * sum(m * n for m, n in _WEIGHT_SHAPES)
    cost = pl.CostEstimate(
        flops=2 * Bp * (ZSIZE_PAD * H1 + H1 * H2 + H2 * H3 + H3 * OUT_PAD),
        transcendentals=Bp * OUT_PAD,
        bytes_accessed=(weight_bytes + Bp * ZSIZE_PAD * 2
                        + Bp * OUT_PAD * jnp.dtype(out_dtype).itemsize),
    )

    def run(single_buffer_weights):
        if single_buffer_weights:
            # Constant index_map -> weights stay VMEM-resident across the grid;
            # single-buffer them (~3.1 MiB instead of ~6.2 MiB of VMEM).
            w_specs = [
                pl.BlockSpec(s, lambda i: (0, 0), pipeline_mode=pl.Buffered(1))
                for s in _WEIGHT_SHAPES
            ]
        else:
            w_specs = [pl.BlockSpec(s, lambda i: (0, 0)) for s in _WEIGHT_SHAPES]
        return pl.pallas_call(
            generator_kernel,
            out_shape=jax.ShapeDtypeStruct((Bp, OUT_PAD), out_dtype),
            grid_spec=pltpu.PrefetchScalarGridSpec(
                num_scalar_prefetch=0,
                grid=grid,
                in_specs=[pl.BlockSpec((tile, ZSIZE_PAD), lambda i: (i, 0))] + w_specs,
                out_specs=pl.BlockSpec((tile, OUT_PAD), lambda i: (i, 0)),
            ),
            compiler_params=pltpu.CompilerParams(
                dimension_semantics=("parallel",),
                vmem_limit_bytes=vmem_limit,
            ),
            cost_estimate=cost,
        )(zp, w1p, w2p, w3p, w4p)

    try:
        out = run(True)
    except Exception:
        # pipeline_mode=pl.Buffered(1) not supported by this jax build: fall
        # back to the default (double-buffered) pipeline — still correct.
        out = run(False)

    # Strip batch padding and the lane-padding of the output features.
    return out[:B, :IN_FEATURES]


def init_params(key):
    # torch.nn.init.normal_(weight, 0.0, 0.02) — deterministic synthetic init.
    k1, k2, k3, k4 = jax.random.split(key, 4)
    std = 0.02
    w1 = std * jax.random.normal(k1, (ZSIZE, H1), dtype=jnp.float32)
    w2 = std * jax.random.normal(k2, (H1, H2), dtype=jnp.float32)
    w3 = std * jax.random.normal(k3, (H2, H3), dtype=jnp.float32)
    w4 = std * jax.random.normal(k4, (H3, IN_FEATURES), dtype=jnp.float32)
    return w1, w2, w3, w4


def reference_forward(z, w1, w2, w3, w4):
    h = jnp.maximum(z @ w1, 0.0)
    h = jnp.maximum(h @ w2, 0.0)
    h = jnp.maximum(h @ w3, 0.0)
    return jnp.tanh(h @ w4)


if __name__ == "__main__":
    key = jax.random.PRNGKey(0)
    kz, kp = jax.random.split(key)

    B = 64  # small demo batch (single grid step on every chip generation)
    z = jax.random.normal(kz, (B, ZSIZE), dtype=jnp.float32)
    w1, w2, w3, w4 = init_params(kp)

    # Hoisted weight prep: pad + bf16-cast once, reuse for every forward call.
    prepared = prepare_weights(w1, w2, w3, w4)

    out = generator_forward(z, prepared)
    out = jax.block_until_ready(out)

    ref = reference_forward(z, w1, w2, w3, w4)
    assert out.shape == (B, IN_FEATURES)
    # bf16 operands (f32 accumulation) -> looser tolerance than pure f32.
    assert jnp.allclose(out, ref, atol=2e-3, rtol=2e-2), (
        float(jnp.max(jnp.abs(out - ref)))
    )

    print("KERNEL_OK")
</pallas_src>

<mosaic_0001>
module attributes {stable_mosaic.version = 11 : i64} {
  func.func @generator_kernel(%arg0: i32, %arg1: memref<64x128xbf16, #tpu.memory_space<vmem>>, %arg2: memref<128x256xbf16, #tpu.memory_space<vmem>>, %arg3: memref<256x512xbf16, #tpu.memory_space<vmem>>, %arg4: memref<512x1024xbf16, #tpu.memory_space<vmem>>, %arg5: memref<1024x896xbf16, #tpu.memory_space<vmem>>, %arg6: memref<64x896xf32, #tpu.memory_space<vmem>>) attributes {dimension_semantics = [#tpu.dimension_semantics<parallel>], iteration_bounds = array<i64: 1>, scalar_prefetch = 0 : i64, scratch_operands = 0 : i64, tpu.core_type = #tpu.core_type<tc>, window_params = [{transform_indices = @transform_0, window_bounds = array<i64: 64, 128>}, {pipeline_mode = #tpu.pipeline_mode<synchronous>, transform_indices = @transform_1, window_bounds = array<i64: 128, 256>}, {pipeline_mode = #tpu.pipeline_mode<synchronous>, transform_indices = @transform_2, window_bounds = array<i64: 256, 512>}, {pipeline_mode = #tpu.pipeline_mode<synchronous>, transform_indices = @transform_3, window_bounds = array<i64: 512, 1024>}, {pipeline_mode = #tpu.pipeline_mode<synchronous>, transform_indices = @transform_4, window_bounds = array<i64: 1024, 896>}, {transform_indices = @transform_5, window_bounds = array<i64: 64, 896>}]} {
    %c0 = arith.constant 0 : index
    %c0_0 = arith.constant 0 : index
    %0 = vector.load %arg1[%c0, %c0_0] : memref<64x128xbf16, #tpu.memory_space<vmem>>, vector<64x128xbf16>
    %c0_1 = arith.constant 0 : index
    %c0_2 = arith.constant 0 : index
    %1 = vector.load %arg2[%c0_1, %c0_2] : memref<128x256xbf16, #tpu.memory_space<vmem>>, vector<128x256xbf16>
    %cst = arith.constant dense<0.000000e+00> : vector<64x256xf32>
    %2 = tpu.matmul %0, %1, %cst {dimension_numbers = #tpu.dot_dimension_numbers<[1], [0], [0], [1], [0, 0, 1, 1], [], []>} : vector<64x128xbf16>, vector<128x256xbf16>, vector<64x256xf32> -> vector<64x256xf32>
    %cst_3 = arith.constant 0.000000e+00 : f32
    %3 = vector.broadcast %cst_3 : f32 to vector<64x256xf32>
    %4 = arith.maximumf %2, %3 : vector<64x256xf32>
    %5 = arith.truncf %4 : vector<64x256xf32> to vector<64x256xbf16>
    %c0_4 = arith.constant 0 : index
    %c0_5 = arith.constant 0 : index
    %6 = vector.load %arg3[%c0_4, %c0_5] : memref<256x512xbf16, #tpu.memory_space<vmem>>, vector<256x512xbf16>
    %cst_6 = arith.constant dense<0.000000e+00> : vector<64x512xf32>
    %7 = tpu.matmul %5, %6, %cst_6 {dimension_numbers = #tpu.dot_dimension_numbers<[1], [0], [0], [1], [0, 0, 1, 1], [], []>} : vector<64x256xbf16>, vector<256x512xbf16>, vector<64x512xf32> -> vector<64x512xf32>
    %cst_7 = arith.constant 0.000000e+00 : f32
    %8 = vector.broadcast %cst_7 : f32 to vector<64x512xf32>
    %9 = arith.maximumf %7, %8 : vector<64x512xf32>
    %10 = arith.truncf %9 : vector<64x512xf32> to vector<64x512xbf16>
    %c0_8 = arith.constant 0 : index
    %c0_9 = arith.constant 0 : index
    %11 = vector.load %arg4[%c0_8, %c0_9] : memref<512x1024xbf16, #tpu.memory_space<vmem>>, vector<512x1024xbf16>
    %cst_10 = arith.constant dense<0.000000e+00> : vector<64x1024xf32>
    %12 = tpu.matmul %10, %11, %cst_10 {dimension_numbers = #tpu.dot_dimension_numbers<[1], [0], [0], [1], [0, 0, 1, 1], [], []>} : vector<64x512xbf16>, vector<512x1024xbf16>, vector<64x1024xf32> -> vector<64x1024xf32>
    %cst_11 = arith.constant 0.000000e+00 : f32
    %13 = vector.broadcast %cst_11 : f32 to vector<64x1024xf32>
    %14 = arith.maximumf %12, %13 : vector<64x1024xf32>
    %15 = arith.truncf %14 : vector<64x1024xf32> to vector<64x1024xbf16>
    %c0_12 = arith.constant 0 : index
    %c0_13 = arith.constant 0 : index
    %16 = vector.load %arg5[%c0_12, %c0_13] : memref<1024x896xbf16, #tpu.memory_space<vmem>>, vector<1024x896xbf16>
    %cst_14 = arith.constant dense<0.000000e+00> : vector<64x896xf32>
    %17 = tpu.matmul %15, %16, %cst_14 {dimension_numbers = #tpu.dot_dimension_numbers<[1], [0], [0], [1], [0, 0, 1, 1], [], []>} : vector<64x1024xbf16>, vector<1024x896xbf16>, vector<64x896xf32> -> vector<64x896xf32>
    %18 = math.tanh %17 : vector<64x896xf32>
    %c0_15 = arith.constant 0 : index
    %c0_16 = arith.constant 0 : index
    %19 = vector.load %arg6[%c0_15, %c0_16] : memref<64x896xf32, #tpu.memory_space<vmem>>, vector<64x896xf32>
    tpu.vector_store %arg6[%c0_15, %c0_16], %18 {strides = array<i32>} : memref<64x896xf32, #tpu.memory_space<vmem>>, vector<64x896xf32>,
    return
  }
  func.func @transform_0(%arg0: i32) -> (i32, i32) {
    %c0_i32 = arith.constant 0 : i32
    %c0_i32_0 = arith.constant 0 : i32
    return %arg0, %c0_i32 : i32, i32
  }
  func.func @transform_1(%arg0: i32) -> (i32, i32) {
    %c0_i32 = arith.constant 0 : i32
    %c0_i32_0 = arith.constant 0 : i32
    %c0_i32_1 = arith.constant 0 : i32
    return %c0_i32, %c0_i32_0 : i32, i32
  }
  func.func @transform_2(%arg0: i32) -> (i32, i32) {
    %c0_i32 = arith.constant 0 : i32
    %c0_i32_0 = arith.constant 0 : i32
    %c0_i32_1 = arith.constant 0 : i32
    return %c0_i32, %c0_i32_0 : i32, i32
  }
  func.func @transform_3(%arg0: i32) -> (i32, i32) {
    %c0_i32 = arith.constant 0 : i32
    %c0_i32_0 = arith.constant 0 : i32
    %c0_i32_1 = arith.constant 0 : i32
    return %c0_i32, %c0_i32_0 : i32, i32
  }
  func.func @transform_4(%arg0: i32) -> (i32, i32) {
    %c0_i32 = arith.constant 0 : i32
    %c0_i32_0 = arith.constant 0 : i32
    %c0_i32_1 = arith.constant 0 : i32
    return %c0_i32, %c0_i32_0 : i32, i32
  }
  func.func @transform_5(%arg0: i32) -> (i32, i32) {
    %c0_i32 = arith.constant 0 : i32
    %c0_i32_0 = arith.constant 0 : i32
    return %arg0, %c0_i32 : i32, i32
  }
}

module attributes {stable_mosaic.version = 11 : i64} {
  func.func @generator_kernel(%arg0: i32, %arg1: memref<64x128xbf16, #tpu.memory_space<vmem>>, %arg2: memref<128x256xbf16, #tpu.memory_space<vmem>>, %arg3: memref<256x512xbf16, #tpu.memory_space<vmem>>, %arg4: memref<512x1024xbf16, #tpu.memory_space<vmem>>, %arg5: memref<1024x896xbf16, #tpu.memory_space<vmem>>, %arg6: memref<64x896xf32, #tpu.memory_space<vmem>>) attributes {dimension_semantics = [#tpu.dimension_semantics<parallel>], iteration_bounds = array<i64: 1>, scalar_prefetch = 0 : i64, scratch_operands = 0 : i64, tpu.core_type = #tpu.core_type<tc>, window_params = [{transform_indices = @transform_0, window_bounds = array<i64: 64, 128>}, {pipeline_mode = #tpu.pipeline_mode<synchronous>, transform_indices = @transform_1, window_bounds = array<i64: 128, 256>}, {pipeline_mode = #tpu.pipeline_mode<synchronous>, transform_indices = @transform_2, window_bounds = array<i64: 256, 512>}, {pipeline_mode = #tpu.pipeline_mode<synchronous>, transform_indices = @transform_3, window_bounds = array<i64: 512, 1024>}, {pipeline_mode = #tpu.pipeline_mode<synchronous>, transform_indices = @transform_4, window_bounds = array<i64: 1024, 896>}, {transform_indices = @transform_5, window_bounds = array<i64: 64, 896>}]} {
    %c0 = arith.constant 0 : index
    %c0_0 = arith.constant 0 : index
    %0 = vector.load %arg1[%c0, %c0_0] : memref<64x128xbf16, #tpu.memory_space<vmem>>, vector<64x128xbf16>
    %c0_1 = arith.constant 0 : index
    %c0_2 = arith.constant 0 : index
    %1 = vector.load %arg2[%c0_1, %c0_2] : memref<128x256xbf16, #tpu.memory_space<vmem>>, vector<128x256xbf16>
    %cst = arith.constant dense<0.000000e+00> : vector<64x256xf32>
    %2 = tpu.matmul %0, %1, %cst {dimension_numbers = #tpu.dot_dimension_numbers<[1], [0], [0], [1], [0, 0, 1, 1], [], []>} : vector<64x128xbf16>, vector<128x256xbf16>, vector<64x256xf32> -> vector<64x256xf32>
    %cst_3 = arith.constant 0.000000e+00 : f32
    %3 = vector.broadcast %cst_3 : f32 to vector<64x256xf32>
    %4 = arith.maximumf %2, %3 : vector<64x256xf32>
    %5 = arith.truncf %4 : vector<64x256xf32> to vector<64x256xbf16>
    %c0_4 = arith.constant 0 : index
    %c0_5 = arith.constant 0 : index
    %6 = vector.load %arg3[%c0_4, %c0_5] : memref<256x512xbf16, #tpu.memory_space<vmem>>, vector<256x512xbf16>
    %cst_6 = arith.constant dense<0.000000e+00> : vector<64x512xf32>
    %7 = tpu.matmul %5, %6, %cst_6 {dimension_numbers = #tpu.dot_dimension_numbers<[1], [0], [0], [1], [0, 0, 1, 1], [], []>} : vector<64x256xbf16>, vector<256x512xbf16>, vector<64x512xf32> -> vector<64x512xf32>
    %cst_7 = arith.constant 0.000000e+00 : f32
    %8 = vector.broadcast %cst_7 : f32 to vector<64x512xf32>
    %9 = arith.maximumf %7, %8 : vector<64x512xf32>
    %10 = arith.truncf %9 : vector<64x512xf32> to vector<64x512xbf16>
    %c0_8 = arith.constant 0 : index
    %c0_9 = arith.constant 0 : index
    %11 = vector.load %arg4[%c0_8, %c0_9] : memref<512x1024xbf16, #tpu.memory_space<vmem>>, vector<512x1024xbf16>
    %cst_10 = arith.constant dense<0.000000e+00> : vector<64x1024xf32>
    %12 = tpu.matmul %10, %11, %cst_10 {dimension_numbers = #tpu.dot_dimension_numbers<[1], [0], [0], [1], [0, 0, 1, 1], [], []>} : vector<64x512xbf16>, vector<512x1024xbf16>, vector<64x1024xf32> -> vector<64x1024xf32>
    %cst_11 = arith.constant 0.000000e+00 : f32
    %13 = vector.broadcast %cst_11 : f32 to vector<64x1024xf32>
    %14 = arith.maximumf %12, %13 : vector<64x1024xf32>
    %15 = arith.truncf %14 : vector<64x1024xf32> to vector<64x1024xbf16>
    %c0_12 = arith.constant 0 : index
    %c0_13 = arith.constant 0 : index
    %16 = vector.load %arg5[%c0_12, %c0_13] : memref<1024x896xbf16, #tpu.memory_space<vmem>>, vector<1024x896xbf16>
    %cst_14 = arith.constant dense<0.000000e+00> : vector<64x896xf32>
    %17 = tpu.matmul %15, %16, %cst_14 {dimension_numbers = #tpu.dot_dimension_numbers<[1], [0], [0], [1], [0, 0, 1, 1], [], []>} : vector<64x1024xbf16>, vector<1024x896xbf16>, vector<64x896xf32> -> vector<64x896xf32>
    %18 = math.tanh %17 : vector<64x896xf32>
    %c0_15 = arith.constant 0 : index
    %c0_16 = arith.constant 0 : index
    %19 = vector.load %arg6[%c0_15, %c0_16] : memref<64x896xf32, #tpu.memory_space<vmem>>, vector<64x896xf32>
    tpu.vector_store %arg6[%c0_15, %c0_16], %18 {strides = array<i32>} : memref<64x896xf32, #tpu.memory_space<vmem>>, vector<64x896xf32>,
    return
  }
  func.func @transform_0(%arg0: i32) -> (i32, i32) {
    %c0_i32 = arith.constant 0 : i32
    %c0_i32_0 = arith.constant 0 : i32
    return %arg0, %c0_i32 : i32, i32
  }
  func.func @transform_1(%arg0: i32) -> (i32, i32) {
    %c0_i32 = arith.constant 0 : i32
    %c0_i32_0 = arith.constant 0 : i32
    %c0_i32_1 = arith.constant 0 : i32
    return %c0_i32, %c0_i32_0 : i32, i32
  }
  func.func @transform_2(%arg0: i32) -> (i32, i32) {
    %c0_i32 = arith.constant 0 : i32
    %c0_i32_0 = arith.constant 0 : i32
    %c0_i32_1 = arith.constant 0 : i32
    return %c0_i32, %c0_i32_0 : i32, i32
  }
  func.func @transform_3(%arg0: i32) -> (i32, i32) {
    %c0_i32 = arith.constant 0 : i32
    %c0_i32_0 = arith.constant 0 : i32
    %c0_i32_1 = arith.constant 0 : i32
    return %c0_i32, %c0_i32_0 : i32, i32
  }
  func.func @transform_4(%arg0: i32) -> (i32, i32) {
    %c0_i32 = arith.constant 0 : i32
    %c0_i32_0 = arith.constant 0 : i32
    %c0_i32_1 = arith.constant 0 : i32
    return %c0_i32, %c0_i32_0 : i32, i32
  }
  func.func @transform_5(%arg0: i32) -> (i32, i32) {
    %c0_i32 = arith.constant 0 : i32
    %c0_i32_0 = arith.constant 0 : i32
    return %arg0, %c0_i32 : i32, i32
  }
}

</mosaic_0001>

<llo_original>
// kernel: tpu_custom_call.1
$region0: #{tpu_custom_call.1}
  #allocation0 [shape = 'u32[]', space=smem, size = 0x4, offset = 0x4, fixed_abs, tag = 'smem constant byte address 0x4 - core index']
  #allocation1 [shape = 'u32[144,128]{1,0:T(1,128)}', space=vmem, size = 0x12000, scoped, tag = 'internal scratch']
  %s0 = inlined_call_operand.hbm [shape: bf16[64,128], index: 0, kind: input, shape index: {}]
  %s1 = inlined_call_operand.hbm [shape: bf16[128,256], index: 1, kind: input, shape index: {}]
  %s2 = inlined_call_operand.hbm [shape: bf16[256,512], index: 2, kind: input, shape index: {}]
  %s3 = inlined_call_operand.hbm [shape: bf16[512,1024], index: 3, kind: input, shape index: {}]
  %s4 = inlined_call_operand.hbm [shape: bf16[1024,896], index: 4, kind: input, shape index: {}]
  %s5 = inlined_call_operand.hbm [shape: f32[64,896], index: 5, kind: output, shape index: {}]
  %s6 = sld [smem:[#allocation0]]
  $region50: #{tpu_custom_call.1} parent=0
    _
  %s8 = ssub.s32 1, %s6
  %s9 = scalar_select 0, %s8, %s6
  $region1: #{tpu_custom_call.1} parent=0
    #allocation2 [shape = 'u8[16384]{0}', space=vmem, size = 0x4000, scoped, tag = 'input window, operand 0, single buffered']
    #allocation3 [shape = 's32[1]{0}', space=sflag, size = 0x4, scoped, tag = 'scoped memory for tpu_custom_call.1']
    #allocation4 [shape = 's32[1]{0}', space=sflag, size = 0x4, scoped, tag = 'scoped memory for tpu_custom_call.1']
    #allocation5 [shape = 'u8[65536]{0}', space=vmem, size = 0x10000, scoped, tag = 'input window, operand 1, single buffered']
    #allocation6 [shape = 's32[1]{0}', space=sflag, size = 0x4, scoped, tag = 'scoped memory for tpu_custom_call.1']
    #allocation7 [shape = 'u8[262144]{0}', space=vmem, size = 0x40000, scoped, tag = 'input window, operand 2, single buffered']
    #allocation8 [shape = 'u8[1048576]{0}', space=vmem, size = 0x100000, scoped, tag = 'input window, operand 3, single buffered']
    #allocation9 [shape = 's32[1]{0}', space=sflag, size = 0x4, scoped, tag = 'scoped memory for tpu_custom_call.1']
    #allocation10 [shape = 'u8[1835008]{0}', space=vmem, size = 0x1c0000, scoped, tag = 'input window, operand 4, single buffered']
    #allocation11 [shape = 'u8[229376]{0}', space=vmem, size = 0x38000, scoped, tag = 'output window, operand 0, single buffered']
    %10 = vsyncpa [#allocation3], 0
    %11 = vsyncpa [#allocation6], 0
    %12 = vsyncpa [#allocation9], 0
    %13 = vsyncpa [#allocation4], 0
    // Predicated region
    $region2: #{tpu_custom_call.1} parent=1 // pred_check
      _
    $region3: #{tpu_custom_call.1} parent=1 // pred_check_branch
      %15 = sbr.rel (0) target = $region5
    $region4: #{tpu_custom_call.1} parent=1 // pred_region
      %s17 = ssub.s32 512, 512
      %18 = vsyncadd [#allocation3], %s17
      %s19 = sshll.u32 [#allocation2], 4
      %s20 = int_to_ptr.vmem [resolvable:$true] %s19
      %25 = dma.hbm_to_vmem [thread:$0]  %s0, 512, %s20, [#allocation3], 64, 64, 4
    $region5: #{tpu_custom_call.1} parent=1 // pred_fallthru
      _
    // Predicated region
    $region6: #{tpu_custom_call.1} parent=1 // pred_check
      _
    $region7: #{tpu_custom_call.1} parent=1 // pred_check_branch
      %27 = sbr.rel (0) target = $region9
    $region8: #{tpu_custom_call.1} parent=1 // pred_region
      %s29 = ssub.s32 2048, 2048
      %30 = vsyncadd [#allocation6], %s29
      %s31 = sshll.u32 [#allocation5], 4
      %s32 = int_to_ptr.vmem [resolvable:$true] %s31
      %37 = dma.hbm_to_vmem [thread:$0]  %s1, 2048, %s32, [#allocation6], 128, 128, 8
    $region9: #{tpu_custom_call.1} parent=1 // pred_fallthru
      _
    // Predicated region
    $region10: #{tpu_custom_call.1} parent=1 // pred_check
      _
    $region11: #{tpu_custom_call.1} parent=1 // pred_check_branch
      %39 = sbr.rel (0) target = $region13
    $region12: #{tpu_custom_call.1} parent=1 // pred_region
      %s41 = ssub.s32 8192, 8192
      %42 = vsyncadd [#allocation6], %s41
      %s43 = sshll.u32 [#allocation7], 4
      %s44 = int_to_ptr.vmem [resolvable:$true] %s43
      %49 = dma.hbm_to_vmem [thread:$0]  %s2, 8192, %s44, [#allocation6], 256, 256, 16
    $region13: #{tpu_custom_call.1} parent=1 // pred_fallthru
      _
    // Predicated region
    $region14: #{tpu_custom_call.1} parent=1 // pred_check
      _
    $region15: #{tpu_custom_call.1} parent=1 // pred_check_branch
      %51 = sbr.rel (0) target = $region17
    $region16: #{tpu_custom_call.1} parent=1 // pred_region
      %s53 = ssub.s32 32768, 32768
      %54 = vsyncadd [#allocation9], %s53
      %s55 = sshll.u32 [#allocation8], 4
      %s56 = int_to_ptr.vmem [resolvable:$true] %s55
      %61 = dma.hbm_to_vmem [thread:$0]  %s3, 32768, %s56, [#allocation9], 512, 512, 32
    $region17: #{tpu_custom_call.1} parent=1 // pred_fallthru
      _
    // Predicated region
    $region18: #{tpu_custom_call.1} parent=1 // pred_check
      _
    $region19: #{tpu_custom_call.1} parent=1 // pred_check_branch
      %63 = sbr.rel (0) target = $region21
    $region20: #{tpu_custom_call.1} parent=1 // pred_region
      %s65 = ssub.s32 57344, 57344
      %66 = vsyncadd [#allocation9], %s65
      %s67 = sshll.u32 [#allocation10], 4
      %s68 = int_to_ptr.vmem [resolvable:$true] %s67
      %73 = dma.hbm_to_vmem [thread:$0]  %s4, 57344, %s68, [#allocation9], 448, 448, 28
    $region21: #{tpu_custom_call.1} parent=1 // pred_fallthru
      _
    // Predicated region
    $region22: #{tpu_custom_call.1} parent=1 // pred_check
      _
    $region23: #{tpu_custom_call.1} parent=1 // pred_check_branch
      %75 = sbr.rel (0) target = $region25
    $region24: #{tpu_custom_call.1} parent=1 // pred_region
      %76 = dma.done [#allocation3], 512
    $region25: #{tpu_custom_call.1} parent=1 // pred_fallthru
      _
    // Predicated region
    $region26: #{tpu_custom_call.1} parent=1 // pred_check
      _
    $region27: #{tpu_custom_call.1} parent=1 // pred_check_branch
      %78 = sbr.rel (0) target = $region29
    $region28: #{tpu_custom_call.1} parent=1 // pred_region
      %79 = dma.done [#allocation6], 2048
    $region29: #{tpu_custom_call.1} parent=1 // pred_fallthru
      _
    // Predicated region
    $region30: #{tpu_custom_call.1} parent=1 // pred_check
      _
    $region31: #{tpu_custom_call.1} parent=1 // pred_check_branch
      %81 = sbr.rel (0) target = $region33
    $region32: #{tpu_custom_call.1} parent=1 // pred_region
      %82 = dma.done [#allocation6], 8192
    $region33: #{tpu_custom_call.1} parent=1 // pred_fallthru
      _
    // Predicated region
    $region34: #{tpu_custom_call.1} parent=1 // pred_check
      _
    $region35: #{tpu_custom_call.1} parent=1 // pred_check_branch
      %84 = sbr.rel (0) target = $region37
    $region36: #{tpu_custom_call.1} parent=1 // pred_region
      %85 = dma.done [#allocation9], 32768
    $region37: #{tpu_custom_call.1} parent=1 // pred_fallthru
      _
    // Predicated region
    $region38: #{tpu_custom_call.1} parent=1 // pred_check
      _
    $region39: #{tpu_custom_call.1} parent=1 // pred_check_branch
      %87 = sbr.rel (0) target = $region41
    $region40: #{tpu_custom_call.1} parent=1 // pred_region
      %88 = dma.done [#allocation9], 57344
    $region41: #{tpu_custom_call.1} parent=1 // pred_fallthru
      _
    %v90 = vld [vmem:[#allocation2] sm:$0xf]
    %v91 = vld [vmem:[#allocation2 + $0x4] sm:$0xf]
    %v92 = vld [vmem:[#allocation2 + $0x8] sm:$0xf]
    %v93 = vld [vmem:[#allocation2 + $0xc] sm:$0xf]
    %v94 = vld [vmem:[#allocation2 + $0x10] sm:$0xf]
    %v95 = vld [vmem:[#allocation2 + $0x14] sm:$0xf]
    %v96 = vld [vmem:[#allocation2 + $0x18] sm:$0xf]
    %v97 = vld [vmem:[#allocation2 + $0x1c] sm:$0xf]
    %v98 = vld [vmem:[#allocation5] sm:$0xff]
    %v99 = vld [vmem:[#allocation5 + $0x8] sm:$0xff]
    %v100 = vld [vmem:[#allocation5 + $0x10] sm:$0xff]
    %v101 = vld [vmem:[#allocation5 + $0x18] sm:$0xff]
    %v102 = vld [vmem:[#allocation5 + $0x20] sm:$0xff]
    %v103 = vld [vmem:[#allocation5 + $0x28] sm:$0xff]
    %v104 = vld [vmem:[#allocation5 + $0x30] sm:$0xff]
    %v105 = vld [vmem:[#allocation5 + $0x38] sm:$0xff]
    %v106 = vld [vmem:[#allocation5 + $0x40] sm:$0xff]
    %v107 = vld [vmem:[#allocation5 + $0x48] sm:$0xff]
    %v108 = vld [vmem:[#allocation5 + $0x50] sm:$0xff]
    %v109 = vld [vmem:[#allocation5 + $0x58] sm:$0xff]
    %v110 = vld [vmem:[#allocation5 + $0x60] sm:$0xff]
    %v111 = vld [vmem:[#allocation5 + $0x68] sm:$0xff]
    %v112 = vld [vmem:[#allocation5 + $0x70] sm:$0xff]
    %v113 = vld [vmem:[#allocation5 + $0x78] sm:$0xff]
    %v122 = vunpack.c.l.b16 %v90
    %v123 = vunpack.c.l.b16 %v91
    %v124 = vunpack.c.l.b16 %v92
    %v125 = vunpack.c.l.b16 %v93
    %v126 = vunpack.c.l.b16 %v94
    %v127 = vunpack.c.l.b16 %v95
    %v128 = vunpack.c.l.b16 %v96
    %v129 = vunpack.c.l.b16 %v97
    %v130 = vpack.c.b16 %v123, %v122
    %v131 = vpack.c.b16 %v125, %v124
    %v132 = vpack.c.b16 %v127, %v126
    %v133 = vpack.c.b16 %v129, %v128
    %v154 = vunpack.c.l.b16 %v98
    %v155 = vunpack.c.h.b16 %v98
    %v156 = vunpack.c.l.b16 %v99
    %v157 = vunpack.c.h.b16 %v99
    %v158 = vunpack.c.l.b16 %v100
    %v159 = vunpack.c.h.b16 %v100
    %v160 = vunpack.c.l.b16 %v101
    %v161 = vunpack.c.h.b16 %v101
    %v162 = vunpack.c.l.b16 %v102
    %v163 = vunpack.c.h.b16 %v102
    %v164 = vunpack.c.l.b16 %v103
    %v165 = vunpack.c.h.b16 %v103
    %v166 = vunpack.c.l.b16 %v104
    %v167 = vunpack.c.h.b16 %v104
    %v168 = vunpack.c.l.b16 %v105
    %v169 = vunpack.c.h.b16 %v105
    %v170 = vunpack.c.l.b16 %v106
    %v171 = vunpack.c.h.b16 %v106
    %v172 = vunpack.c.l.b16 %v107
    %v173 = vunpack.c.h.b16 %v107
    %v174 = vunpack.c.l.b16 %v108
    %v175 = vunpack.c.h.b16 %v108
    %v176 = vunpack.c.l.b16 %v109
    %v177 = vunpack.c.h.b16 %v109
    %v178 = vunpack.c.l.b16 %v110
    %v179 = vunpack.c.h.b16 %v110
    %v180 = vunpack.c.l.b16 %v111
    %v181 = vunpack.c.h.b16 %v111
    %v182 = vunpack.c.l.b16 %v112
    %v183 = vunpack.c.h.b16 %v112
    %v184 = vunpack.c.l.b16 %v113
    %v185 = vunpack.c.h.b16 %v113
    %v186 = vpack.c.b16 %v156, %v154
    %v187 = vpack.c.b16 %v157, %v155
    %v188 = vpack.c.b16 %v160, %v158
    %v189 = vpack.c.b16 %v161, %v159
    %v190 = vpack.c.b16 %v164, %v162
    %v191 = vpack.c.b16 %v165, %v163
    %v192 = vpack.c.b16 %v168, %v166
    %v193 = vpack.c.b16 %v169, %v167
    %v194 = vpack.c.b16 %v172, %v170
    %v195 = vpack.c.b16 %v173, %v171
    %v196 = vpack.c.b16 %v176, %v174
    %v197 = vpack.c.b16 %v177, %v175
    %v198 = vpack.c.b16 %v180, %v178
    %v199 = vpack.c.b16 %v181, %v179
    %v200 = vpack.c.b16 %v184, %v182
    %v201 = vpack.c.b16 %v185, %v183
    %218 = vmatprep.subr.bf16.mxu0 %v187
    %219 = vmatpush1.bf16.msra.mxu0 %v186
    %220 = vmatprep.subr.bf16.mxu0 %v189
    %221 = vmatpush1.bf16.msra.mxu0 %v188
    %222 = vmatprep.subr.bf16.mxu0 %v191
    %223 = vmatpush1.bf16.msra.mxu0 %v190
    %224 = vmatprep.subr.bf16.mxu0 %v193
    %225 = vmatpush1.bf16.msra.mxu0 %v192
    %226 = vmatprep.subr.bf16.mxu0 %v195
    %227 = vmatpush1.bf16.msra.mxu0 %v194
    %228 = vmatprep.subr.bf16.mxu0 %v197
    %229 = vmatpush1.bf16.msra.mxu0 %v196
    %230 = vmatprep.subr.bf16.mxu0 %v199
    %231 = vmatpush1.bf16.msra.mxu0 %v198
    %232 = vmatprep.subr.bf16.mxu0 %v201
    %233 = vmatpush1.bf16.msra.mxu0 %v200
    %234 = vmatprep.subr.bf16.mxu0 0
    %235 = vmatpush1.bf16.msra.mxu0 0
    %236 = vmatprep.subr.bf16.mxu0 0
    %237 = vmatpush1.bf16.msra.mxu0 0
    %238 = vmatprep.subr.bf16.mxu0 0
    %239 = vmatpush1.bf16.msra.mxu0 0
    %240 = vmatprep.subr.bf16.mxu0 0
    %241 = vmatpush1.bf16.msra.mxu0 0
    %242 = vmatprep.subr.bf16.mxu0 0
    %243 = vmatpush1.bf16.msra.mxu0 0
    %244 = vmatprep.subr.bf16.mxu0 0
    %245 = vmatpush1.bf16.msra.mxu0 0
    %246 = vmatprep.subr.bf16.mxu0 0
    %247 = vmatpush1.bf16.msra.mxu0 0
    %248 = vmatprep.subr.bf16.mxu0 0
    %249 = vmatpush1.bf16.msra.mxu0 0
    %250 = vmatprep.mubr.bf16.mxu0 0
    %251 = vmatmul.mubr.bf16.gmra.mrb[0].mxu0 %v130
    %v252 = vpop.f32.mrb[0].mxu0
    %v253 = vadd.f32 0.0, %v252
    %v254 = vpop.f32.mrb[0].mxu0
    %v255 = vadd.f32 0.0, %v254
    %v256 = vpop.f32.mrb[0].mxu0
    %v257 = vadd.f32 0.0, %v256
    %v258 = vpop.f32.mrb[0].mxu0
    %v259 = vadd.f32 0.0, %v258
    %260 = vmatprep.mubr.bf16.mxu0 0
    %261 = vmatmul.mubr.bf16.gmra.mrb[0].mxu0 %v131
    %v262 = vpop.f32.mrb[0].mxu0
    %v263 = vadd.f32 0.0, %v262
    %v264 = vpop.f32.mrb[0].mxu0
    %v265 = vadd.f32 0.0, %v264
    %v266 = vpop.f32.mrb[0].mxu0
    %v267 = vadd.f32 0.0, %v266
    %v268 = vpop.f32.mrb[0].mxu0
    %v269 = vadd.f32 0.0, %v268
    %270 = vmatprep.mubr.bf16.mxu0 0
    %271 = vmatmul.mubr.bf16.gmra.mrb[0].mxu0 %v132
    %v272 = vpop.f32.mrb[0].mxu0
    %v273 = vadd.f32 0.0, %v272
    %v274 = vpop.f32.mrb[0].mxu0
    %v275 = vadd.f32 0.0, %v274
    %v276 = vpop.f32.mrb[0].mxu0
    %v277 = vadd.f32 0.0, %v276
    %v278 = vpop.f32.mrb[0].mxu0
    %v279 = vadd.f32 0.0, %v278
    %280 = vmatprep.mubr.bf16.mxu0 0
    %281 = vmatmul.mubr.bf16.gmra.mrb[0].mxu0 %v133
    %v282 = vpop.f32.mrb[0].mxu0
    %v283 = vadd.f32 0.0, %v282
    %v284 = vpop.f32.mrb[0].mxu0
    %v285 = vadd.f32 0.0, %v284
    %v286 = vpop.f32.mrb[0].mxu0
    %v287 = vadd.f32 0.0, %v286
    %v288 = vpop.f32.mrb[0].mxu0
    %v289 = vadd.f32 0.0, %v288
    %290 = vdwg.mxu0
    %v291 = vmax.f32 %v253, 0.0
    %v292 = vmax.f32 %v255, 0.0
    %v293 = vmax.f32 %v257, 0.0
    %v294 = vmax.f32 %v259, 0.0
    %v295 = vmax.f32 %v263, 0.0
    %v296 = vmax.f32 %v265, 0.0
    %v297 = vmax.f32 %v267, 0.0
    %v298 = vmax.f32 %v269, 0.0
    %v299 = vmax.f32 %v273, 0.0
    %v300 = vmax.f32 %v275, 0.0
    %v301 = vmax.f32 %v277, 0.0
    %v302 = vmax.f32 %v279, 0.0
    %v303 = vmax.f32 %v283, 0.0
    %v304 = vmax.f32 %v285, 0.0
    %v305 = vmax.f32 %v287, 0.0
    %v306 = vmax.f32 %v289, 0.0
    %v307 = vpack.c.bf16 %v293, %v291
    %v308 = vpack.c.bf16 %v294, %v292
    %v309 = vpack.c.bf16 %v297, %v295
    %v310 = vpack.c.bf16 %v298, %v296
    %v311 = vpack.c.bf16 %v301, %v299
    %v312 = vpack.c.bf16 %v302, %v300
    %v313 = vpack.c.bf16 %v305, %v303
    %v314 = vpack.c.bf16 %v306, %v304
    %v315 = vld [vmem:[#allocation7] sm:$0xff]
    %v316 = vld [vmem:[#allocation7 + $0x8] sm:$0xff]
    %v317 = vld [vmem:[#allocation7 + $0x10] sm:$0xff]
    %v318 = vld [vmem:[#allocation7 + $0x18] sm:$0xff]
    %v319 = vld [vmem:[#allocation7 + $0x20] sm:$0xff]
    %v320 = vld [vmem:[#allocation7 + $0x28] sm:$0xff]
    %v321 = vld [vmem:[#allocation7 + $0x30] sm:$0xff]
    %v322 = vld [vmem:[#allocation7 + $0x38] sm:$0xff]
    %v323 = vld [vmem:[#allocation7 + $0x40] sm:$0xff]
    %v324 = vld [vmem:[#allocation7 + $0x48] sm:$0xff]
    %v325 = vld [vmem:[#allocation7 + $0x50] sm:$0xff]
    %v326 = vld [vmem:[#allocation7 + $0x58] sm:$0xff]
    %v327 = vld [vmem:[#allocation7 + $0x60] sm:$0xff]
    %v328 = vld [vmem:[#allocation7 + $0x68] sm:$0xff]
    %v329 = vld [vmem:[#allocation7 + $0x70] sm:$0xff]
    %v330 = vld [vmem:[#allocation7 + $0x78] sm:$0xff]
    %v331 = vld [vmem:[#allocation7 + $0x80] sm:$0xff]
    %v332 = vld [vmem:[#allocation7 + $0x88] sm:$0xff]
    %v333 = vld [vmem:[#allocation7 + $0x90] sm:$0xff]
    %v334 = vld [vmem:[#allocation7 + $0x98] sm:$0xff]
    %v335 = vld [vmem:[#allocation7 + $0xa0] sm:$0xff]
    %v336 = vld [vmem:[#allocation7 + $0xa8] sm:$0xff]
    %v337 = vld [vmem:[#allocation7 + $0xb0] sm:$0xff]
    %v338 = vld [vmem:[#allocation7 + $0xb8] sm:$0xff]
    %v339 = vld [vmem:[#allocation7 + $0xc0] sm:$0xff]
    %v340 = vld [vmem:[#allocation7 + $0xc8] sm:$0xff]
    %v341 = vld [vmem:[#allocation7 + $0xd0] sm:$0xff]
    %v342 = vld [vmem:[#allocation7 + $0xd8] sm:$0xff]
    %v343 = vld [vmem:[#allocation7 + $0xe0] sm:$0xff]
    %v344 = vld [vmem:[#allocation7 + $0xe8] sm:$0xff]
    %v345 = vld [vmem:[#allocation7 + $0xf0] sm:$0xff]
    %v346 = vld [vmem:[#allocation7 + $0xf8] sm:$0xff]
    %v347 = vld [vmem:[#allocation7 + $0x100] sm:$0xff]
    %v348 = vld [vmem:[#allocation7 + $0x108] sm:$0xff]
    %v349 = vld [vmem:[#allocation7 + $0x110] sm:$0xff]
    %v350 = vld [vmem:[#allocation7 + $0x118] sm:$0xff]
    %v351 = vld [vmem:[#allocation7 + $0x120] sm:$0xff]
    %v352 = vld [vmem:[#allocation7 + $0x128] sm:$0xff]
    %v353 = vld [vmem:[#allocation7 + $0x130] sm:$0xff]
    %v354 = vld [vmem:[#allocation7 + $0x138] sm:$0xff]
    %v355 = vld [vmem:[#allocation7 + $0x140] sm:$0xff]
    %v356 = vld [vmem:[#allocation7 + $0x148] sm:$0xff]
    %v357 = vld [vmem:[#allocation7 + $0x150] sm:$0xff]
    %v358 = vld [vmem:[#allocation7 + $0x158] sm:$0xff]
    %v359 = vld [vmem:[#allocation7 + $0x160] sm:$0xff]
    %v360 = vld [vmem:[#allocation7 + $0x168] sm:$0xff]
    %v361 = vld [vmem:[#allocation7 + $0x170] sm:$0xff]
    %v362 = vld [vmem:[#allocation7 + $0x178] sm:$0xff]
    %v363 = vld [vmem:[#allocation7 + $0x180] sm:$0xff]
    %v364 = vld [vmem:[#allocation7 + $0x188] sm:$0xff]
    %v365 = vld [vmem:[#allocation7 + $0x190] sm:$0xff]
    %v366 = vld [vmem:[#allocation7 + $0x198] sm:$0xff]
    %v367 = vld [vmem:[#allocation7 + $0x1a0] sm:$0xff]
    %v368 = vld [vmem:[#allocation7 + $0x1a8] sm:$0xff]
    %v369 = vld [vmem:[#allocation7 + $0x1b0] sm:$0xff]
    %v370 = vld [vmem:[#allocation7 + $0x1b8] sm:$0xff]
    %v371 = vld [vmem:[#allocation7 + $0x1c0] sm:$0xff]
    %v372 = vld [vmem:[#allocation7 + $0x1c8] sm:$0xff]
    %v373 = vld [vmem:[#allocation7 + $0x1d0] sm:$0xff]
    %v374 = vld [vmem:[#allocation7 + $0x1d8] sm:$0xff]
    %v375 = vld [vmem:[#allocation7 + $0x1e0] sm:$0xff]
    %v376 = vld [vmem:[#allocation7 + $0x1e8] sm:$0xff]
    %v377 = vld [vmem:[#allocation7 + $0x1f0] sm:$0xff]
    %v378 = vld [vmem:[#allocation7 + $0x1f8] sm:$0xff]
    %v443 = vunpack.c.l.b16 %v315
    %v444 = vunpack.c.h.b16 %v315
    %v445 = vunpack.c.l.b16 %v316
    %v446 = vunpack.c.h.b16 %v316
    %v447 = vunpack.c.l.b16 %v317
    %v448 = vunpack.c.h.b16 %v317
    %v449 = vunpack.c.l.b16 %v318
    %v450 = vunpack.c.h.b16 %v318
    %v451 = vunpack.c.l.b16 %v319
    %v452 = vunpack.c.h.b16 %v319
    %v453 = vunpack.c.l.b16 %v320
    %v454 = vunpack.c.h.b16 %v320
    %v455 = vunpack.c.l.b16 %v321
    %v456 = vunpack.c.h.b16 %v321
    %v457 = vunpack.c.l.b16 %v322
    %v458 = vunpack.c.h.b16 %v322
    %v459 = vunpack.c.l.b16 %v323
    %v460 = vunpack.c.h.b16 %v323
    %v461 = vunpack.c.l.b16 %v324
    %v462 = vunpack.c.h.b16 %v324
    %v463 = vunpack.c.l.b16 %v325
    %v464 = vunpack.c.h.b16 %v325
    %v465 = vunpack.c.l.b16 %v326
    %v466 = vunpack.c.h.b16 %v326
    %v467 = vunpack.c.l.b16 %v327
    %v468 = vunpack.c.h.b16 %v327
    %v469 = vunpack.c.l.b16 %v328
    %v470 = vunpack.c.h.b16 %v328
    %v471 = vunpack.c.l.b16 %v329
    %v472 = vunpack.c.h.b16 %v329
    %v473 = vunpack.c.l.b16 %v330
    %v474 = vunpack.c.h.b16 %v330
    %v475 = vunpack.c.l.b16 %v331
    %v476 = vunpack.c.h.b16 %v331
    %v477 = vunpack.c.l.b16 %v332
    %v478 = vunpack.c.h.b16 %v332
    %v479 = vunpack.c.l.b16 %v333
    %v480 = vunpack.c.h.b16 %v333
    %v481 = vunpack.c.l.b16 %v334
    %v482 = vunpack.c.h.b16 %v334
    %v483 = vunpack.c.l.b16 %v335
    %v484 = vunpack.c.h.b16 %v335
    %v485 = vunpack.c.l.b16 %v336
    %v486 = vunpack.c.h.b16 %v336
    %v487 = vunpack.c.l.b16 %v337
    %v488 = vunpack.c.h.b16 %v337
    %v489 = vunpack.c.l.b16 %v338
    %v490 = vunpack.c.h.b16 %v338
    %v491 = vunpack.c.l.b16 %v339
    %v492 = vunpack.c.h.b16 %v339
    %v493 = vunpack.c.l.b16 %v340
    %v494 = vunpack.c.h.b16 %v340
    %v495 = vunpack.c.l.b16 %v341
    %v496 = vunpack.c.h.b16 %v341
    %v497 = vunpack.c.l.b16 %v342
    %v498 = vunpack.c.h.b16 %v342
    %v499 = vunpack.c.l.b16 %v343
    %v500 = vunpack.c.h.b16 %v343
    %v501 = vunpack.c.l.b16 %v344
    %v502 = vunpack.c.h.b16 %v344
    %v503 = vunpack.c.l.b16 %v345
    %v504 = vunpack.c.h.b16 %v345
    %v505 = vunpack.c.l.b16 %v346
    %v506 = vunpack.c.h.b16 %v346
    %v507 = vunpack.c.l.b16 %v347
    %v508 = vunpack.c.h.b16 %v347
    %v509 = vunpack.c.l.b16 %v348
    %v510 = vunpack.c.h.b16 %v348
    %v511 = vunpack.c.l.b16 %v349
    %v512 = vunpack.c.h.b16 %v349
    %v513 = vunpack.c.l.b16 %v350
    %v514 = vunpack.c.h.b16 %v350
    %v515 = vunpack.c.l.b16 %v351
    %v516 = vunpack.c.h.b16 %v351
    %v517 = vunpack.c.l.b16 %v352
    %v518 = vunpack.c.h.b16 %v352
    %v519 = vunpack.c.l.b16 %v353
    %v520 = vunpack.c.h.b16 %v353
    %v521 = vunpack.c.l.b16 %v354
    %v522 = vunpack.c.h.b16 %v354
    %v523 = vunpack.c.l.b16 %v355
    %v524 = vunpack.c.h.b16 %v355
    %v525 = vunpack.c.l.b16 %v356
    %v526 = vunpack.c.h.b16 %v356
    %v527 = vunpack.c.l.b16 %v357
    %v528 = vunpack.c.h.b16 %v357
    %v529 = vunpack.c.l.b16 %v358
    %v530 = vunpack.c.h.b16 %v358
    %v531 = vunpack.c.l.b16 %v359
    %v532 = vunpack.c.h.b16 %v359
    %v533 = vunpack.c.l.b16 %v360
    %v534 = vunpack.c.h.b16 %v360
    %v535 = vunpack.c.l.b16 %v361
    %v536 = vunpack.c.h.b16 %v361
    %v537 = vunpack.c.l.b16 %v362
    %v538 = vunpack.c.h.b16 %v362
    %v539 = vunpack.c.l.b16 %v363
    %v540 = vunpack.c.h.b16 %v363
    %v541 = vunpack.c.l.b16 %v364
    %v542 = vunpack.c.h.b16 %v364
    %v543 = vunpack.c.l.b16 %v365
    %v544 = vunpack.c.h.b16 %v365
    %v545 = vunpack.c.l.b16 %v366
    %v546 = vunpack.c.h.b16 %v366
    %v547 = vunpack.c.l.b16 %v367
    %v548 = vunpack.c.h.b16 %v367
    %v549 = vunpack.c.l.b16 %v368
    %v550 = vunpack.c.h.b16 %v368
    %v551 = vunpack.c.l.b16 %v369
    %v552 = vunpack.c.h.b16 %v369
    %v553 = vunpack.c.l.b16 %v370
    %v554 = vunpack.c.h.b16 %v370
    %v555 = vunpack.c.l.b16 %v371
    %v556 = vunpack.c.h.b16 %v371
    %v557 = vunpack.c.l.b16 %v372
    %v558 = vunpack.c.h.b16 %v372
    %v559 = vunpack.c.l.b16 %v373
    %v560 = vunpack.c.h.b16 %v373
    %v561 = vunpack.c.l.b16 %v374
    %v562 = vunpack.c.h.b16 %v374
    %v563 = vunpack.c.l.b16 %v375
    %v564 = vunpack.c.h.b16 %v375
    %v565 = vunpack.c.l.b16 %v376
    %v566 = vunpack.c.h.b16 %v376
    %v567 = vunpack.c.l.b16 %v377
    %v568 = vunpack.c.h.b16 %v377
    %v569 = vunpack.c.l.b16 %v378
    %v570 = vunpack.c.h.b16 %v378
    %v571 = vpack.c.b16 %v447, %v443
    %v572 = vpack.c.b16 %v448, %v444
    %v573 = vpack.c.b16 %v449, %v445
    %v574 = vpack.c.b16 %v450, %v446
    %v575 = vpack.c.b16 %v455, %v451
    %v576 = vpack.c.b16 %v456, %v452
    %v577 = vpack.c.b16 %v457, %v453
    %v578 = vpack.c.b16 %v458, %v454
    %v579 = vpack.c.b16 %v463, %v459
    %v580 = vpack.c.b16 %v464, %v460
    %v581 = vpack.c.b16 %v465, %v461
    %v582 = vpack.c.b16 %v466, %v462
    %v583 = vpack.c.b16 %v471, %v467
    %v584 = vpack.c.b16 %v472, %v468
    %v585 = vpack.c.b16 %v473, %v469
    %v586 = vpack.c.b16 %v474, %v470
    %v587 = vpack.c.b16 %v479, %v475
    %v588 = vpack.c.b16 %v480, %v476
    %v589 = vpack.c.b16 %v481, %v477
    %v590 = vpack.c.b16 %v482, %v478
    %v591 = vpack.c.b16 %v487, %v483
    %v592 = vpack.c.b16 %v488, %v484
    %v593 = vpack.c.b16 %v489, %v485
    %v594 = vpack.c.b16 %v490, %v486
    %v595 = vpack.c.b16 %v495, %v491
    %v596 = vpack.c.b16 %v496, %v492
    %v597 = vpack.c.b16 %v497, %v493
    %v598 = vpack.c.b16 %v498, %v494
    %v599 = vpack.c.b16 %v503, %v499
    %v600 = vpack.c.b16 %v504, %v500
    %v601 = vpack.c.b16 %v505, %v501
    %v602 = vpack.c.b16 %v506, %v502
    %v603 = vpack.c.b16 %v511, %v507
    %v604 = vpack.c.b16 %v512, %v508
    %v605 = vpack.c.b16 %v513, %v509
    %v606 = vpack.c.b16 %v514, %v510
    %v607 = vpack.c.b16 %v519, %v515
    %v608 = vpack.c.b16 %v520, %v516
    %v609 = vpack.c.b16 %v521, %v517
    %v610 = vpack.c.b16 %v522, %v518
    %v611 = vpack.c.b16 %v527, %v523
    %v612 = vpack.c.b16 %v528, %v524
    %v613 = vpack.c.b16 %v529, %v525
    %v614 = vpack.c.b16 %v530, %v526
    %v615 = vpack.c.b16 %v535, %v531
    %v616 = vpack.c.b16 %v536, %v532
    %v617 = vpack.c.b16 %v537, %v533
    %v618 = vpack.c.b16 %v538, %v534
    %v619 = vpack.c.b16 %v543, %v539
    %v620 = vpack.c.b16 %v544, %v540
    %v621 = vpack.c.b16 %v545, %v541
    %v622 = vpack.c.b16 %v546, %v542
    %v623 = vpack.c.b16 %v551, %v547
    %v624 = vpack.c.b16 %v552, %v548
    %v625 = vpack.c.b16 %v553, %v549
    %v626 = vpack.c.b16 %v554, %v550
    %v627 = vpack.c.b16 %v559, %v555
    %v628 = vpack.c.b16 %v560, %v556
    %v629 = vpack.c.b16 %v561, %v557
    %v630 = vpack.c.b16 %v562, %v558
    %v631 = vpack.c.b16 %v567, %v563
    %v632 = vpack.c.b16 %v568, %v564
    %v633 = vpack.c.b16 %v569, %v565
    %v634 = vpack.c.b16 %v570, %v566
    %699 = vmatprep.subr.bf16.mxu0 %v572
    %700 = vmatpush1.bf16.msra.mxu0 %v571
    %701 = vmatprep.subr.bf16.mxu0 %v576
    %702 = vmatpush1.bf16.msra.mxu0 %v575
    %703 = vmatprep.subr.bf16.mxu0 %v580
    %704 = vmatpush1.bf16.msra.mxu0 %v579
    %705 = vmatprep.subr.bf16.mxu0 %v584
    %706 = vmatpush1.bf16.msra.mxu0 %v583
    %707 = vmatprep.subr.bf16.mxu0 %v588
    %708 = vmatpush1.bf16.msra.mxu0 %v587
    %709 = vmatprep.subr.bf16.mxu0 %v592
    %710 = vmatpush1.bf16.msra.mxu0 %v591
    %711 = vmatprep.subr.bf16.mxu0 %v596
    %712 = vmatpush1.bf16.msra.mxu0 %v595
    %713 = vmatprep.subr.bf16.mxu0 %v600
    %714 = vmatpush1.bf16.msra.mxu0 %v599
    %715 = vmatprep.subr.bf16.mxu0 %v604
    %716 = vmatpush1.bf16.msra.mxu0 %v603
    %717 = vmatprep.subr.bf16.mxu0 %v608
    %718 = vmatpush1.bf16.msra.mxu0 %v607
    %719 = vmatprep.subr.bf16.mxu0 %v612
    %720 = vmatpush1.bf16.msra.mxu0 %v611
    %721 = vmatprep.subr.bf16.mxu0 %v616
    %722 = vmatpush1.bf16.msra.mxu0 %v615
    %723 = vmatprep.subr.bf16.mxu0 %v620
    %724 = vmatpush1.bf16.msra.mxu0 %v619
    %725 = vmatprep.subr.bf16.mxu0 %v624
    %726 = vmatpush1.bf16.msra.mxu0 %v623
    %727 = vmatprep.subr.bf16.mxu0 %v628
    %728 = vmatpush1.bf16.msra.mxu0 %v627
    %729 = vmatprep.subr.bf16.mxu0 %v632
    %730 = vmatpush1.bf16.msra.mxu0 %v631
    %731 = vmatprep.mubr.bf16.mxu0 %v308
    %732 = vmatmul.mubr.bf16.gmra.mrb[0].mxu0 %v307
    %v733 = vpop.f32.mrb[0].mxu0
    %v734 = vadd.f32 0.0, %v733
    %v735 = vpop.f32.mrb[0].mxu0
    %v736 = vadd.f32 0.0, %v735
    %v737 = vpop.f32.mrb[0].mxu0
    %v738 = vadd.f32 0.0, %v737
    %v739 = vpop.f32.mrb[0].mxu0
    %v740 = vadd.f32 0.0, %v739
    %741 = vmatprep.mubr.bf16.mxu0 %v310
    %742 = vmatmul.mubr.bf16.gmra.mrb[0].mxu0 %v309
    %v743 = vpop.f32.mrb[0].mxu0
    %v744 = vadd.f32 0.0, %v743
    %v745 = vpop.f32.mrb[0].mxu0
    %v746 = vadd.f32 0.0, %v745
    %v747 = vpop.f32.mrb[0].mxu0
    %v748 = vadd.f32 0.0, %v747
    %v749 = vpop.f32.mrb[0].mxu0
    %v750 = vadd.f32 0.0, %v749
    %751 = vmatprep.mubr.bf16.mxu0 %v312
    %752 = vmatmul.mubr.bf16.gmra.mrb[0].mxu0 %v311
    %v753 = vpop.f32.mrb[0].mxu0
    %v754 = vadd.f32 0.0, %v753
    %v755 = vpop.f32.mrb[0].mxu0
    %v756 = vadd.f32 0.0, %v755
    %v757 = vpop.f32.mrb[0].mxu0
    %v758 = vadd.f32 0.0, %v757
    %v759 = vpop.f32.mrb[0].mxu0
    %v760 = vadd.f32 0.0, %v759
    %761 = vmatprep.mubr.bf16.mxu0 %v314
    %762 = vmatmul.mubr.bf16.gmra.mrb[0].mxu0 %v313
    %v763 = vpop.f32.mrb[0].mxu0
    %v764 = vadd.f32 0.0, %v763
    %v765 = vpop.f32.mrb[0].mxu0
    %v766 = vadd.f32 0.0, %v765
    %v767 = vpop.f32.mrb[0].mxu0
    %v768 = vadd.f32 0.0, %v767
    %v769 = vpop.f32.mrb[0].mxu0
    %v770 = vadd.f32 0.0, %v769
    %771 = vdwg.mxu0
    %772 = vmatprep.subr.bf16.mxu0 %v574
    %773 = vmatpush1.bf16.msra.mxu0 %v573
    %774 = vmatprep.subr.bf16.mxu0 %v578
    %775 = vmatpush1.bf16.msra.mxu0 %v577
    %776 = vmatprep.subr.bf16.mxu0 %v582
    %777 = vmatpush1.bf16.msra.mxu0 %v581
    %778 = vmatprep.subr.bf16.mxu0 %v586
    %779 = vmatpush1.bf16.msra.mxu0 %v585
    %780 = vmatprep.subr.bf16.mxu0 %v590
    %781 = vmatpush1.bf16.msra.mxu0 %v589
    %782 = vmatprep.subr.bf16.mxu0 %v594
    %783 = vmatpush1.bf16.msra.mxu0 %v593
    %784 = vmatprep.subr.bf16.mxu0 %v598
    %785 = vmatpush1.bf16.msra.mxu0 %v597
    %786 = vmatprep.subr.bf16.mxu0 %v602
    %787 = vmatpush1.bf16.msra.mxu0 %v601
    %788 = vmatprep.subr.bf16.mxu0 %v606
    %789 = vmatpush1.bf16.msra.mxu0 %v605
    %790 = vmatprep.subr.bf16.mxu0 %v610
    %791 = vmatpush1.bf16.msra.mxu0 %v609
    %792 = vmatprep.subr.bf16.mxu0 %v614
    %793 = vmatpush1.bf16.msra.mxu0 %v613
    %794 = vmatprep.subr.bf16.mxu0 %v618
    %795 = vmatpush1.bf16.msra.mxu0 %v617
    %796 = vmatprep.subr.bf16.mxu0 %v622
    %797 = vmatpush1.bf16.msra.mxu0 %v621
    %798 = vmatprep.subr.bf16.mxu0 %v626
    %799 = vmatpush1.bf16.msra.mxu0 %v625
    %800 = vmatprep.subr.bf16.mxu0 %v630
    %801 = vmatpush1.bf16.msra.mxu0 %v629
    %802 = vmatprep.subr.bf16.mxu0 %v634
    %803 = vmatpush1.bf16.msra.mxu0 %v633
    %804 = vmatprep.mubr.bf16.mxu0 %v308
    %805 = vmatmul.mubr.bf16.gmra.mrb[0].mxu0 %v307
    %v806 = vpop.f32.mrb[0].mxu0
    %v807 = vadd.f32 0.0, %v806
    %v808 = vpop.f32.mrb[0].mxu0
    %v809 = vadd.f32 0.0, %v808
    %v810 = vpop.f32.mrb[0].mxu0
    %v811 = vadd.f32 0.0, %v810
    %v812 = vpop.f32.mrb[0].mxu0
    %v813 = vadd.f32 0.0, %v812
    %814 = vmatprep.mubr.bf16.mxu0 %v310
    %815 = vmatmul.mubr.bf16.gmra.mrb[0].mxu0 %v309
    %v816 = vpop.f32.mrb[0].mxu0
    %v817 = vadd.f32 0.0, %v816
    %v818 = vpop.f32.mrb[0].mxu0
    %v819 = vadd.f32 0.0, %v818
    %v820 = vpop.f32.mrb[0].mxu0
    %v821 = vadd.f32 0.0, %v820
    %v822 = vpop.f32.mrb[0].mxu0
    %v823 = vadd.f32 0.0, %v822
    %824 = vmatprep.mubr.bf16.mxu0 %v312
    %825 = vmatmul.mubr.bf16.gmra.mrb[0].mxu0 %v311
    %v826 = vpop.f32.mrb[0].mxu0
    %v827 = vadd.f32 0.0, %v826
    %v828 = vpop.f32.mrb[0].mxu0
    %v829 = vadd.f32 0.0, %v828
    %v830 = vpop.f32.mrb[0].mxu0
    %v831 = vadd.f32 0.0, %v830
    %v832 = vpop.f32.mrb[0].mxu0
    %v833 = vadd.f32 0.0, %v832
    %834 = vmatprep.mubr.bf16.mxu0 %v314
    %835 = vmatmul.mubr.bf16.gmra.mrb[0].mxu0 %v313
    %v836 = vpop.f32.mrb[0].mxu0
    %v837 = vadd.f32 0.0, %v836
    %v838 = vpop.f32.mrb[0].mxu0
    %v839 = vadd.f32 0.0, %v838
    %v840 = vpop.f32.mrb[0].mxu0
    %v841 = vadd.f32 0.0, %v840
    %v842 = vpop.f32.mrb[0].mxu0
    %v843 = vadd.f32 0.0, %v842
    %844 = vdwg.mxu0
    %v845 = vmax.f32 %v734, 0.0
    %v846 = vmax.f32 %v736, 0.0
    %v847 = vmax.f32 %v807, 0.0
    %v848 = vmax.f32 %v809, 0.0
    %v849 = vmax.f32 %v738, 0.0
    %v850 = vmax.f32 %v740, 0.0
    %v851 = vmax.f32 %v811, 0.0
    %v852 = vmax.f32 %v813, 0.0
    %v853 = vmax.f32 %v744, 0.0
    %v854 = vmax.f32 %v746, 0.0
    %v855 = vmax.f32 %v817, 0.0
    %v856 = vmax.f32 %v819, 0.0
    %v857 = vmax.f32 %v748, 0.0
    %v858 = vmax.f32 %v750, 0.0
    %v859 = vmax.f32 %v821, 0.0
    %v860 = vmax.f32 %v823, 0.0
    %v861 = vmax.f32 %v754, 0.0
    %v862 = vmax.f32 %v756, 0.0
    %v863 = vmax.f32 %v827, 0.0
    %v864 = vmax.f32 %v829, 0.0
    %v865 = vmax.f32 %v758, 0.0
    %v866 = vmax.f32 %v760, 0.0
    %v867 = vmax.f32 %v831, 0.0
    %v868 = vmax.f32 %v833, 0.0
    %v869 = vmax.f32 %v764, 0.0
    %v870 = vmax.f32 %v766, 0.0
    %v871 = vmax.f32 %v837, 0.0
    %v872 = vmax.f32 %v839, 0.0
    %v873 = vmax.f32 %v768, 0.0
    %v874 = vmax.f32 %v770, 0.0
    %v875 = vmax.f32 %v841, 0.0
    %v876 = vmax.f32 %v843, 0.0
    %v877 = vpack.c.bf16 %v849, %v845
    %v878 = vpack.c.bf16 %v850, %v846
    %v879 = vpack.c.bf16 %v851, %v847
    %v880 = vpack.c.bf16 %v852, %v848
    %v881 = vpack.c.bf16 %v857, %v853
    %v882 = vpack.c.bf16 %v858, %v854
    %v883 = vpack.c.bf16 %v859, %v855
    %v884 = vpack.c.bf16 %v860, %v856
    %v885 = vpack.c.bf16 %v865, %v861
    %v886 = vpack.c.bf16 %v866, %v862
    %v887 = vpack.c.bf16 %v867, %v863
    %v888 = vpack.c.bf16 %v868, %v864
    %v889 = vpack.c.bf16 %v873, %v869
    %v890 = vpack.c.bf16 %v874, %v870
    %v891 = vpack.c.bf16 %v875, %v871
    %v892 = vpack.c.bf16 %v876, %v872
    %v893 = vld [vmem:[#allocation8] sm:$0xff]
    %v894 = vld [vmem:[#allocation8 + $0x8] sm:$0xff]
    %v895 = vld [vmem:[#allocation8 + $0x10] sm:$0xff]
    %v896 = vld [vmem:[#allocation8 + $0x18] sm:$0xff]
    %v897 = vld [vmem:[#allocation8 + $0x20] sm:$0xff]
    %v898 = vld [vmem:[#allocation8 + $0x28] sm:$0xff]
    %v899 = vld [vmem:[#allocation8 + $0x30] sm:$0xff]
    %v900 = vld [vmem:[#allocation8 + $0x38] sm:$0xff]
    %v901 = vld [vmem:[#allocation8 + $0x40] sm:$0xff]
    %v902 = vld [vmem:[#allocation8 + $0x48] sm:$0xff]
    %v903 = vld [vmem:[#allocation8 + $0x50] sm:$0xff]
    %v904 = vld [vmem:[#allocation8 + $0x58] sm:$0xff]
    %v905 = vld [vmem:[#allocation8 + $0x60] sm:$0xff]
    %v906 = vld [vmem:[#allocation8 + $0x68] sm:$0xff]
    %v907 = vld [vmem:[#allocation8 + $0x70] sm:$0xff]
    %v908 = vld [vmem:[#allocation8 + $0x78] sm:$0xff]
    %v909 = vld [vmem:[#allocation8 + $0x80] sm:$0xff]
    %v910 = vld [vmem:[#allocation8 + $0x88] sm:$0xff]
    %v911 = vld [vmem:[#allocation8 + $0x90] sm:$0xff]
    %v912 = vld [vmem:[#allocation8 + $0x98] sm:$0xff]
    %v913 = vld [vmem:[#allocation8 + $0xa0] sm:$0xff]
    %v914 = vld [vmem:[#allocation8 + $0xa8] sm:$0xff]
    %v915 = vld [vmem:[#allocation8 + $0xb0] sm:$0xff]
    %v916 = vld [vmem:[#allocation8 + $0xb8] sm:$0xff]
    %v917 = vld [vmem:[#allocation8 + $0xc0] sm:$0xff]
    %v918 = vld [vmem:[#allocation8 + $0xc8] sm:$0xff]
    %v919 = vld [vmem:[#allocation8 + $0xd0] sm:$0xff]
    %v920 = vld [vmem:[#allocation8 + $0xd8] sm:$0xff]
    %v921 = vld [vmem:[#allocation8 + $0xe0] sm:$0xff]
    %v922 = vld [vmem:[#allocation8 + $0xe8] sm:$0xff]
    %v923 = vld [vmem:[#allocation8 + $0xf0] sm:$0xff]
    %v924 = vld [vmem:[#allocation8 + $0xf8] sm:$0xff]
    %v925 = vld [vmem:[#allocation8 + $0x100] sm:$0xff]
    %v926 = vld [vmem:[#allocation8 + $0x108] sm:$0xff]
    %v927 = vld [vmem:[#allocation8 + $0x110] sm:$0xff]
    %v928 = vld [vmem:[#allocation8 + $0x118] sm:$0xff]
    %v929 = vld [vmem:[#allocation8 + $0x120] sm:$0xff]
    %v930 = vld [vmem:[#allocation8 + $0x128] sm:$0xff]
    %v931 = vld [vmem:[#allocation8 + $0x130] sm:$0xff]
    %v932 = vld [vmem:[#allocation8 + $0x138] sm:$0xff]
    %v933 = vld [vmem:[#allocation8 + $0x140] sm:$0xff]
    %v934 = vld [vmem:[#allocation8 + $0x148] sm:$0xff]
    %v935 = vld [vmem:[#allocation8 + $0x150] sm:$0xff]
    %v936 = vld [vmem:[#allocation8 + $0x158] sm:$0xff]
    %v937 = vld [vmem:[#allocation8 + $0x160] sm:$0xff]
    %v938 = vld [vmem:[#allocation8 + $0x168] sm:$0xff]
    %v939 = vld [vmem:[#allocation8 + $0x170] sm:$0xff]
    %v940 = vld [vmem:[#allocation8 + $0x178] sm:$0xff]
    %v941 = vld [vmem:[#allocation8 + $0x180] sm:$0xff]
    %v942 = vld [vmem:[#allocation8 + $0x188] sm:$0xff]
    %v943 = vld [vmem:[#allocation8 + $0x190] sm:$0xff]
    %v944 = vld [vmem:[#allocation8 + $0x198] sm:$0xff]
    %v945 = vld [vmem:[#allocation8 + $0x1a0] sm:$0xff]
    %v946 = vld [vmem:[#allocation8 + $0x1a8] sm:$0xff]
    %v947 = vld [vmem:[#allocation8 + $0x1b0] sm:$0xff]
    %v948 = vld [vmem:[#allocation8 + $0x1b8] sm:$0xff]
    %v949 = vld [vmem:[#allocation8 + $0x1c0] sm:$0xff]
    %v950 = vld [vmem:[#allocation8 + $0x1c8] sm:$0xff]
    %v951 = vld [vmem:[#allocation8 + $0x1d0] sm:$0xff]
    %v952 = vld [vmem:[#allocation8 + $0x1d8] sm:$0xff]
    %v953 = vld [vmem:[#allocation8 + $0x1e0] sm:$0xff]
    %v954 = vld [vmem:[#allocation8 + $0x1e8] sm:$0xff]
    %v955 = vld [vmem:[#allocation8 + $0x1f0] sm:$0xff]
    %v956 = vld [vmem:[#allocation8 + $0x1f8] sm:$0xff]
    %v957 = vld [vmem:[#allocation8 + $0x200] sm:$0xff]
    %v958 = vld [vmem:[#allocation8 + $0x208] sm:$0xff]
    %v959 = vld [vmem:[#allocation8 + $0x210] sm:$0xff]
    %v960 = vld [vmem:[#allocation8 + $0x218] sm:$0xff]
    %v961 = vld [vmem:[#allocation8 + $0x220] sm:$0xff]
    %v962 = vld [vmem:[#allocation8 + $0x228] sm:$0xff]
    %v963 = vld [vmem:[#allocation8 + $0x230] sm:$0xff]
    %v964 = vld [vmem:[#allocation8 + $0x238] sm:$0xff]
    %v965 = vld [vmem:[#allocation8 + $0x240] sm:$0xff]
    %v966 = vld [vmem:[#allocation8 + $0x248] sm:$0xff]
    %v967 = vld [vmem:[#allocation8 + $0x250] sm:$0xff]
    %v968 = vld [vmem:[#allocation8 + $0x258] sm:$0xff]
    %v969 = vld [vmem:[#allocation8 + $0x260] sm:$0xff]
    %v970 = vld [vmem:[#allocation8 + $0x268] sm:$0xff]
    %v971 = vld [vmem:[#allocation8 + $0x270] sm:$0xff]
    %v972 = vld [vmem:[#allocation8 + $0x278] sm:$0xff]
    %v973 = vld [vmem:[#allocation8 + $0x280] sm:$0xff]
    %v974 = vld [vmem:[#allocation8 + $0x288] sm:$0xff]
    %v975 = vld [vmem:[#allocation8 + $0x290] sm:$0xff]
    %v976 = vld [vmem:[#allocation8 + $0x298] sm:$0xff]
    %v977 = vld [vmem:[#allocation8 + $0x2a0] sm:$0xff]
    %v978 = vld [vmem:[#allocation8 + $0x2a8] sm:$0xff]
    %v979 = vld [vmem:[#allocation8 + $0x2b0] sm:$0xff]
    %v980 = vld [vmem:[#allocation8 + $0x2b8] sm:$0xff]
    %v981 = vld [vmem:[#allocation8 + $0x2c0] sm:$0xff]
    %v982 = vld [vmem:[#allocation8 + $0x2c8] sm:$0xff]
    %v983 = vld [vmem:[#allocation8 + $0x2d0] sm:$0xff]
    %v984 = vld [vmem:[#allocation8 + $0x2d8] sm:$0xff]
    %v985 = vld [vmem:[#allocation8 + $0x2e0] sm:$0xff]
    %v986 = vld [vmem:[#allocation8 + $0x2e8] sm:$0xff]
    %v987 = vld [vmem:[#allocation8 + $0x2f0] sm:$0xff]
    %v988 = vld [vmem:[#allocation8 + $0x2f8] sm:$0xff]
    %v989 = vld [vmem:[#allocation8 + $0x300] sm:$0xff]
    %v990 = vld [vmem:[#allocation8 + $0x308] sm:$0xff]
    %v991 = vld [vmem:[#allocation8 + $0x310] sm:$0xff]
    %v992 = vld [vmem:[#allocation8 + $0x318] sm:$0xff]
    %v993 = vld [vmem:[#allocation8 + $0x320] sm:$0xff]
    %v994 = vld [vmem:[#allocation8 + $0x328] sm:$0xff]
    %v995 = vld [vmem:[#allocation8 + $0x330] sm:$0xff]
    %v996 = vld [vmem:[#allocation8 + $0x338] sm:$0xff]
    %v997 = vld [vmem:[#allocation8 + $0x340] sm:$0xff]
    %v998 = vld [vmem:[#allocation8 + $0x348] sm:$0xff]
    %v999 = vld [vmem:[#allocation8 + $0x350] sm:$0xff]
    %v1000 = vld [vmem:[#allocation8 + $0x358] sm:$0xff]
    %v1001 = vld [vmem:[#allocation8 + $0x360] sm:$0xff]
    %v1002 = vld [vmem:[#allocation8 + $0x368] sm:$0xff]
    %v1003 = vld [vmem:[#allocation8 + $0x370] sm:$0xff]
    %v1004 = vld [vmem:[#allocation8 + $0x378] sm:$0xff]
    %v1005 = vld [vmem:[#allocation8 + $0x380] sm:$0xff]
    %v1006 = vld [vmem:[#allocation8 + $0x388] sm:$0xff]
    %v1007 = vld [vmem:[#allocation8 + $0x390] sm:$0xff]
    %v1008 = vld [vmem:[#allocation8 + $0x398] sm:$0xff]
    %v1009 = vld [vmem:[#allocation8 + $0x3a0] sm:$0xff]
    %v1010 = vld [vmem:[#allocation8 + $0x3a8] sm:$0xff]
    %v1011 = vld [vmem:[#allocation8 + $0x3b0] sm:$0xff]
    %v1012 = vld [vmem:[#allocation8 + $0x3b8] sm:$0xff]
    %v1013 = vld [vmem:[#allocation8 + $0x3c0] sm:$0xff]
    %v1014 = vld [vmem:[#allocation8 + $0x3c8] sm:$0xff]
    %v1015 = vld [vmem:[#allocation8 + $0x3d0] sm:$0xff]
    %v1016 = vld [vmem:[#allocation8 + $0x3d8] sm:$0xff]
    %v1017 = vld [vmem:[#allocation8 + $0x3e0] sm:$0xff]
    %v1018 = vld [vmem:[#allocation8 + $0x3e8] sm:$0xff]
    %v1019 = vld [vmem:[#allocation8 + $0x3f0] sm:$0xff]
    %v1020 = vld [vmem:[#allocation8 + $0x3f8] sm:$0xff]
    %v1021 = vld [vmem:[#allocation8 + $0x400] sm:$0xff]
    %v1022 = vld [vmem:[#allocation8 + $0x408] sm:$0xff]
    %v1023 = vld [vmem:[#allocation8 + $0x410] sm:$0xff]
    %v1024 = vld [vmem:[#allocation8 + $0x418] sm:$0xff]
    %v1025 = vld [vmem:[#allocation8 + $0x420] sm:$0xff]
    %v1026 = vld [vmem:[#allocation8 + $0x428] sm:$0xff]
    %v1027 = vld [vmem:[#allocation8 + $0x430] sm:$0xff]
    %v1028 = vld [vmem:[#allocation8 + $0x438] sm:$0xff]
    %v1029 = vld [vmem:[#allocation8 + $0x440] sm:$0xff]
    %v1030 = vld [vmem:[#allocation8 + $0x448] sm:$0xff]
    %v1031 = vld [vmem:[#allocation8 + $0x450] sm:$0xff]
    %v1032 = vld [vmem:[#allocation8 + $0x458] sm:$0xff]
    %v1033 = vld [vmem:[#allocation8 + $0x460] sm:$0xff]
    %v1034 = vld [vmem:[#allocation8 + $0x468] sm:$0xff]
    %v1035 = vld [vmem:[#allocation8 + $0x470] sm:$0xff]
    %v1036 = vld [vmem:[#allocation8 + $0x478] sm:$0xff]
    %v1037 = vld [vmem:[#allocation8 + $0x480] sm:$0xff]
    %v1038 = vld [vmem:[#allocation8 + $0x488] sm:$0xff]
    %v1039 = vld [vmem:[#allocation8 + $0x490] sm:$0xff]
    %v1040 = vld [vmem:[#allocation8 + $0x498] sm:$0xff]
    %v1041 = vld [vmem:[#allocation8 + $0x4a0] sm:$0xff]
    %v1042 = vld [vmem:[#allocation8 + $0x4a8] sm:$0xff]
    %v1043 = vld [vmem:[#allocation8 + $0x4b0] sm:$0xff]
    %v1044 = vld [vmem:[#allocation8 + $0x4b8] sm:$0xff]
    %v1045 = vld [vmem:[#allocation8 + $0x4c0] sm:$0xff]
    %v1046 = vld [vmem:[#allocation8 + $0x4c8] sm:$0xff]
    %v1047 = vld [vmem:[#allocation8 + $0x4d0] sm:$0xff]
    %v1048 = vld [vmem:[#allocation8 + $0x4d8] sm:$0xff]
    %v1049 = vld [vmem:[#allocation8 + $0x4e0] sm:$0xff]
    %v1050 = vld [vmem:[#allocation8 + $0x4e8] sm:$0xff]
    %v1051 = vld [vmem:[#allocation8 + $0x4f0] sm:$0xff]
    %v1052 = vld [vmem:[#allocation8 + $0x4f8] sm:$0xff]
    %v1053 = vld [vmem:[#allocation8 + $0x500] sm:$0xff]
    %v1054 = vld [vmem:[#allocation8 + $0x508] sm:$0xff]
    %v1055 = vld [vmem:[#allocation8 + $0x510] sm:$0xff]
    %v1056 = vld [vmem:[#allocation8 + $0x518] sm:$0xff]
    %v1057 = vld [vmem:[#allocation8 + $0x520] sm:$0xff]
    %v1058 = vld [vmem:[#allocation8 + $0x528] sm:$0xff]
    %v1059 = vld [vmem:[#allocation8 + $0x530] sm:$0xff]
    %v1060 = vld [vmem:[#allocation8 + $0x538] sm:$0xff]
    %v1061 = vld [vmem:[#allocation8 + $0x540] sm:$0xff]
    %v1062 = vld [vmem:[#allocation8 + $0x548] sm:$0xff]
    %v1063 = vld [vmem:[#allocation8 + $0x550] sm:$0xff]
    %v1064 = vld [vmem:[#allocation8 + $0x558] sm:$0xff]
    %v1065 = vld [vmem:[#allocation8 + $0x560] sm:$0xff]
    %v1066 = vld [vmem:[#allocation8 + $0x568] sm:$0xff]
    %v1067 = vld [vmem:[#allocation8 + $0x570] sm:$0xff]
    %v1068 = vld [vmem:[#allocation8 + $0x578] sm:$0xff]
    %v1069 = vld [vmem:[#allocation8 + $0x580] sm:$0xff]
    %v1070 = vld [vmem:[#allocation8 + $0x588] sm:$0xff]
    %v1071 = vld [vmem:[#allocation8 + $0x590] sm:$0xff]
    %v1072 = vld [vmem:[#allocation8 + $0x598] sm:$0xff]
    %v1073 = vld [vmem:[#allocation8 + $0x5a0] sm:$0xff]
    %v1074 = vld [vmem:[#allocation8 + $0x5a8] sm:$0xff]
    %v1075 = vld [vmem:[#allocation8 + $0x5b0] sm:$0xff]
    %v1076 = vld [vmem:[#allocation8 + $0x5b8] sm:$0xff]
    %v1077 = vld [vmem:[#allocation8 + $0x5c0] sm:$0xff]
    %v1078 = vld [vmem:[#allocation8 + $0x5c8] sm:$0xff]
    %v1079 = vld [vmem:[#allocation8 + $0x5d0] sm:$0xff]
    %v1080 = vld [vmem:[#allocation8 + $0x5d8] sm:$0xff]
    %v1081 = vld [vmem:[#allocation8 + $0x5e0] sm:$0xff]
    %v1082 = vld [vmem:[#allocation8 + $0x5e8] sm:$0xff]
    %v1083 = vld [vmem:[#allocation8 + $0x5f0] sm:$0xff]
    %v1084 = vld [vmem:[#allocation8 + $0x5f8] sm:$0xff]
    %v1085 = vld [vmem:[#allocation8 + $0x600] sm:$0xff]
    %v1086 = vld [vmem:[#allocation8 + $0x608] sm:$0xff]
    %v1087 = vld [vmem:[#allocation8 + $0x610] sm:$0xff]
    %v1088 = vld [vmem:[#allocation8 + $0x618] sm:$0xff]
    %v1089 = vld [vmem:[#allocation8 + $0x620] sm:$0xff]
    %v1090 = vld [vmem:[#allocation8 + $0x628] sm:$0xff]
    %v1091 = vld [vmem:[#allocation8 + $0x630] sm:$0xff]
    %v1092 = vld [vmem:[#allocation8 + $0x638] sm:$0xff]
    %v1093 = vld [vmem:[#allocation8 + $0x640] sm:$0xff]
    %v1094 = vld [vmem:[#allocation8 + $0x648] sm:$0xff]
    %v1095 = vld [vmem:[#allocation8 + $0x650] sm:$0xff]
    %v1096 = vld [vmem:[#allocation8 + $0x658] sm:$0xff]
    %v1097 = vld [vmem:[#allocation8 + $0x660] sm:$0xff]
    %v1098 = vld [vmem:[#allocation8 + $0x668] sm:$0xff]
    %v1099 = vld [vmem:[#allocation8 + $0x670] sm:$0xff]
    %v1100 = vld [vmem:[#allocation8 + $0x678] sm:$0xff]
    %v1101 = vld [vmem:[#allocation8 + $0x680] sm:$0xff]
    %v1102 = vld [vmem:[#allocation8 + $0x688] sm:$0xff]
    %v1103 = vld [vmem:[#allocation8 + $0x690] sm:$0xff]
    %v1104 = vld [vmem:[#allocation8 + $0x698] sm:$0xff]
    %v1105 = vld [vmem:[#allocation8 + $0x6a0] sm:$0xff]
    %v1106 = vld [vmem:[#allocation8 + $0x6a8] sm:$0xff]
    %v1107 = vld [vmem:[#allocation8 + $0x6b0] sm:$0xff]
    %v1108 = vld [vmem:[#allocation8 + $0x6b8] sm:$0xff]
    %v1109 = vld [vmem:[#allocation8 + $0x6c0] sm:$0xff]
    %v1110 = vld [vmem:[#allocation8 + $0x6c8] sm:$0xff]
    %v1111 = vld [vmem:[#allocation8 + $0x6d0] sm:$0xff]
    %v1112 = vld [vmem:[#allocation8 + $0x6d8] sm:$0xff]
    %v1113 = vld [vmem:[#allocation8 + $0x6e0] sm:$0xff]
    %v1114 = vld [vmem:[#allocation8 + $0x6e8] sm:$0xff]
    %v1115 = vld [vmem:[#allocation8 + $0x6f0] sm:$0xff]
    %v1116 = vld [vmem:[#allocation8 + $0x6f8] sm:$0xff]
    %v1117 = vld [vmem:[#allocation8 + $0x700] sm:$0xff]
    %v1118 = vld [vmem:[#allocation8 + $0x708] sm:$0xff]
    %v1119 = vld [vmem:[#allocation8 + $0x710] sm:$0xff]
    %v1120 = vld [vmem:[#allocation8 + $0x718] sm:$0xff]
    %v1121 = vld [vmem:[#allocation8 + $0x720] sm:$0xff]
    %v1122 = vld [vmem:[#allocation8 + $0x728] sm:$0xff]
    %v1123 = vld [vmem:[#allocation8 + $0x730] sm:$0xff]
    %v1124 = vld [vmem:[#allocation8 + $0x738] sm:$0xff]
    %v1125 = vld [vmem:[#allocation8 + $0x740] sm:$0xff]
    %v1126 = vld [vmem:[#allocation8 + $0x748] sm:$0xff]
    %v1127 = vld [vmem:[#allocation8 + $0x750] sm:$0xff]
    %v1128 = vld [vmem:[#allocation8 + $0x758] sm:$0xff]
    %v1129 = vld [vmem:[#allocation8 + $0x760] sm:$0xff]
    %v1130 = vld [vmem:[#allocation8 + $0x768] sm:$0xff]
    %v1131 = vld [vmem:[#allocation8 + $0x770] sm:$0xff]
    %v1132 = vld [vmem:[#allocation8 + $0x778] sm:$0xff]
    %v1133 = vld [vmem:[#allocation8 + $0x780] sm:$0xff]
    %v1134 = vld [vmem:[#allocation8 + $0x788] sm:$0xff]
    %v1135 = vld [vmem:[#allocation8 + $0x790] sm:$0xff]
    %v1136 = vld [vmem:[#allocation8 + $0x798] sm:$0xff]
    %v1137 = vld [vmem:[#allocation8 + $0x7a0] sm:$0xff]
    %v1138 = vld [vmem:[#allocation8 + $0x7a8] sm:$0xff]
    %v1139 = vld [vmem:[#allocation8 + $0x7b0] sm:$0xff]
    %v1140 = vld [vmem:[#allocation8 + $0x7b8] sm:$0xff]
    %v1141 = vld [vmem:[#allocation8 + $0x7c0] sm:$0xff]
    %v1142 = vld [vmem:[#allocation8 + $0x7c8] sm:$0xff]
    %v1143 = vld [vmem:[#allocation8 + $0x7d0] sm:$0xff]
    %v1144 = vld [vmem:[#allocation8 + $0x7d8] sm:$0xff]
    %v1145 = vld [vmem:[#allocation8 + $0x7e0] sm:$0xff]
    %v1146 = vld [vmem:[#allocation8 + $0x7e8] sm:$0xff]
    %v1147 = vld [vmem:[#allocation8 + $0x7f0] sm:$0xff]
    %v1148 = vld [vmem:[#allocation8 + $0x7f8] sm:$0xff]
    %v1405 = vunpack.c.l.b16 %v893
    %v1406 = vunpack.c.h.b16 %v893
    %v1407 = vunpack.c.l.b16 %v894
    %v1408 = vunpack.c.h.b16 %v894
    %v1409 = vunpack.c.l.b16 %v895
    %v1410 = vunpack.c.h.b16 %v895
    %v1411 = vunpack.c.l.b16 %v896
    %v1412 = vunpack.c.h.b16 %v896
    %v1413 = vunpack.c.l.b16 %v897
    %v1414 = vunpack.c.h.b16 %v897
    %v1415 = vunpack.c.l.b16 %v898
    %v1416 = vunpack.c.h.b16 %v898
    %v1417 = vunpack.c.l.b16 %v899
    %v1418 = vunpack.c.h.b16 %v899
    %v1419 = vunpack.c.l.b16 %v900
    %v1420 = vunpack.c.h.b16 %v900
    %v1421 = vunpack.c.l.b16 %v901
    %v1422 = vunpack.c.h.b16 %v901
    %v1423 = vunpack.c.l.b16 %v902
    %v1424 = vunpack.c.h.b16 %v902
    %v1425 = vunpack.c.l.b16 %v903
    %v1426 = vunpack.c.h.b16 %v903
    %v1427 = vunpack.c.l.b16 %v904
    %v1428 = vunpack.c.h.b16 %v904
    %v1429 = vunpack.c.l.b16 %v905
    %v1430 = vunpack.c.h.b16 %v905
    %v1431 = vunpack.c.l.b16 %v906
    %v1432 = vunpack.c.h.b16 %v906
    %v1433 = vunpack.c.l.b16 %v907
    %v1434 = vunpack.c.h.b16 %v907
    %v1435 = vunpack.c.l.b16 %v908
    %v1436 = vunpack.c.h.b16 %v908
    %v1437 = vunpack.c.l.b16 %v909
    %v1438 = vunpack.c.h.b16 %v909
    %v1439 = vunpack.c.l.b16 %v910
    %v1440 = vunpack.c.h.b16 %v910
    %v1441 = vunpack.c.l.b16 %v911
    %v1442 = vunpack.c.h.b16 %v911
    %v1443 = vunpack.c.l.b16 %v912
    %v1444 = vunpack.c.h.b16 %v912
    %v1445 = vunpack.c.l.b16 %v913
    %v1446 = vunpack.c.h.b16 %v913
    %v1447 = vunpack.c.l.b16 %v914
    %v1448 = vunpack.c.h.b16 %v914
    %v1449 = vunpack.c.l.b16 %v915
    %v1450 = vunpack.c.h.b16 %v915
    %v1451 = vunpack.c.l.b16 %v916
    %v1452 = vunpack.c.h.b16 %v916
    %v1453 = vunpack.c.l.b16 %v917
    %v1454 = vunpack.c.h.b16 %v917
    %v1455 = vunpack.c.l.b16 %v918
    %v1456 = vunpack.c.h.b16 %v918
    %v1457 = vunpack.c.l.b16 %v919
    %v1458 = vunpack.c.h.b16 %v919
    %v1459 = vunpack.c.l.b16 %v920
    %v1460 = vunpack.c.h.b16 %v920
    %v1461 = vunpack.c.l.b16 %v921
    %v1462 = vunpack.c.h.b16 %v921
    %v1463 = vunpack.c.l.b16 %v922
    %v1464 = vunpack.c.h.b16 %v922
    %v1465 = vunpack.c.l.b16 %v923
    %v1466 = vunpack.c.h.b16 %v923
    %v1467 = vunpack.c.l.b16 %v924
    %v1468 = vunpack.c.h.b16 %v924
    %v1469 = vunpack.c.l.b16 %v925
    %v1470 = vunpack.c.h.b16 %v925
    %v1471 = vunpack.c.l.b16 %v926
    %v1472 = vunpack.c.h.b16 %v926
    %v1473 = vunpack.c.l.b16 %v927
    %v1474 = vunpack.c.h.b16 %v927
    %v1475 = vunpack.c.l.b16 %v928
    %v1476 = vunpack.c.h.b16 %v928
    %v1477 = vunpack.c.l.b16 %v929
    %v1478 = vunpack.c.h.b16 %v929
    %v1479 = vunpack.c.l.b16 %v930
    %v1480 = vunpack.c.h.b16 %v930
    %v1481 = vunpack.c.l.b16 %v931
    %v1482 = vunpack.c.h.b16 %v931
    %v1483 = vunpack.c.l.b16 %v932
    %v1484 = vunpack.c.h.b16 %v932
    %v1485 = vunpack.c.l.b16 %v933
    %v1486 = vunpack.c.h.b16 %v933
    %v1487 = vunpack.c.l.b16 %v934
    %v1488 = vunpack.c.h.b16 %v934
    %v1489 = vunpack.c.l.b16 %v935
    %v1490 = vunpack.c.h.b16 %v935
    %v1491 = vunpack.c.l.b16 %v936
    %v1492 = vunpack.c.h.b16 %v936
    %v1493 = vunpack.c.l.b16 %v937
    %v1494 = vunpack.c.h.b16 %v937
    %v1495 = vunpack.c.l.b16 %v938
    %v1496 = vunpack.c.h.b16 %v938
    %v1497 = vunpack.c.l.b16 %v939
    %v1498 = vunpack.c.h.b16 %v939
    %v1499 = vunpack.c.l.b16 %v940
    %v1500 = vunpack.c.h.b16 %v940
    %v1501 = vunpack.c.l.b16 %v941
    %v1502 = vunpack.c.h.b16 %v941
    %v1503 = vunpack.c.l.b16 %v942
    %v1504 = vunpack.c.h.b16 %v942
    %v1505 = vunpack.c.l.b16 %v943
    %v1506 = vunpack.c.h.b16 %v943
    %v1507 = vunpack.c.l.b16 %v944
    %v1508 = vunpack.c.h.b16 %v944
    %v1509 = vunpack.c.l.b16 %v945
    %v1510 = vunpack.c.h.b16 %v945
    %v1511 = vunpack.c.l.b16 %v946
    %v1512 = vunpack.c.h.b16 %v946
    %v1513 = vunpack.c.l.b16 %v947
    %v1514 = vunpack.c.h.b16 %v947
    %v1515 = vunpack.c.l.b16 %v948
    %v1516 = vunpack.c.h.b16 %v948
    %v1517 = vunpack.c.l.b16 %v949
    %v1518 = vunpack.c.h.b16 %v949
    %v1519 = vunpack.c.l.b16 %v950
    %v1520 = vunpack.c.h.b16 %v950
    %v1521 = vunpack.c.l.b16 %v951
    %v1522 = vunpack.c.h.b16 %v951
    %v1523 = vunpack.c.l.b16 %v952
    %v1524 = vunpack.c.h.b16 %v952
    %v1525 = vunpack.c.l.b16 %v953
    %v1526 = vunpack.c.h.b16 %v953
    %v1527 = vunpack.c.l.b16 %v954
    %v1528 = vunpack.c.h.b16 %v954
    %v1529 = vunpack.c.l.b16 %v955
    %v1530 = vunpack.c.h.b16 %v955
    %v1531 = vunpack.c.l.b16 %v956
    %v1532 = vunpack.c.h.b16 %v956
    %v1533 = vunpack.c.l.b16 %v957
    %v1534 = vunpack.c.h.b16 %v957
    %v1535 = vunpack.c.l.b16 %v958
    %v1536 = vunpack.c.h.b16 %v958
    %v1537 = vunpack.c.l.b16 %v959
    %v1538 = vunpack.c.h.b16 %v959
    %v1539 = vunpack.c.l.b16 %v960
    %v1540 = vunpack.c.h.b16 %v960
    %v1541 = vunpack.c.l.b16 %v961
    %v1542 = vunpack.c.h.b16 %v961
    %v1543 = vunpack.c.l.b16 %v962
    %v1544 = vunpack.c.h.b16 %v962
    %v1545 = vunpack.c.l.b16 %v963
    %v1546 = vunpack.c.h.b16 %v963
    %v1547 = vunpack.c.l.b16 %v964
    %v1548 = vunpack.c.h.b16 %v964
    %v1549 = vunpack.c.l.b16 %v965
    %v1550 = vunpack.c.h.b16 %v965
    %v1551 = vunpack.c.l.b16 %v966
    %v1552 = vunpack.c.h.b16 %v966
    %v1553 = vunpack.c.l.b16 %v967
    %v1554 = vunpack.c.h.b16 %v967
    %v1555 = vunpack.c.l.b16 %v968
    %v1556 = vunpack.c.h.b16 %v968
    %v1557 = vunpack.c.l.b16 %v969
    %v1558 = vunpack.c.h.b16 %v969
    %v1559 = vunpack.c.l.b16 %v970
    %v1560 = vunpack.c.h.b16 %v970
    %v1561 = vunpack.c.l.b16 %v971
    %v1562 = vunpack.c.h.b16 %v971
    %v1563 = vunpack.c.l.b16 %v972
    %v1564 = vunpack.c.h.b16 %v972
    %v1565 = vunpack.c.l.b16 %v973
    %v1566 = vunpack.c.h.b16 %v973
    %v1567 = vunpack.c.l.b16 %v974
    %v1568 = vunpack.c.h.b16 %v974
    %v1569 = vunpack.c.l.b16 %v975
    %v1570 = vunpack.c.h.b16 %v975
    %v1571 = vunpack.c.l.b16 %v976
    %v1572 = vunpack.c.h.b16 %v976
    %v1573 = vunpack.c.l.b16 %v977
    %v1574 = vunpack.c.h.b16 %v977
    %v1575 = vunpack.c.l.b16 %v978
    %v1576 = vunpack.c.h.b16 %v978
    %v1577 = vunpack.c.l.b16 %v979
    %v1578 = vunpack.c.h.b16 %v979
    %v1579 = vunpack.c.l.b16 %v980
    %v1580 = vunpack.c.h.b16 %v980
    %v1581 = vunpack.c.l.b16 %v981
    %v1582 = vunpack.c.h.b16 %v981
    %v1583 = vunpack.c.l.b16 %v982
    %v1584 = vunpack.c.h.b16 %v982
    %v1585 = vunpack.c.l.b16 %v983
    %v1586 = vunpack.c.h.b16 %v983
    %v1587 = vunpack.c.l.b16 %v984
    %v1588 = vunpack.c.h.b16 %v984
    %v1589 = vunpack.c.l.b16 %v985
    %v1590 = vunpack.c.h.b16 %v985
    %v1591 = vunpack.c.l.b16 %v986
    %v1592 = vunpack.c.h.b16 %v986
    %v1593 = vunpack.c.l.b16 %v987
    %v1594 = vunpack.c.h.b16 %v987
    %v1595 = vunpack.c.l.b16 %v988
    %v1596 = vunpack.c.h.b16 %v988
    %v1597 = vunpack.c.l.b16 %v989
    %v1598 = vunpack.c.h.b16 %v989
    %v1599 = vunpack.c.l.b16 %v990
    %v1600 = vunpack.c.h.b16 %v990
    %v1601 = vunpack.c.l.b16 %v991
    %v1602 = vunpack.c.h.b16 %v991
    %v1603 = vunpack.c.l.b16 %v992
    %v1604 = vunpack.c.h.b16 %v992
    %v1605 = vunpack.c.l.b16 %v993
    %v1606 = vunpack.c.h.b16 %v993
    %v1607 = vunpack.c.l.b16 %v994
    %v1608 = vunpack.c.h.b16 %v994
    %v1609 = vunpack.c.l.b16 %v995
    %v1610 = vunpack.c.h.b16 %v995
    %v1611 = vunpack.c.l.b16 %v996
    %v1612 = vunpack.c.h.b16 %v996
    %v1613 = vunpack.c.l.b16 %v997
    %v1614 = vunpack.c.h.b16 %v997
    %v1615 = vunpack.c.l.b16 %v998
    %v1616 = vunpack.c.h.b16 %v998
    %v1617 = vunpack.c.l.b16 %v999
    %v1618 = vunpack.c.h.b16 %v999
    %v1619 = vunpack.c.l.b16 %v1000
    %v1620 = vunpack.c.h.b16 %v1000
    %v1621 = vunpack.c.l.b16 %v1001
    %v1622 = vunpack.c.h.b16 %v1001
    %v1623 = vunpack.c.l.b16 %v1002
    %v1624 = vunpack.c.h.b16 %v1002
    %v1625 = vunpack.c.l.b16 %v1003
    %v1626 = vunpack.c.h.b16 %v1003
    %v1627 = vunpack.c.l.b16 %v1004
    %v1628 = vunpack.c.h.b16 %v1004
    %v1629 = vunpack.c.l.b16 %v1005
    %v1630 = vunpack.c.h.b16 %v1005
    %v1631 = vunpack.c.l.b16 %v1006
    %v1632 = vunpack.c.h.b16 %v1006
    %v1633 = vunpack.c.l.b16 %v1007
    %v1634 = vunpack.c.h.b16 %v1007
    %v1635 = vunpack.c.l.b16 %v1008
    %v1636 = vunpack.c.h.b16 %v1008
    %v1637 = vunpack.c.l.b16 %v1009
    %v1638 = vunpack.c.h.b16 %v1009
    %v1639 = vunpack.c.l.b16 %v1010
    %v1640 = vunpack.c.h.b16 %v1010
    %v1641 = vunpack.c.l.b16 %v1011
    %v1642 = vunpack.c.h.b16 %v1011
    %v1643 = vunpack.c.l.b16 %v1012
    %v1644 = vunpack.c.h.b16 %v1012
    %v1645 = vunpack.c.l.b16 %v1013
    %v1646 = vunpack.c.h.b16 %v1013
    %v1647 = vunpack.c.l.b16 %v1014
    %v1648 = vunpack.c.h.b16 %v1014
    %v1649 = vunpack.c.l.b16 %v1015
    %v1650 = vunpack.c.h.b16 %v1015
    %v1651 = vunpack.c.l.b16 %v1016
    %v1652 = vunpack.c.h.b16 %v1016
    %v1653 = vunpack.c.l.b16 %v1017
    %v1654 = vunpack.c.h.b16 %v1017
    %v1655 = vunpack.c.l.b16 %v1018
    %v1656 = vunpack.c.h.b16 %v1018
    %v1657 = vunpack.c.l.b16 %v1019
    %v1658 = vunpack.c.h.b16 %v1019
    %v1659 = vunpack.c.l.b16 %v1020
    %v1660 = vunpack.c.h.b16 %v1020
    %v1661 = vunpack.c.l.b16 %v1021
    %v1662 = vunpack.c.h.b16 %v1021
    %v1663 = vunpack.c.l.b16 %v1022
    %v1664 = vunpack.c.h.b16 %v1022
    %v1665 = vunpack.c.l.b16 %v1023
    %v1666 = vunpack.c.h.b16 %v1023
    %v1667 = vunpack.c.l.b16 %v1024
    %v1668 = vunpack.c.h.b16 %v1024
    %v1669 = vunpack.c.l.b16 %v1025
    %v1670 = vunpack.c.h.b16 %v1025
    %v1671 = vunpack.c.l.b16 %v1026
    %v1672 = vunpack.c.h.b16 %v1026
    %v1673 = vunpack.c.l.b16 %v1027
    %v1674 = vunpack.c.h.b16 %v1027
    %v1675 = vunpack.c.l.b16 %v1028
    %v1676 = vunpack.c.h.b16 %v1028
    %v1677 = vunpack.c.l.b16 %v1029
    %v1678 = vunpack.c.h.b16 %v1029
    %v1679 = vunpack.c.l.b16 %v1030
    %v1680 = vunpack.c.h.b16 %v1030
    %v1681 = vunpack.c.l.b16 %v1031
    %v1682 = vunpack.c.h.b16 %v1031
    %v1683 = vunpack.c.l.b16 %v1032
    %v1684 = vunpack.c.h.b16 %v1032
    %v1685 = vunpack.c.l.b16 %v1033
    %v1686 = vunpack.c.h.b16 %v1033
    %v1687 = vunpack.c.l.b16 %v1034
    %v1688 = vunpack.c.h.b16 %v1034
    %v1689 = vunpack.c.l.b16 %v1035
    %v1690 = vunpack.c.h.b16 %v1035
    %v1691 = vunpack.c.l.b16 %v1036
    %v1692 = vunpack.c.h.b16 %v1036
    %v1693 = vunpack.c.l.b16 %v1037
    %v1694 = vunpack.c.h.b16 %v1037
    %v1695 = vunpack.c.l.b16 %v1038
    %v1696 = vunpack.c.h.b16 %v1038
    %v1697 = vunpack.c.l.b16 %v1039
    %v1698 = vunpack.c.h.b16 %v1039
    %v1699 = vunpack.c.l.b16 %v1040
    %v1700 = vunpack.c.h.b16 %v1040
    %v1701 = vunpack.c.l.b16 %v1041
    %v1702 = vunpack.c.h.b16 %v1041
    %v1703 = vunpack.c.l.b16 %v1042
    %v1704 = vunpack.c.h.b16 %v1042
    %v1705 = vunpack.c.l.b16 %v1043
    %v1706 = vunpack.c.h.b16 %v1043
    %v1707 = vunpack.c.l.b16 %v1044
    %v1708 = vunpack.c.h.b16 %v1044
    %v1709 = vunpack.c.l.b16 %v1045
    %v1710 = vunpack.c.h.b16 %v1045
    %v1711 = vunpack.c.l.b16 %v1046
    %v1712 = vunpack.c.h.b16 %v1046
    %v1713 = vunpack.c.l.b16 %v1047
    %v1714 = vunpack.c.h.b16 %v1047
    %v1715 = vunpack.c.l.b16 %v1048
    %v1716 = vunpack.c.h.b16 %v1048
    %v1717 = vunpack.c.l.b16 %v1049
    %v1718 = vunpack.c.h.b16 %v1049
    %v1719 = vunpack.c.l.b16 %v1050
    %v1720 = vunpack.c.h.b16 %v1050
    %v1721 = vunpack.c.l.b16 %v1051
    %v1722 = vunpack.c.h.b16 %v1051
    %v1723 = vunpack.c.l.b16 %v1052
    %v1724 = vunpack.c.h.b16 %v1052
    %v1725 = vunpack.c.l.b16 %v1053
    %v1726 = vunpack.c.h.b16 %v1053
    %v1727 = vunpack.c.l.b16 %v1054
    %v1728 = vunpack.c.h.b16 %v1054
    %v1729 = vunpack.c.l.b16 %v1055
    %v1730 = vunpack.c.h.b16 %v1055
    %v1731 = vunpack.c.l.b16 %v1056
    %v1732 = vunpack.c.h.b16 %v1056
    %v1733 = vunpack.c.l.b16 %v1057
    %v1734 = vunpack.c.h.b16 %v1057
    %v1735 = vunpack.c.l.b16 %v1058
    %v1736 = vunpack.c.h.b16 %v1058
    %v1737 = vunpack.c.l.b16 %v1059
    %v1738 = vunpack.c.h.b16 %v1059
    %v1739 = vunpack.c.l.b16 %v1060
    %v1740 = vunpack.c.h.b16 %v1060
    %v1741 = vunpack.c.l.b16 %v1061
    %v1742 = vunpack.c.h.b16 %v1061
    %v1743 = vunpack.c.l.b16 %v1062
    %v1744 = vunpack.c.h.b16 %v1062
    %v1745 = vunpack.c.l.b16 %v1063
    %v1746 = vunpack.c.h.b16 %v1063
    %v1747 = vunpack.c.l.b16 %v1064
    %v1748 = vunpack.c.h.b16 %v1064
    %v1749 = vunpack.c.l.b16 %v1065
    %v1750 = vunpack.c.h.b16 %v1065
    %v1751 = vunpack.c.l.b16 %v1066
    %v1752 = vunpack.c.h.b16 %v1066
    %v1753 = vunpack.c.l.b16 %v1067
    %v1754 = vunpack.c.h.b16 %v1067
    %v1755 = vunpack.c.l.b16 %v1068
    %v1756 = vunpack.c.h.b16 %v1068
    %v1757 = vunpack.c.l.b16 %v1069
    %v1758 = vunpack.c.h.b16 %v1069
    %v1759 = vunpack.c.l.b16 %v1070
    %v1760 = vunpack.c.h.b16 %v1070
    %v1761 = vunpack.c.l.b16 %v1071
    %v1762 = vunpack.c.h.b16 %v1071
    %v1763 = vunpack.c.l.b16 %v1072
    %v1764 = vunpack.c.h.b16 %v1072
    %v1765 = vunpack.c.l.b16 %v1073
    %v1766 = vunpack.c.h.b16 %v1073
    %v1767 = vunpack.c.l.b16 %v1074
    %v1768 = vunpack.c.h.b16 %v1074
    %v1769 = vunpack.c.l.b16 %v1075
    %v1770 = vunpack.c.h.b16 %v1075
    %v1771 = vunpack.c.l.b16 %v1076
    %v1772 = vunpack.c.h.b16 %v1076
    %v1773 = vunpack.c.l.b16 %v1077
    %v1774 = vunpack.c.h.b16 %v1077
    %v1775 = vunpack.c.l.b16 %v1078
    %v1776 = vunpack.c.h.b16 %v1078
    %v1777 = vunpack.c.l.b16 %v1079
    %v1778 = vunpack.c.h.b16 %v1079
    %v1779 = vunpack.c.l.b16 %v1080
    %v1780 = vunpack.c.h.b16 %v1080
    %v1781 = vunpack.c.l.b16 %v1081
    %v1782 = vunpack.c.h.b16 %v1081
    %v1783 = vunpack.c.l.b16 %v1082
    %v1784 = vunpack.c.h.b16 %v1082
    %v1785 = vunpack.c.l.b16 %v1083
    %v1786 = vunpack.c.h.b16 %v1083
    %v1787 = vunpack.c.l.b16 %v1084
    %v1788 = vunpack.c.h.b16 %v1084
    %v1789 = vunpack.c.l.b16 %v1085
    %v1790 = vunpack.c.h.b16 %v1085
    %v1791 = vunpack.c.l.b16 %v1086
    %v1792 = vunpack.c.h.b16 %v1086
    %v1793 = vunpack.c.l.b16 %v1087
    %v1794 = vunpack.c.h.b16 %v1087
    %v1795 = vunpack.c.l.b16 %v1088
    %v1796 = vunpack.c.h.b16 %v1088
    %v1797 = vunpack.c.l.b16 %v1089
    %v1798 = vunpack.c.h.b16 %v1089
    %v1799 = vunpack.c.l.b16 %v1090
    %v1800 = vunpack.c.h.b16 %v1090
    %v1801 = vunpack.c.l.b16 %v1091
    %v1802 = vunpack.c.h.b16 %v1091
    %v1803 = vunpack.c.l.b16 %v1092
    %v1804 = vunpack.c.h.b16 %v1092
    %v1805 = vunpack.c.l.b16 %v1093
    %v1806 = vunpack.c.h.b16 %v1093
    %v1807 = vunpack.c.l.b16 %v1094
    %v1808 = vunpack.c.h.b16 %v1094
    %v1809 = vunpack.c.l.b16 %v1095
    %v1810 = vunpack.c.h.b16 %v1095
    %v1811 = vunpack.c.l.b16 %v1096
    %v1812 = vunpack.c.h.b16 %v1096
    %v1813 = vunpack.c.l.b16 %v1097
    %v1814 = vunpack.c.h.b16 %v1097
    %v1815 = vunpack.c.l.b16 %v1098
    %v1816 = vunpack.c.h.b16 %v1098
    %v1817 = vunpack.c.l.b16 %v1099
    %v1818 = vunpack.c.h.b16 %v1099
    %v1819 = vunpack.c.l.b16 %v1100
    %v1820 = vunpack.c.h.b16 %v1100
    %v1821 = vunpack.c.l.b16 %v1101
    %v1822 = vunpack.c.h.b16 %v1101
    %v1823 = vunpack.c.l.b16 %v1102
    %v1824 = vunpack.c.h.b16 %v1102
    %v1825 = vunpack.c.l.b16 %v1103
    %v1826 = vunpack.c.h.b16 %v1103
    %v1827 = vunpack.c.l.b16 %v1104
    %v1828 = vunpack.c.h.b16 %v1104
    %v1829 = vunpack.c.l.b16 %v1105
    %v1830 = vunpack.c.h.b16 %v1105
    %v1831 = vunpack.c.l.b16 %v1106
    %v1832 = vunpack.c.h.b16 %v1106
    %v1833 = vunpack.c.l.b16 %v1107
    %v1834 = vunpack.c.h.b16 %v1107
    %v1835 = vunpack.c.l.b16 %v1108
    %v1836 = vunpack.c.h.b16 %v1108
    %v1837 = vunpack.c.l.b16 %v1109
    %v1838 = vunpack.c.h.b16 %v1109
    %v1839 = vunpack.c.l.b16 %v1110
    %v1840 = vunpack.c.h.b16 %v1110
    %v1841 = vunpack.c.l.b16 %v1111
    %v1842 = vunpack.c.h.b16 %v1111
    %v1843 = vunpack.c.l.b16 %v1112
    %v1844 = vunpack.c.h.b16 %v1112
    %v1845 = vunpack.c.l.b16 %v1113
    %v1846 = vunpack.c.h.b16 %v1113
    %v1847 = vunpack.c.l.b16 %v1114
    %v1848 = vunpack.c.h.b16 %v1114
    %v1849 = vunpack.c.l.b16 %v1115
    %v1850 = vunpack.c.h.b16 %v1115
    %v1851 = vunpack.c.l.b16 %v1116
    %v1852 = vunpack.c.h.b16 %v1116
    %v1853 = vunpack.c.l.b16 %v1117
    %v1854 = vunpack.c.h.b16 %v1117
    %v1855 = vunpack.c.l.b16 %v1118
    %v1856 = vunpack.c.h.b16 %v1118
    %v1857 = vunpack.c.l.b16 %v1119
    %v1858 = vunpack.c.h.b16 %v1119
    %v1859 = vunpack.c.l.b16 %v1120
    %v1860 = vunpack.c.h.b16 %v1120
    %v1861 = vunpack.c.l.b16 %v1121
    %v1862 = vunpack.c.h.b16 %v1121
    %v1863 = vunpack.c.l.b16 %v1122
    %v1864 = vunpack.c.h.b16 %v1122
    %v1865 = vunpack.c.l.b16 %v1123
    %v1866 = vunpack.c.h.b16 %v1123
    %v1867 = vunpack.c.l.b16 %v1124
    %v1868 = vunpack.c.h.b16 %v1124
    %v1869 = vunpack.c.l.b16 %v1125
    %v1870 = vunpack.c.h.b16 %v1125
    %v1871 = vunpack.c.l.b16 %v1126
    %v1872 = vunpack.c.h.b16 %v1126
    %v1873 = vunpack.c.l.b16 %v1127
    %v1874 = vunpack.c.h.b16 %v1127
    %v1875 = vunpack.c.l.b16 %v1128
    %v1876 = vunpack.c.h.b16 %v1128
    %v1877 = vunpack.c.l.b16 %v1129
    %v1878 = vunpack.c.h.b16 %v1129
    %v1879 = vunpack.c.l.b16 %v1130
    %v1880 = vunpack.c.h.b16 %v1130
    %v1881 = vunpack.c.l.b16 %v1131
    %v1882 = vunpack.c.h.b16 %v1131
    %v1883 = vunpack.c.l.b16 %v1132
    %v1884 = vunpack.c.h.b16 %v1132
    %v1885 = vunpack.c.l.b16 %v1133
    %v1886 = vunpack.c.h.b16 %v1133
    %v1887 = vunpack.c.l.b16 %v1134
    %v1888 = vunpack.c.h.b16 %v1134
    %v1889 = vunpack.c.l.b16 %v1135
    %v1890 = vunpack.c.h.b16 %v1135
    %v1891 = vunpack.c.l.b16 %v1136
    %v1892 = vunpack.c.h.b16 %v1136
    %v1893 = vunpack.c.l.b16 %v1137
    %v1894 = vunpack.c.h.b16 %v1137
    %v1895 = vunpack.c.l.b16 %v1138
    %v1896 = vunpack.c.h.b16 %v1138
    %v1897 = vunpack.c.l.b16 %v1139
    %v1898 = vunpack.c.h.b16 %v1139
    %v1899 = vunpack.c.l.b16 %v1140
    %v1900 = vunpack.c.h.b16 %v1140
    %v1901 = vunpack.c.l.b16 %v1141
    %v1902 = vunpack.c.h.b16 %v1141
    %v1903 = vunpack.c.l.b16 %v1142
    %v1904 = vunpack.c.h.b16 %v1142
    %v1905 = vunpack.c.l.b16 %v1143
    %v1906 = vunpack.c.h.b16 %v1143
    %v1907 = vunpack.c.l.b16 %v1144
    %v1908 = vunpack.c.h.b16 %v1144
    %v1909 = vunpack.c.l.b16 %v1145
    %v1910 = vunpack.c.h.b16 %v1145
    %v1911 = vunpack.c.l.b16 %v1146
    %v1912 = vunpack.c.h.b16 %v1146
    %v1913 = vunpack.c.l.b16 %v1147
    %v1914 = vunpack.c.h.b16 %v1147
    %v1915 = vunpack.c.l.b16 %v1148
    %v1916 = vunpack.c.h.b16 %v1148
    %v1917 = vpack.c.b16 %v1413, %v1405
    %v1918 = vpack.c.b16 %v1414, %v1406
    %v1919 = vpack.c.b16 %v1415, %v1407
    %v1920 = vpack.c.b16 %v1416, %v1408
    %v1921 = vpack.c.b16 %v1417, %v1409
    %v1922 = vpack.c.b16 %v1418, %v1410
    %v1923 = vpack.c.b16 %v1419, %v1411
    %v1924 = vpack.c.b16 %v1420, %v1412
    %v1925 = vpack.c.b16 %v1429, %v1421
    %v1926 = vpack.c.b16 %v1430, %v1422
    %v1927 = vpack.c.b16 %v1431, %v1423
    %v1928 = vpack.c.b16 %v1432, %v1424
    %v1929 = vpack.c.b16 %v1433, %v1425
    %v1930 = vpack.c.b16 %v1434, %v1426
    %v1931 = vpack.c.b16 %v1435, %v1427
    %v1932 = vpack.c.b16 %v1436, %v1428
    %v1933 = vpack.c.b16 %v1445, %v1437
    %v1934 = vpack.c.b16 %v1446, %v1438
    %v1935 = vpack.c.b16 %v1447, %v1439
    %v1936 = vpack.c.b16 %v1448, %v1440
    %v1937 = vpack.c.b16 %v1449, %v1441
    %v1938 = vpack.c.b16 %v1450, %v1442
    %v1939 = vpack.c.b16 %v1451, %v1443
    %v1940 = vpack.c.b16 %v1452, %v1444
    %v1941 = vpack.c.b16 %v1461, %v1453
    %v1942 = vpack.c.b16 %v1462, %v1454
    %v1943 = vpack.c.b16 %v1463, %v1455
    %v1944 = vpack.c.b16 %v1464, %v1456
    %v1945 = vpack.c.b16 %v1465, %v1457
    %v1946 = vpack.c.b16 %v1466, %v1458
    %v1947 = vpack.c.b16 %v1467, %v1459
    %v1948 = vpack.c.b16 %v1468, %v1460
    %v1949 = vpack.c.b16 %v1477, %v1469
    %v1950 = vpack.c.b16 %v1478, %v1470
    %v1951 = vpack.c.b16 %v1479, %v1471
    %v1952 = vpack.c.b16 %v1480, %v1472
    %v1953 = vpack.c.b16 %v1481, %v1473
    %v1954 = vpack.c.b16 %v1482, %v1474
    %v1955 = vpack.c.b16 %v1483, %v1475
    %v1956 = vpack.c.b16 %v1484, %v1476
    %v1957 = vpack.c.b16 %v1493, %v1485
    %v1958 = vpack.c.b16 %v1494, %v1486
    %v1959 = vpack.c.b16 %v1495, %v1487
    %v1960 = vpack.c.b16 %v1496, %v1488
    %v1961 = vpack.c.b16 %v1497, %v1489
    %v1962 = vpack.c.b16 %v1498, %v1490
    %v1963 = vpack.c.b16 %v1499, %v1491
    %v1964 = vpack.c.b16 %v1500, %v1492
    %v1965 = vpack.c.b16 %v1509, %v1501
    %v1966 = vpack.c.b16 %v1510, %v1502
    %v1967 = vpack.c.b16 %v1511, %v1503
    %v1968 = vpack.c.b16 %v1512, %v1504
    %v1969 = vpack.c.b16 %v1513, %v1505
    %v1970 = vpack.c.b16 %v1514, %v1506
    %v1971 = vpack.c.b16 %v1515, %v1507
    %v1972 = vpack.c.b16 %v1516, %v1508
    %v1973 = vpack.c.b16 %v1525, %v1517
    %v1974 = vpack.c.b16 %v1526, %v1518
    %v1975 = vpack.c.b16 %v1527, %v1519
    %v1976 = vpack.c.b16 %v1528, %v1520
    %v1977 = vpack.c.b16 %v1529, %v1521
    %v1978 = vpack.c.b16 %v1530, %v1522
    %v1979 = vpack.c.b16 %v1531, %v1523
    %v1980 = vpack.c.b16 %v1532, %v1524
    %v1981 = vpack.c.b16 %v1541, %v1533
    %v1982 = vpack.c.b16 %v1542, %v1534
    %v1983 = vpack.c.b16 %v1543, %v1535
    %v1984 = vpack.c.b16 %v1544, %v1536
    %v1985 = vpack.c.b16 %v1545, %v1537
    %v1986 = vpack.c.b16 %v1546, %v1538
    %v1987 = vpack.c.b16 %v1547, %v1539
    %v1988 = vpack.c.b16 %v1548, %v1540
    %v1989 = vpack.c.b16 %v1557, %v1549
    %v1990 = vpack.c.b16 %v1558, %v1550
    %v1991 = vpack.c.b16 %v1559, %v1551
    %v1992 = vpack.c.b16 %v1560, %v1552
    %v1993 = vpack.c.b16 %v1561, %v1553
    %v1994 = vpack.c.b16 %v1562, %v1554
    %v1995 = vpack.c.b16 %v1563, %v1555
    %v1996 = vpack.c.b16 %v1564, %v1556
    %v1997 = vpack.c.b16 %v1573, %v1565
    %v1998 = vpack.c.b16 %v1574, %v1566
    %v1999 = vpack.c.b16 %v1575, %v1567
    %v2000 = vpack.c.b16 %v1576, %v1568
    %v2001 = vpack.c.b16 %v1577, %v1569
    %v2002 = vpack.c.b16 %v1578, %v1570
    %v2003 = vpack.c.b16 %v1579, %v1571
    %v2004 = vpack.c.b16 %v1580, %v1572
    %v2005 = vpack.c.b16 %v1589, %v1581
    %v2006 = vpack.c.b16 %v1590, %v1582
    %v2007 = vpack.c.b16 %v1591, %v1583
    %v2008 = vpack.c.b16 %v1592, %v1584
    %v2009 = vpack.c.b16 %v1593, %v1585
    %v2010 = vpack.c.b16 %v1594, %v1586
    %v2011 = vpack.c.b16 %v1595, %v1587
    %v2012 = vpack.c.b16 %v1596, %v1588
    %v2013 = vpack.c.b16 %v1605, %v1597
    %v2014 = vpack.c.b16 %v1606, %v1598
    %v2015 = vpack.c.b16 %v1607, %v1599
    %v2016 = vpack.c.b16 %v1608, %v1600
    %v2017 = vpack.c.b16 %v1609, %v1601
    %v2018 = vpack.c.b16 %v1610, %v1602
    %v2019 = vpack.c.b16 %v1611, %v1603
    %v2020 = vpack.c.b16 %v1612, %v1604
    %v2021 = vpack.c.b16 %v1621, %v1613
    %v2022 = vpack.c.b16 %v1622, %v1614
    %v2023 = vpack.c.b16 %v1623, %v1615
    %v2024 = vpack.c.b16 %v1624, %v1616
    %v2025 = vpack.c.b16 %v1625, %v1617
    %v2026 = vpack.c.b16 %v1626, %v1618
    %v2027 = vpack.c.b16 %v1627, %v1619
    %v2028 = vpack.c.b16 %v1628, %v1620
    %v2029 = vpack.c.b16 %v1637, %v1629
    %v2030 = vpack.c.b16 %v1638, %v1630
    %v2031 = vpack.c.b16 %v1639, %v1631
    %v2032 = vpack.c.b16 %v1640, %v1632
    %v2033 = vpack.c.b16 %v1641, %v1633
    %v2034 = vpack.c.b16 %v1642, %v1634
    %v2035 = vpack.c.b16 %v1643, %v1635
    %v2036 = vpack.c.b16 %v1644, %v1636
    %v2037 = vpack.c.b16 %v1653, %v1645
    %v2038 = vpack.c.b16 %v1654, %v1646
    %v2039 = vpack.c.b16 %v1655, %v1647
    %v2040 = vpack.c.b16 %v1656, %v1648
    %v2041 = vpack.c.b16 %v1657, %v1649
    %v2042 = vpack.c.b16 %v1658, %v1650
    %v2043 = vpack.c.b16 %v1659, %v1651
    %v2044 = vpack.c.b16 %v1660, %v1652
    %v2045 = vpack.c.b16 %v1669, %v1661
    %v2046 = vpack.c.b16 %v1670, %v1662
    %v2047 = vpack.c.b16 %v1671, %v1663
    %v2048 = vpack.c.b16 %v1672, %v1664
    %v2049 = vpack.c.b16 %v1673, %v1665
    %v2050 = vpack.c.b16 %v1674, %v1666
    %v2051 = vpack.c.b16 %v1675, %v1667
    %v2052 = vpack.c.b16 %v1676, %v1668
    %v2053 = vpack.c.b16 %v1685, %v1677
    %v2054 = vpack.c.b16 %v1686, %v1678
    %v2055 = vpack.c.b16 %v1687, %v1679
    %v2056 = vpack.c.b16 %v1688, %v1680
    %v2057 = vpack.c.b16 %v1689, %v1681
    %v2058 = vpack.c.b16 %v1690, %v1682
    %v2059 = vpack.c.b16 %v1691, %v1683
    %v2060 = vpack.c.b16 %v1692, %v1684
    %v2061 = vpack.c.b16 %v1701, %v1693
    %v2062 = vpack.c.b16 %v1702, %v1694
    %v2063 = vpack.c.b16 %v1703, %v1695
    %v2064 = vpack.c.b16 %v1704, %v1696
    %v2065 = vpack.c.b16 %v1705, %v1697
    %v2066 = vpack.c.b16 %v1706, %v1698
    %v2067 = vpack.c.b16 %v1707, %v1699
    %v2068 = vpack.c.b16 %v1708, %v1700
    %v2069 = vpack.c.b16 %v1717, %v1709
    %v2070 = vpack.c.b16 %v1718, %v1710
    %v2071 = vpack.c.b16 %v1719, %v1711
    %v2072 = vpack.c.b16 %v1720, %v1712
    %v2073 = vpack.c.b16 %v1721, %v1713
    %v2074 = vpack.c.b16 %v1722, %v1714
    %v2075 = vpack.c.b16 %v1723, %v1715
    %v2076 = vpack.c.b16 %v1724, %v1716
    %v2077 = vpack.c.b16 %v1733, %v1725
    %v2078 = vpack.c.b16 %v1734, %v1726
    %v2079 = vpack.c.b16 %v1735, %v1727
    %v2080 = vpack.c.b16 %v1736, %v1728
    %v2081 = vpack.c.b16 %v1737, %v1729
    %v2082 = vpack.c.b16 %v1738, %v1730
    %v2083 = vpack.c.b16 %v1739, %v1731
    %v2084 = vpack.c.b16 %v1740, %v1732
    %v2085 = vpack.c.b16 %v1749, %v1741
    %v2086 = vpack.c.b16 %v1750, %v1742
    %v2087 = vpack.c.b16 %v1751, %v1743
    %v2088 = vpack.c.b16 %v1752, %v1744
    %v2089 = vpack.c.b16 %v1753, %v1745
    %v2090 = vpack.c.b16 %v1754, %v1746
    %v2091 = vpack.c.b16 %v1755, %v1747
    %v2092 = vpack.c.b16 %v1756, %v1748
    %v2093 = vpack.c.b16 %v1765, %v1757
    %v2094 = vpack.c.b16 %v1766, %v1758
    %v2095 = vpack.c.b16 %v1767, %v1759
    %v2096 = vpack.c.b16 %v1768, %v1760
    %v2097 = vpack.c.b16 %v1769, %v1761
    %v2098 = vpack.c.b16 %v1770, %v1762
    %v2099 = vpack.c.b16 %v1771, %v1763
    %v2100 = vpack.c.b16 %v1772, %v1764
    %v2101 = vpack.c.b16 %v1781, %v1773
    %v2102 = vpack.c.b16 %v1782, %v1774
    %v2103 = vpack.c.b16 %v1783, %v1775
    %v2104 = vpack.c.b16 %v1784, %v1776
    %v2105 = vpack.c.b16 %v1785, %v1777
    %v2106 = vpack.c.b16 %v1786, %v1778
    %v2107 = vpack.c.b16 %v1787, %v1779
    %v2108 = vpack.c.b16 %v1788, %v1780
    %v2109 = vpack.c.b16 %v1797, %v1789
    %v2110 = vpack.c.b16 %v1798, %v1790
    %v2111 = vpack.c.b16 %v1799, %v1791
    %v2112 = vpack.c.b16 %v1800, %v1792
    %v2113 = vpack.c.b16 %v1801, %v1793
    %v2114 = vpack.c.b16 %v1802, %v1794
    %v2115 = vpack.c.b16 %v1803, %v1795
    %v2116 = vpack.c.b16 %v1804, %v1796
    %v2117 = vpack.c.b16 %v1813, %v1805
    %v2118 = vpack.c.b16 %v1814, %v1806
    %v2119 = vpack.c.b16 %v1815, %v1807
    %v2120 = vpack.c.b16 %v1816, %v1808
    %v2121 = vpack.c.b16 %v1817, %v1809
    %v2122 = vpack.c.b16 %v1818, %v1810
    %v2123 = vpack.c.b16 %v1819, %v1811
    %v2124 = vpack.c.b16 %v1820, %v1812
    %v2125 = vpack.c.b16 %v1829, %v1821
    %v2126 = vpack.c.b16 %v1830, %v1822
    %v2127 = vpack.c.b16 %v1831, %v1823
    %v2128 = vpack.c.b16 %v1832, %v1824
    %v2129 = vpack.c.b16 %v1833, %v1825
    %v2130 = vpack.c.b16 %v1834, %v1826
    %v2131 = vpack.c.b16 %v1835, %v1827
    %v2132 = vpack.c.b16 %v1836, %v1828
    %v2133 = vpack.c.b16 %v1845, %v1837
    %v2134 = vpack.c.b16 %v1846, %v1838
    %v2135 = vpack.c.b16 %v1847, %v1839
    %v2136 = vpack.c.b16 %v1848, %v1840
    %v2137 = vpack.c.b16 %v1849, %v1841
    %v2138 = vpack.c.b16 %v1850, %v1842
    %v2139 = vpack.c.b16 %v1851, %v1843
    %v2140 = vpack.c.b16 %v1852, %v1844
    %v2141 = vpack.c.b16 %v1861, %v1853
    %v2142 = vpack.c.b16 %v1862, %v1854
    %v2143 = vpack.c.b16 %v1863, %v1855
    %v2144 = vpack.c.b16 %v1864, %v1856
    %v2145 = vpack.c.b16 %v1865, %v1857
    %v2146 = vpack.c.b16 %v1866, %v1858
    %v2147 = vpack.c.b16 %v1867, %v1859
    %v2148 = vpack.c.b16 %v1868, %v1860
    %v2149 = vpack.c.b16 %v1877, %v1869
    %v2150 = vpack.c.b16 %v1878, %v1870
    %v2151 = vpack.c.b16 %v1879, %v1871
    %v2152 = vpack.c.b16 %v1880, %v1872
    %v2153 = vpack.c.b16 %v1881, %v1873
    %v2154 = vpack.c.b16 %v1882, %v1874
    %v2155 = vpack.c.b16 %v1883, %v1875
    %v2156 = vpack.c.b16 %v1884, %v1876
    %v2157 = vpack.c.b16 %v1893, %v1885
    %v2158 = vpack.c.b16 %v1894, %v1886
    %v2159 = vpack.c.b16 %v1895, %v1887
    %v2160 = vpack.c.b16 %v1896, %v1888
    %v2161 = vpack.c.b16 %v1897, %v1889
    %v2162 = vpack.c.b16 %v1898, %v1890
    %v2163 = vpack.c.b16 %v1899, %v1891
    %v2164 = vpack.c.b16 %v1900, %v1892
    %v2165 = vpack.c.b16 %v1909, %v1901
    %v2166 = vpack.c.b16 %v1910, %v1902
    %v2167 = vpack.c.b16 %v1911, %v1903
    %v2168 = vpack.c.b16 %v1912, %v1904
    %v2169 = vpack.c.b16 %v1913, %v1905
    %v2170 = vpack.c.b16 %v1914, %v1906
    %v2171 = vpack.c.b16 %v1915, %v1907
    %v2172 = vpack.c.b16 %v1916, %v1908
    %2429 = vmatprep.subr.bf16.mxu0 %v1918
    %2430 = vmatpush1.bf16.msra.mxu0 %v1917
    %2431 = vmatprep.subr.bf16.mxu0 %v1926
    %2432 = vmatpush1.bf16.msra.mxu0 %v1925
    %2433 = vmatprep.subr.bf16.mxu0 %v1934
    %2434 = vmatpush1.bf16.msra.mxu0 %v1933
    %2435 = vmatprep.subr.bf16.mxu0 %v1942
    %2436 = vmatpush1.bf16.msra.mxu0 %v1941
    %2437 = vmatprep.subr.bf16.mxu0 %v1950
    %2438 = vmatpush1.bf16.msra.mxu0 %v1949
    %2439 = vmatprep.subr.bf16.mxu0 %v1958
    %2440 = vmatpush1.bf16.msra.mxu0 %v1957
    %2441 = vmatprep.subr.bf16.mxu0 %v1966
    %2442 = vmatpush1.bf16.msra.mxu0 %v1965
    %2443 = vmatprep.subr.bf16.mxu0 %v1974
    %2444 = vmatpush1.bf16.msra.mxu0 %v1973
    %2445 = vmatprep.subr.bf16.mxu0 %v1982
    %2446 = vmatpush1.bf16.msra.mxu0 %v1981
    %2447 = vmatprep.subr.bf16.mxu0 %v1990
    %2448 = vmatpush1.bf16.msra.mxu0 %v1989
    %2449 = vmatprep.subr.bf16.mxu0 %v1998
    %2450 = vmatpush1.bf16.msra.mxu0 %v1997
    %2451 = vmatprep.subr.bf16.mxu0 %v2006
    %2452 = vmatpush1.bf16.msra.mxu0 %v2005
    %2453 = vmatprep.subr.bf16.mxu0 %v2014
    %2454 = vmatpush1.bf16.msra.mxu0 %v2013
    %2455 = vmatprep.subr.bf16.mxu0 %v2022
    %2456 = vmatpush1.bf16.msra.mxu0 %v2021
    %2457 = vmatprep.subr.bf16.mxu0 %v2030
    %2458 = vmatpush1.bf16.msra.mxu0 %v2029
    %2459 = vmatprep.subr.bf16.mxu0 %v2038
    %2460 = vmatpush1.bf16.msra.mxu0 %v2037
    %2461 = vmatprep.mubr.bf16.mxu0 %v878
    %2462 = vmatmul.mubr.bf16.gmra.mrb[0].mxu0 %v877
    %v2463 = vpop.f32.mrb[0].mxu0
    %v2464 = vadd.f32 0.0, %v2463
    %v2465 = vpop.f32.mrb[0].mxu0
    %v2466 = vadd.f32 0.0, %v2465
    %v2467 = vpop.f32.mrb[0].mxu0
    %v2468 = vadd.f32 0.0, %v2467
    %v2469 = vpop.f32.mrb[0].mxu0
    %v2470 = vadd.f32 0.0, %v2469
    %2471 = vmatprep.mubr.bf16.mxu0 %v882
    %2472 = vmatmul.mubr.bf16.gmra.mrb[0].mxu0 %v881
    %v2473 = vpop.f32.mrb[0].mxu0
    %v2474 = vadd.f32 0.0, %v2473
    %v2475 = vpop.f32.mrb[0].mxu0
    %v2476 = vadd.f32 0.0, %v2475
    %v2477 = vpop.f32.mrb[0].mxu0
    %v2478 = vadd.f32 0.0, %v2477
    %v2479 = vpop.f32.mrb[0].mxu0
    %v2480 = vadd.f32 0.0, %v2479
    %2481 = vmatprep.mubr.bf16.mxu0 %v886
    %2482 = vmatmul.mubr.bf16.gmra.mrb[0].mxu0 %v885
    %v2483 = vpop.f32.mrb[0].mxu0
    %v2484 = vadd.f32 0.0, %v2483
    %v2485 = vpop.f32.mrb[0].mxu0
    %v2486 = vadd.f32 0.0, %v2485
    %v2487 = vpop.f32.mrb[0].mxu0
    %v2488 = vadd.f32 0.0, %v2487
    %v2489 = vpop.f32.mrb[0].mxu0
    %v2490 = vadd.f32 0.0, %v2489
    %2491 = vmatprep.mubr.bf16.mxu0 %v890
    %2492 = vmatmul.mubr.bf16.gmra.mrb[0].mxu0 %v889
    %v2493 = vpop.f32.mrb[0].mxu0
    %v2494 = vadd.f32 0.0, %v2493
    %v2495 = vpop.f32.mrb[0].mxu0
    %v2496 = vadd.f32 0.0, %v2495
    %v2497 = vpop.f32.mrb[0].mxu0
    %v2498 = vadd.f32 0.0, %v2497
    %v2499 = vpop.f32.mrb[0].mxu0
    %v2500 = vadd.f32 0.0, %v2499
    %2501 = vdwg.mxu0
    %2502 = vmatprep.subr.bf16.mxu0 %v2046
    %2503 = vmatpush1.bf16.msra.mxu0 %v2045
    %2504 = vmatprep.subr.bf16.mxu0 %v2054
    %2505 = vmatpush1.bf16.msra.mxu0 %v2053
    %2506 = vmatprep.subr.bf16.mxu0 %v2062
    %2507 = vmatpush1.bf16.msra.mxu0 %v2061
    %2508 = vmatprep.subr.bf16.mxu0 %v2070
    %2509 = vmatpush1.bf16.msra.mxu0 %v2069
    %2510 = vmatprep.subr.bf16.mxu0 %v2078
    %2511 = vmatpush1.bf16.msra.mxu0 %v2077
    %2512 = vmatprep.subr.bf16.mxu0 %v2086
    %2513 = vmatpush1.bf16.msra.mxu0 %v2085
    %2514 = vmatprep.subr.bf16.mxu0 %v2094
    %2515 = vmatpush1.bf16.msra.mxu0 %v2093
    %2516 = vmatprep.subr.bf16.mxu0 %v2102
    %2517 = vmatpush1.bf16.msra.mxu0 %v2101
    %2518 = vmatprep.subr.bf16.mxu0 %v2110
    %2519 = vmatpush1.bf16.msra.mxu0 %v2109
    %2520 = vmatprep.subr.bf16.mxu0 %v2118
    %2521 = vmatpush1.bf16.msra.mxu0 %v2117
    %2522 = vmatprep.subr.bf16.mxu0 %v2126
    %2523 = vmatpush1.bf16.msra.mxu0 %v2125
    %2524 = vmatprep.subr.bf16.mxu0 %v2134
    %2525 = vmatpush1.bf16.msra.mxu0 %v2133
    %2526 = vmatprep.subr.bf16.mxu0 %v2142
    %2527 = vmatpush1.bf16.msra.mxu0 %v2141
    %2528 = vmatprep.subr.bf16.mxu0 %v2150
    %2529 = vmatpush1.bf16.msra.mxu0 %v2149
    %2530 = vmatprep.subr.bf16.mxu0 %v2158
    %2531 = vmatpush1.bf16.msra.mxu0 %v2157
    %2532 = vmatprep.subr.bf16.mxu0 %v2166
    %2533 = vmatpush1.bf16.msra.mxu0 %v2165
    %2534 = vmatprep.mubr.bf16.mxu0 %v880
    %2535 = vmatmul.mubr.bf16.gmra.mrb[0].mxu0 %v879
    %v2536 = vpop.f32.mrb[0].mxu0
    %v2537 = vadd.f32 %v2464, %v2536
    %v2538 = vpop.f32.mrb[0].mxu0
    %v2539 = vadd.f32 %v2466, %v2538
    %v2540 = vpop.f32.mrb[0].mxu0
    %v2541 = vadd.f32 %v2468, %v2540
    %v2542 = vpop.f32.mrb[0].mxu0
    %v2543 = vadd.f32 %v2470, %v2542
    %2544 = vmatprep.mubr.bf16.mxu0 %v884
    %2545 = vmatmul.mubr.bf16.gmra.mrb[0].mxu0 %v883
    %v2546 = vpop.f32.mrb[0].mxu0
    %v2547 = vadd.f32 %v2474, %v2546
    %v2548 = vpop.f32.mrb[0].mxu0
    %v2549 = vadd.f32 %v2476, %v2548
    %v2550 = vpop.f32.mrb[0].mxu0
    %v2551 = vadd.f32 %v2478, %v2550
    %v2552 = vpop.f32.mrb[0].mxu0
    %v2553 = vadd.f32 %v2480, %v2552
    %2554 = vmatprep.mubr.bf16.mxu0 %v888
    %2555 = vmatmul.mubr.bf16.gmra.mrb[0].mxu0 %v887
    %v2556 = vpop.f32.mrb[0].mxu0
    %v2557 = vadd.f32 %v2484, %v2556
    %v2558 = vpop.f32.mrb[0].mxu0
    %v2559 = vadd.f32 %v2486, %v2558
    %v2560 = vpop.f32.mrb[0].mxu0
    %v2561 = vadd.f32 %v2488, %v2560
    %v2562 = vpop.f32.mrb[0].mxu0
    %v2563 = vadd.f32 %v2490, %v2562
    %2564 = vmatprep.mubr.bf16.mxu0 %v892
    %2565 = vmatmul.mubr.bf16.gmra.mrb[0].mxu0 %v891
    %v2566 = vpop.f32.mrb[0].mxu0
    %v2567 = vadd.f32 %v2494, %v2566
    %v2568 = vpop.f32.mrb[0].mxu0
    %v2569 = vadd.f32 %v2496, %v2568
    %v2570 = vpop.f32.mrb[0].mxu0
    %v2571 = vadd.f32 %v2498, %v2570
    %v2572 = vpop.f32.mrb[0].mxu0
    %v2573 = vadd.f32 %v2500, %v2572
    %2574 = vdwg.mxu0
    %2575 = vmatprep.subr.bf16.mxu0 %v1920
    %2576 = vmatpush1.bf16.msra.mxu0 %v1919
    %2577 = vmatprep.subr.bf16.mxu0 %v1928
    %2578 = vmatpush1.bf16.msra.mxu0 %v1927
    %2579 = vmatprep.subr.bf16.mxu0 %v1936
    %2580 = vmatpush1.bf16.msra.mxu0 %v1935
    %2581 = vmatprep.subr.bf16.mxu0 %v1944
    %2582 = vmatpush1.bf16.msra.mxu0 %v1943
    %2583 = vmatprep.subr.bf16.mxu0 %v1952
    %2584 = vmatpush1.bf16.msra.mxu0 %v1951
    %2585 = vmatprep.subr.bf16.mxu0 %v1960
    %2586 = vmatpush1.bf16.msra.mxu0 %v1959
    %2587 = vmatprep.subr.bf16.mxu0 %v1968
    %2588 = vmatpush1.bf16.msra.mxu0 %v1967
    %2589 = vmatprep.subr.bf16.mxu0 %v1976
    %2590 = vmatpush1.bf16.msra.mxu0 %v1975
    %2591 = vmatprep.subr.bf16.mxu0 %v1984
    %2592 = vmatpush1.bf16.msra.mxu0 %v1983
    %2593 = vmatprep.subr.bf16.mxu0 %v1992
    %2594 = vmatpush1.bf16.msra.mxu0 %v1991
    %2595 = vmatprep.subr.bf16.mxu0 %v2000
    %2596 = vmatpush1.bf16.msra.mxu0 %v1999
    %2597 = vmatprep.subr.bf16.mxu0 %v2008
    %2598 = vmatpush1.bf16.msra.mxu0 %v2007
    %2599 = vmatprep.subr.bf16.mxu0 %v2016
    %2600 = vmatpush1.bf16.msra.mxu0 %v2015
    %2601 = vmatprep.subr.bf16.mxu0 %v2024
    %2602 = vmatpush1.bf16.msra.mxu0 %v2023
    %2603 = vmatprep.subr.bf16.mxu0 %v2032
    %2604 = vmatpush1.bf16.msra.mxu0 %v2031
    %2605 = vmatprep.subr.bf16.mxu0 %v2040
    %2606 = vmatpush1.bf16.msra.mxu0 %v2039
    %2607 = vmatprep.mubr.bf16.mxu0 %v878
    %2608 = vmatmul.mubr.bf16.gmra.mrb[0].mxu0 %v877
    %v2609 = vpop.f32.mrb[0].mxu0
    %v2610 = vadd.f32 0.0, %v2609
    %v2611 = vpop.f32.mrb[0].mxu0
    %v2612 = vadd.f32 0.0, %v2611
    %v2613 = vpop.f32.mrb[0].mxu0
    %v2614 = vadd.f32 0.0, %v2613
    %v2615 = vpop.f32.mrb[0].mxu0
    %v2616 = vadd.f32 0.0, %v2615
    %2617 = vmatprep.mubr.bf16.mxu0 %v882
    %2618 = vmatmul.mubr.bf16.gmra.mrb[0].mxu0 %v881
    %v2619 = vpop.f32.mrb[0].mxu0
    %v2620 = vadd.f32 0.0, %v2619
    %v2621 = vpop.f32.mrb[0].mxu0
    %v2622 = vadd.f32 0.0, %v2621
    %v2623 = vpop.f32.mrb[0].mxu0
    %v2624 = vadd.f32 0.0, %v2623
    %v2625 = vpop.f32.mrb[0].mxu0
    %v2626 = vadd.f32 0.0, %v2625
    %2627 = vmatprep.mubr.bf16.mxu0 %v886
    %2628 = vmatmul.mubr.bf16.gmra.mrb[0].mxu0 %v885
    %v2629 = vpop.f32.mrb[0].mxu0
    %v2630 = vadd.f32 0.0, %v2629
    %v2631 = vpop.f32.mrb[0].mxu0
    %v2632 = vadd.f32 0.0, %v2631
    %v2633 = vpop.f32.mrb[0].mxu0
    %v2634 = vadd.f32 0.0, %v2633
    %v2635 = vpop.f32.mrb[0].mxu0
    %v2636 = vadd.f32 0.0, %v2635
    %2637 = vmatprep.mubr.bf16.mxu0 %v890
    %2638 = vmatmul.mubr.bf16.gmra.mrb[0].mxu0 %v889
    %v2639 = vpop.f32.mrb[0].mxu0
    %v2640 = vadd.f32 0.0, %v2639
    %v2641 = vpop.f32.mrb[0].mxu0
    %v2642 = vadd.f32 0.0, %v2641
    %v2643 = vpop.f32.mrb[0].mxu0
    %v2644 = vadd.f32 0.0, %v2643
    %v2645 = vpop.f32.mrb[0].mxu0
    %v2646 = vadd.f32 0.0, %v2645
    %2647 = vdwg.mxu0
    %2648 = vmatprep.subr.bf16.mxu0 %v2048
    %2649 = vmatpush1.bf16.msra.mxu0 %v2047
    %2650 = vmatprep.subr.bf16.mxu0 %v2056
    %2651 = vmatpush1.bf16.msra.mxu0 %v2055
    %2652 = vmatprep.subr.bf16.mxu0 %v2064
    %2653 = vmatpush1.bf16.msra.mxu0 %v2063
    %2654 = vmatprep.subr.bf16.mxu0 %v2072
    %2655 = vmatpush1.bf16.msra.mxu0 %v2071
    %2656 = vmatprep.subr.bf16.mxu0 %v2080
    %2657 = vmatpush1.bf16.msra.mxu0 %v2079
    %2658 = vmatprep.subr.bf16.mxu0 %v2088
    %2659 = vmatpush1.bf16.msra.mxu0 %v2087
    %2660 = vmatprep.subr.bf16.mxu0 %v2096
    %2661 = vmatpush1.bf16.msra.mxu0 %v2095
    %2662 = vmatprep.subr.bf16.mxu0 %v2104
    %2663 = vmatpush1.bf16.msra.mxu0 %v2103
    %2664 = vmatprep.subr.bf16.mxu0 %v2112
    %2665 = vmatpush1.bf16.msra.mxu0 %v2111
    %2666 = vmatprep.subr.bf16.mxu0 %v2120
    %2667 = vmatpush1.bf16.msra.mxu0 %v2119
    %2668 = vmatprep.subr.bf16.mxu0 %v2128
    %2669 = vmatpush1.bf16.msra.mxu0 %v2127
    %2670 = vmatprep.subr.bf16.mxu0 %v2136
    %2671 = vmatpush1.bf16.msra.mxu0 %v2135
    %2672 = vmatprep.subr.bf16.mxu0 %v2144
    %2673 = vmatpush1.bf16.msra.mxu0 %v2143
    %2674 = vmatprep.subr.bf16.mxu0 %v2152
    %2675 = vmatpush1.bf16.msra.mxu0 %v2151
    %2676 = vmatprep.subr.bf16.mxu0 %v2160
    %2677 = vmatpush1.bf16.msra.mxu0 %v2159
    %2678 = vmatprep.subr.bf16.mxu0 %v2168
    %2679 = vmatpush1.bf16.msra.mxu0 %v2167
    %2680 = vmatprep.mubr.bf16.mxu0 %v880
    %2681 = vmatmul.mubr.bf16.gmra.mrb[0].mxu0 %v879
    %v2682 = vpop.f32.mrb[0].mxu0
    %v2683 = vadd.f32 %v2610, %v2682
    %v2684 = vpop.f32.mrb[0].mxu0
    %v2685 = vadd.f32 %v2612, %v2684
    %v2686 = vpop.f32.mrb[0].mxu0
    %v2687 = vadd.f32 %v2614, %v2686
    %v2688 = vpop.f32.mrb[0].mxu0
    %v2689 = vadd.f32 %v2616, %v2688
    %2690 = vmatprep.mubr.bf16.mxu0 %v884
    %2691 = vmatmul.mubr.bf16.gmra.mrb[0].mxu0 %v883
    %v2692 = vpop.f32.mrb[0].mxu0
    %v2693 = vadd.f32 %v2620, %v2692
    %v2694 = vpop.f32.mrb[0].mxu0
    %v2695 = vadd.f32 %v2622, %v2694
    %v2696 = vpop.f32.mrb[0].mxu0
    %v2697 = vadd.f32 %v2624, %v2696
    %v2698 = vpop.f32.mrb[0].mxu0
    %v2699 = vadd.f32 %v2626, %v2698
    %2700 = vmatprep.mubr.bf16.mxu0 %v888
    %2701 = vmatmul.mubr.bf16.gmra.mrb[0].mxu0 %v887
    %v2702 = vpop.f32.mrb[0].mxu0
    %v2703 = vadd.f32 %v2630, %v2702
    %v2704 = vpop.f32.mrb[0].mxu0
    %v2705 = vadd.f32 %v2632, %v2704
    %v2706 = vpop.f32.mrb[0].mxu0
    %v2707 = vadd.f32 %v2634, %v2706
    %v2708 = vpop.f32.mrb[0].mxu0
    %v2709 = vadd.f32 %v2636, %v2708
    %2710 = vmatprep.mubr.bf16.mxu0 %v892
    %2711 = vmatmul.mubr.bf16.gmra.mrb[0].mxu0 %v891
    %v2712 = vpop.f32.mrb[0].mxu0
    %v2713 = vadd.f32 %v2640, %v2712
    %v2714 = vpop.f32.mrb[0].mxu0
    %v2715 = vadd.f32 %v2642, %v2714
    %v2716 = vpop.f32.mrb[0].mxu0
    %v2717 = vadd.f32 %v2644, %v2716
    %v2718 = vpop.f32.mrb[0].mxu0
    %v2719 = vadd.f32 %v2646, %v2718
    %2720 = vdwg.mxu0
    %2721 = vmatprep.subr.bf16.mxu0 %v1922
    %2722 = vmatpush1.bf16.msra.mxu0 %v1921
    %2723 = vmatprep.subr.bf16.mxu0 %v1930
    %2724 = vmatpush1.bf16.msra.mxu0 %v1929
    %2725 = vmatprep.subr.bf16.mxu0 %v1938
    %2726 = vmatpush1.bf16.msra.mxu0 %v1937
    %2727 = vmatprep.subr.bf16.mxu0 %v1946
    %2728 = vmatpush1.bf16.msra.mxu0 %v1945
    %2729 = vmatprep.subr.bf16.mxu0 %v1954
    %2730 = vmatpush1.bf16.msra.mxu0 %v1953
    %2731 = vmatprep.subr.bf16.mxu0 %v1962
    %2732 = vmatpush1.bf16.msra.mxu0 %v1961
    %2733 = vmatprep.subr.bf16.mxu0 %v1970
    %2734 = vmatpush1.bf16.msra.mxu0 %v1969
    %2735 = vmatprep.subr.bf16.mxu0 %v1978
    %2736 = vmatpush1.bf16.msra.mxu0 %v1977
    %2737 = vmatprep.subr.bf16.mxu0 %v1986
    %2738 = vmatpush1.bf16.msra.mxu0 %v1985
    %2739 = vmatprep.subr.bf16.mxu0 %v1994
    %2740 = vmatpush1.bf16.msra.mxu0 %v1993
    %2741 = vmatprep.subr.bf16.mxu0 %v2002
    %2742 = vmatpush1.bf16.msra.mxu0 %v2001
    %2743 = vmatprep.subr.bf16.mxu0 %v2010
    %2744 = vmatpush1.bf16.msra.mxu0 %v2009
    %2745 = vmatprep.subr.bf16.mxu0 %v2018
    %2746 = vmatpush1.bf16.msra.mxu0 %v2017
    %2747 = vmatprep.subr.bf16.mxu0 %v2026
    %2748 = vmatpush1.bf16.msra.mxu0 %v2025
    %2749 = vmatprep.subr.bf16.mxu0 %v2034
    %2750 = vmatpush1.bf16.msra.mxu0 %v2033
    %2751 = vmatprep.subr.bf16.mxu0 %v2042
    %2752 = vmatpush1.bf16.msra.mxu0 %v2041
    %2753 = vmatprep.mubr.bf16.mxu0 %v878
    %2754 = vmatmul.mubr.bf16.gmra.mrb[0].mxu0 %v877
    %v2755 = vpop.f32.mrb[0].mxu0
    %v2756 = vadd.f32 0.0, %v2755
    %v2757 = vpop.f32.mrb[0].mxu0
    %v2758 = vadd.f32 0.0, %v2757
    %v2759 = vpop.f32.mrb[0].mxu0
    %v2760 = vadd.f32 0.0, %v2759
    %v2761 = vpop.f32.mrb[0].mxu0
    %v2762 = vadd.f32 0.0, %v2761
    %2763 = vmatprep.mubr.bf16.mxu0 %v882
    %2764 = vmatmul.mubr.bf16.gmra.mrb[0].mxu0 %v881
    %v2765 = vpop.f32.mrb[0].mxu0
    %v2766 = vadd.f32 0.0, %v2765
    %v2767 = vpop.f32.mrb[0].mxu0
    %v2768 = vadd.f32 0.0, %v2767
    %v2769 = vpop.f32.mrb[0].mxu0
    %v2770 = vadd.f32 0.0, %v2769
    %v2771 = vpop.f32.mrb[0].mxu0
    %v2772 = vadd.f32 0.0, %v2771
    %2773 = vmatprep.mubr.bf16.mxu0 %v886
    %2774 = vmatmul.mubr.bf16.gmra.mrb[0].mxu0 %v885
    %v2775 = vpop.f32.mrb[0].mxu0
    %v2776 = vadd.f32 0.0, %v2775
    %v2777 = vpop.f32.mrb[0].mxu0
    %v2778 = vadd.f32 0.0, %v2777
    %v2779 = vpop.f32.mrb[0].mxu0
    %v2780 = vadd.f32 0.0, %v2779
    %v2781 = vpop.f32.mrb[0].mxu0
    %v2782 = vadd.f32 0.0, %v2781
    %2783 = vmatprep.mubr.bf16.mxu0 %v890
    %2784 = vmatmul.mubr.bf16.gmra.mrb[0].mxu0 %v889
    %v2785 = vpop.f32.mrb[0].mxu0
    %v2786 = vadd.f32 0.0, %v2785
    %v2787 = vpop.f32.mrb[0].mxu0
    %v2788 = vadd.f32 0.0, %v2787
    %v2789 = vpop.f32.mrb[0].mxu0
    %v2790 = vadd.f32 0.0, %v2789
    %v2791 = vpop.f32.mrb[0].mxu0
    %v2792 = vadd.f32 0.0, %v2791
    %2793 = vdwg.mxu0
    %2794 = vmatprep.subr.bf16.mxu0 %v2050
    %2795 = vmatpush1.bf16.msra.mxu0 %v2049
    %2796 = vmatprep.subr.bf16.mxu0 %v2058
    %2797 = vmatpush1.bf16.msra.mxu0 %v2057
    %2798 = vmatprep.subr.bf16.mxu0 %v2066
    %2799 = vmatpush1.bf16.msra.mxu0 %v2065
    %2800 = vmatprep.subr.bf16.mxu0 %v2074
    %2801 = vmatpush1.bf16.msra.mxu0 %v2073
    %2802 = vmatprep.subr.bf16.mxu0 %v2082
    %2803 = vmatpush1.bf16.msra.mxu0 %v2081
    %2804 = vmatprep.subr.bf16.mxu0 %v2090
    %2805 = vmatpush1.bf16.msra.mxu0 %v2089
    %2806 = vmatprep.subr.bf16.mxu0 %v2098
    %2807 = vmatpush1.bf16.msra.mxu0 %v2097
    %2808 = vmatprep.subr.bf16.mxu0 %v2106
    %2809 = vmatpush1.bf16.msra.mxu0 %v2105
    %2810 = vmatprep.subr.bf16.mxu0 %v2114
    %2811 = vmatpush1.bf16.msra.mxu0 %v2113
    %2812 = vmatprep.subr.bf16.mxu0 %v2122
    %2813 = vmatpush1.bf16.msra.mxu0 %v2121
    %2814 = vmatprep.subr.bf16.mxu0 %v2130
    %2815 = vmatpush1.bf16.msra.mxu0 %v2129
    %2816 = vmatprep.subr.bf16.mxu0 %v2138
    %2817 = vmatpush1.bf16.msra.mxu0 %v2137
    %2818 = vmatprep.subr.bf16.mxu0 %v2146
    %2819 = vmatpush1.bf16.msra.mxu0 %v2145
    %2820 = vmatprep.subr.bf16.mxu0 %v2154
    %2821 = vmatpush1.bf16.msra.mxu0 %v2153
    %2822 = vmatprep.subr.bf16.mxu0 %v2162
    %2823 = vmatpush1.bf16.msra.mxu0 %v2161
    %2824 = vmatprep.subr.bf16.mxu0 %v2170
    %2825 = vmatpush1.bf16.msra.mxu0 %v2169
    %2826 = vmatprep.mubr.bf16.mxu0 %v880
    %2827 = vmatmul.mubr.bf16.gmra.mrb[0].mxu0 %v879
    %v2828 = vpop.f32.mrb[0].mxu0
    %v2829 = vadd.f32 %v2756, %v2828
    %v2830 = vpop.f32.mrb[0].mxu0
    %v2831 = vadd.f32 %v2758, %v2830
    %v2832 = vpop.f32.mrb[0].mxu0
    %v2833 = vadd.f32 %v2760, %v2832
    %v2834 = vpop.f32.mrb[0].mxu0
    %v2835 = vadd.f32 %v2762, %v2834
    %2836 = vmatprep.mubr.bf16.mxu0 %v884
    %2837 = vmatmul.mubr.bf16.gmra.mrb[0].mxu0 %v883
    %v2838 = vpop.f32.mrb[0].mxu0
    %v2839 = vadd.f32 %v2766, %v2838
    %v2840 = vpop.f32.mrb[0].mxu0
    %v2841 = vadd.f32 %v2768, %v2840
    %v2842 = vpop.f32.mrb[0].mxu0
    %v2843 = vadd.f32 %v2770, %v2842
    %v2844 = vpop.f32.mrb[0].mxu0
    %v2845 = vadd.f32 %v2772, %v2844
    %2846 = vmatprep.mubr.bf16.mxu0 %v888
    %2847 = vmatmul.mubr.bf16.gmra.mrb[0].mxu0 %v887
    %v2848 = vpop.f32.mrb[0].mxu0
    %v2849 = vadd.f32 %v2776, %v2848
    %v2850 = vpop.f32.mrb[0].mxu0
    %v2851 = vadd.f32 %v2778, %v2850
    %v2852 = vpop.f32.mrb[0].mxu0
    %v2853 = vadd.f32 %v2780, %v2852
    %v2854 = vpop.f32.mrb[0].mxu0
    %v2855 = vadd.f32 %v2782, %v2854
    %2856 = vmatprep.mubr.bf16.mxu0 %v892
    %2857 = vmatmul.mubr.bf16.gmra.mrb[0].mxu0 %v891
    %v2858 = vpop.f32.mrb[0].mxu0
    %v2859 = vadd.f32 %v2786, %v2858
    %v2860 = vpop.f32.mrb[0].mxu0
    %v2861 = vadd.f32 %v2788, %v2860
    %v2862 = vpop.f32.mrb[0].mxu0
    %v2863 = vadd.f32 %v2790, %v2862
    %v2864 = vpop.f32.mrb[0].mxu0
    %v2865 = vadd.f32 %v2792, %v2864
    %2866 = vdwg.mxu0
    %2867 = vmatprep.subr.bf16.mxu0 %v1924
    %2868 = vmatpush1.bf16.msra.mxu0 %v1923
    %2869 = vmatprep.subr.bf16.mxu0 %v1932
    %2870 = vmatpush1.bf16.msra.mxu0 %v1931
    %2871 = vmatprep.subr.bf16.mxu0 %v1940
    %2872 = vmatpush1.bf16.msra.mxu0 %v1939
    %2873 = vmatprep.subr.bf16.mxu0 %v1948
    %2874 = vmatpush1.bf16.msra.mxu0 %v1947
    %2875 = vmatprep.subr.bf16.mxu0 %v1956
    %2876 = vmatpush1.bf16.msra.mxu0 %v1955
    %2877 = vmatprep.subr.bf16.mxu0 %v1964
    %2878 = vmatpush1.bf16.msra.mxu0 %v1963
    %2879 = vmatprep.subr.bf16.mxu0 %v1972
    %2880 = vmatpush1.bf16.msra.mxu0 %v1971
    %2881 = vmatprep.subr.bf16.mxu0 %v1980
    %2882 = vmatpush1.bf16.msra.mxu0 %v1979
    %2883 = vmatprep.subr.bf16.mxu0 %v1988
    %2884 = vmatpush1.bf16.msra.mxu0 %v1987
    %2885 = vmatprep.subr.bf16.mxu0 %v1996
    %2886 = vmatpush1.bf16.msra.mxu0 %v1995
    %2887 = vmatprep.subr.bf16.mxu0 %v2004
    %2888 = vmatpush1.bf16.msra.mxu0 %v2003
    %2889 = vmatprep.subr.bf16.mxu0 %v2012
    %2890 = vmatpush1.bf16.msra.mxu0 %v2011
    %2891 = vmatprep.subr.bf16.mxu0 %v2020
    %2892 = vmatpush1.bf16.msra.mxu0 %v2019
    %2893 = vmatprep.subr.bf16.mxu0 %v2028
    %2894 = vmatpush1.bf16.msra.mxu0 %v2027
    %2895 = vmatprep.subr.bf16.mxu0 %v2036
    %2896 = vmatpush1.bf16.msra.mxu0 %v2035
    %2897 = vmatprep.subr.bf16.mxu0 %v2044
    %2898 = vmatpush1.bf16.msra.mxu0 %v2043
    %2899 = vmatprep.mubr.bf16.mxu0 %v878
    %2900 = vmatmul.mubr.bf16.gmra.mrb[0].mxu0 %v877
    %v2901 = vpop.f32.mrb[0].mxu0
    %v2902 = vadd.f32 0.0, %v2901
    %v2903 = vpop.f32.mrb[0].mxu0
    %v2904 = vadd.f32 0.0, %v2903
    %v2905 = vpop.f32.mrb[0].mxu0
    %v2906 = vadd.f32 0.0, %v2905
    %v2907 = vpop.f32.mrb[0].mxu0
    %v2908 = vadd.f32 0.0, %v2907
    %2909 = vmatprep.mubr.bf16.mxu0 %v882
    %2910 = vmatmul.mubr.bf16.gmra.mrb[0].mxu0 %v881
    %v2911 = vpop.f32.mrb[0].mxu0
    %v2912 = vadd.f32 0.0, %v2911
    %v2913 = vpop.f32.mrb[0].mxu0
    %v2914 = vadd.f32 0.0, %v2913
    %v2915 = vpop.f32.mrb[0].mxu0
    %v2916 = vadd.f32 0.0, %v2915
    %v2917 = vpop.f32.mrb[0].mxu0
    %v2918 = vadd.f32 0.0, %v2917
    %2919 = vmatprep.mubr.bf16.mxu0 %v886
    %2920 = vmatmul.mubr.bf16.gmra.mrb[0].mxu0 %v885
    %v2921 = vpop.f32.mrb[0].mxu0
    %v2922 = vadd.f32 0.0, %v2921
    %v2923 = vpop.f32.mrb[0].mxu0
    %v2924 = vadd.f32 0.0, %v2923
    %v2925 = vpop.f32.mrb[0].mxu0
    %v2926 = vadd.f32 0.0, %v2925
    %v2927 = vpop.f32.mrb[0].mxu0
    %v2928 = vadd.f32 0.0, %v2927
    %2929 = vmatprep.mubr.bf16.mxu0 %v890
    %2930 = vmatmul.mubr.bf16.gmra.mrb[0].mxu0 %v889
    %v2931 = vpop.f32.mrb[0].mxu0
    %v2932 = vadd.f32 0.0, %v2931
    %v2933 = vpop.f32.mrb[0].mxu0
    %v2934 = vadd.f32 0.0, %v2933
    %v2935 = vpop.f32.mrb[0].mxu0
    %v2936 = vadd.f32 0.0, %v2935
    %v2937 = vpop.f32.mrb[0].mxu0
    %v2938 = vadd.f32 0.0, %v2937
    %2939 = vdwg.mxu0
    %2940 = vmatprep.subr.bf16.mxu0 %v2052
    %2941 = vmatpush1.bf16.msra.mxu0 %v2051
    %2942 = vmatprep.subr.bf16.mxu0 %v2060
    %2943 = vmatpush1.bf16.msra.mxu0 %v2059
    %2944 = vmatprep.subr.bf16.mxu0 %v2068
    %2945 = vmatpush1.bf16.msra.mxu0 %v2067
    %2946 = vmatprep.subr.bf16.mxu0 %v2076
    %2947 = vmatpush1.bf16.msra.mxu0 %v2075
    %2948 = vmatprep.subr.bf16.mxu0 %v2084
    %2949 = vmatpush1.bf16.msra.mxu0 %v2083
    %2950 = vmatprep.subr.bf16.mxu0 %v2092
    %2951 = vmatpush1.bf16.msra.mxu0 %v2091
    %2952 = vmatprep.subr.bf16.mxu0 %v2100
    %2953 = vmatpush1.bf16.msra.mxu0 %v2099
    %2954 = vmatprep.subr.bf16.mxu0 %v2108
    %2955 = vmatpush1.bf16.msra.mxu0 %v2107
    %2956 = vmatprep.subr.bf16.mxu0 %v2116
    %2957 = vmatpush1.bf16.msra.mxu0 %v2115
    %2958 = vmatprep.subr.bf16.mxu0 %v2124
    %2959 = vmatpush1.bf16.msra.mxu0 %v2123
    %2960 = vmatprep.subr.bf16.mxu0 %v2132
    %2961 = vmatpush1.bf16.msra.mxu0 %v2131
    %2962 = vmatprep.subr.bf16.mxu0 %v2140
    %2963 = vmatpush1.bf16.msra.mxu0 %v2139
    %2964 = vmatprep.subr.bf16.mxu0 %v2148
    %2965 = vmatpush1.bf16.msra.mxu0 %v2147
    %2966 = vmatprep.subr.bf16.mxu0 %v2156
    %2967 = vmatpush1.bf16.msra.mxu0 %v2155
    %2968 = vmatprep.subr.bf16.mxu0 %v2164
    %2969 = vmatpush1.bf16.msra.mxu0 %v2163
    %2970 = vmatprep.subr.bf16.mxu0 %v2172
    %2971 = vmatpush1.bf16.msra.mxu0 %v2171
    %2972 = vmatprep.mubr.bf16.mxu0 %v880
    %2973 = vmatmul.mubr.bf16.gmra.mrb[0].mxu0 %v879
    %v2974 = vpop.f32.mrb[0].mxu0
    %v2975 = vadd.f32 %v2902, %v2974
    %v2976 = vpop.f32.mrb[0].mxu0
    %v2977 = vadd.f32 %v2904, %v2976
    %v2978 = vpop.f32.mrb[0].mxu0
    %v2979 = vadd.f32 %v2906, %v2978
    %v2980 = vpop.f32.mrb[0].mxu0
    %v2981 = vadd.f32 %v2908, %v2980
    %2982 = vmatprep.mubr.bf16.mxu0 %v884
    %2983 = vmatmul.mubr.bf16.gmra.mrb[0].mxu0 %v883
    %v2984 = vpop.f32.mrb[0].mxu0
    %v2985 = vadd.f32 %v2912, %v2984
    %v2986 = vpop.f32.mrb[0].mxu0
    %v2987 = vadd.f32 %v2914, %v2986
    %v2988 = vpop.f32.mrb[0].mxu0
    %v2989 = vadd.f32 %v2916, %v2988
    %v2990 = vpop.f32.mrb[0].mxu0
    %v2991 = vadd.f32 %v2918, %v2990
    %2992 = vmatprep.mubr.bf16.mxu0 %v888
    %2993 = vmatmul.mubr.bf16.gmra.mrb[0].mxu0 %v887
    %v2994 = vpop.f32.mrb[0].mxu0
    %v2995 = vadd.f32 %v2922, %v2994
    %v2996 = vpop.f32.mrb[0].mxu0
    %v2997 = vadd.f32 %v2924, %v2996
    %v2998 = vpop.f32.mrb[0].mxu0
    %v2999 = vadd.f32 %v2926, %v2998
    %v3000 = vpop.f32.mrb[0].mxu0
    %v3001 = vadd.f32 %v2928, %v3000
    %3002 = vmatprep.mubr.bf16.mxu0 %v892
    %3003 = vmatmul.mubr.bf16.gmra.mrb[0].mxu0 %v891
    %v3004 = vpop.f32.mrb[0].mxu0
    %v3005 = vadd.f32 %v2932, %v3004
    %v3006 = vpop.f32.mrb[0].mxu0
    %v3007 = vadd.f32 %v2934, %v3006
    %v3008 = vpop.f32.mrb[0].mxu0
    %v3009 = vadd.f32 %v2936, %v3008
    %v3010 = vpop.f32.mrb[0].mxu0
    %v3011 = vadd.f32 %v2938, %v3010
    %3012 = vdwg.mxu0
    %v3013 = vmax.f32 %v2537, 0.0
    %v3014 = vmax.f32 %v2539, 0.0
    %v3015 = vmax.f32 %v2683, 0.0
    %v3016 = vmax.f32 %v2685, 0.0
    %v3017 = vmax.f32 %v2829, 0.0
    %v3018 = vmax.f32 %v2831, 0.0
    %v3019 = vmax.f32 %v2975, 0.0
    %v3020 = vmax.f32 %v2977, 0.0
    %v3021 = vmax.f32 %v2541, 0.0
    %v3022 = vmax.f32 %v2543, 0.0
    %v3023 = vmax.f32 %v2687, 0.0
    %v3024 = vmax.f32 %v2689, 0.0
    %v3025 = vmax.f32 %v2833, 0.0
    %v3026 = vmax.f32 %v2835, 0.0
    %v3027 = vmax.f32 %v2979, 0.0
    %v3028 = vmax.f32 %v2981, 0.0
    %v3029 = vmax.f32 %v2547, 0.0
    %v3030 = vmax.f32 %v2549, 0.0
    %v3031 = vmax.f32 %v2693, 0.0
    %v3032 = vmax.f32 %v2695, 0.0
    %v3033 = vmax.f32 %v2839, 0.0
    %v3034 = vmax.f32 %v2841, 0.0
    %v3035 = vmax.f32 %v2985, 0.0
    %v3036 = vmax.f32 %v2987, 0.0
    %v3037 = vmax.f32 %v2551, 0.0
    %v3038 = vmax.f32 %v2553, 0.0
    %v3039 = vmax.f32 %v2697, 0.0
    %v3040 = vmax.f32 %v2699, 0.0
    %v3041 = vmax.f32 %v2843, 0.0
    %v3042 = vmax.f32 %v2845, 0.0
    %v3043 = vmax.f32 %v2989, 0.0
    %v3044 = vmax.f32 %v2991, 0.0
    %v3045 = vmax.f32 %v2557, 0.0
    %v3046 = vmax.f32 %v2559, 0.0
    %v3047 = vmax.f32 %v2703, 0.0
    %v3048 = vmax.f32 %v2705, 0.0
    %v3049 = vmax.f32 %v2849, 0.0
    %v3050 = vmax.f32 %v2851, 0.0
    %v3051 = vmax.f32 %v2995, 0.0
    %v3052 = vmax.f32 %v2997, 0.0
    %v3053 = vmax.f32 %v2561, 0.0
    %v3054 = vmax.f32 %v2563, 0.0
    %v3055 = vmax.f32 %v2707, 0.0
    %v3056 = vmax.f32 %v2709, 0.0
    %v3057 = vmax.f32 %v2853, 0.0
    %v3058 = vmax.f32 %v2855, 0.0
    %v3059 = vmax.f32 %v2999, 0.0
    %v3060 = vmax.f32 %v3001, 0.0
    %v3061 = vmax.f32 %v2567, 0.0
    %v3062 = vmax.f32 %v2569, 0.0
    %v3063 = vmax.f32 %v2713, 0.0
    %v3064 = vmax.f32 %v2715, 0.0
    %v3065 = vmax.f32 %v2859, 0.0
    %v3066 = vmax.f32 %v2861, 0.0
    %v3067 = vmax.f32 %v3005, 0.0
    %v3068 = vmax.f32 %v3007, 0.0
    %v3069 = vmax.f32 %v2571, 0.0
    %v3070 = vmax.f32 %v2573, 0.0
    %v3071 = vmax.f32 %v2717, 0.0
    %v3072 = vmax.f32 %v2719, 0.0
    %v3073 = vmax.f32 %v2863, 0.0
    %v3074 = vmax.f32 %v2865, 0.0
    %v3075 = vmax.f32 %v3009, 0.0
    %v3076 = vmax.f32 %v3011, 0.0
    %v3077 = vpack.c.bf16 %v3021, %v3013
    %v3078 = vpack.c.bf16 %v3022, %v3014
    %v3079 = vpack.c.bf16 %v3023, %v3015
    %v3080 = vpack.c.bf16 %v3024, %v3016
    %v3081 = vpack.c.bf16 %v3025, %v3017
    %v3082 = vpack.c.bf16 %v3026, %v3018
    %v3083 = vpack.c.bf16 %v3027, %v3019
    %v3084 = vpack.c.bf16 %v3028, %v3020
    %v3085 = vpack.c.bf16 %v3037, %v3029
    %v3086 = vpack.c.bf16 %v3038, %v3030
    %v3087 = vpack.c.bf16 %v3039, %v3031
    %v3088 = vpack.c.bf16 %v3040, %v3032
    %v3089 = vpack.c.bf16 %v3041, %v3033
    %v3090 = vpack.c.bf16 %v3042, %v3034
    %v3091 = vpack.c.bf16 %v3043, %v3035
    %v3092 = vpack.c.bf16 %v3044, %v3036
    %v3093 = vpack.c.bf16 %v3053, %v3045
    %v3094 = vpack.c.bf16 %v3054, %v3046
    %v3095 = vpack.c.bf16 %v3055, %v3047
    %v3096 = vpack.c.bf16 %v3056, %v3048
    %v3097 = vpack.c.bf16 %v3057, %v3049
    %v3098 = vpack.c.bf16 %v3058, %v3050
    %v3099 = vpack.c.bf16 %v3059, %v3051
    %v3100 = vpack.c.bf16 %v3060, %v3052
    %v3101 = vpack.c.bf16 %v3069, %v3061
    %v3102 = vpack.c.bf16 %v3070, %v3062
    %v3103 = vpack.c.bf16 %v3071, %v3063
    %v3104 = vpack.c.bf16 %v3072, %v3064
    %v3105 = vpack.c.bf16 %v3073, %v3065
    %v3106 = vpack.c.bf16 %v3074, %v3066
    %v3107 = vpack.c.bf16 %v3075, %v3067
    %v3108 = vpack.c.bf16 %v3076, %v3068
    %v3109 = vld [vmem:[#allocation10] sm:$0xff]
    %v3110 = vld [vmem:[#allocation10 + $0x8] sm:$0xff]
    %v3111 = vld [vmem:[#allocation10 + $0x10] sm:$0xff]
    %v3112 = vld [vmem:[#allocation10 + $0x18] sm:$0xf]
    %v3113 = vld [vmem:[#allocation10 + $0x1c] sm:$0xff]
    %v3114 = vld [vmem:[#allocation10 + $0x24] sm:$0xff]
    %v3115 = vld [vmem:[#allocation10 + $0x2c] sm:$0xff]
    %v3116 = vld [vmem:[#allocation10 + $0x34] sm:$0xf]
    %v3117 = vld [vmem:[#allocation10 + $0x38] sm:$0xff]
    %v3118 = vld [vmem:[#allocation10 + $0x40] sm:$0xff]
    %v3119 = vld [vmem:[#allocation10 + $0x48] sm:$0xff]
    %v3120 = vld [vmem:[#allocation10 + $0x50] sm:$0xf]
    %v3121 = vld [vmem:[#allocation10 + $0x54] sm:$0xff]
    %v3122 = vld [vmem:[#allocation10 + $0x5c] sm:$0xff]
    %v3123 = vld [vmem:[#allocation10 + $0x64] sm:$0xff]
    %v3124 = vld [vmem:[#allocation10 + $0x6c] sm:$0xf]
    %v3125 = vld [vmem:[#allocation10 + $0x70] sm:$0xff]
    %v3126 = vld [vmem:[#allocation10 + $0x78] sm:$0xff]
    %v3127 = vld [vmem:[#allocation10 + $0x80] sm:$0xff]
    %v3128 = vld [vmem:[#allocation10 + $0x88] sm:$0xf]
    %v3129 = vld [vmem:[#allocation10 + $0x8c] sm:$0xff]
    %v3130 = vld [vmem:[#allocation10 + $0x94] sm:$0xff]
    %v3131 = vld [vmem:[#allocation10 + $0x9c] sm:$0xff]
    %v3132 = vld [vmem:[#allocation10 + $0xa4] sm:$0xf]
    %v3133 = vld [vmem:[#allocation10 + $0xa8] sm:$0xff]
    %v3134 = vld [vmem:[#allocation10 + $0xb0] sm:$0xff]
    %v3135 = vld [vmem:[#allocation10 + $0xb8] sm:$0xff]
    %v3136 = vld [vmem:[#allocation10 + $0xc0] sm:$0xf]
    %v3137 = vld [vmem:[#allocation10 + $0xc4] sm:$0xff]
    %v3138 = vld [vmem:[#allocation10 + $0xcc] sm:$0xff]
    %v3139 = vld [vmem:[#allocation10 + $0xd4] sm:$0xff]
    %v3140 = vld [vmem:[#allocation10 + $0xdc] sm:$0xf]
    %v3141 = vld [vmem:[#allocation10 + $0xe0] sm:$0xff]
    %v3142 = vld [vmem:[#allocation10 + $0xe8] sm:$0xff]
    %v3143 = vld [vmem:[#allocation10 + $0xf0] sm:$0xff]
    %v3144 = vld [vmem:[#allocation10 + $0xf8] sm:$0xf]
    %v3145 = vld [vmem:[#allocation10 + $0xfc] sm:$0xff]
    %v3146 = vld [vmem:[#allocation10 + $0x104] sm:$0xff]
    %v3147 = vld [vmem:[#allocation10 + $0x10c] sm:$0xff]
    %v3148 = vld [vmem:[#allocation10 + $0x114] sm:$0xf]
    %v3149 = vld [vmem:[#allocation10 + $0x118] sm:$0xff]
    %v3150 = vld [vmem:[#allocation10 + $0x120] sm:$0xff]
    %v3151 = vld [vmem:[#allocation10 + $0x128] sm:$0xff]
    %v3152 = vld [vmem:[#allocation10 + $0x130] sm:$0xf]
    %v3153 = vld [vmem:[#allocation10 + $0x134] sm:$0xff]
    %v3154 = vld [vmem:[#allocation10 + $0x13c] sm:$0xff]
    %v3155 = vld [vmem:[#allocation10 + $0x144] sm:$0xff]
    %v3156 = vld [vmem:[#allocation10 + $0x14c] sm:$0xf]
    %v3157 = vld [vmem:[#allocation10 + $0x150] sm:$0xff]
    %v3158 = vld [vmem:[#allocation10 + $0x158] sm:$0xff]
    %v3159 = vld [vmem:[#allocation10 + $0x160] sm:$0xff]
    %v3160 = vld [vmem:[#allocation10 + $0x168] sm:$0xf]
    %v3161 = vld [vmem:[#allocation10 + $0x16c] sm:$0xff]
    %v3162 = vld [vmem:[#allocation10 + $0x174] sm:$0xff]
    %v3163 = vld [vmem:[#allocation10 + $0x17c] sm:$0xff]
    %v3164 = vld [vmem:[#allocation10 + $0x184] sm:$0xf]
    %v3165 = vld [vmem:[#allocation10 + $0x188] sm:$0xff]
    %v3166 = vld [vmem:[#allocation10 + $0x190] sm:$0xff]
    %v3167 = vld [vmem:[#allocation10 + $0x198] sm:$0xff]
    %v3168 = vld [vmem:[#allocation10 + $0x1a0] sm:$0xf]
    %v3169 = vld [vmem:[#allocation10 + $0x1a4] sm:$0xff]
    %v3170 = vld [vmem:[#allocation10 + $0x1ac] sm:$0xff]
    %v3171 = vld [vmem:[#allocation10 + $0x1b4] sm:$0xff]
    %v3172 = vld [vmem:[#allocation10 + $0x1bc] sm:$0xf]
    %v3173 = vld [vmem:[#allocation10 + $0x1c0] sm:$0xff]
    %v3174 = vld [vmem:[#allocation10 + $0x1c8] sm:$0xff]
    %v3175 = vld [vmem:[#allocation10 + $0x1d0] sm:$0xff]
    %v3176 = vld [vmem:[#allocation10 + $0x1d8] sm:$0xf]
    %v3177 = vld [vmem:[#allocation10 + $0x1dc] sm:$0xff]
    %v3178 = vld [vmem:[#allocation10 + $0x1e4] sm:$0xff]
    %v3179 = vld [vmem:[#allocation10 + $0x1ec] sm:$0xff]
    %v3180 = vld [vmem:[#allocation10 + $0x1f4] sm:$0xf]
    %v3181 = vld [vmem:[#allocation10 + $0x1f8] sm:$0xff]
    %v3182 = vld [vmem:[#allocation10 + $0x200] sm:$0xff]
    %v3183 = vld [vmem:[#allocation10 + $0x208] sm:$0xff]
    %v3184 = vld [vmem:[#allocation10 + $0x210] sm:$0xf]
    %v3185 = vld [vmem:[#allocation10 + $0x214] sm:$0xff]
    %v3186 = vld [vmem:[#allocation10 + $0x21c] sm:$0xff]
    %v3187 = vld [vmem:[#allocation10 + $0x224] sm:$0xff]
    %v3188 = vld [vmem:[#allocation10 + $0x22c] sm:$0xf]
    %v3189 = vld [vmem:[#allocation10 + $0x230] sm:$0xff]
    %v3190 = vld [vmem:[#allocation10 + $0x238] sm:$0xff]
    %v3191 = vld [vmem:[#allocation10 + $0x240] sm:$0xff]
    %v3192 = vld [vmem:[#allocation10 + $0x248] sm:$0xf]
    %v3193 = vld [vmem:[#allocation10 + $0x24c] sm:$0xff]
    %v3194 = vld [vmem:[#allocation10 + $0x254] sm:$0xff]
    %v3195 = vld [vmem:[#allocation10 + $0x25c] sm:$0xff]
    %v3196 = vld [vmem:[#allocation10 + $0x264] sm:$0xf]
    %v3197 = vld [vmem:[#allocation10 + $0x268] sm:$0xff]
    %v3198 = vld [vmem:[#allocation10 + $0x270] sm:$0xff]
    %v3199 = vld [vmem:[#allocation10 + $0x278] sm:$0xff]
    %v3200 = vld [vmem:[#allocation10 + $0x280] sm:$0xf]
    %v3201 = vld [vmem:[#allocation10 + $0x284] sm:$0xff]
    %v3202 = vld [vmem:[#allocation10 + $0x28c] sm:$0xff]
    %v3203 = vld [vmem:[#allocation10 + $0x294] sm:$0xff]
    %v3204 = vld [vmem:[#allocation10 + $0x29c] sm:$0xf]
    %v3205 = vld [vmem:[#allocation10 + $0x2a0] sm:$0xff]
    %v3206 = vld [vmem:[#allocation10 + $0x2a8] sm:$0xff]
    %v3207 = vld [vmem:[#allocation10 + $0x2b0] sm:$0xff]
    %v3208 = vld [vmem:[#allocation10 + $0x2b8] sm:$0xf]
    %v3209 = vld [vmem:[#allocation10 + $0x2bc] sm:$0xff]
    %v3210 = vld [vmem:[#allocation10 + $0x2c4] sm:$0xff]
    %v3211 = vld [vmem:[#allocation10 + $0x2cc] sm:$0xff]
    %v3212 = vld [vmem:[#allocation10 + $0x2d4] sm:$0xf]
    %v3213 = vld [vmem:[#allocation10 + $0x2d8] sm:$0xff]
    %v3214 = vld [vmem:[#allocation10 + $0x2e0] sm:$0xff]
    %v3215 = vld [vmem:[#allocation10 + $0x2e8] sm:$0xff]
    %v3216 = vld [vmem:[#allocation10 + $0x2f0] sm:$0xf]
    %v3217 = vld [vmem:[#allocation10 + $0x2f4] sm:$0xff]
    %v3218 = vld [vmem:[#allocation10 + $0x2fc] sm:$0xff]
    %v3219 = vld [vmem:[#allocation10 + $0x304] sm:$0xff]
    %v3220 = vld [vmem:[#allocation10 + $0x30c] sm:$0xf]
    %v3221 = vld [vmem:[#allocation10 + $0x310] sm:$0xff]
    %v3222 = vld [vmem:[#allocation10 + $0x318] sm:$0xff]
    %v3223 = vld [vmem:[#allocation10 + $0x320] sm:$0xff]
    %v3224 = vld [vmem:[#allocation10 + $0x328] sm:$0xf]
    %v3225 = vld [vmem:[#allocation10 + $0x32c] sm:$0xff]
    %v3226 = vld [vmem:[#allocation10 + $0x334] sm:$0xff]
    %v3227 = vld [vmem:[#allocation10 + $0x33c] sm:$0xff]
    %v3228 = vld [vmem:[#allocation10 + $0x344] sm:$0xf]
    %v3229 = vld [vmem:[#allocation10 + $0x348] sm:$0xff]
    %v3230 = vld [vmem:[#allocation10 + $0x350] sm:$0xff]
    %v3231 = vld [vmem:[#allocation10 + $0x358] sm:$0xff]
    %v3232 = vld [vmem:[#allocation10 + $0x360] sm:$0xf]
    %v3233 = vld [vmem:[#allocation10 + $0x364] sm:$0xff]
    %v3234 = vld [vmem:[#allocation10 + $0x36c] sm:$0xff]
    %v3235 = vld [vmem:[#allocation10 + $0x374] sm:$0xff]
    %v3236 = vld [vmem:[#allocation10 + $0x37c] sm:$0xf]
    %v3237 = vld [vmem:[#allocation10 + $0x380] sm:$0xff]
    %v3238 = vld [vmem:[#allocation10 + $0x388] sm:$0xff]
    %v3239 = vld [vmem:[#allocation10 + $0x390] sm:$0xff]
    %v3240 = vld [vmem:[#allocation10 + $0x398] sm:$0xf]
    %v3241 = vld [vmem:[#allocation10 + $0x39c] sm:$0xff]
    %v3242 = vld [vmem:[#allocation10 + $0x3a4] sm:$0xff]
    %v3243 = vld [vmem:[#allocation10 + $0x3ac] sm:$0xff]
    %v3244 = vld [vmem:[#allocation10 + $0x3b4] sm:$0xf]
    %v3245 = vld [vmem:[#allocation10 + $0x3b8] sm:$0xff]
    %v3246 = vld [vmem:[#allocation10 + $0x3c0] sm:$0xff]
    %v3247 = vld [vmem:[#allocation10 + $0x3c8] sm:$0xff]
    %v3248 = vld [vmem:[#allocation10 + $0x3d0] sm:$0xf]
    %v3249 = vld [vmem:[#allocation10 + $0x3d4] sm:$0xff]
    %v3250 = vld [vmem:[#allocation10 + $0x3dc] sm:$0xff]
    %v3251 = vld [vmem:[#allocation10 + $0x3e4] sm:$0xff]
    %v3252 = vld [vmem:[#allocation10 + $0x3ec] sm:$0xf]
    %v3253 = vld [vmem:[#allocation10 + $0x3f0] sm:$0xff]
    %v3254 = vld [vmem:[#allocation10 + $0x3f8] sm:$0xff]
    %v3255 = vld [vmem:[#allocation10 + $0x400] sm:$0xff]
    %v3256 = vld [vmem:[#allocation10 + $0x408] sm:$0xf]
    %v3257 = vld [vmem:[#allocation10 + $0x40c] sm:$0xff]
    %v3258 = vld [vmem:[#allocation10 + $0x414] sm:$0xff]
    %v3259 = vld [vmem:[#allocation10 + $0x41c] sm:$0xff]
    %v3260 = vld [vmem:[#allocation10 + $0x424] sm:$0xf]
    %v3261 = vld [vmem:[#allocation10 + $0x428] sm:$0xff]
    %v3262 = vld [vmem:[#allocation10 + $0x430] sm:$0xff]
    %v3263 = vld [vmem:[#allocation10 + $0x438] sm:$0xff]
    %v3264 = vld [vmem:[#allocation10 + $0x440] sm:$0xf]
    %v3265 = vld [vmem:[#allocation10 + $0x444] sm:$0xff]
    %v3266 = vld [vmem:[#allocation10 + $0x44c] sm:$0xff]
    %v3267 = vld [vmem:[#allocation10 + $0x454] sm:$0xff]
    %v3268 = vld [vmem:[#allocation10 + $0x45c] sm:$0xf]
    %v3269 = vld [vmem:[#allocation10 + $0x460] sm:$0xff]
    %v3270 = vld [vmem:[#allocation10 + $0x468] sm:$0xff]
    %v3271 = vld [vmem:[#allocation10 + $0x470] sm:$0xff]
    %v3272 = vld [vmem:[#allocation10 + $0x478] sm:$0xf]
    %v3273 = vld [vmem:[#allocation10 + $0x47c] sm:$0xff]
    %v3274 = vld [vmem:[#allocation10 + $0x484] sm:$0xff]
    %v3275 = vld [vmem:[#allocation10 + $0x48c] sm:$0xff]
    %v3276 = vld [vmem:[#allocation10 + $0x494] sm:$0xf]
    %v3277 = vld [vmem:[#allocation10 + $0x498] sm:$0xff]
    %v3278 = vld [vmem:[#allocation10 + $0x4a0] sm:$0xff]
    %v3279 = vld [vmem:[#allocation10 + $0x4a8] sm:$0xff]
    %v3280 = vld [vmem:[#allocation10 + $0x4b0] sm:$0xf]
    %v3281 = vld [vmem:[#allocation10 + $0x4b4] sm:$0xff]
    %v3282 = vld [vmem:[#allocation10 + $0x4bc] sm:$0xff]
    %v3283 = vld [vmem:[#allocation10 + $0x4c4] sm:$0xff]
    %v3284 = vld [vmem:[#allocation10 + $0x4cc] sm:$0xf]
    %v3285 = vld [vmem:[#allocation10 + $0x4d0] sm:$0xff]
    %v3286 = vld [vmem:[#allocation10 + $0x4d8] sm:$0xff]
    %v3287 = vld [vmem:[#allocation10 + $0x4e0] sm:$0xff]
    %v3288 = vld [vmem:[#allocation10 + $0x4e8] sm:$0xf]
    %v3289 = vld [vmem:[#allocation10 + $0x4ec] sm:$0xff]
    %v3290 = vld [vmem:[#allocation10 + $0x4f4] sm:$0xff]
    %v3291 = vld [vmem:[#allocation10 + $0x4fc] sm:$0xff]
    %v3292 = vld [vmem:[#allocation10 + $0x504] sm:$0xf]
    %v3293 = vld [vmem:[#allocation10 + $0x508] sm:$0xff]
    %v3294 = vld [vmem:[#allocation10 + $0x510] sm:$0xff]
    %v3295 = vld [vmem:[#allocation10 + $0x518] sm:$0xff]
    %v3296 = vld [vmem:[#allocation10 + $0x520] sm:$0xf]
    %v3297 = vld [vmem:[#allocation10 + $0x524] sm:$0xff]
    %v3298 = vld [vmem:[#allocation10 + $0x52c] sm:$0xff]
    %v3299 = vld [vmem:[#allocation10 + $0x534] sm:$0xff]
    %v3300 = vld [vmem:[#allocation10 + $0x53c] sm:$0xf]
    %v3301 = vld [vmem:[#allocation10 + $0x540] sm:$0xff]
    %v3302 = vld [vmem:[#allocation10 + $0x548] sm:$0xff]
    %v3303 = vld [vmem:[#allocation10 + $0x550] sm:$0xff]
    %v3304 = vld [vmem:[#allocation10 + $0x558] sm:$0xf]
    %v3305 = vld [vmem:[#allocation10 + $0x55c] sm:$0xff]
    %v3306 = vld [vmem:[#allocation10 + $0x564] sm:$0xff]
    %v3307 = vld [vmem:[#allocation10 + $0x56c] sm:$0xff]
    %v3308 = vld [vmem:[#allocation10 + $0x574] sm:$0xf]
    %v3309 = vld [vmem:[#allocation10 + $0x578] sm:$0xff]
    %v3310 = vld [vmem:[#allocation10 + $0x580] sm:$0xff]
    %v3311 = vld [vmem:[#allocation10 + $0x588] sm:$0xff]
    %v3312 = vld [vmem:[#allocation10 + $0x590] sm:$0xf]
    %v3313 = vld [vmem:[#allocation10 + $0x594] sm:$0xff]
    %v3314 = vld [vmem:[#allocation10 + $0x59c] sm:$0xff]
    %v3315 = vld [vmem:[#allocation10 + $0x5a4] sm:$0xff]
    %v3316 = vld [vmem:[#allocation10 + $0x5ac] sm:$0xf]
    %v3317 = vld [vmem:[#allocation10 + $0x5b0] sm:$0xff]
    %v3318 = vld [vmem:[#allocation10 + $0x5b8] sm:$0xff]
    %v3319 = vld [vmem:[#allocation10 + $0x5c0] sm:$0xff]
    %v3320 = vld [vmem:[#allocation10 + $0x5c8] sm:$0xf]
    %v3321 = vld [vmem:[#allocation10 + $0x5cc] sm:$0xff]
    %v3322 = vld [vmem:[#allocation10 + $0x5d4] sm:$0xff]
    %v3323 = vld [vmem:[#allocation10 + $0x5dc] sm:$0xff]
    %v3324 = vld [vmem:[#allocation10 + $0x5e4] sm:$0xf]
    %v3325 = vld [vmem:[#allocation10 + $0x5e8] sm:$0xff]
    %v3326 = vld [vmem:[#allocation10 + $0x5f0] sm:$0xff]
    %v3327 = vld [vmem:[#allocation10 + $0x5f8] sm:$0xff]
    %v3328 = vld [vmem:[#allocation10 + $0x600] sm:$0xf]
    %v3329 = vld [vmem:[#allocation10 + $0x604] sm:$0xff]
    %v3330 = vld [vmem:[#allocation10 + $0x60c] sm:$0xff]
    %v3331 = vld [vmem:[#allocation10 + $0x614] sm:$0xff]
    %v3332 = vld [vmem:[#allocation10 + $0x61c] sm:$0xf]
    %v3333 = vld [vmem:[#allocation10 + $0x620] sm:$0xff]
    %v3334 = vld [vmem:[#allocation10 + $0x628] sm:$0xff]
    %v3335 = vld [vmem:[#allocation10 + $0x630] sm:$0xff]
    %v3336 = vld [vmem:[#allocation10 + $0x638] sm:$0xf]
    %v3337 = vld [vmem:[#allocation10 + $0x63c] sm:$0xff]
    %v3338 = vld [vmem:[#allocation10 + $0x644] sm:$0xff]
    %v3339 = vld [vmem:[#allocation10 + $0x64c] sm:$0xff]
    %v3340 = vld [vmem:[#allocation10 + $0x654] sm:$0xf]
    %v3341 = vld [vmem:[#allocation10 + $0x658] sm:$0xff]
    %v3342 = vld [vmem:[#allocation10 + $0x660] sm:$0xff]
    %v3343 = vld [vmem:[#allocation10 + $0x668] sm:$0xff]
    %v3344 = vld [vmem:[#allocation10 + $0x670] sm:$0xf]
    %v3345 = vld [vmem:[#allocation10 + $0x674] sm:$0xff]
    %v3346 = vld [vmem:[#allocation10 + $0x67c] sm:$0xff]
    %v3347 = vld [vmem:[#allocation10 + $0x684] sm:$0xff]
    %v3348 = vld [vmem:[#allocation10 + $0x68c] sm:$0xf]
    %v3349 = vld [vmem:[#allocation10 + $0x690] sm:$0xff]
    %v3350 = vld [vmem:[#allocation10 + $0x698] sm:$0xff]
    %v3351 = vld [vmem:[#allocation10 + $0x6a0] sm:$0xff]
    %v3352 = vld [vmem:[#allocation10 + $0x6a8] sm:$0xf]
    %v3353 = vld [vmem:[#allocation10 + $0x6ac] sm:$0xff]
    %v3354 = vld [vmem:[#allocation10 + $0x6b4] sm:$0xff]
    %v3355 = vld [vmem:[#allocation10 + $0x6bc] sm:$0xff]
    %v3356 = vld [vmem:[#allocation10 + $0x6c4] sm:$0xf]
    %v3357 = vld [vmem:[#allocation10 + $0x6c8] sm:$0xff]
    %v3358 = vld [vmem:[#allocation10 + $0x6d0] sm:$0xff]
    %v3359 = vld [vmem:[#allocation10 + $0x6d8] sm:$0xff]
    %v3360 = vld [vmem:[#allocation10 + $0x6e0] sm:$0xf]
    %v3361 = vld [vmem:[#allocation10 + $0x6e4] sm:$0xff]
    %v3362 = vld [vmem:[#allocation10 + $0x6ec] sm:$0xff]
    %v3363 = vld [vmem:[#allocation10 + $0x6f4] sm:$0xff]
    %v3364 = vld [vmem:[#allocation10 + $0x6fc] sm:$0xf]
    %v3365 = vld [vmem:[#allocation10 + $0x700] sm:$0xff]
    %v3366 = vld [vmem:[#allocation10 + $0x708] sm:$0xff]
    %v3367 = vld [vmem:[#allocation10 + $0x710] sm:$0xff]
    %v3368 = vld [vmem:[#allocation10 + $0x718] sm:$0xf]
    %v3369 = vld [vmem:[#allocation10 + $0x71c] sm:$0xff]
    %v3370 = vld [vmem:[#allocation10 + $0x724] sm:$0xff]
    %v3371 = vld [vmem:[#allocation10 + $0x72c] sm:$0xff]
    %v3372 = vld [vmem:[#allocation10 + $0x734] sm:$0xf]
    %v3373 = vld [vmem:[#allocation10 + $0x738] sm:$0xff]
    %v3374 = vld [vmem:[#allocation10 + $0x740] sm:$0xff]
    %v3375 = vld [vmem:[#allocation10 + $0x748] sm:$0xff]
    %v3376 = vld [vmem:[#allocation10 + $0x750] sm:$0xf]
    %v3377 = vld [vmem:[#allocation10 + $0x754] sm:$0xff]
    %v3378 = vld [vmem:[#allocation10 + $0x75c] sm:$0xff]
    %v3379 = vld [vmem:[#allocation10 + $0x764] sm:$0xff]
    %v3380 = vld [vmem:[#allocation10 + $0x76c] sm:$0xf]
    %v3381 = vld [vmem:[#allocation10 + $0x770] sm:$0xff]
    %v3382 = vld [vmem:[#allocation10 + $0x778] sm:$0xff]
    %v3383 = vld [vmem:[#allocation10 + $0x780] sm:$0xff]
    %v3384 = vld [vmem:[#allocation10 + $0x788] sm:$0xf]
    %v3385 = vld [vmem:[#allocation10 + $0x78c] sm:$0xff]
    %v3386 = vld [vmem:[#allocation10 + $0x794] sm:$0xff]
    %v3387 = vld [vmem:[#allocation10 + $0x79c] sm:$0xff]
    %v3388 = vld [vmem:[#allocation10 + $0x7a4] sm:$0xf]
    %v3389 = vld [vmem:[#allocation10 + $0x7a8] sm:$0xff]
    %v3390 = vld [vmem:[#allocation10 + $0x7b0] sm:$0xff]
    %v3391 = vld [vmem:[#allocation10 + $0x7b8] sm:$0xff]
    %v3392 = vld [vmem:[#allocation10 + $0x7c0] sm:$0xf]
    %v3393 = vld [vmem:[#allocation10 + $0x7c4] sm:$0xff]
    %v3394 = vld [vmem:[#allocation10 + $0x7cc] sm:$0xff]
    %v3395 = vld [vmem:[#allocation10 + $0x7d4] sm:$0xff]
    %v3396 = vld [vmem:[#allocation10 + $0x7dc] sm:$0xf]
    %v3397 = vld [vmem:[#allocation10 + $0x7e0] sm:$0xff]
    %v3398 = vld [vmem:[#allocation10 + $0x7e8] sm:$0xff]
    %v3399 = vld [vmem:[#allocation10 + $0x7f0] sm:$0xff]
    %v3400 = vld [vmem:[#allocation10 + $0x7f8] sm:$0xf]
    %v3401 = vld [vmem:[#allocation10 + $0x7fc] sm:$0xff]
    %v3402 = vld [vmem:[#allocation10 + $0x804] sm:$0xff]
    %v3403 = vld [vmem:[#allocation10 + $0x80c] sm:$0xff]
    %v3404 = vld [vmem:[#allocation10 + $0x814] sm:$0xf]
    %v3405 = vld [vmem:[#allocation10 + $0x818] sm:$0xff]
    %v3406 = vld [vmem:[#allocation10 + $0x820] sm:$0xff]
    %v3407 = vld [vmem:[#allocation10 + $0x828] sm:$0xff]
    %v3408 = vld [vmem:[#allocation10 + $0x830] sm:$0xf]
    %v3409 = vld [vmem:[#allocation10 + $0x834] sm:$0xff]
    %v3410 = vld [vmem:[#allocation10 + $0x83c] sm:$0xff]
    %v3411 = vld [vmem:[#allocation10 + $0x844] sm:$0xff]
    %v3412 = vld [vmem:[#allocation10 + $0x84c] sm:$0xf]
    %v3413 = vld [vmem:[#allocation10 + $0x850] sm:$0xff]
    %v3414 = vld [vmem:[#allocation10 + $0x858] sm:$0xff]
    %v3415 = vld [vmem:[#allocation10 + $0x860] sm:$0xff]
    %v3416 = vld [vmem:[#allocation10 + $0x868] sm:$0xf]
    %v3417 = vld [vmem:[#allocation10 + $0x86c] sm:$0xff]
    %v3418 = vld [vmem:[#allocation10 + $0x874] sm:$0xff]
    %v3419 = vld [vmem:[#allocation10 + $0x87c] sm:$0xff]
    %v3420 = vld [vmem:[#allocation10 + $0x884] sm:$0xf]
    %v3421 = vld [vmem:[#allocation10 + $0x888] sm:$0xff]
    %v3422 = vld [vmem:[#allocation10 + $0x890] sm:$0xff]
    %v3423 = vld [vmem:[#allocation10 + $0x898] sm:$0xff]
    %v3424 = vld [vmem:[#allocation10 + $0x8a0] sm:$0xf]
    %v3425 = vld [vmem:[#allocation10 + $0x8a4] sm:$0xff]
    %v3426 = vld [vmem:[#allocation10 + $0x8ac] sm:$0xff]
    %v3427 = vld [vmem:[#allocation10 + $0x8b4] sm:$0xff]
    %v3428 = vld [vmem:[#allocation10 + $0x8bc] sm:$0xf]
    %v3429 = vld [vmem:[#allocation10 + $0x8c0] sm:$0xff]
    %v3430 = vld [vmem:[#allocation10 + $0x8c8] sm:$0xff]
    %v3431 = vld [vmem:[#allocation10 + $0x8d0] sm:$0xff]
    %v3432 = vld [vmem:[#allocation10 + $0x8d8] sm:$0xf]
    %v3433 = vld [vmem:[#allocation10 + $0x8dc] sm:$0xff]
    %v3434 = vld [vmem:[#allocation10 + $0x8e4] sm:$0xff]
    %v3435 = vld [vmem:[#allocation10 + $0x8ec] sm:$0xff]
    %v3436 = vld [vmem:[#allocation10 + $0x8f4] sm:$0xf]
    %v3437 = vld [vmem:[#allocation10 + $0x8f8] sm:$0xff]
    %v3438 = vld [vmem:[#allocation10 + $0x900] sm:$0xff]
    %v3439 = vld [vmem:[#allocation10 + $0x908] sm:$0xff]
    %v3440 = vld [vmem:[#allocation10 + $0x910] sm:$0xf]
    %v3441 = vld [vmem:[#allocation10 + $0x914] sm:$0xff]
    %v3442 = vld [vmem:[#allocation10 + $0x91c] sm:$0xff]
    %v3443 = vld [vmem:[#allocation10 + $0x924] sm:$0xff]
    %v3444 = vld [vmem:[#allocation10 + $0x92c] sm:$0xf]
    %v3445 = vld [vmem:[#allocation10 + $0x930] sm:$0xff]
    %v3446 = vld [vmem:[#allocation10 + $0x938] sm:$0xff]
    %v3447 = vld [vmem:[#allocation10 + $0x940] sm:$0xff]
    %v3448 = vld [vmem:[#allocation10 + $0x948] sm:$0xf]
    %v3449 = vld [vmem:[#allocation10 + $0x94c] sm:$0xff]
    %v3450 = vld [vmem:[#allocation10 + $0x954] sm:$0xff]
    %v3451 = vld [vmem:[#allocation10 + $0x95c] sm:$0xff]
    %v3452 = vld [vmem:[#allocation10 + $0x964] sm:$0xf]
    %v3453 = vld [vmem:[#allocation10 + $0x968] sm:$0xff]
    %v3454 = vld [vmem:[#allocation10 + $0x970] sm:$0xff]
    %v3455 = vld [vmem:[#allocation10 + $0x978] sm:$0xff]
    %v3456 = vld [vmem:[#allocation10 + $0x980] sm:$0xf]
    %v3457 = vld [vmem:[#allocation10 + $0x984] sm:$0xff]
    %v3458 = vld [vmem:[#allocation10 + $0x98c] sm:$0xff]
    %v3459 = vld [vmem:[#allocation10 + $0x994] sm:$0xff]
    %v3460 = vld [vmem:[#allocation10 + $0x99c] sm:$0xf]
    %v3461 = vld [vmem:[#allocation10 + $0x9a0] sm:$0xff]
    %v3462 = vld [vmem:[#allocation10 + $0x9a8] sm:$0xff]
    %v3463 = vld [vmem:[#allocation10 + $0x9b0] sm:$0xff]
    %v3464 = vld [vmem:[#allocation10 + $0x9b8] sm:$0xf]
    %v3465 = vld [vmem:[#allocation10 + $0x9bc] sm:$0xff]
    %v3466 = vld [vmem:[#allocation10 + $0x9c4] sm:$0xff]
    %v3467 = vld [vmem:[#allocation10 + $0x9cc] sm:$0xff]
    %v3468 = vld [vmem:[#allocation10 + $0x9d4] sm:$0xf]
    %v3469 = vld [vmem:[#allocation10 + $0x9d8] sm:$0xff]
    %v3470 = vld [vmem:[#allocation10 + $0x9e0] sm:$0xff]
    %v3471 = vld [vmem:[#allocation10 + $0x9e8] sm:$0xff]
    %v3472 = vld [vmem:[#allocation10 + $0x9f0] sm:$0xf]
    %v3473 = vld [vmem:[#allocation10 + $0x9f4] sm:$0xff]
    %v3474 = vld [vmem:[#allocation10 + $0x9fc] sm:$0xff]
    %v3475 = vld [vmem:[#allocation10 + $0xa04] sm:$0xff]
    %v3476 = vld [vmem:[#allocation10 + $0xa0c] sm:$0xf]
    %v3477 = vld [vmem:[#allocation10 + $0xa10] sm:$0xff]
    %v3478 = vld [vmem:[#allocation10 + $0xa18] sm:$0xff]
    %v3479 = vld [vmem:[#allocation10 + $0xa20] sm:$0xff]
    %v3480 = vld [vmem:[#allocation10 + $0xa28] sm:$0xf]
    %v3481 = vld [vmem:[#allocation10 + $0xa2c] sm:$0xff]
    %v3482 = vld [vmem:[#allocation10 + $0xa34] sm:$0xff]
    %v3483 = vld [vmem:[#allocation10 + $0xa3c] sm:$0xff]
    %v3484 = vld [vmem:[#allocation10 + $0xa44] sm:$0xf]
    %v3485 = vld [vmem:[#allocation10 + $0xa48] sm:$0xff]
    %v3486 = vld [vmem:[#allocation10 + $0xa50] sm:$0xff]
    %v3487 = vld [vmem:[#allocation10 + $0xa58] sm:$0xff]
    %v3488 = vld [vmem:[#allocation10 + $0xa60] sm:$0xf]
    %v3489 = vld [vmem:[#allocation10 + $0xa64] sm:$0xff]
    %v3490 = vld [vmem:[#allocation10 + $0xa6c] sm:$0xff]
    %v3491 = vld [vmem:[#allocation10 + $0xa74] sm:$0xff]
    %v3492 = vld [vmem:[#allocation10 + $0xa7c] sm:$0xf]
    %v3493 = vld [vmem:[#allocation10 + $0xa80] sm:$0xff]
    %v3494 = vld [vmem:[#allocation10 + $0xa88] sm:$0xff]
    %v3495 = vld [vmem:[#allocation10 + $0xa90] sm:$0xff]
    %v3496 = vld [vmem:[#allocation10 + $0xa98] sm:$0xf]
    %v3497 = vld [vmem:[#allocation10 + $0xa9c] sm:$0xff]
    %v3498 = vld [vmem:[#allocation10 + $0xaa4] sm:$0xff]
    %v3499 = vld [vmem:[#allocation10 + $0xaac] sm:$0xff]
    %v3500 = vld [vmem:[#allocation10 + $0xab4] sm:$0xf]
    %v3501 = vld [vmem:[#allocation10 + $0xab8] sm:$0xff]
    %v3502 = vld [vmem:[#allocation10 + $0xac0] sm:$0xff]
    %v3503 = vld [vmem:[#allocation10 + $0xac8] sm:$0xff]
    %v3504 = vld [vmem:[#allocation10 + $0xad0] sm:$0xf]
    %v3505 = vld [vmem:[#allocation10 + $0xad4] sm:$0xff]
    %v3506 = vld [vmem:[#allocation10 + $0xadc] sm:$0xff]
    %v3507 = vld [vmem:[#allocation10 + $0xae4] sm:$0xff]
    %v3508 = vld [vmem:[#allocation10 + $0xaec] sm:$0xf]
    %v3509 = vld [vmem:[#allocation10 + $0xaf0] sm:$0xff]
    %v3510 = vld [vmem:[#allocation10 + $0xaf8] sm:$0xff]
    %v3511 = vld [vmem:[#allocation10 + $0xb00] sm:$0xff]
    %v3512 = vld [vmem:[#allocation10 + $0xb08] sm:$0xf]
    %v3513 = vld [vmem:[#allocation10 + $0xb0c] sm:$0xff]
    %v3514 = vld [vmem:[#allocation10 + $0xb14] sm:$0xff]
    %v3515 = vld [vmem:[#allocation10 + $0xb1c] sm:$0xff]
    %v3516 = vld [vmem:[#allocation10 + $0xb24] sm:$0xf]
    %v3517 = vld [vmem:[#allocation10 + $0xb28] sm:$0xff]
    %v3518 = vld [vmem:[#allocation10 + $0xb30] sm:$0xff]
    %v3519 = vld [vmem:[#allocation10 + $0xb38] sm:$0xff]
    %v3520 = vld [vmem:[#allocation10 + $0xb40] sm:$0xf]
    %v3521 = vld [vmem:[#allocation10 + $0xb44] sm:$0xff]
    %v3522 = vld [vmem:[#allocation10 + $0xb4c] sm:$0xff]
    %v3523 = vld [vmem:[#allocation10 + $0xb54] sm:$0xff]
    %v3524 = vld [vmem:[#allocation10 + $0xb5c] sm:$0xf]
    %v3525 = vld [vmem:[#allocation10 + $0xb60] sm:$0xff]
    %v3526 = vld [vmem:[#allocation10 + $0xb68] sm:$0xff]
    %v3527 = vld [vmem:[#allocation10 + $0xb70] sm:$0xff]
    %v3528 = vld [vmem:[#allocation10 + $0xb78] sm:$0xf]
    %v3529 = vld [vmem:[#allocation10 + $0xb7c] sm:$0xff]
    %v3530 = vld [vmem:[#allocation10 + $0xb84] sm:$0xff]
    %v3531 = vld [vmem:[#allocation10 + $0xb8c] sm:$0xff]
    %v3532 = vld [vmem:[#allocation10 + $0xb94] sm:$0xf]
    %v3533 = vld [vmem:[#allocation10 + $0xb98] sm:$0xff]
    %v3534 = vld [vmem:[#allocation10 + $0xba0] sm:$0xff]
    %v3535 = vld [vmem:[#allocation10 + $0xba8] sm:$0xff]
    %v3536 = vld [vmem:[#allocation10 + $0xbb0] sm:$0xf]
    %v3537 = vld [vmem:[#allocation10 + $0xbb4] sm:$0xff]
    %v3538 = vld [vmem:[#allocation10 + $0xbbc] sm:$0xff]
    %v3539 = vld [vmem:[#allocation10 + $0xbc4] sm:$0xff]
    %v3540 = vld [vmem:[#allocation10 + $0xbcc] sm:$0xf]
    %v3541 = vld [vmem:[#allocation10 + $0xbd0] sm:$0xff]
    %v3542 = vld [vmem:[#allocation10 + $0xbd8] sm:$0xff]
    %v3543 = vld [vmem:[#allocation10 + $0xbe0] sm:$0xff]
    %v3544 = vld [vmem:[#allocation10 + $0xbe8] sm:$0xf]
    %v3545 = vld [vmem:[#allocation10 + $0xbec] sm:$0xff]
    %v3546 = vld [vmem:[#allocation10 + $0xbf4] sm:$0xff]
    %v3547 = vld [vmem:[#allocation10 + $0xbfc] sm:$0xff]
    %v3548 = vld [vmem:[#allocation10 + $0xc04] sm:$0xf]
    %v3549 = vld [vmem:[#allocation10 + $0xc08] sm:$0xff]
    %v3550 = vld [vmem:[#allocation10 + $0xc10] sm:$0xff]
    %v3551 = vld [vmem:[#allocation10 + $0xc18] sm:$0xff]
    %v3552 = vld [vmem:[#allocation10 + $0xc20] sm:$0xf]
    %v3553 = vld [vmem:[#allocation10 + $0xc24] sm:$0xff]
    %v3554 = vld [vmem:[#allocation10 + $0xc2c] sm:$0xff]
    %v3555 = vld [vmem:[#allocation10 + $0xc34] sm:$0xff]
    %v3556 = vld [vmem:[#allocation10 + $0xc3c] sm:$0xf]
    %v3557 = vld [vmem:[#allocation10 + $0xc40] sm:$0xff]
    %v3558 = vld [vmem:[#allocation10 + $0xc48] sm:$0xff]
    %v3559 = vld [vmem:[#allocation10 + $0xc50] sm:$0xff]
    %v3560 = vld [vmem:[#allocation10 + $0xc58] sm:$0xf]
    %v3561 = vld [vmem:[#allocation10 + $0xc5c] sm:$0xff]
    %v3562 = vld [vmem:[#allocation10 + $0xc64] sm:$0xff]
    %v3563 = vld [vmem:[#allocation10 + $0xc6c] sm:$0xff]
    %v3564 = vld [vmem:[#allocation10 + $0xc74] sm:$0xf]
    %v3565 = vld [vmem:[#allocation10 + $0xc78] sm:$0xff]
    %v3566 = vld [vmem:[#allocation10 + $0xc80] sm:$0xff]
    %v3567 = vld [vmem:[#allocation10 + $0xc88] sm:$0xff]
    %v3568 = vld [vmem:[#allocation10 + $0xc90] sm:$0xf]
    %v3569 = vld [vmem:[#allocation10 + $0xc94] sm:$0xff]
    %v3570 = vld [vmem:[#allocation10 + $0xc9c] sm:$0xff]
    %v3571 = vld [vmem:[#allocation10 + $0xca4] sm:$0xff]
    %v3572 = vld [vmem:[#allocation10 + $0xcac] sm:$0xf]
    %v3573 = vld [vmem:[#allocation10 + $0xcb0] sm:$0xff]
    %v3574 = vld [vmem:[#allocation10 + $0xcb8] sm:$0xff]
    %v3575 = vld [vmem:[#allocation10 + $0xcc0] sm:$0xff]
    %v3576 = vld [vmem:[#allocation10 + $0xcc8] sm:$0xf]
    %v3577 = vld [vmem:[#allocation10 + $0xccc] sm:$0xff]
    %v3578 = vld [vmem:[#allocation10 + $0xcd4] sm:$0xff]
    %v3579 = vld [vmem:[#allocation10 + $0xcdc] sm:$0xff]
    %v3580 = vld [vmem:[#allocation10 + $0xce4] sm:$0xf]
    %v3581 = vld [vmem:[#allocation10 + $0xce8] sm:$0xff]
    %v3582 = vld [vmem:[#allocation10 + $0xcf0] sm:$0xff]
    %v3583 = vld [vmem:[#allocation10 + $0xcf8] sm:$0xff]
    %v3584 = vld [vmem:[#allocation10 + $0xd00] sm:$0xf]
    %v3585 = vld [vmem:[#allocation10 + $0xd04] sm:$0xff]
    %v3586 = vld [vmem:[#allocation10 + $0xd0c] sm:$0xff]
    %v3587 = vld [vmem:[#allocation10 + $0xd14] sm:$0xff]
    %v3588 = vld [vmem:[#allocation10 + $0xd1c] sm:$0xf]
    %v3589 = vld [vmem:[#allocation10 + $0xd20] sm:$0xff]
    %v3590 = vld [vmem:[#allocation10 + $0xd28] sm:$0xff]
    %v3591 = vld [vmem:[#allocation10 + $0xd30] sm:$0xff]
    %v3592 = vld [vmem:[#allocation10 + $0xd38] sm:$0xf]
    %v3593 = vld [vmem:[#allocation10 + $0xd3c] sm:$0xff]
    %v3594 = vld [vmem:[#allocation10 + $0xd44] sm:$0xff]
    %v3595 = vld [vmem:[#allocation10 + $0xd4c] sm:$0xff]
    %v3596 = vld [vmem:[#allocation10 + $0xd54] sm:$0xf]
    %v3597 = vld [vmem:[#allocation10 + $0xd58] sm:$0xff]
    %v3598 = vld [vmem:[#allocation10 + $0xd60] sm:$0xff]
    %v3599 = vld [vmem:[#allocation10 + $0xd68] sm:$0xff]
    %v3600 = vld [vmem:[#allocation10 + $0xd70] sm:$0xf]
    %v3601 = vld [vmem:[#allocation10 + $0xd74] sm:$0xff]
    %v3602 = vld [vmem:[#allocation10 + $0xd7c] sm:$0xff]
    %v3603 = vld [vmem:[#allocation10 + $0xd84] sm:$0xff]
    %v3604 = vld [vmem:[#allocation10 + $0xd8c] sm:$0xf]
    %v3605 = vld [vmem:[#allocation10 + $0xd90] sm:$0xff]
    %v3606 = vld [vmem:[#allocation10 + $0xd98] sm:$0xff]
    %v3607 = vld [vmem:[#allocation10 + $0xda0] sm:$0xff]
    %v3608 = vld [vmem:[#allocation10 + $0xda8] sm:$0xf]
    %v3609 = vld [vmem:[#allocation10 + $0xdac] sm:$0xff]
    %v3610 = vld [vmem:[#allocation10 + $0xdb4] sm:$0xff]
    %v3611 = vld [vmem:[#allocation10 + $0xdbc] sm:$0xff]
    %v3612 = vld [vmem:[#allocation10 + $0xdc4] sm:$0xf]
    %v3613 = vld [vmem:[#allocation10 + $0xdc8] sm:$0xff]
    %v3614 = vld [vmem:[#allocation10 + $0xdd0] sm:$0xff]
    %v3615 = vld [vmem:[#allocation10 + $0xdd8] sm:$0xff]
    %v3616 = vld [vmem:[#allocation10 + $0xde0] sm:$0xf]
    %v3617 = vld [vmem:[#allocation10 + $0xde4] sm:$0xff]
    %v3618 = vld [vmem:[#allocation10 + $0xdec] sm:$0xff]
    %v3619 = vld [vmem:[#allocation10 + $0xdf4] sm:$0xff]
    %v3620 = vld [vmem:[#allocation10 + $0xdfc] sm:$0xf]
    %v4133 = vunpack.c.l.b16 %v3109
    %v4134 = vunpack.c.h.b16 %v3109
    %v4135 = vunpack.c.l.b16 %v3110
    %v4136 = vunpack.c.h.b16 %v3110
    %v4137 = vunpack.c.l.b16 %v3111
    %v4138 = vunpack.c.h.b16 %v3111
    %v4139 = vunpack.c.l.b16 %v3112
    %v4140 = vunpack.c.l.b16 %v3113
    %v4141 = vunpack.c.h.b16 %v3113
    %v4142 = vunpack.c.l.b16 %v3114
    %v4143 = vunpack.c.h.b16 %v3114
    %v4144 = vunpack.c.l.b16 %v3115
    %v4145 = vunpack.c.h.b16 %v3115
    %v4146 = vunpack.c.l.b16 %v3116
    %v4147 = vunpack.c.l.b16 %v3117
    %v4148 = vunpack.c.h.b16 %v3117
    %v4149 = vunpack.c.l.b16 %v3118
    %v4150 = vunpack.c.h.b16 %v3118
    %v4151 = vunpack.c.l.b16 %v3119
    %v4152 = vunpack.c.h.b16 %v3119
    %v4153 = vunpack.c.l.b16 %v3120
    %v4154 = vunpack.c.l.b16 %v3121
    %v4155 = vunpack.c.h.b16 %v3121
    %v4156 = vunpack.c.l.b16 %v3122
    %v4157 = vunpack.c.h.b16 %v3122
    %v4158 = vunpack.c.l.b16 %v3123
    %v4159 = vunpack.c.h.b16 %v3123
    %v4160 = vunpack.c.l.b16 %v3124
    %v4161 = vunpack.c.l.b16 %v3125
    %v4162 = vunpack.c.h.b16 %v3125
    %v4163 = vunpack.c.l.b16 %v3126
    %v4164 = vunpack.c.h.b16 %v3126
    %v4165 = vunpack.c.l.b16 %v3127
    %v4166 = vunpack.c.h.b16 %v3127
    %v4167 = vunpack.c.l.b16 %v3128
    %v4168 = vunpack.c.l.b16 %v3129
    %v4169 = vunpack.c.h.b16 %v3129
    %v4170 = vunpack.c.l.b16 %v3130
    %v4171 = vunpack.c.h.b16 %v3130
    %v4172 = vunpack.c.l.b16 %v3131
    %v4173 = vunpack.c.h.b16 %v3131
    %v4174 = vunpack.c.l.b16 %v3132
    %v4175 = vunpack.c.l.b16 %v3133
    %v4176 = vunpack.c.h.b16 %v3133
    %v4177 = vunpack.c.l.b16 %v3134
    %v4178 = vunpack.c.h.b16 %v3134
    %v4179 = vunpack.c.l.b16 %v3135
    %v4180 = vunpack.c.h.b16 %v3135
    %v4181 = vunpack.c.l.b16 %v3136
    %v4182 = vunpack.c.l.b16 %v3137
    %v4183 = vunpack.c.h.b16 %v3137
    %v4184 = vunpack.c.l.b16 %v3138
    %v4185 = vunpack.c.h.b16 %v3138
    %v4186 = vunpack.c.l.b16 %v3139
    %v4187 = vunpack.c.h.b16 %v3139
    %v4188 = vunpack.c.l.b16 %v3140
    %v4189 = vunpack.c.l.b16 %v3141
    %v4190 = vunpack.c.h.b16 %v3141
    %v4191 = vunpack.c.l.b16 %v3142
    %v4192 = vunpack.c.h.b16 %v3142
    %v4193 = vunpack.c.l.b16 %v3143
    %v4194 = vunpack.c.h.b16 %v3143
    %v4195 = vunpack.c.l.b16 %v3144
    %v4196 = vunpack.c.l.b16 %v3145
    %v4197 = vunpack.c.h.b16 %v3145
    %v4198 = vunpack.c.l.b16 %v3146
    %v4199 = vunpack.c.h.b16 %v3146
    %v4200 = vunpack.c.l.b16 %v3147
    %v4201 = vunpack.c.h.b16 %v3147
    %v4202 = vunpack.c.l.b16 %v3148
    %v4203 = vunpack.c.l.b16 %v3149
    %v4204 = vunpack.c.h.b16 %v3149
    %v4205 = vunpack.c.l.b16 %v3150
    %v4206 = vunpack.c.h.b16 %v3150
    %v4207 = vunpack.c.l.b16 %v3151
    %v4208 = vunpack.c.h.b16 %v3151
    %v4209 = vunpack.c.l.b16 %v3152
    %v4210 = vunpack.c.l.b16 %v3153
    %v4211 = vunpack.c.h.b16 %v3153
    %v4212 = vunpack.c.l.b16 %v3154
    %v4213 = vunpack.c.h.b16 %v3154
    %v4214 = vunpack.c.l.b16 %v3155
    %v4215 = vunpack.c.h.b16 %v3155
    %v4216 = vunpack.c.l.b16 %v3156
    %v4217 = vunpack.c.l.b16 %v3157
    %v4218 = vunpack.c.h.b16 %v3157
    %v4219 = vunpack.c.l.b16 %v3158
    %v4220 = vunpack.c.h.b16 %v3158
    %v4221 = vunpack.c.l.b16 %v3159
    %v4222 = vunpack.c.h.b16 %v3159
    %v4223 = vunpack.c.l.b16 %v3160
    %v4224 = vunpack.c.l.b16 %v3161
    %v4225 = vunpack.c.h.b16 %v3161
    %v4226 = vunpack.c.l.b16 %v3162
    %v4227 = vunpack.c.h.b16 %v3162
    %v4228 = vunpack.c.l.b16 %v3163
    %v4229 = vunpack.c.h.b16 %v3163
    %v4230 = vunpack.c.l.b16 %v3164
    %v4231 = vunpack.c.l.b16 %v3165
    %v4232 = vunpack.c.h.b16 %v3165
    %v4233 = vunpack.c.l.b16 %v3166
    %v4234 = vunpack.c.h.b16 %v3166
    %v4235 = vunpack.c.l.b16 %v3167
    %v4236 = vunpack.c.h.b16 %v3167
    %v4237 = vunpack.c.l.b16 %v3168
    %v4238 = vunpack.c.l.b16 %v3169
    %v4239 = vunpack.c.h.b16 %v3169
    %v4240 = vunpack.c.l.b16 %v3170
    %v4241 = vunpack.c.h.b16 %v3170
    %v4242 = vunpack.c.l.b16 %v3171
    %v4243 = vunpack.c.h.b16 %v3171
    %v4244 = vunpack.c.l.b16 %v3172
    %v4245 = vunpack.c.l.b16 %v3173
    %v4246 = vunpack.c.h.b16 %v3173
    %v4247 = vunpack.c.l.b16 %v3174
    %v4248 = vunpack.c.h.b16 %v3174
    %v4249 = vunpack.c.l.b16 %v3175
    %v4250 = vunpack.c.h.b16 %v3175
    %v4251 = vunpack.c.l.b16 %v3176
    %v4252 = vunpack.c.l.b16 %v3177
    %v4253 = vunpack.c.h.b16 %v3177
    %v4254 = vunpack.c.l.b16 %v3178
    %v4255 = vunpack.c.h.b16 %v3178
    %v4256 = vunpack.c.l.b16 %v3179
    %v4257 = vunpack.c.h.b16 %v3179
    %v4258 = vunpack.c.l.b16 %v3180
    %v4259 = vunpack.c.l.b16 %v3181
    %v4260 = vunpack.c.h.b16 %v3181
    %v4261 = vunpack.c.l.b16 %v3182
    %v4262 = vunpack.c.h.b16 %v3182
    %v4263 = vunpack.c.l.b16 %v3183
    %v4264 = vunpack.c.h.b16 %v3183
    %v4265 = vunpack.c.l.b16 %v3184
    %v4266 = vunpack.c.l.b16 %v3185
    %v4267 = vunpack.c.h.b16 %v3185
    %v4268 = vunpack.c.l.b16 %v3186
    %v4269 = vunpack.c.h.b16 %v3186
    %v4270 = vunpack.c.l.b16 %v3187
    %v4271 = vunpack.c.h.b16 %v3187
    %v4272 = vunpack.c.l.b16 %v3188
    %v4273 = vunpack.c.l.b16 %v3189
    %v4274 = vunpack.c.h.b16 %v3189
    %v4275 = vunpack.c.l.b16 %v3190
    %v4276 = vunpack.c.h.b16 %v3190
    %v4277 = vunpack.c.l.b16 %v3191
    %v4278 = vunpack.c.h.b16 %v3191
    %v4279 = vunpack.c.l.b16 %v3192
    %v4280 = vunpack.c.l.b16 %v3193
    %v4281 = vunpack.c.h.b16 %v3193
    %v4282 = vunpack.c.l.b16 %v3194
    %v4283 = vunpack.c.h.b16 %v3194
    %v4284 = vunpack.c.l.b16 %v3195
    %v4285 = vunpack.c.h.b16 %v3195
    %v4286 = vunpack.c.l.b16 %v3196
    %v4287 = vunpack.c.l.b16 %v3197
    %v4288 = vunpack.c.h.b16 %v3197
    %v4289 = vunpack.c.l.b16 %v3198
    %v4290 = vunpack.c.h.b16 %v3198
    %v4291 = vunpack.c.l.b16 %v3199
    %v4292 = vunpack.c.h.b16 %v3199
    %v4293 = vunpack.c.l.b16 %v3200
    %v4294 = vunpack.c.l.b16 %v3201
    %v4295 = vunpack.c.h.b16 %v3201
    %v4296 = vunpack.c.l.b16 %v3202
    %v4297 = vunpack.c.h.b16 %v3202
    %v4298 = vunpack.c.l.b16 %v3203
    %v4299 = vunpack.c.h.b16 %v3203
    %v4300 = vunpack.c.l.b16 %v3204
    %v4301 = vunpack.c.l.b16 %v3205
    %v4302 = vunpack.c.h.b16 %v3205
    %v4303 = vunpack.c.l.b16 %v3206
    %v4304 = vunpack.c.h.b16 %v3206
    %v4305 = vunpack.c.l.b16 %v3207
    %v4306 = vunpack.c.h.b16 %v3207
    %v4307 = vunpack.c.l.b16 %v3208
    %v4308 = vunpack.c.l.b16 %v3209
    %v4309 = vunpack.c.h.b16 %v3209
    %v4310 = vunpack.c.l.b16 %v3210
    %v4311 = vunpack.c.h.b16 %v3210
    %v4312 = vunpack.c.l.b16 %v3211
    %v4313 = vunpack.c.h.b16 %v3211
    %v4314 = vunpack.c.l.b16 %v3212
    %v4315 = vunpack.c.l.b16 %v3213
    %v4316 = vunpack.c.h.b16 %v3213
    %v4317 = vunpack.c.l.b16 %v3214
    %v4318 = vunpack.c.h.b16 %v3214
    %v4319 = vunpack.c.l.b16 %v3215
    %v4320 = vunpack.c.h.b16 %v3215
    %v4321 = vunpack.c.l.b16 %v3216
    %v4322 = vunpack.c.l.b16 %v3217
    %v4323 = vunpack.c.h.b16 %v3217
    %v4324 = vunpack.c.l.b16 %v3218
    %v4325 = vunpack.c.h.b16 %v3218
    %v4326 = vunpack.c.l.b16 %v3219
    %v4327 = vunpack.c.h.b16 %v3219
    %v4328 = vunpack.c.l.b16 %v3220
    %v4329 = vunpack.c.l.b16 %v3221
    %v4330 = vunpack.c.h.b16 %v3221
    %v4331 = vunpack.c.l.b16 %v3222
    %v4332 = vunpack.c.h.b16 %v3222
    %v4333 = vunpack.c.l.b16 %v3223
    %v4334 = vunpack.c.h.b16 %v3223
    %v4335 = vunpack.c.l.b16 %v3224
    %v4336 = vunpack.c.l.b16 %v3225
    %v4337 = vunpack.c.h.b16 %v3225
    %v4338 = vunpack.c.l.b16 %v3226
    %v4339 = vunpack.c.h.b16 %v3226
    %v4340 = vunpack.c.l.b16 %v3227
    %v4341 = vunpack.c.h.b16 %v3227
    %v4342 = vunpack.c.l.b16 %v3228
    %v4343 = vunpack.c.l.b16 %v3229
    %v4344 = vunpack.c.h.b16 %v3229
    %v4345 = vunpack.c.l.b16 %v3230
    %v4346 = vunpack.c.h.b16 %v3230
    %v4347 = vunpack.c.l.b16 %v3231
    %v4348 = vunpack.c.h.b16 %v3231
    %v4349 = vunpack.c.l.b16 %v3232
    %v4350 = vunpack.c.l.b16 %v3233
    %v4351 = vunpack.c.h.b16 %v3233
    %v4352 = vunpack.c.l.b16 %v3234
    %v4353 = vunpack.c.h.b16 %v3234
    %v4354 = vunpack.c.l.b16 %v3235
    %v4355 = vunpack.c.h.b16 %v3235
    %v4356 = vunpack.c.l.b16 %v3236
    %v4357 = vunpack.c.l.b16 %v3237
    %v4358 = vunpack.c.h.b16 %v3237
    %v4359 = vunpack.c.l.b16 %v3238
    %v4360 = vunpack.c.h.b16 %v3238
    %v4361 = vunpack.c.l.b16 %v3239
    %v4362 = vunpack.c.h.b16 %v3239
    %v4363 = vunpack.c.l.b16 %v3240
    %v4364 = vunpack.c.l.b16 %v3241
    %v4365 = vunpack.c.h.b16 %v3241
    %v4366 = vunpack.c.l.b16 %v3242
    %v4367 = vunpack.c.h.b16 %v3242
    %v4368 = vunpack.c.l.b16 %v3243
    %v4369 = vunpack.c.h.b16 %v3243
    %v4370 = vunpack.c.l.b16 %v3244
    %v4371 = vunpack.c.l.b16 %v3245
    %v4372 = vunpack.c.h.b16 %v3245
    %v4373 = vunpack.c.l.b16 %v3246
    %v4374 = vunpack.c.h.b16 %v3246
    %v4375 = vunpack.c.l.b16 %v3247
    %v4376 = vunpack.c.h.b16 %v3247
    %v4377 = vunpack.c.l.b16 %v3248
    %v4378 = vunpack.c.l.b16 %v3249
    %v4379 = vunpack.c.h.b16 %v3249
    %v4380 = vunpack.c.l.b16 %v3250
    %v4381 = vunpack.c.h.b16 %v3250
    %v4382 = vunpack.c.l.b16 %v3251
    %v4383 = vunpack.c.h.b16 %v3251
    %v4384 = vunpack.c.l.b16 %v3252
    %v4385 = vunpack.c.l.b16 %v3253
    %v4386 = vunpack.c.h.b16 %v3253
    %v4387 = vunpack.c.l.b16 %v3254
    %v4388 = vunpack.c.h.b16 %v3254
    %v4389 = vunpack.c.l.b16 %v3255
    %v4390 = vunpack.c.h.b16 %v3255
    %v4391 = vunpack.c.l.b16 %v3256
    %v4392 = vunpack.c.l.b16 %v3257
    %v4393 = vunpack.c.h.b16 %v3257
    %v4394 = vunpack.c.l.b16 %v3258
    %v4395 = vunpack.c.h.b16 %v3258
    %v4396 = vunpack.c.l.b16 %v3259
    %v4397 = vunpack.c.h.b16 %v3259
    %v4398 = vunpack.c.l.b16 %v3260
    %v4399 = vunpack.c.l.b16 %v3261
    %v4400 = vunpack.c.h.b16 %v3261
    %v4401 = vunpack.c.l.b16 %v3262
    %v4402 = vunpack.c.h.b16 %v3262
    %v4403 = vunpack.c.l.b16 %v3263
    %v4404 = vunpack.c.h.b16 %v3263
    %v4405 = vunpack.c.l.b16 %v3264
    %v4406 = vunpack.c.l.b16 %v3265
    %v4407 = vunpack.c.h.b16 %v3265
    %v4408 = vunpack.c.l.b16 %v3266
    %v4409 = vunpack.c.h.b16 %v3266
    %v4410 = vunpack.c.l.b16 %v3267
    %v4411 = vunpack.c.h.b16 %v3267
    %v4412 = vunpack.c.l.b16 %v3268
    %v4413 = vunpack.c.l.b16 %v3269
    %v4414 = vunpack.c.h.b16 %v3269
    %v4415 = vunpack.c.l.b16 %v3270
    %v4416 = vunpack.c.h.b16 %v3270
    %v4417 = vunpack.c.l.b16 %v3271
    %v4418 = vunpack.c.h.b16 %v3271
    %v4419 = vunpack.c.l.b16 %v3272
    %v4420 = vunpack.c.l.b16 %v3273
    %v4421 = vunpack.c.h.b16 %v3273
    %v4422 = vunpack.c.l.b16 %v3274
    %v4423 = vunpack.c.h.b16 %v3274
    %v4424 = vunpack.c.l.b16 %v3275
    %v4425 = vunpack.c.h.b16 %v3275
    %v4426 = vunpack.c.l.b16 %v3276
    %v4427 = vunpack.c.l.b16 %v3277
    %v4428 = vunpack.c.h.b16 %v3277
    %v4429 = vunpack.c.l.b16 %v3278
    %v4430 = vunpack.c.h.b16 %v3278
    %v4431 = vunpack.c.l.b16 %v3279
    %v4432 = vunpack.c.h.b16 %v3279
    %v4433 = vunpack.c.l.b16 %v3280
    %v4434 = vunpack.c.l.b16 %v3281
    %v4435 = vunpack.c.h.b16 %v3281
    %v4436 = vunpack.c.l.b16 %v3282
    %v4437 = vunpack.c.h.b16 %v3282
    %v4438 = vunpack.c.l.b16 %v3283
    %v4439 = vunpack.c.h.b16 %v3283
    %v4440 = vunpack.c.l.b16 %v3284
    %v4441 = vunpack.c.l.b16 %v3285
    %v4442 = vunpack.c.h.b16 %v3285
    %v4443 = vunpack.c.l.b16 %v3286
    %v4444 = vunpack.c.h.b16 %v3286
    %v4445 = vunpack.c.l.b16 %v3287
    %v4446 = vunpack.c.h.b16 %v3287
    %v4447 = vunpack.c.l.b16 %v3288
    %v4448 = vunpack.c.l.b16 %v3289
    %v4449 = vunpack.c.h.b16 %v3289
    %v4450 = vunpack.c.l.b16 %v3290
    %v4451 = vunpack.c.h.b16 %v3290
    %v4452 = vunpack.c.l.b16 %v3291
    %v4453 = vunpack.c.h.b16 %v3291
    %v4454 = vunpack.c.l.b16 %v3292
    %v4455 = vunpack.c.l.b16 %v3293
    %v4456 = vunpack.c.h.b16 %v3293
    %v4457 = vunpack.c.l.b16 %v3294
    %v4458 = vunpack.c.h.b16 %v3294
    %v4459 = vunpack.c.l.b16 %v3295
    %v4460 = vunpack.c.h.b16 %v3295
    %v4461 = vunpack.c.l.b16 %v3296
    %v4462 = vunpack.c.l.b16 %v3297
    %v4463 = vunpack.c.h.b16 %v3297
    %v4464 = vunpack.c.l.b16 %v3298
    %v4465 = vunpack.c.h.b16 %v3298
    %v4466 = vunpack.c.l.b16 %v3299
    %v4467 = vunpack.c.h.b16 %v3299
    %v4468 = vunpack.c.l.b16 %v3300
    %v4469 = vunpack.c.l.b16 %v3301
    %v4470 = vunpack.c.h.b16 %v3301
    %v4471 = vunpack.c.l.b16 %v3302
    %v4472 = vunpack.c.h.b16 %v3302
    %v4473 = vunpack.c.l.b16 %v3303
    %v4474 = vunpack.c.h.b16 %v3303
    %v4475 = vunpack.c.l.b16 %v3304
    %v4476 = vunpack.c.l.b16 %v3305
    %v4477 = vunpack.c.h.b16 %v3305
    %v4478 = vunpack.c.l.b16 %v3306
    %v4479 = vunpack.c.h.b16 %v3306
    %v4480 = vunpack.c.l.b16 %v3307
    %v4481 = vunpack.c.h.b16 %v3307
    %v4482 = vunpack.c.l.b16 %v3308
    %v4483 = vunpack.c.l.b16 %v3309
    %v4484 = vunpack.c.h.b16 %v3309
    %v4485 = vunpack.c.l.b16 %v3310
    %v4486 = vunpack.c.h.b16 %v3310
    %v4487 = vunpack.c.l.b16 %v3311
    %v4488 = vunpack.c.h.b16 %v3311
    %v4489 = vunpack.c.l.b16 %v3312
    %v4490 = vunpack.c.l.b16 %v3313
    %v4491 = vunpack.c.h.b16 %v3313
    %v4492 = vunpack.c.l.b16 %v3314
    %v4493 = vunpack.c.h.b16 %v3314
    %v4494 = vunpack.c.l.b16 %v3315
    %v4495 = vunpack.c.h.b16 %v3315
    %v4496 = vunpack.c.l.b16 %v3316
    %v4497 = vunpack.c.l.b16 %v3317
    %v4498 = vunpack.c.h.b16 %v3317
    %v4499 = vunpack.c.l.b16 %v3318
    %v4500 = vunpack.c.h.b16 %v3318
    %v4501 = vunpack.c.l.b16 %v3319
    %v4502 = vunpack.c.h.b16 %v3319
    %v4503 = vunpack.c.l.b16 %v3320
    %v4504 = vunpack.c.l.b16 %v3321
    %v4505 = vunpack.c.h.b16 %v3321
    %v4506 = vunpack.c.l.b16 %v3322
    %v4507 = vunpack.c.h.b16 %v3322
    %v4508 = vunpack.c.l.b16 %v3323
    %v4509 = vunpack.c.h.b16 %v3323
    %v4510 = vunpack.c.l.b16 %v3324
    %v4511 = vunpack.c.l.b16 %v3325
    %v4512 = vunpack.c.h.b16 %v3325
    %v4513 = vunpack.c.l.b16 %v3326
    %v4514 = vunpack.c.h.b16 %v3326
    %v4515 = vunpack.c.l.b16 %v3327
    %v4516 = vunpack.c.h.b16 %v3327
    %v4517 = vunpack.c.l.b16 %v3328
    %v4518 = vunpack.c.l.b16 %v3329
    %v4519 = vunpack.c.h.b16 %v3329
    %v4520 = vunpack.c.l.b16 %v3330
    %v4521 = vunpack.c.h.b16 %v3330
    %v4522 = vunpack.c.l.b16 %v3331
    %v4523 = vunpack.c.h.b16 %v3331
    %v4524 = vunpack.c.l.b16 %v3332
    %v4525 = vunpack.c.l.b16 %v3333
    %v4526 = vunpack.c.h.b16 %v3333
    %v4527 = vunpack.c.l.b16 %v3334
    %v4528 = vunpack.c.h.b16 %v3334
    %v4529 = vunpack.c.l.b16 %v3335
    %v4530 = vunpack.c.h.b16 %v3335
    %v4531 = vunpack.c.l.b16 %v3336
    %v4532 = vunpack.c.l.b16 %v3337
    %v4533 = vunpack.c.h.b16 %v3337
    %v4534 = vunpack.c.l.b16 %v3338
    %v4535 = vunpack.c.h.b16 %v3338
    %v4536 = vunpack.c.l.b16 %v3339
    %v4537 = vunpack.c.h.b16 %v3339
    %v4538 = vunpack.c.l.b16 %v3340
    %v4539 = vunpack.c.l.b16 %v3341
    %v4540 = vunpack.c.h.b16 %v3341
    %v4541 = vunpack.c.l.b16 %v3342
    %v4542 = vunpack.c.h.b16 %v3342
    %v4543 = vunpack.c.l.b16 %v3343
    %v4544 = vunpack.c.h.b16 %v3343
    %v4545 = vunpack.c.l.b16 %v3344
    %v4546 = vunpack.c.l.b16 %v3345
    %v4547 = vunpack.c.h.b16 %v3345
    %v4548 = vunpack.c.l.b16 %v3346
    %v4549 = vunpack.c.h.b16 %v3346
    %v4550 = vunpack.c.l.b16 %v3347
    %v4551 = vunpack.c.h.b16 %v3347
    %v4552 = vunpack.c.l.b16 %v3348
    %v4553 = vunpack.c.l.b16 %v3349
    %v4554 = vunpack.c.h.b16 %v3349
    %v4555 = vunpack.c.l.b16 %v3350
    %v4556 = vunpack.c.h.b16 %v3350
    %v4557 = vunpack.c.l.b16 %v3351
    %v4558 = vunpack.c.h.b16 %v3351
    %v4559 = vunpack.c.l.b16 %v3352
    %v4560 = vunpack.c.l.b16 %v3353
    %v4561 = vunpack.c.h.b16 %v3353
    %v4562 = vunpack.c.l.b16 %v3354
    %v4563 = vunpack.c.h.b16 %v3354
    %v4564 = vunpack.c.l.b16 %v3355
    %v4565 = vunpack.c.h.b16 %v3355
    %v4566 = vunpack.c.l.b16 %v3356
    %v4567 = vunpack.c.l.b16 %v3357
    %v4568 = vunpack.c.h.b16 %v3357
    %v4569 = vunpack.c.l.b16 %v3358
    %v4570 = vunpack.c.h.b16 %v3358
    %v4571 = vunpack.c.l.b16 %v3359
    %v4572 = vunpack.c.h.b16 %v3359
    %v4573 = vunpack.c.l.b16 %v3360
    %v4574 = vunpack.c.l.b16 %v3361
    %v4575 = vunpack.c.h.b16 %v3361
    %v4576 = vunpack.c.l.b16 %v3362
    %v4577 = vunpack.c.h.b16 %v3362
    %v4578 = vunpack.c.l.b16 %v3363
    %v4579 = vunpack.c.h.b16 %v3363
    %v4580 = vunpack.c.l.b16 %v3364
    %v4581 = vunpack.c.l.b16 %v3365
    %v4582 = vunpack.c.h.b16 %v3365
    %v4583 = vunpack.c.l.b16 %v3366
    %v4584 = vunpack.c.h.b16 %v3366
    %v4585 = vunpack.c.l.b16 %v3367
    %v4586 = vunpack.c.h.b16 %v3367
    %v4587 = vunpack.c.l.b16 %v3368
    %v4588 = vunpack.c.l.b16 %v3369
    %v4589 = vunpack.c.h.b16 %v3369
    %v4590 = vunpack.c.l.b16 %v3370
    %v4591 = vunpack.c.h.b16 %v3370
    %v4592 = vunpack.c.l.b16 %v3371
    %v4593 = vunpack.c.h.b16 %v3371
    %v4594 = vunpack.c.l.b16 %v3372
    %v4595 = vunpack.c.l.b16 %v3373
    %v4596 = vunpack.c.h.b16 %v3373
    %v4597 = vunpack.c.l.b16 %v3374
    %v4598 = vunpack.c.h.b16 %v3374
    %v4599 = vunpack.c.l.b16 %v3375
    %v4600 = vunpack.c.h.b16 %v3375
    %v4601 = vunpack.c.l.b16 %v3376
    %v4602 = vunpack.c.l.b16 %v3377
    %v4603 = vunpack.c.h.b16 %v3377
    %v4604 = vunpack.c.l.b16 %v3378
    %v4605 = vunpack.c.h.b16 %v3378
    %v4606 = vunpack.c.l.b16 %v3379
    %v4607 = vunpack.c.h.b16 %v3379
    %v4608 = vunpack.c.l.b16 %v3380
    %v4609 = vunpack.c.l.b16 %v3381
    %v4610 = vunpack.c.h.b16 %v3381
    %v4611 = vunpack.c.l.b16 %v3382
    %v4612 = vunpack.c.h.b16 %v3382
    %v4613 = vunpack.c.l.b16 %v3383
    %v4614 = vunpack.c.h.b16 %v3383
    %v4615 = vunpack.c.l.b16 %v3384
    %v4616 = vunpack.c.l.b16 %v3385
    %v4617 = vunpack.c.h.b16 %v3385
    %v4618 = vunpack.c.l.b16 %v3386
    %v4619 = vunpack.c.h.b16 %v3386
    %v4620 = vunpack.c.l.b16 %v3387
    %v4621 = vunpack.c.h.b16 %v3387
    %v4622 = vunpack.c.l.b16 %v3388
    %v4623 = vunpack.c.l.b16 %v3389
    %v4624 = vunpack.c.h.b16 %v3389
    %v4625 = vunpack.c.l.b16 %v3390
    %v4626 = vunpack.c.h.b16 %v3390
    %v4627 = vunpack.c.l.b16 %v3391
    %v4628 = vunpack.c.h.b16 %v3391
    %v4629 = vunpack.c.l.b16 %v3392
    %v4630 = vunpack.c.l.b16 %v3393
    %v4631 = vunpack.c.h.b16 %v3393
    %v4632 = vunpack.c.l.b16 %v3394
    %v4633 = vunpack.c.h.b16 %v3394
    %v4634 = vunpack.c.l.b16 %v3395
    %v4635 = vunpack.c.h.b16 %v3395
    %v4636 = vunpack.c.l.b16 %v3396
    %v4637 = vunpack.c.l.b16 %v3397
    %v4638 = vunpack.c.h.b16 %v3397
    %v4639 = vunpack.c.l.b16 %v3398
    %v4640 = vunpack.c.h.b16 %v3398
    %v4641 = vunpack.c.l.b16 %v3399
    %v4642 = vunpack.c.h.b16 %v3399
    %v4643 = vunpack.c.l.b16 %v3400
    %v4644 = vunpack.c.l.b16 %v3401
    %v4645 = vunpack.c.h.b16 %v3401
    %v4646 = vunpack.c.l.b16 %v3402
    %v4647 = vunpack.c.h.b16 %v3402
    %v4648 = vunpack.c.l.b16 %v3403
    %v4649 = vunpack.c.h.b16 %v3403
    %v4650 = vunpack.c.l.b16 %v3404
    %v4651 = vunpack.c.l.b16 %v3405
    %v4652 = vunpack.c.h.b16 %v3405
    %v4653 = vunpack.c.l.b16 %v3406
    %v4654 = vunpack.c.h.b16 %v3406
    %v4655 = vunpack.c.l.b16 %v3407
    %v4656 = vunpack.c.h.b16 %v3407
    %v4657 = vunpack.c.l.b16 %v3408
    %v4658 = vunpack.c.l.b16 %v3409
    %v4659 = vunpack.c.h.b16 %v3409
    %v4660 = vunpack.c.l.b16 %v3410
    %v4661 = vunpack.c.h.b16 %v3410
    %v4662 = vunpack.c.l.b16 %v3411
    %v4663 = vunpack.c.h.b16 %v3411
    %v4664 = vunpack.c.l.b16 %v3412
    %v4665 = vunpack.c.l.b16 %v3413
    %v4666 = vunpack.c.h.b16 %v3413
    %v4667 = vunpack.c.l.b16 %v3414
    %v4668 = vunpack.c.h.b16 %v3414
    %v4669 = vunpack.c.l.b16 %v3415
    %v4670 = vunpack.c.h.b16 %v3415
    %v4671 = vunpack.c.l.b16 %v3416
    %v4672 = vunpack.c.l.b16 %v3417
    %v4673 = vunpack.c.h.b16 %v3417
    %v4674 = vunpack.c.l.b16 %v3418
    %v4675 = vunpack.c.h.b16 %v3418
    %v4676 = vunpack.c.l.b16 %v3419
    %v4677 = vunpack.c.h.b16 %v3419
    %v4678 = vunpack.c.l.b16 %v3420
    %v4679 = vunpack.c.l.b16 %v3421
    %v4680 = vunpack.c.h.b16 %v3421
    %v4681 = vunpack.c.l.b16 %v3422
    %v4682 = vunpack.c.h.b16 %v3422
    %v4683 = vunpack.c.l.b16 %v3423
    %v4684 = vunpack.c.h.b16 %v3423
    %v4685 = vunpack.c.l.b16 %v3424
    %v4686 = vunpack.c.l.b16 %v3425
    %v4687 = vunpack.c.h.b16 %v3425
    %v4688 = vunpack.c.l.b16 %v3426
    %v4689 = vunpack.c.h.b16 %v3426
    %v4690 = vunpack.c.l.b16 %v3427
    %v4691 = vunpack.c.h.b16 %v3427
    %v4692 = vunpack.c.l.b16 %v3428
    %v4693 = vunpack.c.l.b16 %v3429
    %v4694 = vunpack.c.h.b16 %v3429
    %v4695 = vunpack.c.l.b16 %v3430
    %v4696 = vunpack.c.h.b16 %v3430
    %v4697 = vunpack.c.l.b16 %v3431
    %v4698 = vunpack.c.h.b16 %v3431
    %v4699 = vunpack.c.l.b16 %v3432
    %v4700 = vunpack.c.l.b16 %v3433
    %v4701 = vunpack.c.h.b16 %v3433
    %v4702 = vunpack.c.l.b16 %v3434
    %v4703 = vunpack.c.h.b16 %v3434
    %v4704 = vunpack.c.l.b16 %v3435
    %v4705 = vunpack.c.h.b16 %v3435
    %v4706 = vunpack.c.l.b16 %v3436
    %v4707 = vunpack.c.l.b16 %v3437
    %v4708 = vunpack.c.h.b16 %v3437
    %v4709 = vunpack.c.l.b16 %v3438
    %v4710 = vunpack.c.h.b16 %v3438
    %v4711 = vunpack.c.l.b16 %v3439
    %v4712 = vunpack.c.h.b16 %v3439
    %v4713 = vunpack.c.l.b16 %v3440
    %v4714 = vunpack.c.l.b16 %v3441
    %v4715 = vunpack.c.h.b16 %v3441
    %v4716 = vunpack.c.l.b16 %v3442
    %v4717 = vunpack.c.h.b16 %v3442
    %v4718 = vunpack.c.l.b16 %v3443
    %v4719 = vunpack.c.h.b16 %v3443
    %v4720 = vunpack.c.l.b16 %v3444
    %v4721 = vunpack.c.l.b16 %v3445
    %v4722 = vunpack.c.h.b16 %v3445
    %v4723 = vunpack.c.l.b16 %v3446
    %v4724 = vunpack.c.h.b16 %v3446
    %v4725 = vunpack.c.l.b16 %v3447
    %v4726 = vunpack.c.h.b16 %v3447
    %v4727 = vunpack.c.l.b16 %v3448
    %v4728 = vunpack.c.l.b16 %v3449
    %v4729 = vunpack.c.h.b16 %v3449
    %v4730 = vunpack.c.l.b16 %v3450
    %v4731 = vunpack.c.h.b16 %v3450
    %v4732 = vunpack.c.l.b16 %v3451
    %v4733 = vunpack.c.h.b16 %v3451
    %v4734 = vunpack.c.l.b16 %v3452
    %v4735 = vunpack.c.l.b16 %v3453
    %v4736 = vunpack.c.h.b16 %v3453
    %v4737 = vunpack.c.l.b16 %v3454
    %v4738 = vunpack.c.h.b16 %v3454
    %v4739 = vunpack.c.l.b16 %v3455
    %v4740 = vunpack.c.h.b16 %v3455
    %v4741 = vunpack.c.l.b16 %v3456
    %v4742 = vunpack.c.l.b16 %v3457
    %v4743 = vunpack.c.h.b16 %v3457
    %v4744 = vunpack.c.l.b16 %v3458
    %v4745 = vunpack.c.h.b16 %v3458
    %v4746 = vunpack.c.l.b16 %v3459
    %v4747 = vunpack.c.h.b16 %v3459
    %v4748 = vunpack.c.l.b16 %v3460
    %v4749 = vunpack.c.l.b16 %v3461
    %v4750 = vunpack.c.h.b16 %v3461
    %v4751 = vunpack.c.l.b16 %v3462
    %v4752 = vunpack.c.h.b16 %v3462
    %v4753 = vunpack.c.l.b16 %v3463
    %v4754 = vunpack.c.h.b16 %v3463
    %v4755 = vunpack.c.l.b16 %v3464
    %v4756 = vunpack.c.l.b16 %v3465
    %v4757 = vunpack.c.h.b16 %v3465
    %v4758 = vunpack.c.l.b16 %v3466
    %v4759 = vunpack.c.h.b16 %v3466
    %v4760 = vunpack.c.l.b16 %v3467
    %v4761 = vunpack.c.h.b16 %v3467
    %v4762 = vunpack.c.l.b16 %v3468
    %v4763 = vunpack.c.l.b16 %v3469
    %v4764 = vunpack.c.h.b16 %v3469
    %v4765 = vunpack.c.l.b16 %v3470
    %v4766 = vunpack.c.h.b16 %v3470
    %v4767 = vunpack.c.l.b16 %v3471
    %v4768 = vunpack.c.h.b16 %v3471
    %v4769 = vunpack.c.l.b16 %v3472
    %v4770 = vunpack.c.l.b16 %v3473
    %v4771 = vunpack.c.h.b16 %v3473
    %v4772 = vunpack.c.l.b16 %v3474
    %v4773 = vunpack.c.h.b16 %v3474
    %v4774 = vunpack.c.l.b16 %v3475
    %v4775 = vunpack.c.h.b16 %v3475
    %v4776 = vunpack.c.l.b16 %v3476
    %v4777 = vunpack.c.l.b16 %v3477
    %v4778 = vunpack.c.h.b16 %v3477
    %v4779 = vunpack.c.l.b16 %v3478
    %v4780 = vunpack.c.h.b16 %v3478
    %v4781 = vunpack.c.l.b16 %v3479
    %v4782 = vunpack.c.h.b16 %v3479
    %v4783 = vunpack.c.l.b16 %v3480
    %v4784 = vunpack.c.l.b16 %v3481
    %v4785 = vunpack.c.h.b16 %v3481
    %v4786 = vunpack.c.l.b16 %v3482
    %v4787 = vunpack.c.h.b16 %v3482
    %v4788 = vunpack.c.l.b16 %v3483
    %v4789 = vunpack.c.h.b16 %v3483
    %v4790 = vunpack.c.l.b16 %v3484
    %v4791 = vunpack.c.l.b16 %v3485
    %v4792 = vunpack.c.h.b16 %v3485
    %v4793 = vunpack.c.l.b16 %v3486
    %v4794 = vunpack.c.h.b16 %v3486
    %v4795 = vunpack.c.l.b16 %v3487
    %v4796 = vunpack.c.h.b16 %v3487
    %v4797 = vunpack.c.l.b16 %v3488
    %v4798 = vunpack.c.l.b16 %v3489
    %v4799 = vunpack.c.h.b16 %v3489
    %v4800 = vunpack.c.l.b16 %v3490
    %v4801 = vunpack.c.h.b16 %v3490
    %v4802 = vunpack.c.l.b16 %v3491
    %v4803 = vunpack.c.h.b16 %v3491
    %v4804 = vunpack.c.l.b16 %v3492
    %v4805 = vunpack.c.l.b16 %v3493
    %v4806 = vunpack.c.h.b16 %v3493
    %v4807 = vunpack.c.l.b16 %v3494
    %v4808 = vunpack.c.h.b16 %v3494
    %v4809 = vunpack.c.l.b16 %v3495
    %v4810 = vunpack.c.h.b16 %v3495
    %v4811 = vunpack.c.l.b16 %v3496
    %v4812 = vunpack.c.l.b16 %v3497
    %v4813 = vunpack.c.h.b16 %v3497
    %v4814 = vunpack.c.l.b16 %v3498
    %v4815 = vunpack.c.h.b16 %v3498
    %v4816 = vunpack.c.l.b16 %v3499
    %v4817 = vunpack.c.h.b16 %v3499
    %v4818 = vunpack.c.l.b16 %v3500
    %v4819 = vunpack.c.l.b16 %v3501
    %v4820 = vunpack.c.h.b16 %v3501
    %v4821 = vunpack.c.l.b16 %v3502
    %v4822 = vunpack.c.h.b16 %v3502
    %v4823 = vunpack.c.l.b16 %v3503
    %v4824 = vunpack.c.h.b16 %v3503
    %v4825 = vunpack.c.l.b16 %v3504
    %v4826 = vunpack.c.l.b16 %v3505
    %v4827 = vunpack.c.h.b16 %v3505
    %v4828 = vunpack.c.l.b16 %v3506
    %v4829 = vunpack.c.h.b16 %v3506
    %v4830 = vunpack.c.l.b16 %v3507
    %v4831 = vunpack.c.h.b16 %v3507
    %v4832 = vunpack.c.l.b16 %v3508
    %v4833 = vunpack.c.l.b16 %v3509
    %v4834 = vunpack.c.h.b16 %v3509
    %v4835 = vunpack.c.l.b16 %v3510
    %v4836 = vunpack.c.h.b16 %v3510
    %v4837 = vunpack.c.l.b16 %v3511
    %v4838 = vunpack.c.h.b16 %v3511
    %v4839 = vunpack.c.l.b16 %v3512
    %v4840 = vunpack.c.l.b16 %v3513
    %v4841 = vunpack.c.h.b16 %v3513
    %v4842 = vunpack.c.l.b16 %v3514
    %v4843 = vunpack.c.h.b16 %v3514
    %v4844 = vunpack.c.l.b16 %v3515
    %v4845 = vunpack.c.h.b16 %v3515
    %v4846 = vunpack.c.l.b16 %v3516
    %v4847 = vunpack.c.l.b16 %v3517
    %v4848 = vunpack.c.h.b16 %v3517
    %v4849 = vunpack.c.l.b16 %v3518
    %v4850 = vunpack.c.h.b16 %v3518
    %v4851 = vunpack.c.l.b16 %v3519
    %v4852 = vunpack.c.h.b16 %v3519
    %v4853 = vunpack.c.l.b16 %v3520
    %v4854 = vunpack.c.l.b16 %v3521
    %v4855 = vunpack.c.h.b16 %v3521
    %v4856 = vunpack.c.l.b16 %v3522
    %v4857 = vunpack.c.h.b16 %v3522
    %v4858 = vunpack.c.l.b16 %v3523
    %v4859 = vunpack.c.h.b16 %v3523
    %v4860 = vunpack.c.l.b16 %v3524
    %v4861 = vunpack.c.l.b16 %v3525
    %v4862 = vunpack.c.h.b16 %v3525
    %v4863 = vunpack.c.l.b16 %v3526
    %v4864 = vunpack.c.h.b16 %v3526
    %v4865 = vunpack.c.l.b16 %v3527
    %v4866 = vunpack.c.h.b16 %v3527
    %v4867 = vunpack.c.l.b16 %v3528
    %v4868 = vunpack.c.l.b16 %v3529
    %v4869 = vunpack.c.h.b16 %v3529
    %v4870 = vunpack.c.l.b16 %v3530
    %v4871 = vunpack.c.h.b16 %v3530
    %v4872 = vunpack.c.l.b16 %v3531
    %v4873 = vunpack.c.h.b16 %v3531
    %v4874 = vunpack.c.l.b16 %v3532
    %v4875 = vunpack.c.l.b16 %v3533
    %v4876 = vunpack.c.h.b16 %v3533
    %v4877 = vunpack.c.l.b16 %v3534
    %v4878 = vunpack.c.h.b16 %v3534
    %v4879 = vunpack.c.l.b16 %v3535
    %v4880 = vunpack.c.h.b16 %v3535
    %v4881 = vunpack.c.l.b16 %v3536
    %v4882 = vunpack.c.l.b16 %v3537
    %v4883 = vunpack.c.h.b16 %v3537
    %v4884 = vunpack.c.l.b16 %v3538
    %v4885 = vunpack.c.h.b16 %v3538
    %v4886 = vunpack.c.l.b16 %v3539
    %v4887 = vunpack.c.h.b16 %v3539
    %v4888 = vunpack.c.l.b16 %v3540
    %v4889 = vunpack.c.l.b16 %v3541
    %v4890 = vunpack.c.h.b16 %v3541
    %v4891 = vunpack.c.l.b16 %v3542
    %v4892 = vunpack.c.h.b16 %v3542
    %v4893 = vunpack.c.l.b16 %v3543
    %v4894 = vunpack.c.h.b16 %v3543
    %v4895 = vunpack.c.l.b16 %v3544
    %v4896 = vunpack.c.l.b16 %v3545
    %v4897 = vunpack.c.h.b16 %v3545
    %v4898 = vunpack.c.l.b16 %v3546
    %v4899 = vunpack.c.h.b16 %v3546
    %v4900 = vunpack.c.l.b16 %v3547
    %v4901 = vunpack.c.h.b16 %v3547
    %v4902 = vunpack.c.l.b16 %v3548
    %v4903 = vunpack.c.l.b16 %v3549
    %v4904 = vunpack.c.h.b16 %v3549
    %v4905 = vunpack.c.l.b16 %v3550
    %v4906 = vunpack.c.h.b16 %v3550
    %v4907 = vunpack.c.l.b16 %v3551
    %v4908 = vunpack.c.h.b16 %v3551
    %v4909 = vunpack.c.l.b16 %v3552
    %v4910 = vunpack.c.l.b16 %v3553
    %v4911 = vunpack.c.h.b16 %v3553
    %v4912 = vunpack.c.l.b16 %v3554
    %v4913 = vunpack.c.h.b16 %v3554
    %v4914 = vunpack.c.l.b16 %v3555
    %v4915 = vunpack.c.h.b16 %v3555
    %v4916 = vunpack.c.l.b16 %v3556
    %v4917 = vunpack.c.l.b16 %v3557
    %v4918 = vunpack.c.h.b16 %v3557
    %v4919 = vunpack.c.l.b16 %v3558
    %v4920 = vunpack.c.h.b16 %v3558
    %v4921 = vunpack.c.l.b16 %v3559
    %v4922 = vunpack.c.h.b16 %v3559
    %v4923 = vunpack.c.l.b16 %v3560
    %v4924 = vunpack.c.l.b16 %v3561
    %v4925 = vunpack.c.h.b16 %v3561
    %v4926 = vunpack.c.l.b16 %v3562
    %v4927 = vunpack.c.h.b16 %v3562
    %v4928 = vunpack.c.l.b16 %v3563
    %v4929 = vunpack.c.h.b16 %v3563
    %v4930 = vunpack.c.l.b16 %v3564
    %v4931 = vunpack.c.l.b16 %v3565
    %v4932 = vunpack.c.h.b16 %v3565
    %v4933 = vunpack.c.l.b16 %v3566
    %v4934 = vunpack.c.h.b16 %v3566
    %v4935 = vunpack.c.l.b16 %v3567
    %v4936 = vunpack.c.h.b16 %v3567
    %v4937 = vunpack.c.l.b16 %v3568
    %v4938 = vunpack.c.l.b16 %v3569
    %v4939 = vunpack.c.h.b16 %v3569
    %v4940 = vunpack.c.l.b16 %v3570
    %v4941 = vunpack.c.h.b16 %v3570
    %v4942 = vunpack.c.l.b16 %v3571
    %v4943 = vunpack.c.h.b16 %v3571
    %v4944 = vunpack.c.l.b16 %v3572
    %v4945 = vunpack.c.l.b16 %v3573
    %v4946 = vunpack.c.h.b16 %v3573
    %v4947 = vunpack.c.l.b16 %v3574
    %v4948 = vunpack.c.h.b16 %v3574
    %v4949 = vunpack.c.l.b16 %v3575
    %v4950 = vunpack.c.h.b16 %v3575
    %v4951 = vunpack.c.l.b16 %v3576
    %v4952 = vunpack.c.l.b16 %v3577
    %v4953 = vunpack.c.h.b16 %v3577
    %v4954 = vunpack.c.l.b16 %v3578
    %v4955 = vunpack.c.h.b16 %v3578
    %v4956 = vunpack.c.l.b16 %v3579
    %v4957 = vunpack.c.h.b16 %v3579
    %v4958 = vunpack.c.l.b16 %v3580
    %v4959 = vunpack.c.l.b16 %v3581
    %v4960 = vunpack.c.h.b16 %v3581
    %v4961 = vunpack.c.l.b16 %v3582
    %v4962 = vunpack.c.h.b16 %v3582
    %v4963 = vunpack.c.l.b16 %v3583
    %v4964 = vunpack.c.h.b16 %v3583
    %v4965 = vunpack.c.l.b16 %v3584
    %v4966 = vunpack.c.l.b16 %v3585
    %v4967 = vunpack.c.h.b16 %v3585
    %v4968 = vunpack.c.l.b16 %v3586
    %v4969 = vunpack.c.h.b16 %v3586
    %v4970 = vunpack.c.l.b16 %v3587
    %v4971 = vunpack.c.h.b16 %v3587
    %v4972 = vunpack.c.l.b16 %v3588
    %v4973 = vunpack.c.l.b16 %v3589
    %v4974 = vunpack.c.h.b16 %v3589
    %v4975 = vunpack.c.l.b16 %v3590
    %v4976 = vunpack.c.h.b16 %v3590
    %v4977 = vunpack.c.l.b16 %v3591
    %v4978 = vunpack.c.h.b16 %v3591
    %v4979 = vunpack.c.l.b16 %v3592
    %v4980 = vunpack.c.l.b16 %v3593
    %v4981 = vunpack.c.h.b16 %v3593
    %v4982 = vunpack.c.l.b16 %v3594
    %v4983 = vunpack.c.h.b16 %v3594
    %v4984 = vunpack.c.l.b16 %v3595
    %v4985 = vunpack.c.h.b16 %v3595
    %v4986 = vunpack.c.l.b16 %v3596
    %v4987 = vunpack.c.l.b16 %v3597
    %v4988 = vunpack.c.h.b16 %v3597
    %v4989 = vunpack.c.l.b16 %v3598
    %v4990 = vunpack.c.h.b16 %v3598
    %v4991 = vunpack.c.l.b16 %v3599
    %v4992 = vunpack.c.h.b16 %v3599
    %v4993 = vunpack.c.l.b16 %v3600
    %v4994 = vunpack.c.l.b16 %v3601
    %v4995 = vunpack.c.h.b16 %v3601
    %v4996 = vunpack.c.l.b16 %v3602
    %v4997 = vunpack.c.h.b16 %v3602
    %v4998 = vunpack.c.l.b16 %v3603
    %v4999 = vunpack.c.h.b16 %v3603
    %v5000 = vunpack.c.l.b16 %v3604
    %v5001 = vunpack.c.l.b16 %v3605
    %v5002 = vunpack.c.h.b16 %v3605
    %v5003 = vunpack.c.l.b16 %v3606
    %v5004 = vunpack.c.h.b16 %v3606
    %v5005 = vunpack.c.l.b16 %v3607
    %v5006 = vunpack.c.h.b16 %v3607
    %v5007 = vunpack.c.l.b16 %v3608
    %v5008 = vunpack.c.l.b16 %v3609
    %v5009 = vunpack.c.h.b16 %v3609
    %v5010 = vunpack.c.l.b16 %v3610
    %v5011 = vunpack.c.h.b16 %v3610
    %v5012 = vunpack.c.l.b16 %v3611
    %v5013 = vunpack.c.h.b16 %v3611
    %v5014 = vunpack.c.l.b16 %v3612
    %v5015 = vunpack.c.l.b16 %v3613
    %v5016 = vunpack.c.h.b16 %v3613
    %v5017 = vunpack.c.l.b16 %v3614
    %v5018 = vunpack.c.h.b16 %v3614
    %v5019 = vunpack.c.l.b16 %v3615
    %v5020 = vunpack.c.h.b16 %v3615
    %v5021 = vunpack.c.l.b16 %v3616
    %v5022 = vunpack.c.l.b16 %v3617
    %v5023 = vunpack.c.h.b16 %v3617
    %v5024 = vunpack.c.l.b16 %v3618
    %v5025 = vunpack.c.h.b16 %v3618
    %v5026 = vunpack.c.l.b16 %v3619
    %v5027 = vunpack.c.h.b16 %v3619
    %v5028 = vunpack.c.l.b16 %v3620
    %v5029 = vpack.c.b16 %v4140, %v4133
    %v5030 = vpack.c.b16 %v4141, %v4134
    %v5031 = vpack.c.b16 %v4142, %v4135
    %v5032 = vpack.c.b16 %v4143, %v4136
    %v5033 = vpack.c.b16 %v4144, %v4137
    %v5034 = vpack.c.b16 %v4145, %v4138
    %v5035 = vpack.c.b16 %v4146, %v4139
    %v5036 = vpack.c.b16 %v4154, %v4147
    %v5037 = vpack.c.b16 %v4155, %v4148
    %v5038 = vpack.c.b16 %v4156, %v4149
    %v5039 = vpack.c.b16 %v4157, %v4150
    %v5040 = vpack.c.b16 %v4158, %v4151
    %v5041 = vpack.c.b16 %v4159, %v4152
    %v5042 = vpack.c.b16 %v4160, %v4153
    %v5043 = vpack.c.b16 %v4168, %v4161
    %v5044 = vpack.c.b16 %v4169, %v4162
    %v5045 = vpack.c.b16 %v4170, %v4163
    %v5046 = vpack.c.b16 %v4171, %v4164
    %v5047 = vpack.c.b16 %v4172, %v4165
    %v5048 = vpack.c.b16 %v4173, %v4166
    %v5049 = vpack.c.b16 %v4174, %v4167
    %v5050 = vpack.c.b16 %v4182, %v4175
    %v5051 = vpack.c.b16 %v4183, %v4176
    %v5052 = vpack.c.b16 %v4184, %v4177
    %v5053 = vpack.c.b16 %v4185, %v4178
    %v5054 = vpack.c.b16 %v4186, %v4179
    %v5055 = vpack.c.b16 %v4187, %v4180
    %v5056 = vpack.c.b16 %v4188, %v4181
    %v5057 = vpack.c.b16 %v4196, %v4189
    %v5058 = vpack.c.b16 %v4197, %v4190
    %v5059 = vpack.c.b16 %v4198, %v4191
    %v5060 = vpack.c.b16 %v4199, %v4192
    %v5061 = vpack.c.b16 %v4200, %v4193
    %v5062 = vpack.c.b16 %v4201, %v4194
    %v5063 = vpack.c.b16 %v4202, %v4195
    %v5064 = vpack.c.b16 %v4210, %v4203
    %v5065 = vpack.c.b16 %v4211, %v4204
    %v5066 = vpack.c.b16 %v4212, %v4205
    %v5067 = vpack.c.b16 %v4213, %v4206
    %v5068 = vpack.c.b16 %v4214, %v4207
    %v5069 = vpack.c.b16 %v4215, %v4208
    %v5070 = vpack.c.b16 %v4216, %v4209
    %v5071 = vpack.c.b16 %v4224, %v4217
    %v5072 = vpack.c.b16 %v4225, %v4218
    %v5073 = vpack.c.b16 %v4226, %v4219
    %v5074 = vpack.c.b16 %v4227, %v4220
    %v5075 = vpack.c.b16 %v4228, %v4221
    %v5076 = vpack.c.b16 %v4229, %v4222
    %v5077 = vpack.c.b16 %v4230, %v4223
    %v5078 = vpack.c.b16 %v4238, %v4231
    %v5079 = vpack.c.b16 %v4239, %v4232
    %v5080 = vpack.c.b16 %v4240, %v4233
    %v5081 = vpack.c.b16 %v4241, %v4234
    %v5082 = vpack.c.b16 %v4242, %v4235
    %v5083 = vpack.c.b16 %v4243, %v4236
    %v5084 = vpack.c.b16 %v4244, %v4237
    %v5085 = vpack.c.b16 %v4252, %v4245
    %v5086 = vpack.c.b16 %v4253, %v4246
    %v5087 = vpack.c.b16 %v4254, %v4247
    %v5088 = vpack.c.b16 %v4255, %v4248
    %v5089 = vpack.c.b16 %v4256, %v4249
    %v5090 = vpack.c.b16 %v4257, %v4250
    %v5091 = vpack.c.b16 %v4258, %v4251
    %v5092 = vpack.c.b16 %v4266, %v4259
    %v5093 = vpack.c.b16 %v4267, %v4260
    %v5094 = vpack.c.b16 %v4268, %v4261
    %v5095 = vpack.c.b16 %v4269, %v4262
    %v5096 = vpack.c.b16 %v4270, %v4263
    %v5097 = vpack.c.b16 %v4271, %v4264
    %v5098 = vpack.c.b16 %v4272, %v4265
    %v5099 = vpack.c.b16 %v4280, %v4273
    %v5100 = vpack.c.b16 %v4281, %v4274
    %v5101 = vpack.c.b16 %v4282, %v4275
    %v5102 = vpack.c.b16 %v4283, %v4276
    %v5103 = vpack.c.b16 %v4284, %v4277
    %v5104 = vpack.c.b16 %v4285, %v4278
    %v5105 = vpack.c.b16 %v4286, %v4279
    %v5106 = vpack.c.b16 %v4294, %v4287
    %v5107 = vpack.c.b16 %v4295, %v4288
    %v5108 = vpack.c.b16 %v4296, %v4289
    %v5109 = vpack.c.b16 %v4297, %v4290
    %v5110 = vpack.c.b16 %v4298, %v4291
    %v5111 = vpack.c.b16 %v4299, %v4292
    %v5112 = vpack.c.b16 %v4300, %v4293
    %v5113 = vpack.c.b16 %v4308, %v4301
    %v5114 = vpack.c.b16 %v4309, %v4302
    %v5115 = vpack.c.b16 %v4310, %v4303
    %v5116 = vpack.c.b16 %v4311, %v4304
    %v5117 = vpack.c.b16 %v4312, %v4305
    %v5118 = vpack.c.b16 %v4313, %v4306
    %v5119 = vpack.c.b16 %v4314, %v4307
    %v5120 = vpack.c.b16 %v4322, %v4315
    %v5121 = vpack.c.b16 %v4323, %v4316
    %v5122 = vpack.c.b16 %v4324, %v4317
    %v5123 = vpack.c.b16 %v4325, %v4318
    %v5124 = vpack.c.b16 %v4326, %v4319
    %v5125 = vpack.c.b16 %v4327, %v4320
    %v5126 = vpack.c.b16 %v4328, %v4321
    %v5127 = vpack.c.b16 %v4336, %v4329
    %v5128 = vpack.c.b16 %v4337, %v4330
    %v5129 = vpack.c.b16 %v4338, %v4331
    %v5130 = vpack.c.b16 %v4339, %v4332
    %v5131 = vpack.c.b16 %v4340, %v4333
    %v5132 = vpack.c.b16 %v4341, %v4334
    %v5133 = vpack.c.b16 %v4342, %v4335
    %v5134 = vpack.c.b16 %v4350, %v4343
    %v5135 = vpack.c.b16 %v4351, %v4344
    %v5136 = vpack.c.b16 %v4352, %v4345
    %v5137 = vpack.c.b16 %v4353, %v4346
    %v5138 = vpack.c.b16 %v4354, %v4347
    %v5139 = vpack.c.b16 %v4355, %v4348
    %v5140 = vpack.c.b16 %v4356, %v4349
    %v5141 = vpack.c.b16 %v4364, %v4357
    %v5142 = vpack.c.b16 %v4365, %v4358
    %v5143 = vpack.c.b16 %v4366, %v4359
    %v5144 = vpack.c.b16 %v4367, %v4360
    %v5145 = vpack.c.b16 %v4368, %v4361
    %v5146 = vpack.c.b16 %v4369, %v4362
    %v5147 = vpack.c.b16 %v4370, %v4363
    %v5148 = vpack.c.b16 %v4378, %v4371
    %v5149 = vpack.c.b16 %v4379, %v4372
    %v5150 = vpack.c.b16 %v4380, %v4373
    %v5151 = vpack.c.b16 %v4381, %v4374
    %v5152 = vpack.c.b16 %v4382, %v4375
    %v5153 = vpack.c.b16 %v4383, %v4376
    %v5154 = vpack.c.b16 %v4384, %v4377
    %v5155 = vpack.c.b16 %v4392, %v4385
    %v5156 = vpack.c.b16 %v4393, %v4386
    %v5157 = vpack.c.b16 %v4394, %v4387
    %v5158 = vpack.c.b16 %v4395, %v4388
    %v5159 = vpack.c.b16 %v4396, %v4389
    %v5160 = vpack.c.b16 %v4397, %v4390
    %v5161 = vpack.c.b16 %v4398, %v4391
    %v5162 = vpack.c.b16 %v4406, %v4399
    %v5163 = vpack.c.b16 %v4407, %v4400
    %v5164 = vpack.c.b16 %v4408, %v4401
    %v5165 = vpack.c.b16 %v4409, %v4402
    %v5166 = vpack.c.b16 %v4410, %v4403
    %v5167 = vpack.c.b16 %v4411, %v4404
    %v5168 = vpack.c.b16 %v4412, %v4405
    %v5169 = vpack.c.b16 %v4420, %v4413
    %v5170 = vpack.c.b16 %v4421, %v4414
    %v5171 = vpack.c.b16 %v4422, %v4415
    %v5172 = vpack.c.b16 %v4423, %v4416
    %v5173 = vpack.c.b16 %v4424, %v4417
    %v5174 = vpack.c.b16 %v4425, %v4418
    %v5175 = vpack.c.b16 %v4426, %v4419
    %v5176 = vpack.c.b16 %v4434, %v4427
    %v5177 = vpack.c.b16 %v4435, %v4428
    %v5178 = vpack.c.b16 %v4436, %v4429
    %v5179 = vpack.c.b16 %v4437, %v4430
    %v5180 = vpack.c.b16 %v4438, %v4431
    %v5181 = vpack.c.b16 %v4439, %v4432
    %v5182 = vpack.c.b16 %v4440, %v4433
    %v5183 = vpack.c.b16 %v4448, %v4441
    %v5184 = vpack.c.b16 %v4449, %v4442
    %v5185 = vpack.c.b16 %v4450, %v4443
    %v5186 = vpack.c.b16 %v4451, %v4444
    %v5187 = vpack.c.b16 %v4452, %v4445
    %v5188 = vpack.c.b16 %v4453, %v4446
    %v5189 = vpack.c.b16 %v4454, %v4447
    %v5190 = vpack.c.b16 %v4462, %v4455
    %v5191 = vpack.c.b16 %v4463, %v4456
    %v5192 = vpack.c.b16 %v4464, %v4457
    %v5193 = vpack.c.b16 %v4465, %v4458
    %v5194 = vpack.c.b16 %v4466, %v4459
    %v5195 = vpack.c.b16 %v4467, %v4460
    %v5196 = vpack.c.b16 %v4468, %v4461
    %v5197 = vpack.c.b16 %v4476, %v4469
    %v5198 = vpack.c.b16 %v4477, %v4470
    %v5199 = vpack.c.b16 %v4478, %v4471
    %v5200 = vpack.c.b16 %v4479, %v4472
    %v5201 = vpack.c.b16 %v4480, %v4473
    %v5202 = vpack.c.b16 %v4481, %v4474
    %v5203 = vpack.c.b16 %v4482, %v4475
    %v5204 = vpack.c.b16 %v4490, %v4483
    %v5205 = vpack.c.b16 %v4491, %v4484
    %v5206 = vpack.c.b16 %v4492, %v4485
    %v5207 = vpack.c.b16 %v4493, %v4486
    %v5208 = vpack.c.b16 %v4494, %v4487
    %v5209 = vpack.c.b16 %v4495, %v4488
    %v5210 = vpack.c.b16 %v4496, %v4489
    %v5211 = vpack.c.b16 %v4504, %v4497
    %v5212 = vpack.c.b16 %v4505, %v4498
    %v5213 = vpack.c.b16 %v4506, %v4499
    %v5214 = vpack.c.b16 %v4507, %v4500
    %v5215 = vpack.c.b16 %v4508, %v4501
    %v5216 = vpack.c.b16 %v4509, %v4502
    %v5217 = vpack.c.b16 %v4510, %v4503
    %v5218 = vpack.c.b16 %v4518, %v4511
    %v5219 = vpack.c.b16 %v4519, %v4512
    %v5220 = vpack.c.b16 %v4520, %v4513
    %v5221 = vpack.c.b16 %v4521, %v4514
    %v5222 = vpack.c.b16 %v4522, %v4515
    %v5223 = vpack.c.b16 %v4523, %v4516
    %v5224 = vpack.c.b16 %v4524, %v4517
    %v5225 = vpack.c.b16 %v4532, %v4525
    %v5226 = vpack.c.b16 %v4533, %v4526
    %v5227 = vpack.c.b16 %v4534, %v4527
    %v5228 = vpack.c.b16 %v4535, %v4528
    %v5229 = vpack.c.b16 %v4536, %v4529
    %v5230 = vpack.c.b16 %v4537, %v4530
    %v5231 = vpack.c.b16 %v4538, %v4531
    %v5232 = vpack.c.b16 %v4546, %v4539
    %v5233 = vpack.c.b16 %v4547, %v4540
    %v5234 = vpack.c.b16 %v4548, %v4541
    %v5235 = vpack.c.b16 %v4549, %v4542
    %v5236 = vpack.c.b16 %v4550, %v4543
    %v5237 = vpack.c.b16 %v4551, %v4544
    %v5238 = vpack.c.b16 %v4552, %v4545
    %v5239 = vpack.c.b16 %v4560, %v4553
    %v5240 = vpack.c.b16 %v4561, %v4554
    %v5241 = vpack.c.b16 %v4562, %v4555
    %v5242 = vpack.c.b16 %v4563, %v4556
    %v5243 = vpack.c.b16 %v4564, %v4557
    %v5244 = vpack.c.b16 %v4565, %v4558
    %v5245 = vpack.c.b16 %v4566, %v4559
    %v5246 = vpack.c.b16 %v4574, %v4567
    %v5247 = vpack.c.b16 %v4575, %v4568
    %v5248 = vpack.c.b16 %v4576, %v4569
    %v5249 = vpack.c.b16 %v4577, %v4570
    %v5250 = vpack.c.b16 %v4578, %v4571
    %v5251 = vpack.c.b16 %v4579, %v4572
    %v5252 = vpack.c.b16 %v4580, %v4573
    %v5253 = vpack.c.b16 %v4588, %v4581
    %v5254 = vpack.c.b16 %v4589, %v4582
    %v5255 = vpack.c.b16 %v4590, %v4583
    %v5256 = vpack.c.b16 %v4591, %v4584
    %v5257 = vpack.c.b16 %v4592, %v4585
    %v5258 = vpack.c.b16 %v4593, %v4586
    %v5259 = vpack.c.b16 %v4594, %v4587
    %v5260 = vpack.c.b16 %v4602, %v4595
    %v5261 = vpack.c.b16 %v4603, %v4596
    %v5262 = vpack.c.b16 %v4604, %v4597
    %v5263 = vpack.c.b16 %v4605, %v4598
    %v5264 = vpack.c.b16 %v4606, %v4599
    %v5265 = vpack.c.b16 %v4607, %v4600
    %v5266 = vpack.c.b16 %v4608, %v4601
    %v5267 = vpack.c.b16 %v4616, %v4609
    %v5268 = vpack.c.b16 %v4617, %v4610
    %v5269 = vpack.c.b16 %v4618, %v4611
    %v5270 = vpack.c.b16 %v4619, %v4612
    %v5271 = vpack.c.b16 %v4620, %v4613
    %v5272 = vpack.c.b16 %v4621, %v4614
    %v5273 = vpack.c.b16 %v4622, %v4615
    %v5274 = vpack.c.b16 %v4630, %v4623
    %v5275 = vpack.c.b16 %v4631, %v4624
    %v5276 = vpack.c.b16 %v4632, %v4625
    %v5277 = vpack.c.b16 %v4633, %v4626
    %v5278 = vpack.c.b16 %v4634, %v4627
    %v5279 = vpack.c.b16 %v4635, %v4628
    %v5280 = vpack.c.b16 %v4636, %v4629
    %v5281 = vpack.c.b16 %v4644, %v4637
    %v5282 = vpack.c.b16 %v4645, %v4638
    %v5283 = vpack.c.b16 %v4646, %v4639
    %v5284 = vpack.c.b16 %v4647, %v4640
    %v5285 = vpack.c.b16 %v4648, %v4641
    %v5286 = vpack.c.b16 %v4649, %v4642
    %v5287 = vpack.c.b16 %v4650, %v4643
    %v5288 = vpack.c.b16 %v4658, %v4651
    %v5289 = vpack.c.b16 %v4659, %v4652
    %v5290 = vpack.c.b16 %v4660, %v4653
    %v5291 = vpack.c.b16 %v4661, %v4654
    %v5292 = vpack.c.b16 %v4662, %v4655
    %v5293 = vpack.c.b16 %v4663, %v4656
    %v5294 = vpack.c.b16 %v4664, %v4657
    %v5295 = vpack.c.b16 %v4672, %v4665
    %v5296 = vpack.c.b16 %v4673, %v4666
    %v5297 = vpack.c.b16 %v4674, %v4667
    %v5298 = vpack.c.b16 %v4675, %v4668
    %v5299 = vpack.c.b16 %v4676, %v4669
    %v5300 = vpack.c.b16 %v4677, %v4670
    %v5301 = vpack.c.b16 %v4678, %v4671
    %v5302 = vpack.c.b16 %v4686, %v4679
    %v5303 = vpack.c.b16 %v4687, %v4680
    %v5304 = vpack.c.b16 %v4688, %v4681
    %v5305 = vpack.c.b16 %v4689, %v4682
    %v5306 = vpack.c.b16 %v4690, %v4683
    %v5307 = vpack.c.b16 %v4691, %v4684
    %v5308 = vpack.c.b16 %v4692, %v4685
    %v5309 = vpack.c.b16 %v4700, %v4693
    %v5310 = vpack.c.b16 %v4701, %v4694
    %v5311 = vpack.c.b16 %v4702, %v4695
    %v5312 = vpack.c.b16 %v4703, %v4696
    %v5313 = vpack.c.b16 %v4704, %v4697
    %v5314 = vpack.c.b16 %v4705, %v4698
    %v5315 = vpack.c.b16 %v4706, %v4699
    %v5316 = vpack.c.b16 %v4714, %v4707
    %v5317 = vpack.c.b16 %v4715, %v4708
    %v5318 = vpack.c.b16 %v4716, %v4709
    %v5319 = vpack.c.b16 %v4717, %v4710
    %v5320 = vpack.c.b16 %v4718, %v4711
    %v5321 = vpack.c.b16 %v4719, %v4712
    %v5322 = vpack.c.b16 %v4720, %v4713
    %v5323 = vpack.c.b16 %v4728, %v4721
    %v5324 = vpack.c.b16 %v4729, %v4722
    %v5325 = vpack.c.b16 %v4730, %v4723
    %v5326 = vpack.c.b16 %v4731, %v4724
    %v5327 = vpack.c.b16 %v4732, %v4725
    %v5328 = vpack.c.b16 %v4733, %v4726
    %v5329 = vpack.c.b16 %v4734, %v4727
    %v5330 = vpack.c.b16 %v4742, %v4735
    %v5331 = vpack.c.b16 %v4743, %v4736
    %v5332 = vpack.c.b16 %v4744, %v4737
    %v5333 = vpack.c.b16 %v4745, %v4738
    %v5334 = vpack.c.b16 %v4746, %v4739
    %v5335 = vpack.c.b16 %v4747, %v4740
    %v5336 = vpack.c.b16 %v4748, %v4741
    %v5337 = vpack.c.b16 %v4756, %v4749
    %v5338 = vpack.c.b16 %v4757, %v4750
    %v5339 = vpack.c.b16 %v4758, %v4751
    %v5340 = vpack.c.b16 %v4759, %v4752
    %v5341 = vpack.c.b16 %v4760, %v4753
    %v5342 = vpack.c.b16 %v4761, %v4754
    %v5343 = vpack.c.b16 %v4762, %v4755
    %v5344 = vpack.c.b16 %v4770, %v4763
    %v5345 = vpack.c.b16 %v4771, %v4764
    %v5346 = vpack.c.b16 %v4772, %v4765
    %v5347 = vpack.c.b16 %v4773, %v4766
    %v5348 = vpack.c.b16 %v4774, %v4767
    %v5349 = vpack.c.b16 %v4775, %v4768
    %v5350 = vpack.c.b16 %v4776, %v4769
    %v5351 = vpack.c.b16 %v4784, %v4777
    %v5352 = vpack.c.b16 %v4785, %v4778
    %v5353 = vpack.c.b16 %v4786, %v4779
    %v5354 = vpack.c.b16 %v4787, %v4780
    %v5355 = vpack.c.b16 %v4788, %v4781
    %v5356 = vpack.c.b16 %v4789, %v4782
    %v5357 = vpack.c.b16 %v4790, %v4783
    %v5358 = vpack.c.b16 %v4798, %v4791
    %v5359 = vpack.c.b16 %v4799, %v4792
    %v5360 = vpack.c.b16 %v4800, %v4793
    %v5361 = vpack.c.b16 %v4801, %v4794
    %v5362 = vpack.c.b16 %v4802, %v4795
    %v5363 = vpack.c.b16 %v4803, %v4796
    %v5364 = vpack.c.b16 %v4804, %v4797
    %v5365 = vpack.c.b16 %v4812, %v4805
    %v5366 = vpack.c.b16 %v4813, %v4806
    %v5367 = vpack.c.b16 %v4814, %v4807
    %v5368 = vpack.c.b16 %v4815, %v4808
    %v5369 = vpack.c.b16 %v4816, %v4809
    %v5370 = vpack.c.b16 %v4817, %v4810
    %v5371 = vpack.c.b16 %v4818, %v4811
    %v5372 = vpack.c.b16 %v4826, %v4819
    %v5373 = vpack.c.b16 %v4827, %v4820
    %v5374 = vpack.c.b16 %v4828, %v4821
    %v5375 = vpack.c.b16 %v4829, %v4822
    %v5376 = vpack.c.b16 %v4830, %v4823
    %v5377 = vpack.c.b16 %v4831, %v4824
    %v5378 = vpack.c.b16 %v4832, %v4825
    %v5379 = vpack.c.b16 %v4840, %v4833
    %v5380 = vpack.c.b16 %v4841, %v4834
    %v5381 = vpack.c.b16 %v4842, %v4835
    %v5382 = vpack.c.b16 %v4843, %v4836
    %v5383 = vpack.c.b16 %v4844, %v4837
    %v5384 = vpack.c.b16 %v4845, %v4838
    %v5385 = vpack.c.b16 %v4846, %v4839
    %v5386 = vpack.c.b16 %v4854, %v4847
    %v5387 = vpack.c.b16 %v4855, %v4848
    %v5388 = vpack.c.b16 %v4856, %v4849
    %v5389 = vpack.c.b16 %v4857, %v4850
    %v5390 = vpack.c.b16 %v4858, %v4851
    %v5391 = vpack.c.b16 %v4859, %v4852
    %v5392 = vpack.c.b16 %v4860, %v4853
    %v5393 = vpack.c.b16 %v4868, %v4861
    %v5394 = vpack.c.b16 %v4869, %v4862
    %v5395 = vpack.c.b16 %v4870, %v4863
    %v5396 = vpack.c.b16 %v4871, %v4864
    %v5397 = vpack.c.b16 %v4872, %v4865
    %v5398 = vpack.c.b16 %v4873, %v4866
    %v5399 = vpack.c.b16 %v4874, %v4867
    %v5400 = vpack.c.b16 %v4882, %v4875
    %v5401 = vpack.c.b16 %v4883, %v4876
    %v5402 = vpack.c.b16 %v4884, %v4877
    %v5403 = vpack.c.b16 %v4885, %v4878
    %v5404 = vpack.c.b16 %v4886, %v4879
    %v5405 = vpack.c.b16 %v4887, %v4880
    %v5406 = vpack.c.b16 %v4888, %v4881
    %v5407 = vpack.c.b16 %v4896, %v4889
    %v5408 = vpack.c.b16 %v4897, %v4890
    %v5409 = vpack.c.b16 %v4898, %v4891
    %v5410 = vpack.c.b16 %v4899, %v4892
    %v5411 = vpack.c.b16 %v4900, %v4893
    %v5412 = vpack.c.b16 %v4901, %v4894
    %v5413 = vpack.c.b16 %v4902, %v4895
    %v5414 = vpack.c.b16 %v4910, %v4903
    %v5415 = vpack.c.b16 %v4911, %v4904
    %v5416 = vpack.c.b16 %v4912, %v4905
    %v5417 = vpack.c.b16 %v4913, %v4906
    %v5418 = vpack.c.b16 %v4914, %v4907
    %v5419 = vpack.c.b16 %v4915, %v4908
    %v5420 = vpack.c.b16 %v4916, %v4909
    %v5421 = vpack.c.b16 %v4924, %v4917
    %v5422 = vpack.c.b16 %v4925, %v4918
    %v5423 = vpack.c.b16 %v4926, %v4919
    %v5424 = vpack.c.b16 %v4927, %v4920
    %v5425 = vpack.c.b16 %v4928, %v4921
    %v5426 = vpack.c.b16 %v4929, %v4922
    %v5427 = vpack.c.b16 %v4930, %v4923
    %v5428 = vpack.c.b16 %v4938, %v4931
    %v5429 = vpack.c.b16 %v4939, %v4932
    %v5430 = vpack.c.b16 %v4940, %v4933
    %v5431 = vpack.c.b16 %v4941, %v4934
    %v5432 = vpack.c.b16 %v4942, %v4935
    %v5433 = vpack.c.b16 %v4943, %v4936
    %v5434 = vpack.c.b16 %v4944, %v4937
    %v5435 = vpack.c.b16 %v4952, %v4945
    %v5436 = vpack.c.b16 %v4953, %v4946
    %v5437 = vpack.c.b16 %v4954, %v4947
    %v5438 = vpack.c.b16 %v4955, %v4948
    %v5439 = vpack.c.b16 %v4956, %v4949
    %v5440 = vpack.c.b16 %v4957, %v4950
    %v5441 = vpack.c.b16 %v4958, %v4951
    %v5442 = vpack.c.b16 %v4966, %v4959
    %v5443 = vpack.c.b16 %v4967, %v4960
    %v5444 = vpack.c.b16 %v4968, %v4961
    %v5445 = vpack.c.b16 %v4969, %v4962
    %v5446 = vpack.c.b16 %v4970, %v4963
    %v5447 = vpack.c.b16 %v4971, %v4964
    %v5448 = vpack.c.b16 %v4972, %v4965
    %v5449 = vpack.c.b16 %v4980, %v4973
    %v5450 = vpack.c.b16 %v4981, %v4974
    %v5451 = vpack.c.b16 %v4982, %v4975
    %v5452 = vpack.c.b16 %v4983, %v4976
    %v5453 = vpack.c.b16 %v4984, %v4977
    %v5454 = vpack.c.b16 %v4985, %v4978
    %v5455 = vpack.c.b16 %v4986, %v4979
    %v5456 = vpack.c.b16 %v4994, %v4987
    %v5457 = vpack.c.b16 %v4995, %v4988
    %v5458 = vpack.c.b16 %v4996, %v4989
    %v5459 = vpack.c.b16 %v4997, %v4990
    %v5460 = vpack.c.b16 %v4998, %v4991
    %v5461 = vpack.c.b16 %v4999, %v4992
    %v5462 = vpack.c.b16 %v5000, %v4993
    %v5463 = vpack.c.b16 %v5008, %v5001
    %v5464 = vpack.c.b16 %v5009, %v5002
    %v5465 = vpack.c.b16 %v5010, %v5003
    %v5466 = vpack.c.b16 %v5011, %v5004
    %v5467 = vpack.c.b16 %v5012, %v5005
    %v5468 = vpack.c.b16 %v5013, %v5006
    %v5469 = vpack.c.b16 %v5014, %v5007
    %v5470 = vpack.c.b16 %v5022, %v5015
    %v5471 = vpack.c.b16 %v5023, %v5016
    %v5472 = vpack.c.b16 %v5024, %v5017
    %v5473 = vpack.c.b16 %v5025, %v5018
    %v5474 = vpack.c.b16 %v5026, %v5019
    %v5475 = vpack.c.b16 %v5027, %v5020
    %v5476 = vpack.c.b16 %v5028, %v5021
    %5925 = vmatprep.subr.bf16.mxu0 %v5030
    %5926 = vmatpush1.bf16.msra.mxu0 %v5029
    %5927 = vmatprep.subr.bf16.mxu0 %v5037
    %5928 = vmatpush1.bf16.msra.mxu0 %v5036
    %5929 = vmatprep.subr.bf16.mxu0 %v5044
    %5930 = vmatpush1.bf16.msra.mxu0 %v5043
    %5931 = vmatprep.subr.bf16.mxu0 %v5051
    %5932 = vmatpush1.bf16.msra.mxu0 %v5050
    %5933 = vmatprep.subr.bf16.mxu0 %v5058
    %5934 = vmatpush1.bf16.msra.mxu0 %v5057
    %5935 = vmatprep.subr.bf16.mxu0 %v5065
    %5936 = vmatpush1.bf16.msra.mxu0 %v5064
    %5937 = vmatprep.subr.bf16.mxu0 %v5072
    %5938 = vmatpush1.bf16.msra.mxu0 %v5071
    %5939 = vmatprep.subr.bf16.mxu0 %v5079
    %5940 = vmatpush1.bf16.msra.mxu0 %v5078
    %5941 = vmatprep.subr.bf16.mxu0 %v5086
    %5942 = vmatpush1.bf16.msra.mxu0 %v5085
    %5943 = vmatprep.subr.bf16.mxu0 %v5093
    %5944 = vmatpush1.bf16.msra.mxu0 %v5092
    %5945 = vmatprep.subr.bf16.mxu0 %v5100
    %5946 = vmatpush1.bf16.msra.mxu0 %v5099
    %5947 = vmatprep.subr.bf16.mxu0 %v5107
    %5948 = vmatpush1.bf16.msra.mxu0 %v5106
    %5949 = vmatprep.subr.bf16.mxu0 %v5114
    %5950 = vmatpush1.bf16.msra.mxu0 %v5113
    %5951 = vmatprep.subr.bf16.mxu0 %v5121
    %5952 = vmatpush1.bf16.msra.mxu0 %v5120
    %5953 = vmatprep.subr.bf16.mxu0 %v5128
    %5954 = vmatpush1.bf16.msra.mxu0 %v5127
    %5955 = vmatprep.subr.bf16.mxu0 %v5135
    %5956 = vmatpush1.bf16.msra.mxu0 %v5134
    %5957 = vmatprep.mubr.bf16.mxu0 %v3078
    %5958 = vmatmul.mubr.bf16.gmra.mrb[0].mxu0 %v3077
    %v5959 = vpop.f32.mrb[0].mxu0
    %v5960 = vadd.f32 0.0, %v5959
    %v5961 = vpop.f32.mrb[0].mxu0
    %v5962 = vadd.f32 0.0, %v5961
    %v5963 = vpop.f32.mrb[0].mxu0
    %v5964 = vadd.f32 0.0, %v5963
    %v5965 = vpop.f32.mrb[0].mxu0
    %v5966 = vadd.f32 0.0, %v5965
    %5967 = vmatprep.mubr.bf16.mxu0 %v3086
    %5968 = vmatmul.mubr.bf16.gmra.mrb[0].mxu0 %v3085
    %v5969 = vpop.f32.mrb[0].mxu0
    %v5970 = vadd.f32 0.0, %v5969
    %v5971 = vpop.f32.mrb[0].mxu0
    %v5972 = vadd.f32 0.0, %v5971
    %v5973 = vpop.f32.mrb[0].mxu0
    %v5974 = vadd.f32 0.0, %v5973
    %v5975 = vpop.f32.mrb[0].mxu0
    %v5976 = vadd.f32 0.0, %v5975
    %5977 = vmatprep.mubr.bf16.mxu0 %v3094
    %5978 = vmatmul.mubr.bf16.gmra.mrb[0].mxu0 %v3093
    %v5979 = vpop.f32.mrb[0].mxu0
    %v5980 = vadd.f32 0.0, %v5979
    %v5981 = vpop.f32.mrb[0].mxu0
    %v5982 = vadd.f32 0.0, %v5981
    %v5983 = vpop.f32.mrb[0].mxu0
    %v5984 = vadd.f32 0.0, %v5983
    %v5985 = vpop.f32.mrb[0].mxu0
    %v5986 = vadd.f32 0.0, %v5985
    %5987 = vmatprep.mubr.bf16.mxu0 %v3102
    %5988 = vmatmul.mubr.bf16.gmra.mrb[0].mxu0 %v3101
    %v5989 = vpop.f32.mrb[0].mxu0
    %v5990 = vadd.f32 0.0, %v5989
    %v5991 = vpop.f32.mrb[0].mxu0
    %v5992 = vadd.f32 0.0, %v5991
    %v5993 = vpop.f32.mrb[0].mxu0
    %v5994 = vadd.f32 0.0, %v5993
    %v5995 = vpop.f32.mrb[0].mxu0
    %v5996 = vadd.f32 0.0, %v5995
    %5997 = vdwg.mxu0
    %5998 = vmatprep.subr.bf16.mxu0 %v5142
    %5999 = vmatpush1.bf16.msra.mxu0 %v5141
    %6000 = vmatprep.subr.bf16.mxu0 %v5149
    %6001 = vmatpush1.bf16.msra.mxu0 %v5148
    %6002 = vmatprep.subr.bf16.mxu0 %v5156
    %6003 = vmatpush1.bf16.msra.mxu0 %v5155
    %6004 = vmatprep.subr.bf16.mxu0 %v5163
    %6005 = vmatpush1.bf16.msra.mxu0 %v5162
    %6006 = vmatprep.subr.bf16.mxu0 %v5170
    %6007 = vmatpush1.bf16.msra.mxu0 %v5169
    %6008 = vmatprep.subr.bf16.mxu0 %v5177
    %6009 = vmatpush1.bf16.msra.mxu0 %v5176
    %6010 = vmatprep.subr.bf16.mxu0 %v5184
    %6011 = vmatpush1.bf16.msra.mxu0 %v5183
    %6012 = vmatprep.subr.bf16.mxu0 %v5191
    %6013 = vmatpush1.bf16.msra.mxu0 %v5190
    %6014 = vmatprep.subr.bf16.mxu0 %v5198
    %6015 = vmatpush1.bf16.msra.mxu0 %v5197
    %6016 = vmatprep.subr.bf16.mxu0 %v5205
    %6017 = vmatpush1.bf16.msra.mxu0 %v5204
    %6018 = vmatprep.subr.bf16.mxu0 %v5212
    %6019 = vmatpush1.bf16.msra.mxu0 %v5211
    %6020 = vmatprep.subr.bf16.mxu0 %v5219
    %6021 = vmatpush1.bf16.msra.mxu0 %v5218
    %6022 = vmatprep.subr.bf16.mxu0 %v5226
    %6023 = vmatpush1.bf16.msra.mxu0 %v5225
    %6024 = vmatprep.subr.bf16.mxu0 %v5233
    %6025 = vmatpush1.bf16.msra.mxu0 %v5232
    %6026 = vmatprep.subr.bf16.mxu0 %v5240
    %6027 = vmatpush1.bf16.msra.mxu0 %v5239
    %6028 = vmatprep.subr.bf16.mxu0 %v5247
    %6029 = vmatpush1.bf16.msra.mxu0 %v5246
    %6030 = vmatprep.mubr.bf16.mxu0 %v3080
    %6031 = vmatmul.mubr.bf16.gmra.mrb[0].mxu0 %v3079
    %v6032 = vpop.f32.mrb[0].mxu0
    %v6033 = vadd.f32 %v5960, %v6032
    %v6034 = vpop.f32.mrb[0].mxu0
    %v6035 = vadd.f32 %v5962, %v6034
    %v6036 = vpop.f32.mrb[0].mxu0
    %v6037 = vadd.f32 %v5964, %v6036
    %v6038 = vpop.f32.mrb[0].mxu0
    %v6039 = vadd.f32 %v5966, %v6038
    %6040 = vmatprep.mubr.bf16.mxu0 %v3088
    %6041 = vmatmul.mubr.bf16.gmra.mrb[0].mxu0 %v3087
    %v6042 = vpop.f32.mrb[0].mxu0
    %v6043 = vadd.f32 %v5970, %v6042
    %v6044 = vpop.f32.mrb[0].mxu0
    %v6045 = vadd.f32 %v5972, %v6044
    %v6046 = vpop.f32.mrb[0].mxu0
    %v6047 = vadd.f32 %v5974, %v6046
    %v6048 = vpop.f32.mrb[0].mxu0
    %v6049 = vadd.f32 %v5976, %v6048
    %6050 = vmatprep.mubr.bf16.mxu0 %v3096
    %6051 = vmatmul.mubr.bf16.gmra.mrb[0].mxu0 %v3095
    %v6052 = vpop.f32.mrb[0].mxu0
    %v6053 = vadd.f32 %v5980, %v6052
    %v6054 = vpop.f32.mrb[0].mxu0
    %v6055 = vadd.f32 %v5982, %v6054
    %v6056 = vpop.f32.mrb[0].mxu0
    %v6057 = vadd.f32 %v5984, %v6056
    %v6058 = vpop.f32.mrb[0].mxu0
    %v6059 = vadd.f32 %v5986, %v6058
    %6060 = vmatprep.mubr.bf16.mxu0 %v3104
    %6061 = vmatmul.mubr.bf16.gmra.mrb[0].mxu0 %v3103
    %v6062 = vpop.f32.mrb[0].mxu0
    %v6063 = vadd.f32 %v5990, %v6062
    %v6064 = vpop.f32.mrb[0].mxu0
    %v6065 = vadd.f32 %v5992, %v6064
    %v6066 = vpop.f32.mrb[0].mxu0
    %v6067 = vadd.f32 %v5994, %v6066
    %v6068 = vpop.f32.mrb[0].mxu0
    %v6069 = vadd.f32 %v5996, %v6068
    %6070 = vdwg.mxu0
    %6071 = vmatprep.subr.bf16.mxu0 %v5254
    %6072 = vmatpush1.bf16.msra.mxu0 %v5253
    %6073 = vmatprep.subr.bf16.mxu0 %v5261
    %6074 = vmatpush1.bf16.msra.mxu0 %v5260
    %6075 = vmatprep.subr.bf16.mxu0 %v5268
    %6076 = vmatpush1.bf16.msra.mxu0 %v5267
    %6077 = vmatprep.subr.bf16.mxu0 %v5275
    %6078 = vmatpush1.bf16.msra.mxu0 %v5274
    %6079 = vmatprep.subr.bf16.mxu0 %v5282
    %6080 = vmatpush1.bf16.msra.mxu0 %v5281
    %6081 = vmatprep.subr.bf16.mxu0 %v5289
    %6082 = vmatpush1.bf16.msra.mxu0 %v5288
    %6083 = vmatprep.subr.bf16.mxu0 %v5296
    %6084 = vmatpush1.bf16.msra.mxu0 %v5295
    %6085 = vmatprep.subr.bf16.mxu0 %v5303
    %6086 = vmatpush1.bf16.msra.mxu0 %v5302
    %6087 = vmatprep.subr.bf16.mxu0 %v5310
    %6088 = vmatpush1.bf16.msra.mxu0 %v5309
    %6089 = vmatprep.subr.bf16.mxu0 %v5317
    %6090 = vmatpush1.bf16.msra.mxu0 %v5316
    %6091 = vmatprep.subr.bf16.mxu0 %v5324
    %6092 = vmatpush1.bf16.msra.mxu0 %v5323
    %6093 = vmatprep.subr.bf16.mxu0 %v5331
    %6094 = vmatpush1.bf16.msra.mxu0 %v5330
    %6095 = vmatprep.subr.bf16.mxu0 %v5338
    %6096 = vmatpush1.bf16.msra.mxu0 %v5337
    %6097 = vmatprep.subr.bf16.mxu0 %v5345
    %6098 = vmatpush1.bf16.msra.mxu0 %v5344
    %6099 = vmatprep.subr.bf16.mxu0 %v5352
    %6100 = vmatpush1.bf16.msra.mxu0 %v5351
    %6101 = vmatprep.subr.bf16.mxu0 %v5359
    %6102 = vmatpush1.bf16.msra.mxu0 %v5358
    %6103 = vmatprep.mubr.bf16.mxu0 %v3082
    %6104 = vmatmul.mubr.bf16.gmra.mrb[0].mxu0 %v3081
    %v6105 = vpop.f32.mrb[0].mxu0
    %v6106 = vadd.f32 %v6033, %v6105
    %v6107 = vpop.f32.mrb[0].mxu0
    %v6108 = vadd.f32 %v6035, %v6107
    %v6109 = vpop.f32.mrb[0].mxu0
    %v6110 = vadd.f32 %v6037, %v6109
    %v6111 = vpop.f32.mrb[0].mxu0
    %v6112 = vadd.f32 %v6039, %v6111
    %6113 = vmatprep.mubr.bf16.mxu0 %v3090
    %6114 = vmatmul.mubr.bf16.gmra.mrb[0].mxu0 %v3089
    %v6115 = vpop.f32.mrb[0].mxu0
    %v6116 = vadd.f32 %v6043, %v6115
    %v6117 = vpop.f32.mrb[0].mxu0
    %v6118 = vadd.f32 %v6045, %v6117
    %v6119 = vpop.f32.mrb[0].mxu0
    %v6120 = vadd.f32 %v6047, %v6119
    %v6121 = vpop.f32.mrb[0].mxu0
    %v6122 = vadd.f32 %v6049, %v6121
    %6123 = vmatprep.mubr.bf16.mxu0 %v3098
    %6124 = vmatmul.mubr.bf16.gmra.mrb[0].mxu0 %v3097
    %v6125 = vpop.f32.mrb[0].mxu0
    %v6126 = vadd.f32 %v6053, %v6125
    %v6127 = vpop.f32.mrb[0].mxu0
    %v6128 = vadd.f32 %v6055, %v6127
    %v6129 = vpop.f32.mrb[0].mxu0
    %v6130 = vadd.f32 %v6057, %v6129
    %v6131 = vpop.f32.mrb[0].mxu0
    %v6132 = vadd.f32 %v6059, %v6131
    %6133 = vmatprep.mubr.bf16.mxu0 %v3106
    %6134 = vmatmul.mubr.bf16.gmra.mrb[0].mxu0 %v3105
    %v6135 = vpop.f32.mrb[0].mxu0
    %v6136 = vadd.f32 %v6063, %v6135
    %v6137 = vpop.f32.mrb[0].mxu0
    %v6138 = vadd.f32 %v6065, %v6137
    %v6139 = vpop.f32.mrb[0].mxu0
    %v6140 = vadd.f32 %v6067, %v6139
    %v6141 = vpop.f32.mrb[0].mxu0
    %v6142 = vadd.f32 %v6069, %v6141
    %6143 = vdwg.mxu0
    %6144 = vmatprep.subr.bf16.mxu0 %v5366
    %6145 = vmatpush1.bf16.msra.mxu0 %v5365
    %6146 = vmatprep.subr.bf16.mxu0 %v5373
    %6147 = vmatpush1.bf16.msra.mxu0 %v5372
    %6148 = vmatprep.subr.bf16.mxu0 %v5380
    %6149 = vmatpush1.bf16.msra.mxu0 %v5379
    %6150 = vmatprep.subr.bf16.mxu0 %v5387
    %6151 = vmatpush1.bf16.msra.mxu0 %v5386
    %6152 = vmatprep.subr.bf16.mxu0 %v5394
    %6153 = vmatpush1.bf16.msra.mxu0 %v5393
    %6154 = vmatprep.subr.bf16.mxu0 %v5401
    %6155 = vmatpush1.bf16.msra.mxu0 %v5400
    %6156 = vmatprep.subr.bf16.mxu0 %v5408
    %6157 = vmatpush1.bf16.msra.mxu0 %v5407
    %6158 = vmatprep.subr.bf16.mxu0 %v5415
    %6159 = vmatpush1.bf16.msra.mxu0 %v5414
    %6160 = vmatprep.subr.bf16.mxu0 %v5422
    %6161 = vmatpush1.bf16.msra.mxu0 %v5421
    %6162 = vmatprep.subr.bf16.mxu0 %v5429
    %6163 = vmatpush1.bf16.msra.mxu0 %v5428
    %6164 = vmatprep.subr.bf16.mxu0 %v5436
    %6165 = vmatpush1.bf16.msra.mxu0 %v5435
    %6166 = vmatprep.subr.bf16.mxu0 %v5443
    %6167 = vmatpush1.bf16.msra.mxu0 %v5442
    %6168 = vmatprep.subr.bf16.mxu0 %v5450
    %6169 = vmatpush1.bf16.msra.mxu0 %v5449
    %6170 = vmatprep.subr.bf16.mxu0 %v5457
    %6171 = vmatpush1.bf16.msra.mxu0 %v5456
    %6172 = vmatprep.subr.bf16.mxu0 %v5464
    %6173 = vmatpush1.bf16.msra.mxu0 %v5463
    %6174 = vmatprep.subr.bf16.mxu0 %v5471
    %6175 = vmatpush1.bf16.msra.mxu0 %v5470
    %6176 = vmatprep.mubr.bf16.mxu0 %v3084
    %6177 = vmatmul.mubr.bf16.gmra.mrb[0].mxu0 %v3083
    %v6178 = vpop.f32.mrb[0].mxu0
    %v6179 = vadd.f32 %v6106, %v6178
    %v6180 = vpop.f32.mrb[0].mxu0
    %v6181 = vadd.f32 %v6108, %v6180
    %v6182 = vpop.f32.mrb[0].mxu0
    %v6183 = vadd.f32 %v6110, %v6182
    %v6184 = vpop.f32.mrb[0].mxu0
    %v6185 = vadd.f32 %v6112, %v6184
    %6186 = vmatprep.mubr.bf16.mxu0 %v3092
    %6187 = vmatmul.mubr.bf16.gmra.mrb[0].mxu0 %v3091
    %v6188 = vpop.f32.mrb[0].mxu0
    %v6189 = vadd.f32 %v6116, %v6188
    %v6190 = vpop.f32.mrb[0].mxu0
    %v6191 = vadd.f32 %v6118, %v6190
    %v6192 = vpop.f32.mrb[0].mxu0
    %v6193 = vadd.f32 %v6120, %v6192
    %v6194 = vpop.f32.mrb[0].mxu0
    %v6195 = vadd.f32 %v6122, %v6194
    %6196 = vmatprep.mubr.bf16.mxu0 %v3100
    %6197 = vmatmul.mubr.bf16.gmra.mrb[0].mxu0 %v3099
    %v6198 = vpop.f32.mrb[0].mxu0
    %v6199 = vadd.f32 %v6126, %v6198
    %v6200 = vpop.f32.mrb[0].mxu0
    %v6201 = vadd.f32 %v6128, %v6200
    %v6202 = vpop.f32.mrb[0].mxu0
    %v6203 = vadd.f32 %v6130, %v6202
    %v6204 = vpop.f32.mrb[0].mxu0
    %v6205 = vadd.f32 %v6132, %v6204
    %6206 = vmatprep.mubr.bf16.mxu0 %v3108
    %6207 = vmatmul.mubr.bf16.gmra.mrb[0].mxu0 %v3107
    %v6208 = vpop.f32.mrb[0].mxu0
    %v6209 = vadd.f32 %v6136, %v6208
    %v6210 = vpop.f32.mrb[0].mxu0
    %v6211 = vadd.f32 %v6138, %v6210
    %v6212 = vpop.f32.mrb[0].mxu0
    %v6213 = vadd.f32 %v6140, %v6212
    %v6214 = vpop.f32.mrb[0].mxu0
    %v6215 = vadd.f32 %v6142, %v6214
    %6216 = vdwg.mxu0
    %6217 = vmatprep.subr.bf16.mxu0 %v5032
    %6218 = vmatpush1.bf16.msra.mxu0 %v5031
    %6219 = vmatprep.subr.bf16.mxu0 %v5039
    %6220 = vmatpush1.bf16.msra.mxu0 %v5038
    %6221 = vmatprep.subr.bf16.mxu0 %v5046
    %6222 = vmatpush1.bf16.msra.mxu0 %v5045
    %6223 = vmatprep.subr.bf16.mxu0 %v5053
    %6224 = vmatpush1.bf16.msra.mxu0 %v5052
    %6225 = vmatprep.subr.bf16.mxu0 %v5060
    %6226 = vmatpush1.bf16.msra.mxu0 %v5059
    %6227 = vmatprep.subr.bf16.mxu0 %v5067
    %6228 = vmatpush1.bf16.msra.mxu0 %v5066
    %6229 = vmatprep.subr.bf16.mxu0 %v5074
    %6230 = vmatpush1.bf16.msra.mxu0 %v5073
    %6231 = vmatprep.subr.bf16.mxu0 %v5081
    %6232 = vmatpush1.bf16.msra.mxu0 %v5080
    %6233 = vmatprep.subr.bf16.mxu0 %v5088
    %6234 = vmatpush1.bf16.msra.mxu0 %v5087
    %6235 = vmatprep.subr.bf16.mxu0 %v5095
    %6236 = vmatpush1.bf16.msra.mxu0 %v5094
    %6237 = vmatprep.subr.bf16.mxu0 %v5102
    %6238 = vmatpush1.bf16.msra.mxu0 %v5101
    %6239 = vmatprep.subr.bf16.mxu0 %v5109
    %6240 = vmatpush1.bf16.msra.mxu0 %v5108
    %6241 = vmatprep.subr.bf16.mxu0 %v5116
    %6242 = vmatpush1.bf16.msra.mxu0 %v5115
    %6243 = vmatprep.subr.bf16.mxu0 %v5123
    %6244 = vmatpush1.bf16.msra.mxu0 %v5122
    %6245 = vmatprep.subr.bf16.mxu0 %v5130
    %6246 = vmatpush1.bf16.msra.mxu0 %v5129
    %6247 = vmatprep.subr.bf16.mxu0 %v5137
    %6248 = vmatpush1.bf16.msra.mxu0 %v5136
    %6249 = vmatprep.mubr.bf16.mxu0 %v3078
    %6250 = vmatmul.mubr.bf16.gmra.mrb[0].mxu0 %v3077
    %v6251 = vpop.f32.mrb[0].mxu0
    %v6252 = vadd.f32 0.0, %v6251
    %v6253 = vpop.f32.mrb[0].mxu0
    %v6254 = vadd.f32 0.0, %v6253
    %v6255 = vpop.f32.mrb[0].mxu0
    %v6256 = vadd.f32 0.0, %v6255
    %v6257 = vpop.f32.mrb[0].mxu0
    %v6258 = vadd.f32 0.0, %v6257
    %6259 = vmatprep.mubr.bf16.mxu0 %v3086
    %6260 = vmatmul.mubr.bf16.gmra.mrb[0].mxu0 %v3085
    %v6261 = vpop.f32.mrb[0].mxu0
    %v6262 = vadd.f32 0.0, %v6261
    %v6263 = vpop.f32.mrb[0].mxu0
    %v6264 = vadd.f32 0.0, %v6263
    %v6265 = vpop.f32.mrb[0].mxu0
    %v6266 = vadd.f32 0.0, %v6265
    %v6267 = vpop.f32.mrb[0].mxu0
    %v6268 = vadd.f32 0.0, %v6267
    %6269 = vmatprep.mubr.bf16.mxu0 %v3094
    %6270 = vmatmul.mubr.bf16.gmra.mrb[0].mxu0 %v3093
    %v6271 = vpop.f32.mrb[0].mxu0
    %v6272 = vadd.f32 0.0, %v6271
    %v6273 = vpop.f32.mrb[0].mxu0
    %v6274 = vadd.f32 0.0, %v6273
    %v6275 = vpop.f32.mrb[0].mxu0
    %v6276 = vadd.f32 0.0, %v6275
    %v6277 = vpop.f32.mrb[0].mxu0
    %v6278 = vadd.f32 0.0, %v6277
    %6279 = vmatprep.mubr.bf16.mxu0 %v3102
    %6280 = vmatmul.mubr.bf16.gmra.mrb[0].mxu0 %v3101
    %v6281 = vpop.f32.mrb[0].mxu0
    %v6282 = vadd.f32 0.0, %v6281
    %v6283 = vpop.f32.mrb[0].mxu0
    %v6284 = vadd.f32 0.0, %v6283
    %v6285 = vpop.f32.mrb[0].mxu0
    %v6286 = vadd.f32 0.0, %v6285
    %v6287 = vpop.f32.mrb[0].mxu0
    %v6288 = vadd.f32 0.0, %v6287
    %6289 = vdwg.mxu0
    %6290 = vmatprep.subr.bf16.mxu0 %v5144
    %6291 = vmatpush1.bf16.msra.mxu0 %v5143
    %6292 = vmatprep.subr.bf16.mxu0 %v5151
    %6293 = vmatpush1.bf16.msra.mxu0 %v5150
    %6294 = vmatprep.subr.bf16.mxu0 %v5158
    %6295 = vmatpush1.bf16.msra.mxu0 %v5157
    %6296 = vmatprep.subr.bf16.mxu0 %v5165
    %6297 = vmatpush1.bf16.msra.mxu0 %v5164
    %6298 = vmatprep.subr.bf16.mxu0 %v5172
    %6299 = vmatpush1.bf16.msra.mxu0 %v5171
    %6300 = vmatprep.subr.bf16.mxu0 %v5179
    %6301 = vmatpush1.bf16.msra.mxu0 %v5178
    %6302 = vmatprep.subr.bf16.mxu0 %v5186
    %6303 = vmatpush1.bf16.msra.mxu0 %v5185
    %6304 = vmatprep.subr.bf16.mxu0 %v5193
    %6305 = vmatpush1.bf16.msra.mxu0 %v5192
    %6306 = vmatprep.subr.bf16.mxu0 %v5200
    %6307 = vmatpush1.bf16.msra.mxu0 %v5199
    %6308 = vmatprep.subr.bf16.mxu0 %v5207
    %6309 = vmatpush1.bf16.msra.mxu0 %v5206
    %6310 = vmatprep.subr.bf16.mxu0 %v5214
    %6311 = vmatpush1.bf16.msra.mxu0 %v5213
    %6312 = vmatprep.subr.bf16.mxu0 %v5221
    %6313 = vmatpush1.bf16.msra.mxu0 %v5220
    %6314 = vmatprep.subr.bf16.mxu0 %v5228
    %6315 = vmatpush1.bf16.msra.mxu0 %v5227
    %6316 = vmatprep.subr.bf16.mxu0 %v5235
    %6317 = vmatpush1.bf16.msra.mxu0 %v5234
    %6318 = vmatprep.subr.bf16.mxu0 %v5242
    %6319 = vmatpush1.bf16.msra.mxu0 %v5241
    %6320 = vmatprep.subr.bf16.mxu0 %v5249
    %6321 = vmatpush1.bf16.msra.mxu0 %v5248
    %6322 = vmatprep.mubr.bf16.mxu0 %v3080
    %6323 = vmatmul.mubr.bf16.gmra.mrb[0].mxu0 %v3079
    %v6324 = vpop.f32.mrb[0].mxu0
    %v6325 = vadd.f32 %v6252, %v6324
    %v6326 = vpop.f32.mrb[0].mxu0
    %v6327 = vadd.f32 %v6254, %v6326
    %v6328 = vpop.f32.mrb[0].mxu0
    %v6329 = vadd.f32 %v6256, %v6328
    %v6330 = vpop.f32.mrb[0].mxu0
    %v6331 = vadd.f32 %v6258, %v6330
    %6332 = vmatprep.mubr.bf16.mxu0 %v3088
    %6333 = vmatmul.mubr.bf16.gmra.mrb[0].mxu0 %v3087
    %v6334 = vpop.f32.mrb[0].mxu0
    %v6335 = vadd.f32 %v6262, %v6334
    %v6336 = vpop.f32.mrb[0].mxu0
    %v6337 = vadd.f32 %v6264, %v6336
    %v6338 = vpop.f32.mrb[0].mxu0
    %v6339 = vadd.f32 %v6266, %v6338
    %v6340 = vpop.f32.mrb[0].mxu0
    %v6341 = vadd.f32 %v6268, %v6340
    %6342 = vmatprep.mubr.bf16.mxu0 %v3096
    %6343 = vmatmul.mubr.bf16.gmra.mrb[0].mxu0 %v3095
    %v6344 = vpop.f32.mrb[0].mxu0
    %v6345 = vadd.f32 %v6272, %v6344
    %v6346 = vpop.f32.mrb[0].mxu0
    %v6347 = vadd.f32 %v6274, %v6346
    %v6348 = vpop.f32.mrb[0].mxu0
    %v6349 = vadd.f32 %v6276, %v6348
    %v6350 = vpop.f32.mrb[0].mxu0
    %v6351 = vadd.f32 %v6278, %v6350
    %6352 = vmatprep.mubr.bf16.mxu0 %v3104
    %6353 = vmatmul.mubr.bf16.gmra.mrb[0].mxu0 %v3103
    %v6354 = vpop.f32.mrb[0].mxu0
    %v6355 = vadd.f32 %v6282, %v6354
    %v6356 = vpop.f32.mrb[0].mxu0
    %v6357 = vadd.f32 %v6284, %v6356
    %v6358 = vpop.f32.mrb[0].mxu0
    %v6359 = vadd.f32 %v6286, %v6358
    %v6360 = vpop.f32.mrb[0].mxu0
    %v6361 = vadd.f32 %v6288, %v6360
    %6362 = vdwg.mxu0
    %6363 = vmatprep.subr.bf16.mxu0 %v5256
    %6364 = vmatpush1.bf16.msra.mxu0 %v5255
    %6365 = vmatprep.subr.bf16.mxu0 %v5263
    %6366 = vmatpush1.bf16.msra.mxu0 %v5262
    %6367 = vmatprep.subr.bf16.mxu0 %v5270
    %6368 = vmatpush1.bf16.msra.mxu0 %v5269
    %6369 = vmatprep.subr.bf16.mxu0 %v5277
    %6370 = vmatpush1.bf16.msra.mxu0 %v5276
    %6371 = vmatprep.subr.bf16.mxu0 %v5284
    %6372 = vmatpush1.bf16.msra.mxu0 %v5283
    %6373 = vmatprep.subr.bf16.mxu0 %v5291
    %6374 = vmatpush1.bf16.msra.mxu0 %v5290
    %6375 = vmatprep.subr.bf16.mxu0 %v5298
    %6376 = vmatpush1.bf16.msra.mxu0 %v5297
    %6377 = vmatprep.subr.bf16.mxu0 %v5305
    %6378 = vmatpush1.bf16.msra.mxu0 %v5304
    %6379 = vmatprep.subr.bf16.mxu0 %v5312
    %6380 = vmatpush1.bf16.msra.mxu0 %v5311
    %6381 = vmatprep.subr.bf16.mxu0 %v5319
    %6382 = vmatpush1.bf16.msra.mxu0 %v5318
    %6383 = vmatprep.subr.bf16.mxu0 %v5326
    %6384 = vmatpush1.bf16.msra.mxu0 %v5325
    %6385 = vmatprep.subr.bf16.mxu0 %v5333
    %6386 = vmatpush1.bf16.msra.mxu0 %v5332
    %6387 = vmatprep.subr.bf16.mxu0 %v5340
    %6388 = vmatpush1.bf16.msra.mxu0 %v5339
    %6389 = vmatprep.subr.bf16.mxu0 %v5347
    %6390 = vmatpush1.bf16.msra.mxu0 %v5346
    %6391 = vmatprep.subr.bf16.mxu0 %v5354
    %6392 = vmatpush1.bf16.msra.mxu0 %v5353
    %6393 = vmatprep.subr.bf16.mxu0 %v5361
    %6394 = vmatpush1.bf16.msra.mxu0 %v5360
    %6395 = vmatprep.mubr.bf16.mxu0 %v3082
    %6396 = vmatmul.mubr.bf16.gmra.mrb[0].mxu0 %v3081
    %v6397 = vpop.f32.mrb[0].mxu0
    %v6398 = vadd.f32 %v6325, %v6397
    %v6399 = vpop.f32.mrb[0].mxu0
    %v6400 = vadd.f32 %v6327, %v6399
    %v6401 = vpop.f32.mrb[0].mxu0
    %v6402 = vadd.f32 %v6329, %v6401
    %v6403 = vpop.f32.mrb[0].mxu0
    %v6404 = vadd.f32 %v6331, %v6403
    %6405 = vmatprep.mubr.bf16.mxu0 %v3090
    %6406 = vmatmul.mubr.bf16.gmra.mrb[0].mxu0 %v3089
    %v6407 = vpop.f32.mrb[0].mxu0
    %v6408 = vadd.f32 %v6335, %v6407
    %v6409 = vpop.f32.mrb[0].mxu0
    %v6410 = vadd.f32 %v6337, %v6409
    %v6411 = vpop.f32.mrb[0].mxu0
    %v6412 = vadd.f32 %v6339, %v6411
    %v6413 = vpop.f32.mrb[0].mxu0
    %v6414 = vadd.f32 %v6341, %v6413
    %6415 = vmatprep.mubr.bf16.mxu0 %v3098
    %6416 = vmatmul.mubr.bf16.gmra.mrb[0].mxu0 %v3097
    %v6417 = vpop.f32.mrb[0].mxu0
    %v6418 = vadd.f32 %v6345, %v6417
    %v6419 = vpop.f32.mrb[0].mxu0
    %v6420 = vadd.f32 %v6347, %v6419
    %v6421 = vpop.f32.mrb[0].mxu0
    %v6422 = vadd.f32 %v6349, %v6421
    %v6423 = vpop.f32.mrb[0].mxu0
    %v6424 = vadd.f32 %v6351, %v6423
    %6425 = vmatprep.mubr.bf16.mxu0 %v3106
    %6426 = vmatmul.mubr.bf16.gmra.mrb[0].mxu0 %v3105
    %v6427 = vpop.f32.mrb[0].mxu0
    %v6428 = vadd.f32 %v6355, %v6427
    %v6429 = vpop.f32.mrb[0].mxu0
    %v6430 = vadd.f32 %v6357, %v6429
    %v6431 = vpop.f32.mrb[0].mxu0
    %v6432 = vadd.f32 %v6359, %v6431
    %v6433 = vpop.f32.mrb[0].mxu0
    %v6434 = vadd.f32 %v6361, %v6433
    %6435 = vdwg.mxu0
    %6436 = vmatprep.subr.bf16.mxu0 %v5368
    %6437 = vmatpush1.bf16.msra.mxu0 %v5367
    %6438 = vmatprep.subr.bf16.mxu0 %v5375
    %6439 = vmatpush1.bf16.msra.mxu0 %v5374
    %6440 = vmatprep.subr.bf16.mxu0 %v5382
    %6441 = vmatpush1.bf16.msra.mxu0 %v5381
    %6442 = vmatprep.subr.bf16.mxu0 %v5389
    %6443 = vmatpush1.bf16.msra.mxu0 %v5388
    %6444 = vmatprep.subr.bf16.mxu0 %v5396
    %6445 = vmatpush1.bf16.msra.mxu0 %v5395
    %6446 = vmatprep.subr.bf16.mxu0 %v5403
    %6447 = vmatpush1.bf16.msra.mxu0 %v5402
    %6448 = vmatprep.subr.bf16.mxu0 %v5410
    %6449 = vmatpush1.bf16.msra.mxu0 %v5409
    %6450 = vmatprep.subr.bf16.mxu0 %v5417
    %6451 = vmatpush1.bf16.msra.mxu0 %v5416
    %6452 = vmatprep.subr.bf16.mxu0 %v5424
    %6453 = vmatpush1.bf16.msra.mxu0 %v5423
    %6454 = vmatprep.subr.bf16.mxu0 %v5431
    %6455 = vmatpush1.bf16.msra.mxu0 %v5430
    %6456 = vmatprep.subr.bf16.mxu0 %v5438
    %6457 = vmatpush1.bf16.msra.mxu0 %v5437
    %6458 = vmatprep.subr.bf16.mxu0 %v5445
    %6459 = vmatpush1.bf16.msra.mxu0 %v5444
    %6460 = vmatprep.subr.bf16.mxu0 %v5452
    %6461 = vmatpush1.bf16.msra.mxu0 %v5451
    %6462 = vmatprep.subr.bf16.mxu0 %v5459
    %6463 = vmatpush1.bf16.msra.mxu0 %v5458
    %6464 = vmatprep.subr.bf16.mxu0 %v5466
    %6465 = vmatpush1.bf16.msra.mxu0 %v5465
    %6466 = vmatprep.subr.bf16.mxu0 %v5473
    %6467 = vmatpush1.bf16.msra.mxu0 %v5472
    %6468 = vmatprep.mubr.bf16.mxu0 %v3084
    %6469 = vmatmul.mubr.bf16.gmra.mrb[0].mxu0 %v3083
    %v6470 = vpop.f32.mrb[0].mxu0
    %v6471 = vadd.f32 %v6398, %v6470
    %v6472 = vpop.f32.mrb[0].mxu0
    %v6473 = vadd.f32 %v6400, %v6472
    %v6474 = vpop.f32.mrb[0].mxu0
    %v6475 = vadd.f32 %v6402, %v6474
    %v6476 = vpop.f32.mrb[0].mxu0
    %v6477 = vadd.f32 %v6404, %v6476
    %6478 = vmatprep.mubr.bf16.mxu0 %v3092
    %6479 = vmatmul.mubr.bf16.gmra.mrb[0].mxu0 %v3091
    %v6480 = vpop.f32.mrb[0].mxu0
    %v6481 = vadd.f32 %v6408, %v6480
    %v6482 = vpop.f32.mrb[0].mxu0
    %v6483 = vadd.f32 %v6410, %v6482
    %v6484 = vpop.f32.mrb[0].mxu0
    %v6485 = vadd.f32 %v6412, %v6484
    %v6486 = vpop.f32.mrb[0].mxu0
    %v6487 = vadd.f32 %v6414, %v6486
    %6488 = vmatprep.mubr.bf16.mxu0 %v3100
    %6489 = vmatmul.mubr.bf16.gmra.mrb[0].mxu0 %v3099
    %v6490 = vpop.f32.mrb[0].mxu0
    %v6491 = vadd.f32 %v6418, %v6490
    %v6492 = vpop.f32.mrb[0].mxu0
    %v6493 = vadd.f32 %v6420, %v6492
    %v6494 = vpop.f32.mrb[0].mxu0
    %v6495 = vadd.f32 %v6422, %v6494
    %v6496 = vpop.f32.mrb[0].mxu0
    %v6497 = vadd.f32 %v6424, %v6496
    %6498 = vmatprep.mubr.bf16.mxu0 %v3108
    %6499 = vmatmul.mubr.bf16.gmra.mrb[0].mxu0 %v3107
    %v6500 = vpop.f32.mrb[0].mxu0
    %v6501 = vadd.f32 %v6428, %v6500
    %v6502 = vpop.f32.mrb[0].mxu0
    %v6503 = vadd.f32 %v6430, %v6502
    %v6504 = vpop.f32.mrb[0].mxu0
    %v6505 = vadd.f32 %v6432, %v6504
    %v6506 = vpop.f32.mrb[0].mxu0
    %v6507 = vadd.f32 %v6434, %v6506
    %6508 = vdwg.mxu0
    %6509 = vmatprep.subr.bf16.mxu0 %v5034
    %6510 = vmatpush1.bf16.msra.mxu0 %v5033
    %6511 = vmatprep.subr.bf16.mxu0 %v5041
    %6512 = vmatpush1.bf16.msra.mxu0 %v5040
    %6513 = vmatprep.subr.bf16.mxu0 %v5048
    %6514 = vmatpush1.bf16.msra.mxu0 %v5047
    %6515 = vmatprep.subr.bf16.mxu0 %v5055
    %6516 = vmatpush1.bf16.msra.mxu0 %v5054
    %6517 = vmatprep.subr.bf16.mxu0 %v5062
    %6518 = vmatpush1.bf16.msra.mxu0 %v5061
    %6519 = vmatprep.subr.bf16.mxu0 %v5069
    %6520 = vmatpush1.bf16.msra.mxu0 %v5068
    %6521 = vmatprep.subr.bf16.mxu0 %v5076
    %6522 = vmatpush1.bf16.msra.mxu0 %v5075
    %6523 = vmatprep.subr.bf16.mxu0 %v5083
    %6524 = vmatpush1.bf16.msra.mxu0 %v5082
    %6525 = vmatprep.subr.bf16.mxu0 %v5090
    %6526 = vmatpush1.bf16.msra.mxu0 %v5089
    %6527 = vmatprep.subr.bf16.mxu0 %v5097
    %6528 = vmatpush1.bf16.msra.mxu0 %v5096
    %6529 = vmatprep.subr.bf16.mxu0 %v5104
    %6530 = vmatpush1.bf16.msra.mxu0 %v5103
    %6531 = vmatprep.subr.bf16.mxu0 %v5111
    %6532 = vmatpush1.bf16.msra.mxu0 %v5110
    %6533 = vmatprep.subr.bf16.mxu0 %v5118
    %6534 = vmatpush1.bf16.msra.mxu0 %v5117
    %6535 = vmatprep.subr.bf16.mxu0 %v5125
    %6536 = vmatpush1.bf16.msra.mxu0 %v5124
    %6537 = vmatprep.subr.bf16.mxu0 %v5132
    %6538 = vmatpush1.bf16.msra.mxu0 %v5131
    %6539 = vmatprep.subr.bf16.mxu0 %v5139
    %6540 = vmatpush1.bf16.msra.mxu0 %v5138
    %6541 = vmatprep.mubr.bf16.mxu0 %v3078
    %6542 = vmatmul.mubr.bf16.gmra.mrb[0].mxu0 %v3077
    %v6543 = vpop.f32.mrb[0].mxu0
    %v6544 = vadd.f32 0.0, %v6543
    %v6545 = vpop.f32.mrb[0].mxu0
    %v6546 = vadd.f32 0.0, %v6545
    %v6547 = vpop.f32.mrb[0].mxu0
    %v6548 = vadd.f32 0.0, %v6547
    %v6549 = vpop.f32.mrb[0].mxu0
    %v6550 = vadd.f32 0.0, %v6549
    %6551 = vmatprep.mubr.bf16.mxu0 %v3086
    %6552 = vmatmul.mubr.bf16.gmra.mrb[0].mxu0 %v3085
    %v6553 = vpop.f32.mrb[0].mxu0
    %v6554 = vadd.f32 0.0, %v6553
    %v6555 = vpop.f32.mrb[0].mxu0
    %v6556 = vadd.f32 0.0, %v6555
    %v6557 = vpop.f32.mrb[0].mxu0
    %v6558 = vadd.f32 0.0, %v6557
    %v6559 = vpop.f32.mrb[0].mxu0
    %v6560 = vadd.f32 0.0, %v6559
    %6561 = vmatprep.mubr.bf16.mxu0 %v3094
    %6562 = vmatmul.mubr.bf16.gmra.mrb[0].mxu0 %v3093
    %v6563 = vpop.f32.mrb[0].mxu0
    %v6564 = vadd.f32 0.0, %v6563
    %v6565 = vpop.f32.mrb[0].mxu0
    %v6566 = vadd.f32 0.0, %v6565
    %v6567 = vpop.f32.mrb[0].mxu0
    %v6568 = vadd.f32 0.0, %v6567
    %v6569 = vpop.f32.mrb[0].mxu0
    %v6570 = vadd.f32 0.0, %v6569
    %6571 = vmatprep.mubr.bf16.mxu0 %v3102
    %6572 = vmatmul.mubr.bf16.gmra.mrb[0].mxu0 %v3101
    %v6573 = vpop.f32.mrb[0].mxu0
    %v6574 = vadd.f32 0.0, %v6573
    %v6575 = vpop.f32.mrb[0].mxu0
    %v6576 = vadd.f32 0.0, %v6575
    %v6577 = vpop.f32.mrb[0].mxu0
    %v6578 = vadd.f32 0.0, %v6577
    %v6579 = vpop.f32.mrb[0].mxu0
    %v6580 = vadd.f32 0.0, %v6579
    %6581 = vdwg.mxu0
    %6582 = vmatprep.subr.bf16.mxu0 %v5146
    %6583 = vmatpush1.bf16.msra.mxu0 %v5145
    %6584 = vmatprep.subr.bf16.mxu0 %v5153
    %6585 = vmatpush1.bf16.msra.mxu0 %v5152
    %6586 = vmatprep.subr.bf16.mxu0 %v5160
    %6587 = vmatpush1.bf16.msra.mxu0 %v5159
    %6588 = vmatprep.subr.bf16.mxu0 %v5167
    %6589 = vmatpush1.bf16.msra.mxu0 %v5166
    %6590 = vmatprep.subr.bf16.mxu0 %v5174
    %6591 = vmatpush1.bf16.msra.mxu0 %v5173
    %6592 = vmatprep.subr.bf16.mxu0 %v5181
    %6593 = vmatpush1.bf16.msra.mxu0 %v5180
    %6594 = vmatprep.subr.bf16.mxu0 %v5188
    %6595 = vmatpush1.bf16.msra.mxu0 %v5187
    %6596 = vmatprep.subr.bf16.mxu0 %v5195
    %6597 = vmatpush1.bf16.msra.mxu0 %v5194
    %6598 = vmatprep.subr.bf16.mxu0 %v5202
    %6599 = vmatpush1.bf16.msra.mxu0 %v5201
    %6600 = vmatprep.subr.bf16.mxu0 %v5209
    %6601 = vmatpush1.bf16.msra.mxu0 %v5208
    %6602 = vmatprep.subr.bf16.mxu0 %v5216
    %6603 = vmatpush1.bf16.msra.mxu0 %v5215
    %6604 = vmatprep.subr.bf16.mxu0 %v5223
    %6605 = vmatpush1.bf16.msra.mxu0 %v5222
    %6606 = vmatprep.subr.bf16.mxu0 %v5230
    %6607 = vmatpush1.bf16.msra.mxu0 %v5229
    %6608 = vmatprep.subr.bf16.mxu0 %v5237
    %6609 = vmatpush1.bf16.msra.mxu0 %v5236
    %6610 = vmatprep.subr.bf16.mxu0 %v5244
    %6611 = vmatpush1.bf16.msra.mxu0 %v5243
    %6612 = vmatprep.subr.bf16.mxu0 %v5251
    %6613 = vmatpush1.bf16.msra.mxu0 %v5250
    %6614 = vmatprep.mubr.bf16.mxu0 %v3080
    %6615 = vmatmul.mubr.bf16.gmra.mrb[0].mxu0 %v3079
    %v6616 = vpop.f32.mrb[0].mxu0
    %v6617 = vadd.f32 %v6544, %v6616
    %v6618 = vpop.f32.mrb[0].mxu0
    %v6619 = vadd.f32 %v6546, %v6618
    %v6620 = vpop.f32.mrb[0].mxu0
    %v6621 = vadd.f32 %v6548, %v6620
    %v6622 = vpop.f32.mrb[0].mxu0
    %v6623 = vadd.f32 %v6550, %v6622
    %6624 = vmatprep.mubr.bf16.mxu0 %v3088
    %6625 = vmatmul.mubr.bf16.gmra.mrb[0].mxu0 %v3087
    %v6626 = vpop.f32.mrb[0].mxu0
    %v6627 = vadd.f32 %v6554, %v6626
    %v6628 = vpop.f32.mrb[0].mxu0
    %v6629 = vadd.f32 %v6556, %v6628
    %v6630 = vpop.f32.mrb[0].mxu0
    %v6631 = vadd.f32 %v6558, %v6630
    %v6632 = vpop.f32.mrb[0].mxu0
    %v6633 = vadd.f32 %v6560, %v6632
    %6634 = vmatprep.mubr.bf16.mxu0 %v3096
    %6635 = vmatmul.mubr.bf16.gmra.mrb[0].mxu0 %v3095
    %v6636 = vpop.f32.mrb[0].mxu0
    %v6637 = vadd.f32 %v6564, %v6636
    %v6638 = vpop.f32.mrb[0].mxu0
    %v6639 = vadd.f32 %v6566, %v6638
    %v6640 = vpop.f32.mrb[0].mxu0
    %v6641 = vadd.f32 %v6568, %v6640
    %v6642 = vpop.f32.mrb[0].mxu0
    %v6643 = vadd.f32 %v6570, %v6642
    %6644 = vmatprep.mubr.bf16.mxu0 %v3104
    %6645 = vmatmul.mubr.bf16.gmra.mrb[0].mxu0 %v3103
    %v6646 = vpop.f32.mrb[0].mxu0
    %v6647 = vadd.f32 %v6574, %v6646
    %v6648 = vpop.f32.mrb[0].mxu0
    %v6649 = vadd.f32 %v6576, %v6648
    %v6650 = vpop.f32.mrb[0].mxu0
    %v6651 = vadd.f32 %v6578, %v6650
    %v6652 = vpop.f32.mrb[0].mxu0
    %v6653 = vadd.f32 %v6580, %v6652
    %6654 = vdwg.mxu0
    %6655 = vmatprep.subr.bf16.mxu0 %v5258
    %6656 = vmatpush1.bf16.msra.mxu0 %v5257
    %6657 = vmatprep.subr.bf16.mxu0 %v5265
    %6658 = vmatpush1.bf16.msra.mxu0 %v5264
    %6659 = vmatprep.subr.bf16.mxu0 %v5272
    %6660 = vmatpush1.bf16.msra.mxu0 %v5271
    %6661 = vmatprep.subr.bf16.mxu0 %v5279
    %6662 = vmatpush1.bf16.msra.mxu0 %v5278
    %6663 = vmatprep.subr.bf16.mxu0 %v5286
    %6664 = vmatpush1.bf16.msra.mxu0 %v5285
    %6665 = vmatprep.subr.bf16.mxu0 %v5293
    %6666 = vmatpush1.bf16.msra.mxu0 %v5292
    %6667 = vmatprep.subr.bf16.mxu0 %v5300
    %6668 = vmatpush1.bf16.msra.mxu0 %v5299
    %6669 = vmatprep.subr.bf16.mxu0 %v5307
    %6670 = vmatpush1.bf16.msra.mxu0 %v5306
    %6671 = vmatprep.subr.bf16.mxu0 %v5314
    %6672 = vmatpush1.bf16.msra.mxu0 %v5313
    %6673 = vmatprep.subr.bf16.mxu0 %v5321
    %6674 = vmatpush1.bf16.msra.mxu0 %v5320
    %6675 = vmatprep.subr.bf16.mxu0 %v5328
    %6676 = vmatpush1.bf16.msra.mxu0 %v5327
    %6677 = vmatprep.subr.bf16.mxu0 %v5335
    %6678 = vmatpush1.bf16.msra.mxu0 %v5334
    %6679 = vmatprep.subr.bf16.mxu0 %v5342
    %6680 = vmatpush1.bf16.msra.mxu0 %v5341
    %6681 = vmatprep.subr.bf16.mxu0 %v5349
    %6682 = vmatpush1.bf16.msra.mxu0 %v5348
    %6683 = vmatprep.subr.bf16.mxu0 %v5356
    %6684 = vmatpush1.bf16.msra.mxu0 %v5355
    %6685 = vmatprep.subr.bf16.mxu0 %v5363
    %6686 = vmatpush1.bf16.msra.mxu0 %v5362
    %6687 = vmatprep.mubr.bf16.mxu0 %v3082
    %6688 = vmatmul.mubr.bf16.gmra.mrb[0].mxu0 %v3081
    %v6689 = vpop.f32.mrb[0].mxu0
    %v6690 = vadd.f32 %v6617, %v6689
    %v6691 = vpop.f32.mrb[0].mxu0
    %v6692 = vadd.f32 %v6619, %v6691
    %v6693 = vpop.f32.mrb[0].mxu0
    %v6694 = vadd.f32 %v6621, %v6693
    %v6695 = vpop.f32.mrb[0].mxu0
    %v6696 = vadd.f32 %v6623, %v6695
    %6697 = vmatprep.mubr.bf16.mxu0 %v3090
    %6698 = vmatmul.mubr.bf16.gmra.mrb[0].mxu0 %v3089
    %v6699 = vpop.f32.mrb[0].mxu0
    %v6700 = vadd.f32 %v6627, %v6699
    %v6701 = vpop.f32.mrb[0].mxu0
    %v6702 = vadd.f32 %v6629, %v6701
    %v6703 = vpop.f32.mrb[0].mxu0
    %v6704 = vadd.f32 %v6631, %v6703
    %v6705 = vpop.f32.mrb[0].mxu0
    %v6706 = vadd.f32 %v6633, %v6705
    %6707 = vmatprep.mubr.bf16.mxu0 %v3098
    %6708 = vmatmul.mubr.bf16.gmra.mrb[0].mxu0 %v3097
    %v6709 = vpop.f32.mrb[0].mxu0
    %v6710 = vadd.f32 %v6637, %v6709
    %v6711 = vpop.f32.mrb[0].mxu0
    %v6712 = vadd.f32 %v6639, %v6711
    %v6713 = vpop.f32.mrb[0].mxu0
    %v6714 = vadd.f32 %v6641, %v6713
    %v6715 = vpop.f32.mrb[0].mxu0
    %v6716 = vadd.f32 %v6643, %v6715
    %6717 = vmatprep.mubr.bf16.mxu0 %v3106
    %6718 = vmatmul.mubr.bf16.gmra.mrb[0].mxu0 %v3105
    %v6719 = vpop.f32.mrb[0].mxu0
    %v6720 = vadd.f32 %v6647, %v6719
    %v6721 = vpop.f32.mrb[0].mxu0
    %v6722 = vadd.f32 %v6649, %v6721
    %v6723 = vpop.f32.mrb[0].mxu0
    %v6724 = vadd.f32 %v6651, %v6723
    %v6725 = vpop.f32.mrb[0].mxu0
    %v6726 = vadd.f32 %v6653, %v6725
    %6727 = vdwg.mxu0
    %6728 = vmatprep.subr.bf16.mxu0 %v5370
    %6729 = vmatpush1.bf16.msra.mxu0 %v5369
    %6730 = vmatprep.subr.bf16.mxu0 %v5377
    %6731 = vmatpush1.bf16.msra.mxu0 %v5376
    %6732 = vmatprep.subr.bf16.mxu0 %v5384
    %6733 = vmatpush1.bf16.msra.mxu0 %v5383
    %6734 = vmatprep.subr.bf16.mxu0 %v5391
    %6735 = vmatpush1.bf16.msra.mxu0 %v5390
    %6736 = vmatprep.subr.bf16.mxu0 %v5398
    %6737 = vmatpush1.bf16.msra.mxu0 %v5397
    %6738 = vmatprep.subr.bf16.mxu0 %v5405
    %6739 = vmatpush1.bf16.msra.mxu0 %v5404
    %6740 = vmatprep.subr.bf16.mxu0 %v5412
    %6741 = vmatpush1.bf16.msra.mxu0 %v5411
    %6742 = vmatprep.subr.bf16.mxu0 %v5419
    %6743 = vmatpush1.bf16.msra.mxu0 %v5418
    %6744 = vmatprep.subr.bf16.mxu0 %v5426
    %6745 = vmatpush1.bf16.msra.mxu0 %v5425
    %6746 = vmatprep.subr.bf16.mxu0 %v5433
    %6747 = vmatpush1.bf16.msra.mxu0 %v5432
    %6748 = vmatprep.subr.bf16.mxu0 %v5440
    %6749 = vmatpush1.bf16.msra.mxu0 %v5439
    %6750 = vmatprep.subr.bf16.mxu0 %v5447
    %6751 = vmatpush1.bf16.msra.mxu0 %v5446
    %6752 = vmatprep.subr.bf16.mxu0 %v5454
    %6753 = vmatpush1.bf16.msra.mxu0 %v5453
    %6754 = vmatprep.subr.bf16.mxu0 %v5461
    %6755 = vmatpush1.bf16.msra.mxu0 %v5460
    %6756 = vmatprep.subr.bf16.mxu0 %v5468
    %6757 = vmatpush1.bf16.msra.mxu0 %v5467
    %6758 = vmatprep.subr.bf16.mxu0 %v5475
    %6759 = vmatpush1.bf16.msra.mxu0 %v5474
    %6760 = vmatprep.mubr.bf16.mxu0 %v3084
    %6761 = vmatmul.mubr.bf16.gmra.mrb[0].mxu0 %v3083
    %v6762 = vpop.f32.mrb[0].mxu0
    %v6763 = vadd.f32 %v6690, %v6762
    %v6764 = vpop.f32.mrb[0].mxu0
    %v6765 = vadd.f32 %v6692, %v6764
    %v6766 = vpop.f32.mrb[0].mxu0
    %v6767 = vadd.f32 %v6694, %v6766
    %v6768 = vpop.f32.mrb[0].mxu0
    %v6769 = vadd.f32 %v6696, %v6768
    %6770 = vmatprep.mubr.bf16.mxu0 %v3092
    %6771 = vmatmul.mubr.bf16.gmra.mrb[0].mxu0 %v3091
    %v6772 = vpop.f32.mrb[0].mxu0
    %v6773 = vadd.f32 %v6700, %v6772
    %v6774 = vpop.f32.mrb[0].mxu0
    %v6775 = vadd.f32 %v6702, %v6774
    %v6776 = vpop.f32.mrb[0].mxu0
    %v6777 = vadd.f32 %v6704, %v6776
    %v6778 = vpop.f32.mrb[0].mxu0
    %v6779 = vadd.f32 %v6706, %v6778
    %6780 = vmatprep.mubr.bf16.mxu0 %v3100
    %6781 = vmatmul.mubr.bf16.gmra.mrb[0].mxu0 %v3099
    %v6782 = vpop.f32.mrb[0].mxu0
    %v6783 = vadd.f32 %v6710, %v6782
    %v6784 = vpop.f32.mrb[0].mxu0
    %v6785 = vadd.f32 %v6712, %v6784
    %v6786 = vpop.f32.mrb[0].mxu0
    %v6787 = vadd.f32 %v6714, %v6786
    %v6788 = vpop.f32.mrb[0].mxu0
    %v6789 = vadd.f32 %v6716, %v6788
    %6790 = vmatprep.mubr.bf16.mxu0 %v3108
    %6791 = vmatmul.mubr.bf16.gmra.mrb[0].mxu0 %v3107
    %v6792 = vpop.f32.mrb[0].mxu0
    %v6793 = vadd.f32 %v6720, %v6792
    %v6794 = vpop.f32.mrb[0].mxu0
    %v6795 = vadd.f32 %v6722, %v6794
    %v6796 = vpop.f32.mrb[0].mxu0
    %v6797 = vadd.f32 %v6724, %v6796
    %v6798 = vpop.f32.mrb[0].mxu0
    %v6799 = vadd.f32 %v6726, %v6798
    %6800 = vdwg.mxu0
    %6801 = vmatprep.subr.bf16.mxu0 0
    %6802 = vmatpush1.bf16.msra.mxu0 %v5035
    %6803 = vmatprep.subr.bf16.mxu0 0
    %6804 = vmatpush1.bf16.msra.mxu0 %v5042
    %6805 = vmatprep.subr.bf16.mxu0 0
    %6806 = vmatpush1.bf16.msra.mxu0 %v5049
    %6807 = vmatprep.subr.bf16.mxu0 0
    %6808 = vmatpush1.bf16.msra.mxu0 %v5056
    %6809 = vmatprep.subr.bf16.mxu0 0
    %6810 = vmatpush1.bf16.msra.mxu0 %v5063
    %6811 = vmatprep.subr.bf16.mxu0 0
    %6812 = vmatpush1.bf16.msra.mxu0 %v5070
    %6813 = vmatprep.subr.bf16.mxu0 0
    %6814 = vmatpush1.bf16.msra.mxu0 %v5077
    %6815 = vmatprep.subr.bf16.mxu0 0
    %6816 = vmatpush1.bf16.msra.mxu0 %v5084
    %6817 = vmatprep.subr.bf16.mxu0 0
    %6818 = vmatpush1.bf16.msra.mxu0 %v5091
    %6819 = vmatprep.subr.bf16.mxu0 0
    %6820 = vmatpush1.bf16.msra.mxu0 %v5098
    %6821 = vmatprep.subr.bf16.mxu0 0
    %6822 = vmatpush1.bf16.msra.mxu0 %v5105
    %6823 = vmatprep.subr.bf16.mxu0 0
    %6824 = vmatpush1.bf16.msra.mxu0 %v5112
    %6825 = vmatprep.subr.bf16.mxu0 0
    %6826 = vmatpush1.bf16.msra.mxu0 %v5119
    %6827 = vmatprep.subr.bf16.mxu0 0
    %6828 = vmatpush1.bf16.msra.mxu0 %v5126
    %6829 = vmatprep.subr.bf16.mxu0 0
    %6830 = vmatpush1.bf16.msra.mxu0 %v5133
    %6831 = vmatprep.subr.bf16.mxu0 0
    %6832 = vmatpush1.bf16.msra.mxu0 %v5140
    %6833 = vmatprep.mubr.bf16.mxu0 %v3078
    %6834 = vmatmul.mubr.bf16.gmra.mrb[0].mxu0 %v3077
    %v6835 = vpop.f32.mrb[0].mxu0
    %v6836 = vadd.f32 0.0, %v6835
    %v6837 = vpop.f32.mrb[0].mxu0
    %v6838 = vpop.f32.mrb[0].mxu0
    %v6839 = vadd.f32 0.0, %v6838
    %v6840 = vpop.f32.mrb[0].mxu0
    %6841 = vmatprep.mubr.bf16.mxu0 %v3086
    %6842 = vmatmul.mubr.bf16.gmra.mrb[0].mxu0 %v3085
    %v6843 = vpop.f32.mrb[0].mxu0
    %v6844 = vadd.f32 0.0, %v6843
    %v6845 = vpop.f32.mrb[0].mxu0
    %v6846 = vpop.f32.mrb[0].mxu0
    %v6847 = vadd.f32 0.0, %v6846
    %v6848 = vpop.f32.mrb[0].mxu0
    %6849 = vmatprep.mubr.bf16.mxu0 %v3094
    %6850 = vmatmul.mubr.bf16.gmra.mrb[0].mxu0 %v3093
    %v6851 = vpop.f32.mrb[0].mxu0
    %v6852 = vadd.f32 0.0, %v6851
    %v6853 = vpop.f32.mrb[0].mxu0
    %v6854 = vpop.f32.mrb[0].mxu0
    %v6855 = vadd.f32 0.0, %v6854
    %v6856 = vpop.f32.mrb[0].mxu0
    %6857 = vmatprep.mubr.bf16.mxu0 %v3102
    %6858 = vmatmul.mubr.bf16.gmra.mrb[0].mxu0 %v3101
    %v6859 = vpop.f32.mrb[0].mxu0
    %v6860 = vadd.f32 0.0, %v6859
    %v6861 = vpop.f32.mrb[0].mxu0
    %v6862 = vpop.f32.mrb[0].mxu0
    %v6863 = vadd.f32 0.0, %v6862
    %v6864 = vpop.f32.mrb[0].mxu0
    %6865 = vdwg.mxu0
    %6866 = vmatprep.subr.bf16.mxu0 0
    %6867 = vmatpush1.bf16.msra.mxu0 %v5147
    %6868 = vmatprep.subr.bf16.mxu0 0
    %6869 = vmatpush1.bf16.msra.mxu0 %v5154
    %6870 = vmatprep.subr.bf16.mxu0 0
    %6871 = vmatpush1.bf16.msra.mxu0 %v5161
    %6872 = vmatprep.subr.bf16.mxu0 0
    %6873 = vmatpush1.bf16.msra.mxu0 %v5168
    %6874 = vmatprep.subr.bf16.mxu0 0
    %6875 = vmatpush1.bf16.msra.mxu0 %v5175
    %6876 = vmatprep.subr.bf16.mxu0 0
    %6877 = vmatpush1.bf16.msra.mxu0 %v5182
    %6878 = vmatprep.subr.bf16.mxu0 0
    %6879 = vmatpush1.bf16.msra.mxu0 %v5189
    %6880 = vmatprep.subr.bf16.mxu0 0
    %6881 = vmatpush1.bf16.msra.mxu0 %v5196
    %6882 = vmatprep.subr.bf16.mxu0 0
    %6883 = vmatpush1.bf16.msra.mxu0 %v5203
    %6884 = vmatprep.subr.bf16.mxu0 0
    %6885 = vmatpush1.bf16.msra.mxu0 %v5210
    %6886 = vmatprep.subr.bf16.mxu0 0
    %6887 = vmatpush1.bf16.msra.mxu0 %v5217
    %6888 = vmatprep.subr.bf16.mxu0 0
    %6889 = vmatpush1.bf16.msra.mxu0 %v5224
    %6890 = vmatprep.subr.bf16.mxu0 0
    %6891 = vmatpush1.bf16.msra.mxu0 %v5231
    %6892 = vmatprep.subr.bf16.mxu0 0
    %6893 = vmatpush1.bf16.msra.mxu0 %v5238
    %6894 = vmatprep.subr.bf16.mxu0 0
    %6895 = vmatpush1.bf16.msra.mxu0 %v5245
    %6896 = vmatprep.subr.bf16.mxu0 0
    %6897 = vmatpush1.bf16.msra.mxu0 %v5252
    %6898 = vmatprep.mubr.bf16.mxu0 %v3080
    %6899 = vmatmul.mubr.bf16.gmra.mrb[0].mxu0 %v3079
    %v6900 = vpop.f32.mrb[0].mxu0
    %v6901 = vadd.f32 %v6836, %v6900
    %v6902 = vpop.f32.mrb[0].mxu0
    %v6903 = vpop.f32.mrb[0].mxu0
    %v6904 = vadd.f32 %v6839, %v6903
    %v6905 = vpop.f32.mrb[0].mxu0
    %6906 = vmatprep.mubr.bf16.mxu0 %v3088
    %6907 = vmatmul.mubr.bf16.gmra.mrb[0].mxu0 %v3087
    %v6908 = vpop.f32.mrb[0].mxu0
    %v6909 = vadd.f32 %v6844, %v6908
    %v6910 = vpop.f32.mrb[0].mxu0
    %v6911 = vpop.f32.mrb[0].mxu0
    %v6912 = vadd.f32 %v6847, %v6911
    %v6913 = vpop.f32.mrb[0].mxu0
    %6914 = vmatprep.mubr.bf16.mxu0 %v3096
    %6915 = vmatmul.mubr.bf16.gmra.mrb[0].mxu0 %v3095
    %v6916 = vpop.f32.mrb[0].mxu0
    %v6917 = vadd.f32 %v6852, %v6916
    %v6918 = vpop.f32.mrb[0].mxu0
    %v6919 = vpop.f32.mrb[0].mxu0
    %v6920 = vadd.f32 %v6855, %v6919
    %v6921 = vpop.f32.mrb[0].mxu0
    %6922 = vmatprep.mubr.bf16.mxu0 %v3104
    %6923 = vmatmul.mubr.bf16.gmra.mrb[0].mxu0 %v3103
    %v6924 = vpop.f32.mrb[0].mxu0
    %v6925 = vadd.f32 %v6860, %v6924
    %v6926 = vpop.f32.mrb[0].mxu0
    %v6927 = vpop.f32.mrb[0].mxu0
    %v6928 = vadd.f32 %v6863, %v6927
    %v6929 = vpop.f32.mrb[0].mxu0
    %6930 = vdwg.mxu0
    %6931 = vmatprep.subr.bf16.mxu0 0
    %6932 = vmatpush1.bf16.msra.mxu0 %v5259
    %6933 = vmatprep.subr.bf16.mxu0 0
    %6934 = vmatpush1.bf16.msra.mxu0 %v5266
    %6935 = vmatprep.subr.bf16.mxu0 0
    %6936 = vmatpush1.bf16.msra.mxu0 %v5273
    %6937 = vmatprep.subr.bf16.mxu0 0
    %6938 = vmatpush1.bf16.msra.mxu0 %v5280
    %6939 = vmatprep.subr.bf16.mxu0 0
    %6940 = vmatpush1.bf16.msra.mxu0 %v5287
    %6941 = vmatprep.subr.bf16.mxu0 0
    %6942 = vmatpush1.bf16.msra.mxu0 %v5294
    %6943 = vmatprep.subr.bf16.mxu0 0
    %6944 = vmatpush1.bf16.msra.mxu0 %v5301
    %6945 = vmatprep.subr.bf16.mxu0 0
    %6946 = vmatpush1.bf16.msra.mxu0 %v5308
    %6947 = vmatprep.subr.bf16.mxu0 0
    %6948 = vmatpush1.bf16.msra.mxu0 %v5315
    %6949 = vmatprep.subr.bf16.mxu0 0
    %6950 = vmatpush1.bf16.msra.mxu0 %v5322
    %6951 = vmatprep.subr.bf16.mxu0 0
    %6952 = vmatpush1.bf16.msra.mxu0 %v5329
    %6953 = vmatprep.subr.bf16.mxu0 0
    %6954 = vmatpush1.bf16.msra.mxu0 %v5336
    %6955 = vmatprep.subr.bf16.mxu0 0
    %6956 = vmatpush1.bf16.msra.mxu0 %v5343
    %6957 = vmatprep.subr.bf16.mxu0 0
    %6958 = vmatpush1.bf16.msra.mxu0 %v5350
    %6959 = vmatprep.subr.bf16.mxu0 0
    %6960 = vmatpush1.bf16.msra.mxu0 %v5357
    %6961 = vmatprep.subr.bf16.mxu0 0
    %6962 = vmatpush1.bf16.msra.mxu0 %v5364
    %6963 = vmatprep.mubr.bf16.mxu0 %v3082
    %6964 = vmatmul.mubr.bf16.gmra.mrb[0].mxu0 %v3081
    %v6965 = vpop.f32.mrb[0].mxu0
    %v6966 = vadd.f32 %v6901, %v6965
    %v6967 = vpop.f32.mrb[0].mxu0
    %v6968 = vpop.f32.mrb[0].mxu0
    %v6969 = vadd.f32 %v6904, %v6968
    %v6970 = vpop.f32.mrb[0].mxu0
    %6971 = vmatprep.mubr.bf16.mxu0 %v3090
    %6972 = vmatmul.mubr.bf16.gmra.mrb[0].mxu0 %v3089
    %v6973 = vpop.f32.mrb[0].mxu0
    %v6974 = vadd.f32 %v6909, %v6973
    %v6975 = vpop.f32.mrb[0].mxu0
    %v6976 = vpop.f32.mrb[0].mxu0
    %v6977 = vadd.f32 %v6912, %v6976
    %v6978 = vpop.f32.mrb[0].mxu0
    %6979 = vmatprep.mubr.bf16.mxu0 %v3098
    %6980 = vmatmul.mubr.bf16.gmra.mrb[0].mxu0 %v3097
    %v6981 = vpop.f32.mrb[0].mxu0
    %v6982 = vadd.f32 %v6917, %v6981
    %v6983 = vpop.f32.mrb[0].mxu0
    %v6984 = vpop.f32.mrb[0].mxu0
    %v6985 = vadd.f32 %v6920, %v6984
    %v6986 = vpop.f32.mrb[0].mxu0
    %6987 = vmatprep.mubr.bf16.mxu0 %v3106
    %6988 = vmatmul.mubr.bf16.gmra.mrb[0].mxu0 %v3105
    %v6989 = vpop.f32.mrb[0].mxu0
    %v6990 = vadd.f32 %v6925, %v6989
    %v6991 = vpop.f32.mrb[0].mxu0
    %v6992 = vpop.f32.mrb[0].mxu0
    %v6993 = vadd.f32 %v6928, %v6992
    %v6994 = vpop.f32.mrb[0].mxu0
    %6995 = vdwg.mxu0
    %6996 = vmatprep.subr.bf16.mxu0 0
    %6997 = vmatpush1.bf16.msra.mxu0 %v5371
    %6998 = vmatprep.subr.bf16.mxu0 0
    %6999 = vmatpush1.bf16.msra.mxu0 %v5378
    %7000 = vmatprep.subr.bf16.mxu0 0
    %7001 = vmatpush1.bf16.msra.mxu0 %v5385
    %7002 = vmatprep.subr.bf16.mxu0 0
    %7003 = vmatpush1.bf16.msra.mxu0 %v5392
    %7004 = vmatprep.subr.bf16.mxu0 0
    %7005 = vmatpush1.bf16.msra.mxu0 %v5399
    %7006 = vmatprep.subr.bf16.mxu0 0
    %7007 = vmatpush1.bf16.msra.mxu0 %v5406
    %7008 = vmatprep.subr.bf16.mxu0 0
    %7009 = vmatpush1.bf16.msra.mxu0 %v5413
    %7010 = vmatprep.subr.bf16.mxu0 0
    %7011 = vmatpush1.bf16.msra.mxu0 %v5420
    %7012 = vmatprep.subr.bf16.mxu0 0
    %7013 = vmatpush1.bf16.msra.mxu0 %v5427
    %7014 = vmatprep.subr.bf16.mxu0 0
    %7015 = vmatpush1.bf16.msra.mxu0 %v5434
    %7016 = vmatprep.subr.bf16.mxu0 0
    %7017 = vmatpush1.bf16.msra.mxu0 %v5441
    %7018 = vmatprep.subr.bf16.mxu0 0
    %7019 = vmatpush1.bf16.msra.mxu0 %v5448
    %7020 = vmatprep.subr.bf16.mxu0 0
    %7021 = vmatpush1.bf16.msra.mxu0 %v5455
    %7022 = vmatprep.subr.bf16.mxu0 0
    %7023 = vmatpush1.bf16.msra.mxu0 %v5462
    %7024 = vmatprep.subr.bf16.mxu0 0
    %7025 = vmatpush1.bf16.msra.mxu0 %v5469
    %7026 = vmatprep.subr.bf16.mxu0 0
    %7027 = vmatpush1.bf16.msra.mxu0 %v5476
    %7028 = vmatprep.mubr.bf16.mxu0 %v3084
    %7029 = vmatmul.mubr.bf16.gmra.mrb[0].mxu0 %v3083
    %v7030 = vpop.f32.mrb[0].mxu0
    %v7031 = vadd.f32 %v6966, %v7030
    %v7032 = vpop.f32.mrb[0].mxu0
    %v7033 = vpop.f32.mrb[0].mxu0
    %v7034 = vadd.f32 %v6969, %v7033
    %v7035 = vpop.f32.mrb[0].mxu0
    %7036 = vmatprep.mubr.bf16.mxu0 %v3092
    %7037 = vmatmul.mubr.bf16.gmra.mrb[0].mxu0 %v3091
    %v7038 = vpop.f32.mrb[0].mxu0
    %v7039 = vadd.f32 %v6974, %v7038
    %v7040 = vpop.f32.mrb[0].mxu0
    %v7041 = vpop.f32.mrb[0].mxu0
    %v7042 = vadd.f32 %v6977, %v7041
    %v7043 = vpop.f32.mrb[0].mxu0
    %7044 = vmatprep.mubr.bf16.mxu0 %v3100
    %7045 = vmatmul.mubr.bf16.gmra.mrb[0].mxu0 %v3099
    %v7046 = vpop.f32.mrb[0].mxu0
    %v7047 = vadd.f32 %v6982, %v7046
    %v7048 = vpop.f32.mrb[0].mxu0
    %v7049 = vpop.f32.mrb[0].mxu0
    %v7050 = vadd.f32 %v6985, %v7049
    %v7051 = vpop.f32.mrb[0].mxu0
    %7052 = vmatprep.mubr.bf16.mxu0 %v3108
    %7053 = vmatmul.mubr.bf16.gmra.mrb[0].mxu0 %v3107
    %v7054 = vpop.f32.mrb[0].mxu0
    %v7055 = vadd.f32 %v6990, %v7054
    %v7056 = vpop.f32.mrb[0].mxu0
    %v7057 = vpop.f32.mrb[0].mxu0
    %v7058 = vadd.f32 %v6993, %v7057
    %v7059 = vpop.f32.mrb[0].mxu0
    %7060 = vdwg.mxu0
    %v7061 = vtanh.pop %v6179
    %v7062 = vtanh.pop %v6181
    %v7063 = vtanh.pop %v6471
    %v7064 = vtanh.pop %v6473
    %v7065 = vtanh.pop %v6763
    %v7066 = vtanh.pop %v6765
    %v7067 = vtanh.pop %v7031
    %v7068 = vtanh.pop %v6183
    %v7069 = vtanh.pop %v6185
    %v7070 = vtanh.pop %v6475
    %v7071 = vtanh.pop %v6477
    %v7072 = vtanh.pop %v6767
    %v7073 = vtanh.pop %v6769
    %v7074 = vtanh.pop %v7034
    %v7075 = vtanh.pop %v6189
    %v7076 = vtanh.pop %v6191
    %v7077 = vtanh.pop %v6481
    %v7078 = vtanh.pop %v6483
    %v7079 = vtanh.pop %v6773
    %v7080 = vtanh.pop %v6775
    %v7081 = vtanh.pop %v7039
    %v7082 = vtanh.pop %v6193
    %v7083 = vtanh.pop %v6195
    %v7084 = vtanh.pop %v6485
    %v7085 = vtanh.pop %v6487
    %v7086 = vtanh.pop %v6777
    %v7087 = vtanh.pop %v6779
    %v7088 = vtanh.pop %v7042
    %v7089 = vtanh.pop %v6199
    %v7090 = vtanh.pop %v6201
    %v7091 = vtanh.pop %v6491
    %v7092 = vtanh.pop %v6493
    %v7093 = vtanh.pop %v6783
    %v7094 = vtanh.pop %v6785
    %v7095 = vtanh.pop %v7047
    %v7096 = vtanh.pop %v6203
    %v7097 = vtanh.pop %v6205
    %v7098 = vtanh.pop %v6495
    %v7099 = vtanh.pop %v6497
    %v7100 = vtanh.pop %v6787
    %v7101 = vtanh.pop %v6789
    %v7102 = vtanh.pop %v7050
    %v7103 = vtanh.pop %v6209
    %v7104 = vtanh.pop %v6211
    %v7105 = vtanh.pop %v6501
    %v7106 = vtanh.pop %v6503
    %v7107 = vtanh.pop %v6793
    %v7108 = vtanh.pop %v6795
    %v7109 = vtanh.pop %v7055
    %v7110 = vtanh.pop %v6213
    %v7111 = vtanh.pop %v6215
    %v7112 = vtanh.pop %v6505
    %v7113 = vtanh.pop %v6507
    %v7114 = vtanh.pop %v6797
    %v7115 = vtanh.pop %v6799
    %v7116 = vtanh.pop %v7058
    %7117 = vst [vmem:[#allocation11] sm:$0xff] %v7061
    %7118 = vst [vmem:[#allocation11 + $0x8] sm:$0xff] %v7062
    %7119 = vst [vmem:[#allocation11 + $0x10] sm:$0xff] %v7063
    %7120 = vst [vmem:[#allocation11 + $0x18] sm:$0xff] %v7064
    %7121 = vst [vmem:[#allocation11 + $0x20] sm:$0xff] %v7065
    %7122 = vst [vmem:[#allocation11 + $0x28] sm:$0xff] %v7066
    %7123 = vst [vmem:[#allocation11 + $0x30] sm:$0xff] %v7067
    %7124 = vst [vmem:[#allocation11 + $0x38] sm:$0xff] %v7068
    %7125 = vst [vmem:[#allocation11 + $0x40] sm:$0xff] %v7069
    %7126 = vst [vmem:[#allocation11 + $0x48] sm:$0xff] %v7070
    %7127 = vst [vmem:[#allocation11 + $0x50] sm:$0xff] %v7071
    %7128 = vst [vmem:[#allocation11 + $0x58] sm:$0xff] %v7072
    %7129 = vst [vmem:[#allocation11 + $0x60] sm:$0xff] %v7073
    %7130 = vst [vmem:[#allocation11 + $0x68] sm:$0xff] %v7074
    %7131 = vst [vmem:[#allocation11 + $0x70] sm:$0xff] %v7075
    %7132 = vst [vmem:[#allocation11 + $0x78] sm:$0xff] %v7076
    %7133 = vst [vmem:[#allocation11 + $0x80] sm:$0xff] %v7077
    %7134 = vst [vmem:[#allocation11 + $0x88] sm:$0xff] %v7078
    %7135 = vst [vmem:[#allocation11 + $0x90] sm:$0xff] %v7079
    %7136 = vst [vmem:[#allocation11 + $0x98] sm:$0xff] %v7080
    %7137 = vst [vmem:[#allocation11 + $0xa0] sm:$0xff] %v7081
    %7138 = vst [vmem:[#allocation11 + $0xa8] sm:$0xff] %v7082
    %7139 = vst [vmem:[#allocation11 + $0xb0] sm:$0xff] %v7083
    %7140 = vst [vmem:[#allocation11 + $0xb8] sm:$0xff] %v7084
    %7141 = vst [vmem:[#allocation11 + $0xc0] sm:$0xff] %v7085
    %7142 = vst [vmem:[#allocation11 + $0xc8] sm:$0xff] %v7086
    %7143 = vst [vmem:[#allocation11 + $0xd0] sm:$0xff] %v7087
    %7144 = vst [vmem:[#allocation11 + $0xd8] sm:$0xff] %v7088
    %7145 = vst [vmem:[#allocation11 + $0xe0] sm:$0xff] %v7089
    %7146 = vst [vmem:[#allocation11 + $0xe8] sm:$0xff] %v7090
    %7147 = vst [vmem:[#allocation11 + $0xf0] sm:$0xff] %v7091
    %7148 = vst [vmem:[#allocation11 + $0xf8] sm:$0xff] %v7092
    %7149 = vst [vmem:[#allocation11 + $0x100] sm:$0xff] %v7093
    %7150 = vst [vmem:[#allocation11 + $0x108] sm:$0xff] %v7094
    %7151 = vst [vmem:[#allocation11 + $0x110] sm:$0xff] %v7095
    %7152 = vst [vmem:[#allocation11 + $0x118] sm:$0xff] %v7096
    %7153 = vst [vmem:[#allocation11 + $0x120] sm:$0xff] %v7097
    %7154 = vst [vmem:[#allocation11 + $0x128] sm:$0xff] %v7098
    %7155 = vst [vmem:[#allocation11 + $0x130] sm:$0xff] %v7099
    %7156 = vst [vmem:[#allocation11 + $0x138] sm:$0xff] %v7100
    %7157 = vst [vmem:[#allocation11 + $0x140] sm:$0xff] %v7101
    %7158 = vst [vmem:[#allocation11 + $0x148] sm:$0xff] %v7102
    %7159 = vst [vmem:[#allocation11 + $0x150] sm:$0xff] %v7103
    %7160 = vst [vmem:[#allocation11 + $0x158] sm:$0xff] %v7104
    %7161 = vst [vmem:[#allocation11 + $0x160] sm:$0xff] %v7105
    %7162 = vst [vmem:[#allocation11 + $0x168] sm:$0xff] %v7106
    %7163 = vst [vmem:[#allocation11 + $0x170] sm:$0xff] %v7107
    %7164 = vst [vmem:[#allocation11 + $0x178] sm:$0xff] %v7108
    %7165 = vst [vmem:[#allocation11 + $0x180] sm:$0xff] %v7109
    %7166 = vst [vmem:[#allocation11 + $0x188] sm:$0xff] %v7110
    %7167 = vst [vmem:[#allocation11 + $0x190] sm:$0xff] %v7111
    %7168 = vst [vmem:[#allocation11 + $0x198] sm:$0xff] %v7112
    %7169 = vst [vmem:[#allocation11 + $0x1a0] sm:$0xff] %v7113
    %7170 = vst [vmem:[#allocation11 + $0x1a8] sm:$0xff] %v7114
    %7171 = vst [vmem:[#allocation11 + $0x1b0] sm:$0xff] %v7115
    %7172 = vst [vmem:[#allocation11 + $0x1b8] sm:$0xff] %v7116
    // Predicated region
    $region42: #{tpu_custom_call.1} parent=1 // pred_check
      _
    $region43: #{tpu_custom_call.1} parent=1 // pred_check_branch
      %7174 = sbr.rel (0) target = $region45
    $region44: #{tpu_custom_call.1} parent=1 // pred_region
      %s7176 = ssub.s32 7168, 7168
      %7177 = vsyncadd [#allocation4], %s7176
      %s7178 = sshll.u32 [#allocation11], 4
      %s7179 = int_to_ptr.vmem [resolvable:$true] %s7178
      %7184 = dma.vmem_to_hbm [thread:$0]  %s7179, 7168, %s5, [#allocation4], 896, 896, 56
    $region45: #{tpu_custom_call.1} parent=1 // pred_fallthru
      _
    // Predicated region
    $region46: #{tpu_custom_call.1} parent=1 // pred_check
      _
    $region47: #{tpu_custom_call.1} parent=1 // pred_check_branch
      %7186 = sbr.rel (0) target = $region49
    $region48: #{tpu_custom_call.1} parent=1 // pred_region
      %7187 = dma.done [#allocation4], 7168
    $region49: #{tpu_custom_call.1} parent=1 // pred_fallthru
      _
    %7188 = vsyncpa [#allocation3], 1
    %7189 = vsyncpa [#allocation6], 1
    %7190 = vsyncpa [#allocation9], 1
    %7191 = vsyncpa [#allocation4], 1

// kernel: tpu_custom_call.1
$region0: #{tpu_custom_call.1}
  #allocation0 [shape = 'u32[]', space=smem, size = 0x4, offset = 0x4, fixed_abs, tag = 'smem constant byte address 0x4 - core index']
  #allocation1 [shape = 'u32[144,128]{1,0:T(1,128)}', space=vmem, size = 0x12000, scoped, tag = 'internal scratch']
  %s0 = inlined_call_operand.hbm [shape: bf16[64,128], index: 0, kind: input, shape index: {}]
  %s1 = inlined_call_operand.hbm [shape: bf16[128,256], index: 1, kind: input, shape index: {}]
  %s2 = inlined_call_operand.hbm [shape: bf16[256,512], index: 2, kind: input, shape index: {}]
  %s3 = inlined_call_operand.hbm [shape: bf16[512,1024], index: 3, kind: input, shape index: {}]
  %s4 = inlined_call_operand.hbm [shape: bf16[1024,896], index: 4, kind: input, shape index: {}]
  %s5 = inlined_call_operand.hbm [shape: f32[64,896], index: 5, kind: output, shape index: {}]
  %s6 = sld [smem:[#allocation0]]
  $region50: #{tpu_custom_call.1} parent=0
    _
  %s8 = ssub.s32 1, %s6
  %s9 = scalar_select 0, %s8, %s6
  $region1: #{tpu_custom_call.1} parent=0
    #allocation2 [shape = 'u8[16384]{0}', space=vmem, size = 0x4000, scoped, tag = 'input window, operand 0, single buffered']
    #allocation3 [shape = 's32[1]{0}', space=sflag, size = 0x4, scoped, tag = 'scoped memory for tpu_custom_call.1']
    #allocation4 [shape = 's32[1]{0}', space=sflag, size = 0x4, scoped, tag = 'scoped memory for tpu_custom_call.1']
    #allocation5 [shape = 'u8[65536]{0}', space=vmem, size = 0x10000, scoped, tag = 'input window, operand 1, single buffered']
    #allocation6 [shape = 's32[1]{0}', space=sflag, size = 0x4, scoped, tag = 'scoped memory for tpu_custom_call.1']
    #allocation7 [shape = 'u8[262144]{0}', space=vmem, size = 0x40000, scoped, tag = 'input window, operand 2, single buffered']
    #allocation8 [shape = 'u8[1048576]{0}', space=vmem, size = 0x100000, scoped, tag = 'input window, operand 3, single buffered']
    #allocation9 [shape = 's32[1]{0}', space=sflag, size = 0x4, scoped, tag = 'scoped memory for tpu_custom_call.1']
    #allocation10 [shape = 'u8[1835008]{0}', space=vmem, size = 0x1c0000, scoped, tag = 'input window, operand 4, single buffered']
    #allocation11 [shape = 'u8[229376]{0}', space=vmem, size = 0x38000, scoped, tag = 'output window, operand 0, single buffered']
    %10 = vsyncpa [#allocation3], 0
    %11 = vsyncpa [#allocation6], 0
    %12 = vsyncpa [#allocation9], 0
    %13 = vsyncpa [#allocation4], 0
    // Predicated region
    $region2: #{tpu_custom_call.1} parent=1 // pred_check
      _
    $region3: #{tpu_custom_call.1} parent=1 // pred_check_branch
      %15 = sbr.rel (0) target = $region5
    $region4: #{tpu_custom_call.1} parent=1 // pred_region
      %s17 = ssub.s32 512, 512
      %18 = vsyncadd [#allocation3], %s17
      %s19 = sshll.u32 [#allocation2], 4
      %s20 = int_to_ptr.vmem [resolvable:$true] %s19
      %25 = dma.hbm_to_vmem [thread:$0]  %s0, 512, %s20, [#allocation3], 64, 64, 4
    $region5: #{tpu_custom_call.1} parent=1 // pred_fallthru
      _
    // Predicated region
    $region6: #{tpu_custom_call.1} parent=1 // pred_check
      _
    $region7: #{tpu_custom_call.1} parent=1 // pred_check_branch
      %27 = sbr.rel (0) target = $region9
    $region8: #{tpu_custom_call.1} parent=1 // pred_region
      %s29 = ssub.s32 2048, 2048
      %30 = vsyncadd [#allocation6], %s29
      %s31 = sshll.u32 [#allocation5], 4
      %s32 = int_to_ptr.vmem [resolvable:$true] %s31
      %37 = dma.hbm_to_vmem [thread:$0]  %s1, 2048, %s32, [#allocation6], 128, 128, 8
    $region9: #{tpu_custom_call.1} parent=1 // pred_fallthru
      _
    // Predicated region
    $region10: #{tpu_custom_call.1} parent=1 // pred_check
      _
    $region11: #{tpu_custom_call.1} parent=1 // pred_check_branch
      %39 = sbr.rel (0) target = $region13
    $region12: #{tpu_custom_call.1} parent=1 // pred_region
      %s41 = ssub.s32 8192, 8192
      %42 = vsyncadd [#allocation6], %s41
      %s43 = sshll.u32 [#allocation7], 4
      %s44 = int_to_ptr.vmem [resolvable:$true] %s43
      %49 = dma.hbm_to_vmem [thread:$0]  %s2, 8192, %s44, [#allocation6], 256, 256, 16
    $region13: #{tpu_custom_call.1} parent=1 // pred_fallthru
      _
    // Predicated region
    $region14: #{tpu_custom_call.1} parent=1 // pred_check
      _
    $region15: #{tpu_custom_call.1} parent=1 // pred_check_branch
      %51 = sbr.rel (0) target = $region17
    $region16: #{tpu_custom_call.1} parent=1 // pred_region
      %s53 = ssub.s32 32768, 32768
      %54 = vsyncadd [#allocation9], %s53
      %s55 = sshll.u32 [#allocation8], 4
      %s56 = int_to_ptr.vmem [resolvable:$true] %s55
      %61 = dma.hbm_to_vmem [thread:$0]  %s3, 32768, %s56, [#allocation9], 512, 512, 32
    $region17: #{tpu_custom_call.1} parent=1 // pred_fallthru
      _
    // Predicated region
    $region18: #{tpu_custom_call.1} parent=1 // pred_check
      _
    $region19: #{tpu_custom_call.1} parent=1 // pred_check_branch
      %63 = sbr.rel (0) target = $region21
    $region20: #{tpu_custom_call.1} parent=1 // pred_region
      %s65 = ssub.s32 57344, 57344
      %66 = vsyncadd [#allocation9], %s65
      %s67 = sshll.u32 [#allocation10], 4
      %s68 = int_to_ptr.vmem [resolvable:$true] %s67
      %73 = dma.hbm_to_vmem [thread:$0]  %s4, 57344, %s68, [#allocation9], 448, 448, 28
    $region21: #{tpu_custom_call.1} parent=1 // pred_fallthru
      _
    // Predicated region
    $region22: #{tpu_custom_call.1} parent=1 // pred_check
      _
    $region23: #{tpu_custom_call.1} parent=1 // pred_check_branch
      %75 = sbr.rel (0) target = $region25
    $region24: #{tpu_custom_call.1} parent=1 // pred_region
      %76 = dma.done [#allocation3], 512
    $region25: #{tpu_custom_call.1} parent=1 // pred_fallthru
      _
    // Predicated region
    $region26: #{tpu_custom_call.1} parent=1 // pred_check
      _
    $region27: #{tpu_custom_call.1} parent=1 // pred_check_branch
      %78 = sbr.rel (0) target = $region29
    $region28: #{tpu_custom_call.1} parent=1 // pred_region
      %79 = dma.done [#allocation6], 2048
    $region29: #{tpu_custom_call.1} parent=1 // pred_fallthru
      _
    // Predicated region
    $region30: #{tpu_custom_call.1} parent=1 // pred_check
      _
    $region31: #{tpu_custom_call.1} parent=1 // pred_check_branch
      %81 = sbr.rel (0) target = $region33
    $region32: #{tpu_custom_call.1} parent=1 // pred_region
      %82 = dma.done [#allocation6], 8192
    $region33: #{tpu_custom_call.1} parent=1 // pred_fallthru
      _
    // Predicated region
    $region34: #{tpu_custom_call.1} parent=1 // pred_check
      _
    $region35: #{tpu_custom_call.1} parent=1 // pred_check_branch
      %84 = sbr.rel (0) target = $region37
    $region36: #{tpu_custom_call.1} parent=1 // pred_region
      %85 = dma.done [#allocation9], 32768
    $region37: #{tpu_custom_call.1} parent=1 // pred_fallthru
      _
    // Predicated region
    $region38: #{tpu_custom_call.1} parent=1 // pred_check
      _
    $region39: #{tpu_custom_call.1} parent=1 // pred_check_branch
      %87 = sbr.rel (0) target = $region41
    $region40: #{tpu_custom_call.1} parent=1 // pred_region
      %88 = dma.done [#allocation9], 57344
    $region41: #{tpu_custom_call.1} parent=1 // pred_fallthru
      _
    %v90 = vld [vmem:[#allocation2] sm:$0xf]
    %v91 = vld [vmem:[#allocation2 + $0x4] sm:$0xf]
    %v92 = vld [vmem:[#allocation2 + $0x8] sm:$0xf]
    %v93 = vld [vmem:[#allocation2 + $0xc] sm:$0xf]
    %v94 = vld [vmem:[#allocation2 + $0x10] sm:$0xf]
    %v95 = vld [vmem:[#allocation2 + $0x14] sm:$0xf]
    %v96 = vld [vmem:[#allocation2 + $0x18] sm:$0xf]
    %v97 = vld [vmem:[#allocation2 + $0x1c] sm:$0xf]
    %v98 = vld [vmem:[#allocation5] sm:$0xff]
    %v99 = vld [vmem:[#allocation5 + $0x8] sm:$0xff]
    %v100 = vld [vmem:[#allocation5 + $0x10] sm:$0xff]
    %v101 = vld [vmem:[#allocation5 + $0x18] sm:$0xff]
    %v102 = vld [vmem:[#allocation5 + $0x20] sm:$0xff]
    %v103 = vld [vmem:[#allocation5 + $0x28] sm:$0xff]
    %v104 = vld [vmem:[#allocation5 + $0x30] sm:$0xff]
    %v105 = vld [vmem:[#allocation5 + $0x38] sm:$0xff]
    %v106 = vld [vmem:[#allocation5 + $0x40] sm:$0xff]
    %v107 = vld [vmem:[#allocation5 + $0x48] sm:$0xff]
    %v108 = vld [vmem:[#allocation5 + $0x50] sm:$0xff]
    %v109 = vld [vmem:[#allocation5 + $0x58] sm:$0xff]
    %v110 = vld [vmem:[#allocation5 + $0x60] sm:$0xff]
    %v111 = vld [vmem:[#allocation5 + $0x68] sm:$0xff]
    %v112 = vld [vmem:[#allocation5 + $0x70] sm:$0xff]
    %v113 = vld [vmem:[#allocation5 + $0x78] sm:$0xff]
    %v122 = vunpack.c.l.b16 %v90
    %v123 = vunpack.c.l.b16 %v91
    %v124 = vunpack.c.l.b16 %v92
    %v125 = vunpack.c.l.b16 %v93
    %v126 = vunpack.c.l.b16 %v94
    %v127 = vunpack.c.l.b16 %v95
    %v128 = vunpack.c.l.b16 %v96
    %v129 = vunpack.c.l.b16 %v97
    %v130 = vpack.c.b16 %v123, %v122
    %v131 = vpack.c.b16 %v125, %v124
    %v132 = vpack.c.b16 %v127, %v126
    %v133 = vpack.c.b16 %v129, %v128
    %v154 = vunpack.c.l.b16 %v98
    %v155 = vunpack.c.h.b16 %v98
    %v156 = vunpack.c.l.b16 %v99
    %v157 = vunpack.c.h.b16 %v99
    %v158 = vunpack.c.l.b16 %v100
    %v159 = vunpack.c.h.b16 %v100
    %v160 = vunpack.c.l.b16 %v101
    %v161 = vunpack.c.h.b16 %v101
    %v162 = vunpack.c.l.b16 %v102
    %v163 = vunpack.c.h.b16 %v102
    %v164 = vunpack.c.l.b16 %v103
    %v165 = vunpack.c.h.b16 %v103
    %v166 = vunpack.c.l.b16 %v104
    %v167 = vunpack.c.h.b16 %v104
    %v168 = vunpack.c.l.b16 %v105
    %v169 = vunpack.c.h.b16 %v105
    %v170 = vunpack.c.l.b16 %v106
    %v171 = vunpack.c.h.b16 %v106
    %v172 = vunpack.c.l.b16 %v107
    %v173 = vunpack.c.h.b16 %v107
    %v174 = vunpack.c.l.b16 %v108
    %v175 = vunpack.c.h.b16 %v108
    %v176 = vunpack.c.l.b16 %v109
    %v177 = vunpack.c.h.b16 %v109
    %v178 = vunpack.c.l.b16 %v110
    %v179 = vunpack.c.h.b16 %v110
    %v180 = vunpack.c.l.b16 %v111
    %v181 = vunpack.c.h.b16 %v111
    %v182 = vunpack.c.l.b16 %v112
    %v183 = vunpack.c.h.b16 %v112
    %v184 = vunpack.c.l.b16 %v113
    %v185 = vunpack.c.h.b16 %v113
    %v186 = vpack.c.b16 %v156, %v154
    %v187 = vpack.c.b16 %v157, %v155
    %v188 = vpack.c.b16 %v160, %v158
    %v189 = vpack.c.b16 %v161, %v159
    %v190 = vpack.c.b16 %v164, %v162
    %v191 = vpack.c.b16 %v165, %v163
    %v192 = vpack.c.b16 %v168, %v166
    %v193 = vpack.c.b16 %v169, %v167
    %v194 = vpack.c.b16 %v172, %v170
    %v195 = vpack.c.b16 %v173, %v171
    %v196 = vpack.c.b16 %v176, %v174
    %v197 = vpack.c.b16 %v177, %v175
    %v198 = vpack.c.b16 %v180, %v178
    %v199 = vpack.c.b16 %v181, %v179
    %v200 = vpack.c.b16 %v184, %v182
    %v201 = vpack.c.b16 %v185, %v183
    %218 = vmatprep.subr.bf16.mxu0 %v187
    %219 = vmatpush1.bf16.msra.mxu0 %v186
    %220 = vmatprep.subr.bf16.mxu0 %v189
    %221 = vmatpush1.bf16.msra.mxu0 %v188
    %222 = vmatprep.subr.bf16.mxu0 %v191
    %223 = vmatpush1.bf16.msra.mxu0 %v190
    %224 = vmatprep.subr.bf16.mxu0 %v193
    %225 = vmatpush1.bf16.msra.mxu0 %v192
    %226 = vmatprep.subr.bf16.mxu0 %v195
    %227 = vmatpush1.bf16.msra.mxu0 %v194
    %228 = vmatprep.subr.bf16.mxu0 %v197
    %229 = vmatpush1.bf16.msra.mxu0 %v196
    %230 = vmatprep.subr.bf16.mxu0 %v199
    %231 = vmatpush1.bf16.msra.mxu0 %v198
    %232 = vmatprep.subr.bf16.mxu0 %v201
    %233 = vmatpush1.bf16.msra.mxu0 %v200
    %234 = vmatprep.subr.bf16.mxu0 0
    %235 = vmatpush1.bf16.msra.mxu0 0
    %236 = vmatprep.subr.bf16.mxu0 0
    %237 = vmatpush1.bf16.msra.mxu0 0
    %238 = vmatprep.subr.bf16.mxu0 0
    %239 = vmatpush1.bf16.msra.mxu0 0
    %240 = vmatprep.subr.bf16.mxu0 0
    %241 = vmatpush1.bf16.msra.mxu0 0
    %242 = vmatprep.subr.bf16.mxu0 0
    %243 = vmatpush1.bf16.msra.mxu0 0
    %244 = vmatprep.subr.bf16.mxu0 0
    %245 = vmatpush1.bf16.msra.mxu0 0
    %246 = vmatprep.subr.bf16.mxu0 0
    %247 = vmatpush1.bf16.msra.mxu0 0
    %248 = vmatprep.subr.bf16.mxu0 0
    %249 = vmatpush1.bf16.msra.mxu0 0
    %250 = vmatprep.mubr.bf16.mxu0 0
    %251 = vmatmul.mubr.bf16.gmra.mrb[0].mxu0 %v130
    %v252 = vpop.f32.mrb[0].mxu0
    %v253 = vadd.f32 0.0, %v252
    %v254 = vpop.f32.mrb[0].mxu0
    %v255 = vadd.f32 0.0, %v254
    %v256 = vpop.f32.mrb[0].mxu0
    %v257 = vadd.f32 0.0, %v256
    %v258 = vpop.f32.mrb[0].mxu0
    %v259 = vadd.f32 0.0, %v258
    %260 = vmatprep.mubr.bf16.mxu0 0
    %261 = vmatmul.mubr.bf16.gmra.mrb[0].mxu0 %v131
    %v262 = vpop.f32.mrb[0].mxu0
    %v263 = vadd.f32 0.0, %v262
    %v264 = vpop.f32.mrb[0].mxu0
    %v265 = vadd.f32 0.0, %v264
    %v266 = vpop.f32.mrb[0].mxu0
    %v267 = vadd.f32 0.0, %v266
    %v268 = vpop.f32.mrb[0].mxu0
    %v269 = vadd.f32 0.0, %v268
    %270 = vmatprep.mubr.bf16.mxu0 0
    %271 = vmatmul.mubr.bf16.gmra.mrb[0].mxu0 %v132
    %v272 = vpop.f32.mrb[0].mxu0
    %v273 = vadd.f32 0.0, %v272
    %v274 = vpop.f32.mrb[0].mxu0
    %v275 = vadd.f32 0.0, %v274
    %v276 = vpop.f32.mrb[0].mxu0
    %v277 = vadd.f32 0.0, %v276
    %v278 = vpop.f32.mrb[0].mxu0
    %v279 = vadd.f32 0.0, %v278
    %280 = vmatprep.mubr.bf16.mxu0 0
    %281 = vmatmul.mubr.bf16.gmra.mrb[0].mxu0 %v133
    %v282 = vpop.f32.mrb[0].mxu0
    %v283 = vadd.f32 0.0, %v282
    %v284 = vpop.f32.mrb[0].mxu0
    %v285 = vadd.f32 0.0, %v284
    %v286 = vpop.f32.mrb[0].mxu0
    %v287 = vadd.f32 0.0, %v286
    %v288 = vpop.f32.mrb[0].mxu0
    %v289 = vadd.f32 0.0, %v288
    %290 = vdwg.mxu0
    %v291 = vmax.f32 %v253, 0.0
    %v292 = vmax.f32 %v255, 0.0
    %v293 = vmax.f32 %v257, 0.0
    %v294 = vmax.f32 %v259, 0.0
    %v295 = vmax.f32 %v263, 0.0
    %v296 = vmax.f32 %v265, 0.0
    %v297 = vmax.f32 %v267, 0.0
    %v298 = vmax.f32 %v269, 0.0
    %v299 = vmax.f32 %v273, 0.0
    %v300 = vmax.f32 %v275, 0.0
    %v301 = vmax.f32 %v277, 0.0
    %v302 = vmax.f32 %v279, 0.0
    %v303 = vmax.f32 %v283, 0.0
    %v304 = vmax.f32 %v285, 0.0
    %v305 = vmax.f32 %v287, 0.0
    %v306 = vmax.f32 %v289, 0.0
    %v307 = vpack.c.bf16 %v293, %v291
    %v308 = vpack.c.bf16 %v294, %v292
    %v309 = vpack.c.bf16 %v297, %v295
    %v310 = vpack.c.bf16 %v298, %v296
    %v311 = vpack.c.bf16 %v301, %v299
    %v312 = vpack.c.bf16 %v302, %v300
    %v313 = vpack.c.bf16 %v305, %v303
    %v314 = vpack.c.bf16 %v306, %v304
    %v315 = vld [vmem:[#allocation7] sm:$0xff]
    %v316 = vld [vmem:[#allocation7 + $0x8] sm:$0xff]
    %v317 = vld [vmem:[#allocation7 + $0x10] sm:$0xff]
    %v318 = vld [vmem:[#allocation7 + $0x18] sm:$0xff]
    %v319 = vld [vmem:[#allocation7 + $0x20] sm:$0xff]
    %v320 = vld [vmem:[#allocation7 + $0x28] sm:$0xff]
    %v321 = vld [vmem:[#allocation7 + $0x30] sm:$0xff]
    %v322 = vld [vmem:[#allocation7 + $0x38] sm:$0xff]
    %v323 = vld [vmem:[#allocation7 + $0x40] sm:$0xff]
    %v324 = vld [vmem:[#allocation7 + $0x48] sm:$0xff]
    %v325 = vld [vmem:[#allocation7 + $0x50] sm:$0xff]
    %v326 = vld [vmem:[#allocation7 + $0x58] sm:$0xff]
    %v327 = vld [vmem:[#allocation7 + $0x60] sm:$0xff]
    %v328 = vld [vmem:[#allocation7 + $0x68] sm:$0xff]
    %v329 = vld [vmem:[#allocation7 + $0x70] sm:$0xff]
    %v330 = vld [vmem:[#allocation7 + $0x78] sm:$0xff]
    %v331 = vld [vmem:[#allocation7 + $0x80] sm:$0xff]
    %v332 = vld [vmem:[#allocation7 + $0x88] sm:$0xff]
    %v333 = vld [vmem:[#allocation7 + $0x90] sm:$0xff]
    %v334 = vld [vmem:[#allocation7 + $0x98] sm:$0xff]
    %v335 = vld [vmem:[#allocation7 + $0xa0] sm:$0xff]
    %v336 = vld [vmem:[#allocation7 + $0xa8] sm:$0xff]
    %v337 = vld [vmem:[#allocation7 + $0xb0] sm:$0xff]
    %v338 = vld [vmem:[#allocation7 + $0xb8] sm:$0xff]
    %v339 = vld [vmem:[#allocation7 + $0xc0] sm:$0xff]
    %v340 = vld [vmem:[#allocation7 + $0xc8] sm:$0xff]
    %v341 = vld [vmem:[#allocation7 + $0xd0] sm:$0xff]
    %v342 = vld [vmem:[#allocation7 + $0xd8] sm:$0xff]
    %v343 = vld [vmem:[#allocation7 + $0xe0] sm:$0xff]
    %v344 = vld [vmem:[#allocation7 + $0xe8] sm:$0xff]
    %v345 = vld [vmem:[#allocation7 + $0xf0] sm:$0xff]
    %v346 = vld [vmem:[#allocation7 + $0xf8] sm:$0xff]
    %v347 = vld [vmem:[#allocation7 + $0x100] sm:$0xff]
    %v348 = vld [vmem:[#allocation7 + $0x108] sm:$0xff]
    %v349 = vld [vmem:[#allocation7 + $0x110] sm:$0xff]
    %v350 = vld [vmem:[#allocation7 + $0x118] sm:$0xff]
    %v351 = vld [vmem:[#allocation7 + $0x120] sm:$0xff]
    %v352 = vld [vmem:[#allocation7 + $0x128] sm:$0xff]
    %v353 = vld [vmem:[#allocation7 + $0x130] sm:$0xff]
    %v354 = vld [vmem:[#allocation7 + $0x138] sm:$0xff]
    %v355 = vld [vmem:[#allocation7 + $0x140] sm:$0xff]
    %v356 = vld [vmem:[#allocation7 + $0x148] sm:$0xff]
    %v357 = vld [vmem:[#allocation7 + $0x150] sm:$0xff]
    %v358 = vld [vmem:[#allocation7 + $0x158] sm:$0xff]
    %v359 = vld [vmem:[#allocation7 + $0x160] sm:$0xff]
    %v360 = vld [vmem:[#allocation7 + $0x168] sm:$0xff]
    %v361 = vld [vmem:[#allocation7 + $0x170] sm:$0xff]
    %v362 = vld [vmem:[#allocation7 + $0x178] sm:$0xff]
    %v363 = vld [vmem:[#allocation7 + $0x180] sm:$0xff]
    %v364 = vld [vmem:[#allocation7 + $0x188] sm:$0xff]
    %v365 = vld [vmem:[#allocation7 + $0x190] sm:$0xff]
    %v366 = vld [vmem:[#allocation7 + $0x198] sm:$0xff]
    %v367 = vld [vmem:[#allocation7 + $0x1a0] sm:$0xff]
    %v368 = vld [vmem:[#allocation7 + $0x1a8] sm:$0xff]
    %v369 = vld [vmem:[#allocation7 + $0x1b0] sm:$0xff]
    %v370 = vld [vmem:[#allocation7 + $0x1b8] sm:$0xff]
    %v371 = vld [vmem:[#allocation7 + $0x1c0] sm:$0xff]
    %v372 = vld [vmem:[#allocation7 + $0x1c8] sm:$0xff]
    %v373 = vld [vmem:[#allocation7 + $0x1d0] sm:$0xff]
    %v374 = vld [vmem:[#allocation7 + $0x1d8] sm:$0xff]
    %v375 = vld [vmem:[#allocation7 + $0x1e0] sm:$0xff]
    %v376 = vld [vmem:[#allocation7 + $0x1e8] sm:$0xff]
    %v377 = vld [vmem:[#allocation7 + $0x1f0] sm:$0xff]
    %v378 = vld [vmem:[#allocation7 + $0x1f8] sm:$0xff]
    %v443 = vunpack.c.l.b16 %v315
    %v444 = vunpack.c.h.b16 %v315
    %v445 = vunpack.c.l.b16 %v316
    %v446 = vunpack.c.h.b16 %v316
    %v447 = vunpack.c.l.b16 %v317
    %v448 = vunpack.c.h.b16 %v317
    %v449 = vunpack.c.l.b16 %v318
    %v450 = vunpack.c.h.b16 %v318
    %v451 = vunpack.c.l.b16 %v319
    %v452 = vunpack.c.h.b16 %v319
    %v453 = vunpack.c.l.b16 %v320
    %v454 = vunpack.c.h.b16 %v320
    %v455 = vunpack.c.l.b16 %v321
    %v456 = vunpack.c.h.b16 %v321
    %v457 = vunpack.c.l.b16 %v322
    %v458 = vunpack.c.h.b16 %v322
    %v459 = vunpack.c.l.b16 %v323
    %v460 = vunpack.c.h.b16 %v323
    %v461 = vunpack.c.l.b16 %v324
    %v462 = vunpack.c.h.b16 %v324
    %v463 = vunpack.c.l.b16 %v325
    %v464 = vunpack.c.h.b16 %v325
    %v465 = vunpack.c.l.b16 %v326
    %v466 = vunpack.c.h.b16 %v326
    %v467 = vunpack.c.l.b16 %v327
    %v468 = vunpack.c.h.b16 %v327
    %v469 = vunpack.c.l.b16 %v328
    %v470 = vunpack.c.h.b16 %v328
    %v471 = vunpack.c.l.b16 %v329
    %v472 = vunpack.c.h.b16 %v329
    %v473 = vunpack.c.l.b16 %v330
    %v474 = vunpack.c.h.b16 %v330
    %v475 = vunpack.c.l.b16 %v331
    %v476 = vunpack.c.h.b16 %v331
    %v477 = vunpack.c.l.b16 %v332
    %v478 = vunpack.c.h.b16 %v332
    %v479 = vunpack.c.l.b16 %v333
    %v480 = vunpack.c.h.b16 %v333
    %v481 = vunpack.c.l.b16 %v334
    %v482 = vunpack.c.h.b16 %v334
    %v483 = vunpack.c.l.b16 %v335
    %v484 = vunpack.c.h.b16 %v335
    %v485 = vunpack.c.l.b16 %v336
    %v486 = vunpack.c.h.b16 %v336
    %v487 = vunpack.c.l.b16 %v337
    %v488 = vunpack.c.h.b16 %v337
    %v489 = vunpack.c.l.b16 %v338
    %v490 = vunpack.c.h.b16 %v338
    %v491 = vunpack.c.l.b16 %v339
    %v492 = vunpack.c.h.b16 %v339
    %v493 = vunpack.c.l.b16 %v340
    %v494 = vunpack.c.h.b16 %v340
    %v495 = vunpack.c.l.b16 %v341
    %v496 = vunpack.c.h.b16 %v341
    %v497 = vunpack.c.l.b16 %v342
    %v498 = vunpack.c.h.b16 %v342
    %v499 = vunpack.c.l.b16 %v343
    %v500 = vunpack.c.h.b16 %v343
    %v501 = vunpack.c.l.b16 %v344
    %v502 = vunpack.c.h.b16 %v344
    %v503 = vunpack.c.l.b16 %v345
    %v504 = vunpack.c.h.b16 %v345
    %v505 = vunpack.c.l.b16 %v346
    %v506 = vunpack.c.h.b16 %v346
    %v507 = vunpack.c.l.b16 %v347
    %v508 = vunpack.c.h.b16 %v347
    %v509 = vunpack.c.l.b16 %v348
    %v510 = vunpack.c.h.b16 %v348
    %v511 = vunpack.c.l.b16 %v349
    %v512 = vunpack.c.h.b16 %v349
    %v513 = vunpack.c.l.b16 %v350
    %v514 = vunpack.c.h.b16 %v350
    %v515 = vunpack.c.l.b16 %v351
    %v516 = vunpack.c.h.b16 %v351
    %v517 = vunpack.c.l.b16 %v352
    %v518 = vunpack.c.h.b16 %v352
    %v519 = vunpack.c.l.b16 %v353
    %v520 = vunpack.c.h.b16 %v353
    %v521 = vunpack.c.l.b16 %v354
    %v522 = vunpack.c.h.b16 %v354
    %v523 = vunpack.c.l.b16 %v355
    %v524 = vunpack.c.h.b16 %v355
    %v525 = vunpack.c.l.b16 %v356
    %v526 = vunpack.c.h.b16 %v356
    %v527 = vunpack.c.l.b16 %v357
    %v528 = vunpack.c.h.b16 %v357
    %v529 = vunpack.c.l.b16 %v358
    %v530 = vunpack.c.h.b16 %v358
    %v531 = vunpack.c.l.b16 %v359
    %v532 = vunpack.c.h.b16 %v359
    %v533 = vunpack.c.l.b16 %v360
    %v534 = vunpack.c.h.b16 %v360
    %v535 = vunpack.c.l.b16 %v361
    %v536 = vunpack.c.h.b16 %v361
    %v537 = vunpack.c.l.b16 %v362
    %v538 = vunpack.c.h.b16 %v362
    %v539 = vunpack.c.l.b16 %v363
    %v540 = vunpack.c.h.b16 %v363
    %v541 = vunpack.c.l.b16 %v364
    %v542 = vunpack.c.h.b16 %v364
    %v543 = vunpack.c.l.b16 %v365
    %v544 = vunpack.c.h.b16 %v365
    %v545 = vunpack.c.l.b16 %v366
    %v546 = vunpack.c.h.b16 %v366
    %v547 = vunpack.c.l.b16 %v367
    %v548 = vunpack.c.h.b16 %v367
    %v549 = vunpack.c.l.b16 %v368
    %v550 = vunpack.c.h.b16 %v368
    %v551 = vunpack.c.l.b16 %v369
    %v552 = vunpack.c.h.b16 %v369
    %v553 = vunpack.c.l.b16 %v370
    %v554 = vunpack.c.h.b16 %v370
    %v555 = vunpack.c.l.b16 %v371
    %v556 = vunpack.c.h.b16 %v371
    %v557 = vunpack.c.l.b16 %v372
    %v558 = vunpack.c.h.b16 %v372
    %v559 = vunpack.c.l.b16 %v373
    %v560 = vunpack.c.h.b16 %v373
    %v561 = vunpack.c.l.b16 %v374
    %v562 = vunpack.c.h.b16 %v374
    %v563 = vunpack.c.l.b16 %v375
    %v564 = vunpack.c.h.b16 %v375
    %v565 = vunpack.c.l.b16 %v376
    %v566 = vunpack.c.h.b16 %v376
    %v567 = vunpack.c.l.b16 %v377
    %v568 = vunpack.c.h.b16 %v377
    %v569 = vunpack.c.l.b16 %v378
    %v570 = vunpack.c.h.b16 %v378
    %v571 = vpack.c.b16 %v447, %v443
    %v572 = vpack.c.b16 %v448, %v444
    %v573 = vpack.c.b16 %v449, %v445
    %v574 = vpack.c.b16 %v450, %v446
    %v575 = vpack.c.b16 %v455, %v451
    %v576 = vpack.c.b16 %v456, %v452
    %v577 = vpack.c.b16 %v457, %v453
    %v578 = vpack.c.b16 %v458, %v454
    %v579 = vpack.c.b16 %v463, %v459
    %v580 = vpack.c.b16 %v464, %v460
    %v581 = vpack.c.b16 %v465, %v461
    %v582 = vpack.c.b16 %v466, %v462
    %v583 = vpack.c.b16 %v471, %v467
    %v584 = vpack.c.b16 %v472, %v468
    %v585 = vpack.c.b16 %v473, %v469
    %v586 = vpack.c.b16 %v474, %v470
    %v587 = vpack.c.b16 %v479, %v475
    %v588 = vpack.c.b16 %v480, %v476
    %v589 = vpack.c.b16 %v481, %v477
    %v590 = vpack.c.b16 %v482, %v478
    %v591 = vpack.c.b16 %v487, %v483
    %v592 = vpack.c.b16 %v488, %v484
    %v593 = vpack.c.b16 %v489, %v485
    %v594 = vpack.c.b16 %v490, %v486
    %v595 = vpack.c.b16 %v495, %v491
    %v596 = vpack.c.b16 %v496, %v492
    %v597 = vpack.c.b16 %v497, %v493
    %v598 = vpack.c.b16 %v498, %v494
    %v599 = vpack.c.b16 %v503, %v499
    %v600 = vpack.c.b16 %v504, %v500
    %v601 = vpack.c.b16 %v505, %v501
    %v602 = vpack.c.b16 %v506, %v502
    %v603 = vpack.c.b16 %v511, %v507
    %v604 = vpack.c.b16 %v512, %v508
    %v605 = vpack.c.b16 %v513, %v509
    %v606 = vpack.c.b16 %v514, %v510
    %v607 = vpack.c.b16 %v519, %v515
    %v608 = vpack.c.b16 %v520, %v516
    %v609 = vpack.c.b16 %v521, %v517
    %v610 = vpack.c.b16 %v522, %v518
    %v611 = vpack.c.b16 %v527, %v523
    %v612 = vpack.c.b16 %v528, %v524
    %v613 = vpack.c.b16 %v529, %v525
    %v614 = vpack.c.b16 %v530, %v526
    %v615 = vpack.c.b16 %v535, %v531
    %v616 = vpack.c.b16 %v536, %v532
    %v617 = vpack.c.b16 %v537, %v533
    %v618 = vpack.c.b16 %v538, %v534
    %v619 = vpack.c.b16 %v543, %v539
    %v620 = vpack.c.b16 %v544, %v540
    %v621 = vpack.c.b16 %v545, %v541
    %v622 = vpack.c.b16 %v546, %v542
    %v623 = vpack.c.b16 %v551, %v547
    %v624 = vpack.c.b16 %v552, %v548
    %v625 = vpack.c.b16 %v553, %v549
    %v626 = vpack.c.b16 %v554, %v550
    %v627 = vpack.c.b16 %v559, %v555
    %v628 = vpack.c.b16 %v560, %v556
    %v629 = vpack.c.b16 %v561, %v557
    %v630 = vpack.c.b16 %v562, %v558
    %v631 = vpack.c.b16 %v567, %v563
    %v632 = vpack.c.b16 %v568, %v564
    %v633 = vpack.c.b16 %v569, %v565
    %v634 = vpack.c.b16 %v570, %v566
    %699 = vmatprep.subr.bf16.mxu0 %v572
    %700 = vmatpush1.bf16.msra.mxu0 %v571
    %701 = vmatprep.subr.bf16.mxu0 %v576
    %702 = vmatpush1.bf16.msra.mxu0 %v575
    %703 = vmatprep.subr.bf16.mxu0 %v580
    %704 = vmatpush1.bf16.msra.mxu0 %v579
    %705 = vmatprep.subr.bf16.mxu0 %v584
    %706 = vmatpush1.bf16.msra.mxu0 %v583
    %707 = vmatprep.subr.bf16.mxu0 %v588
    %708 = vmatpush1.bf16.msra.mxu0 %v587
    %709 = vmatprep.subr.bf16.mxu0 %v592
    %710 = vmatpush1.bf16.msra.mxu0 %v591
    %711 = vmatprep.subr.bf16.mxu0 %v596
    %712 = vmatpush1.bf16.msra.mxu0 %v595
    %713 = vmatprep.subr.bf16.mxu0 %v600
    %714 = vmatpush1.bf16.msra.mxu0 %v599
    %715 = vmatprep.subr.bf16.mxu0 %v604
    %716 = vmatpush1.bf16.msra.mxu0 %v603
    %717 = vmatprep.subr.bf16.mxu0 %v608
    %718 = vmatpush1.bf16.msra.mxu0 %v607
    %719 = vmatprep.subr.bf16.mxu0 %v612
    %720 = vmatpush1.bf16.msra.mxu0 %v611
    %721 = vmatprep.subr.bf16.mxu0 %v616
    %722 = vmatpush1.bf16.msra.mxu0 %v615
    %723 = vmatprep.subr.bf16.mxu0 %v620
    %724 = vmatpush1.bf16.msra.mxu0 %v619
    %725 = vmatprep.subr.bf16.mxu0 %v624
    %726 = vmatpush1.bf16.msra.mxu0 %v623
    %727 = vmatprep.subr.bf16.mxu0 %v628
    %728 = vmatpush1.bf16.msra.mxu0 %v627
    %729 = vmatprep.subr.bf16.mxu0 %v632
    %730 = vmatpush1.bf16.msra.mxu0 %v631
    %731 = vmatprep.mubr.bf16.mxu0 %v308
    %732 = vmatmul.mubr.bf16.gmra.mrb[0].mxu0 %v307
    %v733 = vpop.f32.mrb[0].mxu0
    %v734 = vadd.f32 0.0, %v733
    %v735 = vpop.f32.mrb[0].mxu0
    %v736 = vadd.f32 0.0, %v735
    %v737 = vpop.f32.mrb[0].mxu0
    %v738 = vadd.f32 0.0, %v737
    %v739 = vpop.f32.mrb[0].mxu0
    %v740 = vadd.f32 0.0, %v739
    %741 = vmatprep.mubr.bf16.mxu0 %v310
    %742 = vmatmul.mubr.bf16.gmra.mrb[0].mxu0 %v309
    %v743 = vpop.f32.mrb[0].mxu0
    %v744 = vadd.f32 0.0, %v743
    %v745 = vpop.f32.mrb[0].mxu0
    %v746 = vadd.f32 0.0, %v745
    %v747 = vpop.f32.mrb[0].mxu0
    %v748 = vadd.f32 0.0, %v747
    %v749 = vpop.f32.mrb[0].mxu0
    %v750 = vadd.f32 0.0, %v749
    %751 = vmatprep.mubr.bf16.mxu0 %v312
    %752 = vmatmul.mubr.bf16.gmra.mrb[0].mxu0 %v311
    %v753 = vpop.f32.mrb[0].mxu0
    %v754 = vadd.f32 0.0, %v753
    %v755 = vpop.f32.mrb[0].mxu0
    %v756 = vadd.f32 0.0, %v755
    %v757 = vpop.f32.mrb[0].mxu0
    %v758 = vadd.f32 0.0, %v757
    %v759 = vpop.f32.mrb[0].mxu0
    %v760 = vadd.f32 0.0, %v759
    %761 = vmatprep.mubr.bf16.mxu0 %v314
    %762 = vmatmul.mubr.bf16.gmra.mrb[0].mxu0 %v313
    %v763 = vpop.f32.mrb[0].mxu0
    %v764 = vadd.f32 0.0, %v763
    %v765 = vpop.f32.mrb[0].mxu0
    %v766 = vadd.f32 0.0, %v765
    %v767 = vpop.f32.mrb[0].mxu0
    %v768 = vadd.f32 0.0, %v767
    %v769 = vpop.f32.mrb[0].mxu0
    %v770 = vadd.f32 0.0, %v769
    %771 = vdwg.mxu0
    %772 = vmatprep.subr.bf16.mxu0 %v574
    %773 = vmatpush1.bf16.msra.mxu0 %v573
    %774 = vmatprep.subr.bf16.mxu0 %v578
    %775 = vmatpush1.bf16.msra.mxu0 %v577
    %776 = vmatprep.subr.bf16.mxu0 %v582
    %777 = vmatpush1.bf16.msra.mxu0 %v581
    %778 = vmatprep.subr.bf16.mxu0 %v586
    %779 = vmatpush1.bf16.msra.mxu0 %v585
    %780 = vmatprep.subr.bf16.mxu0 %v590
    %781 = vmatpush1.bf16.msra.mxu0 %v589
    %782 = vmatprep.subr.bf16.mxu0 %v594
    %783 = vmatpush1.bf16.msra.mxu0 %v593
    %784 = vmatprep.subr.bf16.mxu0 %v598
    %785 = vmatpush1.bf16.msra.mxu0 %v597
    %786 = vmatprep.subr.bf16.mxu0 %v602
    %787 = vmatpush1.bf16.msra.mxu0 %v601
    %788 = vmatprep.subr.bf16.mxu0 %v606
    %789 = vmatpush1.bf16.msra.mxu0 %v605
    %790 = vmatprep.subr.bf16.mxu0 %v610
    %791 = vmatpush1.bf16.msra.mxu0 %v609
    %792 = vmatprep.subr.bf16.mxu0 %v614
    %793 = vmatpush1.bf16.msra.mxu0 %v613
    %794 = vmatprep.subr.bf16.mxu0 %v618
    %795 = vmatpush1.bf16.msra.mxu0 %v617
    %796 = vmatprep.subr.bf16.mxu0 %v622
    %797 = vmatpush1.bf16.msra.mxu0 %v621
    %798 = vmatprep.subr.bf16.mxu0 %v626
    %799 = vmatpush1.bf16.msra.mxu0 %v625
    %800 = vmatprep.subr.bf16.mxu0 %v630
    %801 = vmatpush1.bf16.msra.mxu0 %v629
    %802 = vmatprep.subr.bf16.mxu0 %v634
    %803 = vmatpush1.bf16.msra.mxu0 %v633
    %804 = vmatprep.mubr.bf16.mxu0 %v308
    %805 = vmatmul.mubr.bf16.gmra.mrb[0].mxu0 %v307
    %v806 = vpop.f32.mrb[0].mxu0
    %v807 = vadd.f32 0.0, %v806
    %v808 = vpop.f32.mrb[0].mxu0
    %v809 = vadd.f32 0.0, %v808
    %v810 = vpop.f32.mrb[0].mxu0
    %v811 = vadd.f32 0.0, %v810
    %v812 = vpop.f32.mrb[0].mxu0
    %v813 = vadd.f32 0.0, %v812
    %814 = vmatprep.mubr.bf16.mxu0 %v310
    %815 = vmatmul.mubr.bf16.gmra.mrb[0].mxu0 %v309
    %v816 = vpop.f32.mrb[0].mxu0
    %v817 = vadd.f32 0.0, %v816
    %v818 = vpop.f32.mrb[0].mxu0
    %v819 = vadd.f32 0.0, %v818
    %v820 = vpop.f32.mrb[0].mxu0
    %v821 = vadd.f32 0.0, %v820
    %v822 = vpop.f32.mrb[0].mxu0
    %v823 = vadd.f32 0.0, %v822
    %824 = vmatprep.mubr.bf16.mxu0 %v312
    %825 = vmatmul.mubr.bf16.gmra.mrb[0].mxu0 %v311
    %v826 = vpop.f32.mrb[0].mxu0
    %v827 = vadd.f32 0.0, %v826
    %v828 = vpop.f32.mrb[0].mxu0
    %v829 = vadd.f32 0.0, %v828
    %v830 = vpop.f32.mrb[0].mxu0
    %v831 = vadd.f32 0.0, %v830
    %v832 = vpop.f32.mrb[0].mxu0
    %v833 = vadd.f32 0.0, %v832
    %834 = vmatprep.mubr.bf16.mxu0 %v314
    %835 = vmatmul.mubr.bf16.gmra.mrb[0].mxu0 %v313
    %v836 = vpop.f32.mrb[0].mxu0
    %v837 = vadd.f32 0.0, %v836
    %v838 = vpop.f32.mrb[0].mxu0
    %v839 = vadd.f32 0.0, %v838
    %v840 = vpop.f32.mrb[0].mxu0
    %v841 = vadd.f32 0.0, %v840
    %v842 = vpop.f32.mrb[0].mxu0
    %v843 = vadd.f32 0.0, %v842
    %844 = vdwg.mxu0
    %v845 = vmax.f32 %v734, 0.0
    %v846 = vmax.f32 %v736, 0.0
    %v847 = vmax.f32 %v807, 0.0
    %v848 = vmax.f32 %v809, 0.0
    %v849 = vmax.f32 %v738, 0.0
    %v850 = vmax.f32 %v740, 0.0
    %v851 = vmax.f32 %v811, 0.0
    %v852 = vmax.f32 %v813, 0.0
    %v853 = vmax.f32 %v744, 0.0
    %v854 = vmax.f32 %v746, 0.0
    %v855 = vmax.f32 %v817, 0.0
    %v856 = vmax.f32 %v819, 0.0
    %v857 = vmax.f32 %v748, 0.0
    %v858 = vmax.f32 %v750, 0.0
    %v859 = vmax.f32 %v821, 0.0
    %v860 = vmax.f32 %v823, 0.0
    %v861 = vmax.f32 %v754, 0.0
    %v862 = vmax.f32 %v756, 0.0
    %v863 = vmax.f32 %v827, 0.0
    %v864 = vmax.f32 %v829, 0.0
    %v865 = vmax.f32 %v758, 0.0
    %v866 = vmax.f32 %v760, 0.0
    %v867 = vmax.f32 %v831, 0.0
    %v868 = vmax.f32 %v833, 0.0
    %v869 = vmax.f32 %v764, 0.0
    %v870 = vmax.f32 %v766, 0.0
    %v871 = vmax.f32 %v837, 0.0
    %v872 = vmax.f32 %v839, 0.0
    %v873 = vmax.f32 %v768, 0.0
    %v874 = vmax.f32 %v770, 0.0
    %v875 = vmax.f32 %v841, 0.0
    %v876 = vmax.f32 %v843, 0.0
    %v877 = vpack.c.bf16 %v849, %v845
    %v878 = vpack.c.bf16 %v850, %v846
    %v879 = vpack.c.bf16 %v851, %v847
    %v880 = vpack.c.bf16 %v852, %v848
    %v881 = vpack.c.bf16 %v857, %v853
    %v882 = vpack.c.bf16 %v858, %v854
    %v883 = vpack.c.bf16 %v859, %v855
    %v884 = vpack.c.bf16 %v860, %v856
    %v885 = vpack.c.bf16 %v865, %v861
    %v886 = vpack.c.bf16 %v866, %v862
    %v887 = vpack.c.bf16 %v867, %v863
    %v888 = vpack.c.bf16 %v868, %v864
    %v889 = vpack.c.bf16 %v873, %v869
    %v890 = vpack.c.bf16 %v874, %v870
    %v891 = vpack.c.bf16 %v875, %v871
    %v892 = vpack.c.bf16 %v876, %v872
    %v893 = vld [vmem:[#allocation8] sm:$0xff]
    %v894 = vld [vmem:[#allocation8 + $0x8] sm:$0xff]
    %v895 = vld [vmem:[#allocation8 + $0x10] sm:$0xff]
    %v896 = vld [vmem:[#allocation8 + $0x18] sm:$0xff]
    %v897 = vld [vmem:[#allocation8 + $0x20] sm:$0xff]
    %v898 = vld [vmem:[#allocation8 + $0x28] sm:$0xff]
    %v899 = vld [vmem:[#allocation8 + $0x30] sm:$0xff]
    %v900 = vld [vmem:[#allocation8 + $0x38] sm:$0xff]
    %v901 = vld [vmem:[#allocation8 + $0x40] sm:$0xff]
    %v902 = vld [vmem:[#allocation8 + $0x48] sm:$0xff]
    %v903 = vld [vmem:[#allocation8 + $0x50] sm:$0xff]
    %v904 = vld [vmem:[#allocation8 + $0x58] sm:$0xff]
    %v905 = vld [vmem:[#allocation8 + $0x60] sm:$0xff]
    %v906 = vld [vmem:[#allocation8 + $0x68] sm:$0xff]
    %v907 = vld [vmem:[#allocation8 + $0x70] sm:$0xff]
    %v908 = vld [vmem:[#allocation8 + $0x78] sm:$0xff]
    %v909 = vld [vmem:[#allocation8 + $0x80] sm:$0xff]
    %v910 = vld [vmem:[#allocation8 + $0x88] sm:$0xff]
    %v911 = vld [vmem:[#allocation8 + $0x90] sm:$0xff]
    %v912 = vld [vmem:[#allocation8 + $0x98] sm:$0xff]
    %v913 = vld [vmem:[#allocation8 + $0xa0] sm:$0xff]
    %v914 = vld [vmem:[#allocation8 + $0xa8] sm:$0xff]
    %v915 = vld [vmem:[#allocation8 + $0xb0] sm:$0xff]
    %v916 = vld [vmem:[#allocation8 + $0xb8] sm:$0xff]
    %v917 = vld [vmem:[#allocation8 + $0xc0] sm:$0xff]
    %v918 = vld [vmem:[#allocation8 + $0xc8] sm:$0xff]
    %v919 = vld [vmem:[#allocation8 + $0xd0] sm:$0xff]
    %v920 = vld [vmem:[#allocation8 + $0xd8] sm:$0xff]
    %v921 = vld [vmem:[#allocation8 + $0xe0] sm:$0xff]
    %v922 = vld [vmem:[#allocation8 + $0xe8] sm:$0xff]
    %v923 = vld [vmem:[#allocation8 + $0xf0] sm:$0xff]
    %v924 = vld [vmem:[#allocation8 + $0xf8] sm:$0xff]
    %v925 = vld [vmem:[#allocation8 + $0x100] sm:$0xff]
    %v926 = vld [vmem:[#allocation8 + $0x108] sm:$0xff]
    %v927 = vld [vmem:[#allocation8 + $0x110] sm:$0xff]
    %v928 = vld [vmem:[#allocation8 + $0x118] sm:$0xff]
    %v929 = vld [vmem:[#allocation8 + $0x120] sm:$0xff]
    %v930 = vld [vmem:[#allocation8 + $0x128] sm:$0xff]
    %v931 = vld [vmem:[#allocation8 + $0x130] sm:$0xff]
    %v932 = vld [vmem:[#allocation8 + $0x138] sm:$0xff]
    %v933 = vld [vmem:[#allocation8 + $0x140] sm:$0xff]
    %v934 = vld [vmem:[#allocation8 + $0x148] sm:$0xff]
    %v935 = vld [vmem:[#allocation8 + $0x150] sm:$0xff]
    %v936 = vld [vmem:[#allocation8 + $0x158] sm:$0xff]
    %v937 = vld [vmem:[#allocation8 + $0x160] sm:$0xff]
    %v938 = vld [vmem:[#allocation8 + $0x168] sm:$0xff]
    %v939 = vld [vmem:[#allocation8 + $0x170] sm:$0xff]
    %v940 = vld [vmem:[#allocation8 + $0x178] sm:$0xff]
    %v941 = vld [vmem:[#allocation8 + $0x180] sm:$0xff]
    %v942 = vld [vmem:[#allocation8 + $0x188] sm:$0xff]
    %v943 = vld [vmem:[#allocation8 + $0x190] sm:$0xff]
    %v944 = vld [vmem:[#allocation8 + $0x198] sm:$0xff]
    %v945 = vld [vmem:[#allocation8 + $0x1a0] sm:$0xff]
    %v946 = vld [vmem:[#allocation8 + $0x1a8] sm:$0xff]
    %v947 = vld [vmem:[#allocation8 + $0x1b0] sm:$0xff]
    %v948 = vld [vmem:[#allocation8 + $0x1b8] sm:$0xff]
    %v949 = vld [vmem:[#allocation8 + $0x1c0] sm:$0xff]
    %v950 = vld [vmem:[#allocation8 + $0x1c8] sm:$0xff]
    %v951 = vld [vmem:[#allocation8 + $0x1d0] sm:$0xff]
    %v952 = vld [vmem:[#allocation8 + $0x1d8] sm:$0xff]
    %v953 = vld [vmem:[#allocation8 + $0x1e0] sm:$0xff]
    %v954 = vld [vmem:[#allocation8 + $0x1e8] sm:$0xff]
    %v955 = vld [vmem:[#allocation8 + $0x1f0] sm:$0xff]
    %v956 = vld [vmem:[#allocation8 + $0x1f8] sm:$0xff]
    %v957 = vld [vmem:[#allocation8 + $0x200] sm:$0xff]
    %v958 = vld [vmem:[#allocation8 + $0x208] sm:$0xff]
    %v959 = vld [vmem:[#allocation8 + $0x210] sm:$0xff]
    %v960 = vld [vmem:[#allocation8 + $0x218] sm:$0xff]
    %v961 = vld [vmem:[#allocation8 + $0x220] sm:$0xff]
    %v962 = vld [vmem:[#allocation8 + $0x228] sm:$0xff]
    %v963 = vld [vmem:[#allocation8 + $0x230] sm:$0xff]
    %v964 = vld [vmem:[#allocation8 + $0x238] sm:$0xff]
    %v965 = vld [vmem:[#allocation8 + $0x240] sm:$0xff]
    %v966 = vld [vmem:[#allocation8 + $0x248] sm:$0xff]
    %v967 = vld [vmem:[#allocation8 + $0x250] sm:$0xff]
    %v968 = vld [vmem:[#allocation8 + $0x258] sm:$0xff]
    %v969 = vld [vmem:[#allocation8 + $0x260] sm:$0xff]
    %v970 = vld [vmem:[#allocation8 + $0x268] sm:$0xff]
    %v971 = vld [vmem:[#allocation8 + $0x270] sm:$0xff]
    %v972 = vld [vmem:[#allocation8 + $0x278] sm:$0xff]
    %v973 = vld [vmem:[#allocation8 + $0x280] sm:$0xff]
    %v974 = vld [vmem:[#allocation8 + $0x288] sm:$0xff]
    %v975 = vld [vmem:[#allocation8 + $0x290] sm:$0xff]
    %v976 = vld [vmem:[#allocation8 + $0x298] sm:$0xff]
    %v977 = vld [vmem:[#allocation8 + $0x2a0] sm:$0xff]
    %v978 = vld [vmem:[#allocation8 + $0x2a8] sm:$0xff]
    %v979 = vld [vmem:[#allocation8 + $0x2b0] sm:$0xff]
    %v980 = vld [vmem:[#allocation8 + $0x2b8] sm:$0xff]
    %v981 = vld [vmem:[#allocation8 + $0x2c0] sm:$0xff]
    %v982 = vld [vmem:[#allocation8 + $0x2c8] sm:$0xff]
    %v983 = vld [vmem:[#allocation8 + $0x2d0] sm:$0xff]
    %v984 = vld [vmem:[#allocation8 + $0x2d8] sm:$0xff]
    %v985 = vld [vmem:[#allocation8 + $0x2e0] sm:$0xff]
    %v986 = vld [vmem:[#allocation8 + $0x2e8] sm:$0xff]
    %v987 = vld [vmem:[#allocation8 + $0x2f0] sm:$0xff]
    %v988 = vld [vmem:[#allocation8 + $0x2f8] sm:$0xff]
    %v989 = vld [vmem:[#allocation8 + $0x300] sm:$0xff]
    %v990 = vld [vmem:[#allocation8 + $0x308] sm:$0xff]
    %v991 = vld [vmem:[#allocation8 + $0x310] sm:$0xff]
    %v992 = vld [vmem:[#allocation8 + $0x318] sm:$0xff]
    %v993 = vld [vmem:[#allocation8 + $0x320] sm:$0xff]
    %v994 = vld [vmem:[#allocation8 + $0x328] sm:$0xff]
    %v995 = vld [vmem:[#allocation8 + $0x330] sm:$0xff]
    %v996 = vld [vmem:[#allocation8 + $0x338] sm:$0xff]
    %v997 = vld [vmem:[#allocation8 + $0x340] sm:$0xff]
    %v998 = vld [vmem:[#allocation8 + $0x348] sm:$0xff]
    %v999 = vld [vmem:[#allocation8 + $0x350] sm:$0xff]
    %v1000 = vld [vmem:[#allocation8 + $0x358] sm:$0xff]
    %v1001 = vld [vmem:[#allocation8 + $0x360] sm:$0xff]
    %v1002 = vld [vmem:[#allocation8 + $0x368] sm:$0xff]
    %v1003 = vld [vmem:[#allocation8 + $0x370] sm:$0xff]
    %v1004 = vld [vmem:[#allocation8 + $0x378] sm:$0xff]
    %v1005 = vld [vmem:[#allocation8 + $0x380] sm:$0xff]
    %v1006 = vld [vmem:[#allocation8 + $0x388] sm:$0xff]
    %v1007 = vld [vmem:[#allocation8 + $0x390] sm:$0xff]
    %v1008 = vld [vmem:[#allocation8 + $0x398] sm:$0xff]
    %v1009 = vld [vmem:[#allocation8 + $0x3a0] sm:$0xff]
    %v1010 = vld [vmem:[#allocation8 + $0x3a8] sm:$0xff]
    %v1011 = vld [vmem:[#allocation8 + $0x3b0] sm:$0xff]
    %v1012 = vld [vmem:[#allocation8 + $0x3b8] sm:$0xff]
    %v1013 = vld [vmem:[#allocation8 + $0x3c0] sm:$0xff]
    %v1014 = vld [vmem:[#allocation8 + $0x3c8] sm:$0xff]
    %v1015 = vld [vmem:[#allocation8 + $0x3d0] sm:$0xff]
    %v1016 = vld [vmem:[#allocation8 + $0x3d8] sm:$0xff]
    %v1017 = vld [vmem:[#allocation8 + $0x3e0] sm:$0xff]
    %v1018 = vld [vmem:[#allocation8 + $0x3e8] sm:$0xff]
    %v1019 = vld [vmem:[#allocation8 + $0x3f0] sm:$0xff]
    %v1020 = vld [vmem:[#allocation8 + $0x3f8] sm:$0xff]
    %v1021 = vld [vmem:[#allocation8 + $0x400] sm:$0xff]
    %v1022 = vld [vmem:[#allocation8 + $0x408] sm:$0xff]
    %v1023 = vld [vmem:[#allocation8 + $0x410] sm:$0xff]
    %v1024 = vld [vmem:[#allocation8 + $0x418] sm:$0xff]
    %v1025 = vld [vmem:[#allocation8 + $0x420] sm:$0xff]
    %v1026 = vld [vmem:[#allocation8 + $0x428] sm:$0xff]
    %v1027 = vld [vmem:[#allocation8 + $0x430] sm:$0xff]
    %v1028 = vld [vmem:[#allocation8 + $0x438] sm:$0xff]
    %v1029 = vld [vmem:[#allocation8 + $0x440] sm:$0xff]
    %v1030 = vld [vmem:[#allocation8 + $0x448] sm:$0xff]
    %v1031 = vld [vmem:[#allocation8 + $0x450] sm:$0xff]
    %v1032 = vld [vmem:[#allocation8 + $0x458] sm:$0xff]
    %v1033 = vld [vmem:[#allocation8 + $0x460] sm:$0xff]
    %v1034 = vld [vmem:[#allocation8 + $0x468] sm:$0xff]
    %v1035 = vld [vmem:[#allocation8 + $0x470] sm:$0xff]
    %v1036 = vld [vmem:[#allocation8 + $0x478] sm:$0xff]
    %v1037 = vld [vmem:[#allocation8 + $0x480] sm:$0xff]
    %v1038 = vld [vmem:[#allocation8 + $0x488] sm:$0xff]
    %v1039 = vld [vmem:[#allocation8 + $0x490] sm:$0xff]
    %v1040 = vld [vmem:[#allocation8 + $0x498] sm:$0xff]
    %v1041 = vld [vmem:[#allocation8 + $0x4a0] sm:$0xff]
    %v1042 = vld [vmem:[#allocation8 + $0x4a8] sm:$0xff]
    %v1043 = vld [vmem:[#allocation8 + $0x4b0] sm:$0xff]
    %v1044 = vld [vmem:[#allocation8 + $0x4b8] sm:$0xff]
    %v1045 = vld [vmem:[#allocation8 + $0x4c0] sm:$0xff]
    %v1046 = vld [vmem:[#allocation8 + $0x4c8] sm:$0xff]
    %v1047 = vld [vmem:[#allocation8 + $0x4d0] sm:$0xff]
    %v1048 = vld [vmem:[#allocation8 + $0x4d8] sm:$0xff]
    %v1049 = vld [vmem:[#allocation8 + $0x4e0] sm:$0xff]
    %v1050 = vld [vmem:[#allocation8 + $0x4e8] sm:$0xff]
    %v1051 = vld [vmem:[#allocation8 + $0x4f0] sm:$0xff]
    %v1052 = vld [vmem:[#allocation8 + $0x4f8] sm:$0xff]
    %v1053 = vld [vmem:[#allocation8 + $0x500] sm:$0xff]
    %v1054 = vld [vmem:[#allocation8 + $0x508] sm:$0xff]
    %v1055 = vld [vmem:[#allocation8 + $0x510] sm:$0xff]
    %v1056 = vld [vmem:[#allocation8 + $0x518] sm:$0xff]
    %v1057 = vld [vmem:[#allocation8 + $0x520] sm:$0xff]
    %v1058 = vld [vmem:[#allocation8 + $0x528] sm:$0xff]
    %v1059 = vld [vmem:[#allocation8 + $0x530] sm:$0xff]
    %v1060 = vld [vmem:[#allocation8 + $0x538] sm:$0xff]
    %v1061 = vld [vmem:[#allocation8 + $0x540] sm:$0xff]
    %v1062 = vld [vmem:[#allocation8 + $0x548] sm:$0xff]
    %v1063 = vld [vmem:[#allocation8 + $0x550] sm:$0xff]
    %v1064 = vld [vmem:[#allocation8 + $0x558] sm:$0xff]
    %v1065 = vld [vmem:[#allocation8 + $0x560] sm:$0xff]
    %v1066 = vld [vmem:[#allocation8 + $0x568] sm:$0xff]
    %v1067 = vld [vmem:[#allocation8 + $0x570] sm:$0xff]
    %v1068 = vld [vmem:[#allocation8 + $0x578] sm:$0xff]
    %v1069 = vld [vmem:[#allocation8 + $0x580] sm:$0xff]
    %v1070 = vld [vmem:[#allocation8 + $0x588] sm:$0xff]
    %v1071 = vld [vmem:[#allocation8 + $0x590] sm:$0xff]
    %v1072 = vld [vmem:[#allocation8 + $0x598] sm:$0xff]
    %v1073 = vld [vmem:[#allocation8 + $0x5a0] sm:$0xff]
    %v1074 = vld [vmem:[#allocation8 + $0x5a8] sm:$0xff]
    %v1075 = vld [vmem:[#allocation8 + $0x5b0] sm:$0xff]
    %v1076 = vld [vmem:[#allocation8 + $0x5b8] sm:$0xff]
    %v1077 = vld [vmem:[#allocation8 + $0x5c0] sm:$0xff]
    %v1078 = vld [vmem:[#allocation8 + $0x5c8] sm:$0xff]
    %v1079 = vld [vmem:[#allocation8 + $0x5d0] sm:$0xff]
    %v1080 = vld [vmem:[#allocation8 + $0x5d8] sm:$0xff]
    %v1081 = vld [vmem:[#allocation8 + $0x5e0] sm:$0xff]
    %v1082 = vld [vmem:[#allocation8 + $0x5e8] sm:$0xff]
    %v1083 = vld [vmem:[#allocation8 + $0x5f0] sm:$0xff]
    %v1084 = vld [vmem:[#allocation8 + $0x5f8] sm:$0xff]
    %v1085 = vld [vmem:[#allocation8 + $0x600] sm:$0xff]
    %v1086 = vld [vmem:[#allocation8 + $0x608] sm:$0xff]
    %v1087 = vld [vmem:[#allocation8 + $0x610] sm:$0xff]
    %v1088 = vld [vmem:[#allocation8 + $0x618] sm:$0xff]
    %v1089 = vld [vmem:[#allocation8 + $0x620] sm:$0xff]
    %v1090 = vld [vmem:[#allocation8 + $0x628] sm:$0xff]
    %v1091 = vld [vmem:[#allocation8 + $0x630] sm:$0xff]
    %v1092 = vld [vmem:[#allocation8 + $0x638] sm:$0xff]
    %v1093 = vld [vmem:[#allocation8 + $0x640] sm:$0xff]
    %v1094 = vld [vmem:[#allocation8 + $0x648] sm:$0xff]
    %v1095 = vld [vmem:[#allocation8 + $0x650] sm:$0xff]
    %v1096 = vld [vmem:[#allocation8 + $0x658] sm:$0xff]
    %v1097 = vld [vmem:[#allocation8 + $0x660] sm:$0xff]
    %v1098 = vld [vmem:[#allocation8 + $0x668] sm:$0xff]
    %v1099 = vld [vmem:[#allocation8 + $0x670] sm:$0xff]
    %v1100 = vld [vmem:[#allocation8 + $0x678] sm:$0xff]
    %v1101 = vld [vmem:[#allocation8 + $0x680] sm:$0xff]
    %v1102 = vld [vmem:[#allocation8 + $0x688] sm:$0xff]
    %v1103 = vld [vmem:[#allocation8 + $0x690] sm:$0xff]
    %v1104 = vld [vmem:[#allocation8 + $0x698] sm:$0xff]
    %v1105 = vld [vmem:[#allocation8 + $0x6a0] sm:$0xff]
    %v1106 = vld [vmem:[#allocation8 + $0x6a8] sm:$0xff]
    %v1107 = vld [vmem:[#allocation8 + $0x6b0] sm:$0xff]
    %v1108 = vld [vmem:[#allocation8 + $0x6b8] sm:$0xff]
    %v1109 = vld [vmem:[#allocation8 + $0x6c0] sm:$0xff]
    %v1110 = vld [vmem:[#allocation8 + $0x6c8] sm:$0xff]
    %v1111 = vld [vmem:[#allocation8 + $0x6d0] sm:$0xff]
    %v1112 = vld [vmem:[#allocation8 + $0x6d8] sm:$0xff]
    %v1113 = vld [vmem:[#allocation8 + $0x6e0] sm:$0xff]
    %v1114 = vld [vmem:[#allocation8 + $0x6e8] sm:$0xff]
    %v1115 = vld [vmem:[#allocation8 + $0x6f0] sm:$0xff]
    %v1116 = vld [vmem:[#allocation8 + $0x6f8] sm:$0xff]
    %v1117 = vld [vmem:[#allocation8 + $0x700] sm:$0xff]
    %v1118 = vld [vmem:[#allocation8 + $0x708] sm:$0xff]
    %v1119 = vld [vmem:[#allocation8 + $0x710] sm:$0xff]
    %v1120 = vld [vmem:[#allocation8 + $0x718] sm:$0xff]
    %v1121 = vld [vmem:[#allocation8 + $0x720] sm:$0xff]
    %v1122 = vld [vmem:[#allocation8 + $0x728] sm:$0xff]
    %v1123 = vld [vmem:[#allocation8 + $0x730] sm:$0xff]
    %v1124 = vld [vmem:[#allocation8 + $0x738] sm:$0xff]
    %v1125 = vld [vmem:[#allocation8 + $0x740] sm:$0xff]
    %v1126 = vld [vmem:[#allocation8 + $0x748] sm:$0xff]
    %v1127 = vld [vmem:[#allocation8 + $0x750] sm:$0xff]
    %v1128 = vld [vmem:[#allocation8 + $0x758] sm:$0xff]
    %v1129 = vld [vmem:[#allocation8 + $0x760] sm:$0xff]
    %v1130 = vld [vmem:[#allocation8 + $0x768] sm:$0xff]
    %v1131 = vld [vmem:[#allocation8 + $0x770] sm:$0xff]
    %v1132 = vld [vmem:[#allocation8 + $0x778] sm:$0xff]
    %v1133 = vld [vmem:[#allocation8 + $0x780] sm:$0xff]
    %v1134 = vld [vmem:[#allocation8 + $0x788] sm:$0xff]
    %v1135 = vld [vmem:[#allocation8 + $0x790] sm:$0xff]
    %v1136 = vld [vmem:[#allocation8 + $0x798] sm:$0xff]
    %v1137 = vld [vmem:[#allocation8 + $0x7a0] sm:$0xff]
    %v1138 = vld [vmem:[#allocation8 + $0x7a8] sm:$0xff]
    %v1139 = vld [vmem:[#allocation8 + $0x7b0] sm:$0xff]
    %v1140 = vld [vmem:[#allocation8 + $0x7b8] sm:$0xff]
    %v1141 = vld [vmem:[#allocation8 + $0x7c0] sm:$0xff]
    %v1142 = vld [vmem:[#allocation8 + $0x7c8] sm:$0xff]
    %v1143 = vld [vmem:[#allocation8 + $0x7d0] sm:$0xff]
    %v1144 = vld [vmem:[#allocation8 + $0x7d8] sm:$0xff]
    %v1145 = vld [vmem:[#allocation8 + $0x7e0] sm:$0xff]
    %v1146 = vld [vmem:[#allocation8 + $0x7e8] sm:$0xff]
    %v1147 = vld [vmem:[#allocation8 + $0x7f0] sm:$0xff]
    %v1148 = vld [vmem:[#allocation8 + $0x7f8] sm:$0xff]
    %v1405 = vunpack.c.l.b16 %v893
    %v1406 = vunpack.c.h.b16 %v893
    %v1407 = vunpack.c.l.b16 %v894
    %v1408 = vunpack.c.h.b16 %v894
    %v1409 = vunpack.c.l.b16 %v895
    %v1410 = vunpack.c.h.b16 %v895
    %v1411 = vunpack.c.l.b16 %v896
    %v1412 = vunpack.c.h.b16 %v896
    %v1413 = vunpack.c.l.b16 %v897
    %v1414 = vunpack.c.h.b16 %v897
    %v1415 = vunpack.c.l.b16 %v898
    %v1416 = vunpack.c.h.b16 %v898
    %v1417 = vunpack.c.l.b16 %v899
    %v1418 = vunpack.c.h.b16 %v899
    %v1419 = vunpack.c.l.b16 %v900
    %v1420 = vunpack.c.h.b16 %v900
    %v1421 = vunpack.c.l.b16 %v901
    %v1422 = vunpack.c.h.b16 %v901
    %v1423 = vunpack.c.l.b16 %v902
    %v1424 = vunpack.c.h.b16 %v902
    %v1425 = vunpack.c.l.b16 %v903
    %v1426 = vunpack.c.h.b16 %v903
    %v1427 = vunpack.c.l.b16 %v904
    %v1428 = vunpack.c.h.b16 %v904
    %v1429 = vunpack.c.l.b16 %v905
    %v1430 = vunpack.c.h.b16 %v905
    %v1431 = vunpack.c.l.b16 %v906
    %v1432 = vunpack.c.h.b16 %v906
    %v1433 = vunpack.c.l.b16 %v907
    %v1434 = vunpack.c.h.b16 %v907
    %v1435 = vunpack.c.l.b16 %v908
    %v1436 = vunpack.c.h.b16 %v908
    %v1437 = vunpack.c.l.b16 %v909
    %v1438 = vunpack.c.h.b16 %v909
    %v1439 = vunpack.c.l.b16 %v910
    %v1440 = vunpack.c.h.b16 %v910
    %v1441 = vunpack.c.l.b16 %v911
    %v1442 = vunpack.c.h.b16 %v911
    %v1443 = vunpack.c.l.b16 %v912
    %v1444 = vunpack.c.h.b16 %v912
    %v1445 = vunpack.c.l.b16 %v913
    %v1446 = vunpack.c.h.b16 %v913
    %v1447 = vunpack.c.l.b16 %v914
    %v1448 = vunpack.c.h.b16 %v914
    %v1449 = vunpack.c.l.b16 %v915
    %v1450 = vunpack.c.h.b16 %v915
    %v1451 = vunpack.c.l.b16 %v916
    %v1452 = vunpack.c.h.b16 %v916
    %v1453 = vunpack.c.l.b16 %v917
    %v1454 = vunpack.c.h.b16 %v917
    %v1455 = vunpack.c.l.b16 %v918
    %v1456 = vunpack.c.h.b16 %v918
    %v1457 = vunpack.c.l.b16 %v919
    %v1458 = vunpack.c.h.b16 %v919
    %v1459 = vunpack.c.l.b16 %v920
    %v1460 = vunpack.c.h.b16 %v920
    %v1461 = vunpack.c.l.b16 %v921
    %v1462 = vunpack.c.h.b16 %v921
    %v1463 = vunpack.c.l.b16 %v922
    %v1464 = vunpack.c.h.b16 %v922
    %v1465 = vunpack.c.l.b16 %v923
    %v1466 = vunpack.c.h.b16 %v923
    %v1467 = vunpack.c.l.b16 %v924
    %v1468 = vunpack.c.h.b16 %v924
    %v1469 = vunpack.c.l.b16 %v925
    %v1470 = vunpack.c.h.b16 %v925
    %v1471 = vunpack.c.l.b16 %v926
    %v1472 = vunpack.c.h.b16 %v926
    %v1473 = vunpack.c.l.b16 %v927
    %v1474 = vunpack.c.h.b16 %v927
    %v1475 = vunpack.c.l.b16 %v928
    %v1476 = vunpack.c.h.b16 %v928
    %v1477 = vunpack.c.l.b16 %v929
    %v1478 = vunpack.c.h.b16 %v929
    %v1479 = vunpack.c.l.b16 %v930
    %v1480 = vunpack.c.h.b16 %v930
    %v1481 = vunpack.c.l.b16 %v931
    %v1482 = vunpack.c.h.b16 %v931
    %v1483 = vunpack.c.l.b16 %v932
    %v1484 = vunpack.c.h.b16 %v932
    %v1485 = vunpack.c.l.b16 %v933
    %v1486 = vunpack.c.h.b16 %v933
    %v1487 = vunpack.c.l.b16 %v934
    %v1488 = vunpack.c.h.b16 %v934
    %v1489 = vunpack.c.l.b16 %v935
    %v1490 = vunpack.c.h.b16 %v935
    %v1491 = vunpack.c.l.b16 %v936
    %v1492 = vunpack.c.h.b16 %v936
    %v1493 = vunpack.c.l.b16 %v937
    %v1494 = vunpack.c.h.b16 %v937
    %v1495 = vunpack.c.l.b16 %v938
    %v1496 = vunpack.c.h.b16 %v938
    %v1497 = vunpack.c.l.b16 %v939
    %v1498 = vunpack.c.h.b16 %v939
    %v1499 = vunpack.c.l.b16 %v940
    %v1500 = vunpack.c.h.b16 %v940
    %v1501 = vunpack.c.l.b16 %v941
    %v1502 = vunpack.c.h.b16 %v941
    %v1503 = vunpack.c.l.b16 %v942
    %v1504 = vunpack.c.h.b16 %v942
    %v1505 = vunpack.c.l.b16 %v943
    %v1506 = vunpack.c.h.b16 %v943
    %v1507 = vunpack.c.l.b16 %v944
    %v1508 = vunpack.c.h.b16 %v944
    %v1509 = vunpack.c.l.b16 %v945
    %v1510 = vunpack.c.h.b16 %v945
    %v1511 = vunpack.c.l.b16 %v946
    %v1512 = vunpack.c.h.b16 %v946
    %v1513 = vunpack.c.l.b16 %v947
    %v1514 = vunpack.c.h.b16 %v947
    %v1515 = vunpack.c.l.b16 %v948
    %v1516 = vunpack.c.h.b16 %v948
    %v1517 = vunpack.c.l.b16 %v949
    %v1518 = vunpack.c.h.b16 %v949
    %v1519 = vunpack.c.l.b16 %v950
    %v1520 = vunpack.c.h.b16 %v950
    %v1521 = vunpack.c.l.b16 %v951
    %v1522 = vunpack.c.h.b16 %v951
    %v1523 = vunpack.c.l.b16 %v952
    %v1524 = vunpack.c.h.b16 %v952
    %v1525 = vunpack.c.l.b16 %v953
    %v1526 = vunpack.c.h.b16 %v953
    %v1527 = vunpack.c.l.b16 %v954
    %v1528 = vunpack.c.h.b16 %v954
    %v1529 = vunpack.c.l.b16 %v955
    %v1530 = vunpack.c.h.b16 %v955
    %v1531 = vunpack.c.l.b16 %v956
    %v1532 = vunpack.c.h.b16 %v956
    %v1533 = vunpack.c.l.b16 %v957
    %v1534 = vunpack.c.h.b16 %v957
    %v1535 = vunpack.c.l.b16 %v958
    %v1536 = vunpack.c.h.b16 %v958
    %v1537 = vunpack.c.l.b16 %v959
    %v1538 = vunpack.c.h.b16 %v959
    %v1539 = vunpack.c.l.b16 %v960
    %v1540 = vunpack.c.h.b16 %v960
    %v1541 = vunpack.c.l.b16 %v961
    %v1542 = vunpack.c.h.b16 %v961
    %v1543 = vunpack.c.l.b16 %v962
    %v1544 = vunpack.c.h.b16 %v962
    %v1545 = vunpack.c.l.b16 %v963
    %v1546 = vunpack.c.h.b16 %v963
    %v1547 = vunpack.c.l.b16 %v964
    %v1548 = vunpack.c.h.b16 %v964
    %v1549 = vunpack.c.l.b16 %v965
    %v1550 = vunpack.c.h.b16 %v965
    %v1551 = vunpack.c.l.b16 %v966
    %v1552 = vunpack.c.h.b16 %v966
    %v1553 = vunpack.c.l.b16 %v967
    %v1554 = vunpack.c.h.b16 %v967
    %v1555 = vunpack.c.l.b16 %v968
    %v1556 = vunpack.c.h.b16 %v968
    %v1557 = vunpack.c.l.b16 %v969
    %v1558 = vunpack.c.h.b16 %v969
    %v1559 = vunpack.c.l.b16 %v970
    %v1560 = vunpack.c.h.b16 %v970
    %v1561 = vunpack.c.l.b16 %v971
    %v1562 = vunpack.c.h.b16 %v971
    %v1563 = vunpack.c.l.b16 %v972
    %v1564 = vunpack.c.h.b16 %v972
    %v1565 = vunpack.c.l.b16 %v973
    %v1566 = vunpack.c.h.b16 %v973
    %v1567 = vunpack.c.l.b16 %v974
    %v1568 = vunpack.c.h.b16 %v974
    %v1569 = vunpack.c.l.b16 %v975
    %v1570 = vunpack.c.h.b16 %v975
    %v1571 = vunpack.c.l.b16 %v976
    %v1572 = vunpack.c.h.b16 %v976
    %v1573 = vunpack.c.l.b16 %v977
    %v1574 = vunpack.c.h.b16 %v977
    %v1575 = vunpack.c.l.b16 %v978
    %v1576 = vunpack.c.h.b16 %v978
    %v1577 = vunpack.c.l.b16 %v979
    %v1578 = vunpack.c.h.b16 %v979
    %v1579 = vunpack.c.l.b16 %v980
    %v1580 = vunpack.c.h.b16 %v980
    %v1581 = vunpack.c.l.b16 %v981
    %v1582 = vunpack.c.h.b16 %v981
    %v1583 = vunpack.c.l.b16 %v982
    %v1584 = vunpack.c.h.b16 %v982
    %v1585 = vunpack.c.l.b16 %v983
    %v1586 = vunpack.c.h.b16 %v983
    %v1587 = vunpack.c.l.b16 %v984
    %v1588 = vunpack.c.h.b16 %v984
    %v1589 = vunpack.c.l.b16 %v985
    %v1590 = vunpack.c.h.b16 %v985
    %v1591 = vunpack.c.l.b16 %v986
    %v1592 = vunpack.c.h.b16 %v986
    %v1593 = vunpack.c.l.b16 %v987
    %v1594 = vunpack.c.h.b16 %v987
    %v1595 = vunpack.c.l.b16 %v988
    %v1596 = vunpack.c.h.b16 %v988
    %v1597 = vunpack.c.l.b16 %v989
    %v1598 = vunpack.c.h.b16 %v989
    %v1599 = vunpack.c.l.b16 %v990
    %v1600 = vunpack.c.h.b16 %v990
    %v1601 = vunpack.c.l.b16 %v991
    %v1602 = vunpack.c.h.b16 %v991
    %v1603 = vunpack.c.l.b16 %v992
    %v1604 = vunpack.c.h.b16 %v992
    %v1605 = vunpack.c.l.b16 %v993
    %v1606 = vunpack.c.h.b16 %v993
    %v1607 = vunpack.c.l.b16 %v994
    %v1608 = vunpack.c.h.b16 %v994
    %v1609 = vunpack.c.l.b16 %v995
    %v1610 = vunpack.c.h.b16 %v995
    %v1611 = vunpack.c.l.b16 %v996
    %v1612 = vunpack.c.h.b16 %v996
    %v1613 = vunpack.c.l.b16 %v997
    %v1614 = vunpack.c.h.b16 %v997
    %v1615 = vunpack.c.l.b16 %v998
    %v1616 = vunpack.c.h.b16 %v998
    %v1617 = vunpack.c.l.b16 %v999
    %v1618 = vunpack.c.h.b16 %v999
    %v1619 = vunpack.c.l.b16 %v1000
    %v1620 = vunpack.c.h.b16 %v1000
    %v1621 = vunpack.c.l.b16 %v1001
    %v1622 = vunpack.c.h.b16 %v1001
    %v1623 = vunpack.c.l.b16 %v1002
    %v1624 = vunpack.c.h.b16 %v1002
    %v1625 = vunpack.c.l.b16 %v1003
    %v1626 = vunpack.c.h.b16 %v1003
    %v1627 = vunpack.c.l.b16 %v1004
    %v1628 = vunpack.c.h.b16 %v1004
    %v1629 = vunpack.c.l.b16 %v1005
    %v1630 = vunpack.c.h.b16 %v1005
    %v1631 = vunpack.c.l.b16 %v1006
    %v1632 = vunpack.c.h.b16 %v1006
    %v1633 = vunpack.c.l.b16 %v1007
    %v1634 = vunpack.c.h.b16 %v1007
    %v1635 = vunpack.c.l.b16 %v1008
    %v1636 = vunpack.c.h.b16 %v1008
    %v1637 = vunpack.c.l.b16 %v1009
    %v1638 = vunpack.c.h.b16 %v1009
    %v1639 = vunpack.c.l.b16 %v1010
    %v1640 = vunpack.c.h.b16 %v1010
    %v1641 = vunpack.c.l.b16 %v1011
    %v1642 = vunpack.c.h.b16 %v1011
    %v1643 = vunpack.c.l.b16 %v1012
    %v1644 = vunpack.c.h.b16 %v1012
    %v1645 = vunpack.c.l.b16 %v1013
    %v1646 = vunpack.c.h.b16 %v1013
    %v1647 = vunpack.c.l.b16 %v1014
    %v1648 = vunpack.c.h.b16 %v1014
    %v1649 = vunpack.c.l.b16 %v1015
    %v1650 = vunpack.c.h.b16 %v1015
    %v1651 = vunpack.c.l.b16 %v1016
    %v1652 = vunpack.c.h.b16 %v1016
    %v1653 = vunpack.c.l.b16 %v1017
    %v1654 = vunpack.c.h.b16 %v1017
    %v1655 = vunpack.c.l.b16 %v1018
    %v1656 = vunpack.c.h.b16 %v1018
    %v1657 = vunpack.c.l.b16 %v1019
    %v1658 = vunpack.c.h.b16 %v1019
    %v1659 = vunpack.c.l.b16 %v1020
    %v1660 = vunpack.c.h.b16 %v1020
    %v1661 = vunpack.c.l.b16 %v1021
    %v1662 = vunpack.c.h.b16 %v1021
    %v1663 = vunpack.c.l.b16 %v1022
    %v1664 = vunpack.c.h.b16 %v1022
    %v1665 = vunpack.c.l.b16 %v1023
    %v1666 = vunpack.c.h.b16 %v1023
    %v1667 = vunpack.c.l.b16 %v1024
    %v1668 = vunpack.c.h.b16 %v1024
    %v1669 = vunpack.c.l.b16 %v1025
    %v1670 = vunpack.c.h.b16 %v1025
    %v1671 = vunpack.c.l.b16 %v1026
    %v1672 = vunpack.c.h.b16 %v1026
    %v1673 = vunpack.c.l.b16 %v1027
    %v1674 = vunpack.c.h.b16 %v1027
    %v1675 = vunpack.c.l.b16 %v1028
    %v1676 = vunpack.c.h.b16 %v1028
    %v1677 = vunpack.c.l.b16 %v1029
    %v1678 = vunpack.c.h.b16 %v1029
    %v1679 = vunpack.c.l.b16 %v1030
    %v1680 = vunpack.c.h.b16 %v1030
    %v1681 = vunpack.c.l.b16 %v1031
    %v1682 = vunpack.c.h.b16 %v1031
    %v1683 = vunpack.c.l.b16 %v1032
    %v1684 = vunpack.c.h.b16 %v1032
    %v1685 = vunpack.c.l.b16 %v1033
    %v1686 = vunpack.c.h.b16 %v1033
    %v1687 = vunpack.c.l.b16 %v1034
    %v1688 = vunpack.c.h.b16 %v1034
    %v1689 = vunpack.c.l.b16 %v1035
    %v1690 = vunpack.c.h.b16 %v1035
    %v1691 = vunpack.c.l.b16 %v1036
    %v1692 = vunpack.c.h.b16 %v1036
    %v1693 = vunpack.c.l.b16 %v1037
    %v1694 = vunpack.c.h.b16 %v1037
    %v1695 = vunpack.c.l.b16 %v1038
    %v1696 = vunpack.c.h.b16 %v1038
    %v1697 = vunpack.c.l.b16 %v1039
    %v1698 = vunpack.c.h.b16 %v1039
    %v1699 = vunpack.c.l.b16 %v1040
    %v1700 = vunpack.c.h.b16 %v1040
    %v1701 = vunpack.c.l.b16 %v1041
    %v1702 = vunpack.c.h.b16 %v1041
    %v1703 = vunpack.c.l.b16 %v1042
    %v1704 = vunpack.c.h.b16 %v1042
    %v1705 = vunpack.c.l.b16 %v1043
    %v1706 = vunpack.c.h.b16 %v1043
    %v1707 = vunpack.c.l.b16 %v1044
    %v1708 = vunpack.c.h.b16 %v1044
    %v1709 = vunpack.c.l.b16 %v1045
    %v1710 = vunpack.c.h.b16 %v1045
    %v1711 = vunpack.c.l.b16 %v1046
    %v1712 = vunpack.c.h.b16 %v1046
    %v1713 = vunpack.c.l.b16 %v1047
    %v1714 = vunpack.c.h.b16 %v1047
    %v1715 = vunpack.c.l.b16 %v1048
    %v1716 = vunpack.c.h.b16 %v1048
    %v1717 = vunpack.c.l.b16 %v1049
    %v1718 = vunpack.c.h.b16 %v1049
    %v1719 = vunpack.c.l.b16 %v1050
    %v1720 = vunpack.c.h.b16 %v1050
    %v1721 = vunpack.c.l.b16 %v1051
    %v1722 = vunpack.c.h.b16 %v1051
    %v1723 = vunpack.c.l.b16 %v1052
    %v1724 = vunpack.c.h.b16 %v1052
    %v1725 = vunpack.c.l.b16 %v1053
    %v1726 = vunpack.c.h.b16 %v1053
    %v1727 = vunpack.c.l.b16 %v1054
    %v1728 = vunpack.c.h.b16 %v1054
    %v1729 = vunpack.c.l.b16 %v1055
    %v1730 = vunpack.c.h.b16 %v1055
    %v1731 = vunpack.c.l.b16 %v1056
    %v1732 = vunpack.c.h.b16 %v1056
    %v1733 = vunpack.c.l.b16 %v1057
    %v1734 = vunpack.c.h.b16 %v1057
    %v1735 = vunpack.c.l.b16 %v1058
    %v1736 = vunpack.c.h.b16 %v1058
    %v1737 = vunpack.c.l.b16 %v1059
    %v1738 = vunpack.c.h.b16 %v1059
    %v1739 = vunpack.c.l.b16 %v1060
    %v1740 = vunpack.c.h.b16 %v1060
    %v1741 = vunpack.c.l.b16 %v1061
    %v1742 = vunpack.c.h.b16 %v1061
    %v1743 = vunpack.c.l.b16 %v1062
    %v1744 = vunpack.c.h.b16 %v1062
    %v1745 = vunpack.c.l.b16 %v1063
    %v1746 = vunpack.c.h.b16 %v1063
    %v1747 = vunpack.c.l.b16 %v1064
    %v1748 = vunpack.c.h.b16 %v1064
    %v1749 = vunpack.c.l.b16 %v1065
    %v1750 = vunpack.c.h.b16 %v1065
    %v1751 = vunpack.c.l.b16 %v1066
    %v1752 = vunpack.c.h.b16 %v1066
    %v1753 = vunpack.c.l.b16 %v1067
    %v1754 = vunpack.c.h.b16 %v1067
    %v1755 = vunpack.c.l.b16 %v1068
    %v1756 = vunpack.c.h.b16 %v1068
    %v1757 = vunpack.c.l.b16 %v1069
    %v1758 = vunpack.c.h.b16 %v1069
    %v1759 = vunpack.c.l.b16 %v1070
    %v1760 = vunpack.c.h.b16 %v1070
    %v1761 = vunpack.c.l.b16 %v1071
    %v1762 = vunpack.c.h.b16 %v1071
    %v1763 = vunpack.c.l.b16 %v1072
    %v1764 = vunpack.c.h.b16 %v1072
    %v1765 = vunpack.c.l.b16 %v1073
    %v1766 = vunpack.c.h.b16 %v1073
    %v1767 = vunpack.c.l.b16 %v1074
    %v1768 = vunpack.c.h.b16 %v1074
    %v1769 = vunpack.c.l.b16 %v1075
    %v1770 = vunpack.c.h.b16 %v1075
    %v1771 = vunpack.c.l.b16 %v1076
    %v1772 = vunpack.c.h.b16 %v1076
    %v1773 = vunpack.c.l.b16 %v1077
    %v1774 = vunpack.c.h.b16 %v1077
    %v1775 = vunpack.c.l.b16 %v1078
    %v1776 = vunpack.c.h.b16 %v1078
    %v1777 = vunpack.c.l.b16 %v1079
    %v1778 = vunpack.c.h.b16 %v1079
    %v1779 = vunpack.c.l.b16 %v1080
    %v1780 = vunpack.c.h.b16 %v1080
    %v1781 = vunpack.c.l.b16 %v1081
    %v1782 = vunpack.c.h.b16 %v1081
    %v1783 = vunpack.c.l.b16 %v1082
    %v1784 = vunpack.c.h.b16 %v1082
    %v1785 = vunpack.c.l.b16 %v1083
    %v1786 = vunpack.c.h.b16 %v1083
    %v1787 = vunpack.c.l.b16 %v1084
    %v1788 = vunpack.c.h.b16 %v1084
    %v1789 = vunpack.c.l.b16 %v1085
    %v1790 = vunpack.c.h.b16 %v1085
    %v1791 = vunpack.c.l.b16 %v1086
    %v1792 = vunpack.c.h.b16 %v1086
    %v1793 = vunpack.c.l.b16 %v1087
    %v1794 = vunpack.c.h.b16 %v1087
    %v1795 = vunpack.c.l.b16 %v1088
    %v1796 = vunpack.c.h.b16 %v1088
    %v1797 = vunpack.c.l.b16 %v1089
    %v1798 = vunpack.c.h.b16 %v1089
    %v1799 = vunpack.c.l.b16 %v1090
    %v1800 = vunpack.c.h.b16 %v1090
    %v1801 = vunpack.c.l.b16 %v1091
    %v1802 = vunpack.c.h.b16 %v1091
    %v1803 = vunpack.c.l.b16 %v1092
    %v1804 = vunpack.c.h.b16 %v1092
    %v1805 = vunpack.c.l.b16 %v1093
    %v1806 = vunpack.c.h.b16 %v1093
    %v1807 = vunpack.c.l.b16 %v1094
    %v1808 = vunpack.c.h.b16 %v1094
    %v1809 = vunpack.c.l.b16 %v1095
    %v1810 = vunpack.c.h.b16 %v1095
    %v1811 = vunpack.c.l.b16 %v1096
    %v1812 = vunpack.c.h.b16 %v1096
    %v1813 = vunpack.c.l.b16 %v1097
    %v1814 = vunpack.c.h.b16 %v1097
    %v1815 = vunpack.c.l.b16 %v1098
    %v1816 = vunpack.c.h.b16 %v1098
    %v1817 = vunpack.c.l.b16 %v1099
    %v1818 = vunpack.c.h.b16 %v1099
    %v1819 = vunpack.c.l.b16 %v1100
    %v1820 = vunpack.c.h.b16 %v1100
    %v1821 = vunpack.c.l.b16 %v1101
    %v1822 = vunpack.c.h.b16 %v1101
    %v1823 = vunpack.c.l.b16 %v1102
    %v1824 = vunpack.c.h.b16 %v1102
    %v1825 = vunpack.c.l.b16 %v1103
    %v1826 = vunpack.c.h.b16 %v1103
    %v1827 = vunpack.c.l.b16 %v1104
    %v1828 = vunpack.c.h.b16 %v1104
    %v1829 = vunpack.c.l.b16 %v1105
    %v1830 = vunpack.c.h.b16 %v1105
    %v1831 = vunpack.c.l.b16 %v1106
    %v1832 = vunpack.c.h.b16 %v1106
    %v1833 = vunpack.c.l.b16 %v1107
    %v1834 = vunpack.c.h.b16 %v1107
    %v1835 = vunpack.c.l.b16 %v1108
    %v1836 = vunpack.c.h.b16 %v1108
    %v1837 = vunpack.c.l.b16 %v1109
    %v1838 = vunpack.c.h.b16 %v1109
    %v1839 = vunpack.c.l.b16 %v1110
    %v1840 = vunpack.c.h.b16 %v1110
    %v1841 = vunpack.c.l.b16 %v1111
    %v1842 = vunpack.c.h.b16 %v1111
    %v1843 = vunpack.c.l.b16 %v1112
    %v1844 = vunpack.c.h.b16 %v1112
    %v1845 = vunpack.c.l.b16 %v1113
    %v1846 = vunpack.c.h.b16 %v1113
    %v1847 = vunpack.c.l.b16 %v1114
    %v1848 = vunpack.c.h.b16 %v1114
    %v1849 = vunpack.c.l.b16 %v1115
    %v1850 = vunpack.c.h.b16 %v1115
    %v1851 = vunpack.c.l.b16 %v1116
    %v1852 = vunpack.c.h.b16 %v1116
    %v1853 = vunpack.c.l.b16 %v1117
    %v1854 = vunpack.c.h.b16 %v1117
    %v1855 = vunpack.c.l.b16 %v1118
    %v1856 = vunpack.c.h.b16 %v1118
    %v1857 = vunpack.c.l.b16 %v1119
    %v1858 = vunpack.c.h.b16 %v1119
    %v1859 = vunpack.c.l.b16 %v1120
    %v1860 = vunpack.c.h.b16 %v1120
    %v1861 = vunpack.c.l.b16 %v1121
    %v1862 = vunpack.c.h.b16 %v1121
    %v1863 = vunpack.c.l.b16 %v1122
    %v1864 = vunpack.c.h.b16 %v1122
    %v1865 = vunpack.c.l.b16 %v1123
    %v1866 = vunpack.c.h.b16 %v1123
    %v1867 = vunpack.c.l.b16 %v1124
    %v1868 = vunpack.c.h.b16 %v1124
    %v1869 = vunpack.c.l.b16 %v1125
    %v1870 = vunpack.c.h.b16 %v1125
    %v1871 = vunpack.c.l.b16 %v1126
    %v1872 = vunpack.c.h.b16 %v1126
    %v1873 = vunpack.c.l.b16 %v1127
    %v1874 = vunpack.c.h.b16 %v1127
    %v1875 = vunpack.c.l.b16 %v1128
    %v1876 = vunpack.c.h.b16 %v1128
    %v1877 = vunpack.c.l.b16 %v1129
    %v1878 = vunpack.c.h.b16 %v1129
    %v1879 = vunpack.c.l.b16 %v1130
    %v1880 = vunpack.c.h.b16 %v1130
    %v1881 = vunpack.c.l.b16 %v1131
    %v1882 = vunpack.c.h.b16 %v1131
    %v1883 = vunpack.c.l.b16 %v1132
    %v1884 = vunpack.c.h.b16 %v1132
    %v1885 = vunpack.c.l.b16 %v1133
    %v1886 = vunpack.c.h.b16 %v1133
    %v1887 = vunpack.c.l.b16 %v1134
    %v1888 = vunpack.c.h.b16 %v1134
    %v1889 = vunpack.c.l.b16 %v1135
    %v1890 = vunpack.c.h.b16 %v1135
    %v1891 = vunpack.c.l.b16 %v1136
    %v1892 = vunpack.c.h.b16 %v1136
    %v1893 = vunpack.c.l.b16 %v1137
    %v1894 = vunpack.c.h.b16 %v1137
    %v1895 = vunpack.c.l.b16 %v1138
    %v1896 = vunpack.c.h.b16 %v1138
    %v1897 = vunpack.c.l.b16 %v1139
    %v1898 = vunpack.c.h.b16 %v1139
    %v1899 = vunpack.c.l.b16 %v1140
    %v1900 = vunpack.c.h.b16 %v1140
    %v1901 = vunpack.c.l.b16 %v1141
    %v1902 = vunpack.c.h.b16 %v1141
    %v1903 = vunpack.c.l.b16 %v1142
    %v1904 = vunpack.c.h.b16 %v1142
    %v1905 = vunpack.c.l.b16 %v1143
    %v1906 = vunpack.c.h.b16 %v1143
    %v1907 = vunpack.c.l.b16 %v1144
    %v1908 = vunpack.c.h.b16 %v1144
    %v1909 = vunpack.c.l.b16 %v1145
    %v1910 = vunpack.c.h.b16 %v1145
    %v1911 = vunpack.c.l.b16 %v1146
    %v1912 = vunpack.c.h.b16 %v1146
    %v1913 = vunpack.c.l.b16 %v1147
    %v1914 = vunpack.c.h.b16 %v1147
    %v1915 = vunpack.c.l.b16 %v1148
    %v1916 = vunpack.c.h.b16 %v1148
    %v1917 = vpack.c.b16 %v1413, %v1405
    %v1918 = vpack.c.b16 %v1414, %v1406
    %v1919 = vpack.c.b16 %v1415, %v1407
    %v1920 = vpack.c.b16 %v1416, %v1408
    %v1921 = vpack.c.b16 %v1417, %v1409
    %v1922 = vpack.c.b16 %v1418, %v1410
    %v1923 = vpack.c.b16 %v1419, %v1411
    %v1924 = vpack.c.b16 %v1420, %v1412
    %v1925 = vpack.c.b16 %v1429, %v1421
    %v1926 = vpack.c.b16 %v1430, %v1422
    %v1927 = vpack.c.b16 %v1431, %v1423
    %v1928 = vpack.c.b16 %v1432, %v1424
    %v1929 = vpack.c.b16 %v1433, %v1425
    %v1930 = vpack.c.b16 %v1434, %v1426
    %v1931 = vpack.c.b16 %v1435, %v1427
    %v1932 = vpack.c.b16 %v1436, %v1428
    %v1933 = vpack.c.b16 %v1445, %v1437
    %v1934 = vpack.c.b16 %v1446, %v1438
    %v1935 = vpack.c.b16 %v1447, %v1439
    %v1936 = vpack.c.b16 %v1448, %v1440
    %v1937 = vpack.c.b16 %v1449, %v1441
    %v1938 = vpack.c.b16 %v1450, %v1442
    %v1939 = vpack.c.b16 %v1451, %v1443
    %v1940 = vpack.c.b16 %v1452, %v1444
    %v1941 = vpack.c.b16 %v1461, %v1453
    %v1942 = vpack.c.b16 %v1462, %v1454
    %v1943 = vpack.c.b16 %v1463, %v1455
    %v1944 = vpack.c.b16 %v1464, %v1456
    %v1945 = vpack.c.b16 %v1465, %v1457
    %v1946 = vpack.c.b16 %v1466, %v1458
    %v1947 = vpack.c.b16 %v1467, %v1459
    %v1948 = vpack.c.b16 %v1468, %v1460
    %v1949 = vpack.c.b16 %v1477, %v1469
    %v1950 = vpack.c.b16 %v1478, %v1470
    %v1951 = vpack.c.b16 %v1479, %v1471
    %v1952 = vpack.c.b16 %v1480, %v1472
    %v1953 = vpack.c.b16 %v1481, %v1473
    %v1954 = vpack.c.b16 %v1482, %v1474
    %v1955 = vpack.c.b16 %v1483, %v1475
    %v1956 = vpack.c.b16 %v1484, %v1476
    %v1957 = vpack.c.b16 %v1493, %v1485
    %v1958 = vpack.c.b16 %v1494, %v1486
    %v1959 = vpack.c.b16 %v1495, %v1487
    %v1960 = vpack.c.b16 %v1496, %v1488
    %v1961 = vpack.c.b16 %v1497, %v1489
    %v1962 = vpack.c.b16 %v1498, %v1490
    %v1963 = vpack.c.b16 %v1499, %v1491
    %v1964 = vpack.c.b16 %v1500, %v1492
    %v1965 = vpack.c.b16 %v1509, %v1501
    %v1966 = vpack.c.b16 %v1510, %v1502
    %v1967 = vpack.c.b16 %v1511, %v1503
    %v1968 = vpack.c.b16 %v1512, %v1504
    %v1969 = vpack.c.b16 %v1513, %v1505
    %v1970 = vpack.c.b16 %v1514, %v1506
    %v1971 = vpack.c.b16 %v1515, %v1507
    %v1972 = vpack.c.b16 %v1516, %v1508
    %v1973 = vpack.c.b16 %v1525, %v1517
    %v1974 = vpack.c.b16 %v1526, %v1518
    %v1975 = vpack.c.b16 %v1527, %v1519
    %v1976 = vpack.c.b16 %v1528, %v1520
    %v1977 = vpack.c.b16 %v1529, %v1521
    %v1978 = vpack.c.b16 %v1530, %v1522
    %v1979 = vpack.c.b16 %v1531, %v1523
    %v1980 = vpack.c.b16 %v1532, %v1524
    %v1981 = vpack.c.b16 %v1541, %v1533
    %v1982 = vpack.c.b16 %v1542, %v1534
    %v1983 = vpack.c.b16 %v1543, %v1535
    %v1984 = vpack.c.b16 %v1544, %v1536
    %v1985 = vpack.c.b16 %v1545, %v1537
    %v1986 = vpack.c.b16 %v1546, %v1538
    %v1987 = vpack.c.b16 %v1547, %v1539
    %v1988 = vpack.c.b16 %v1548, %v1540
    %v1989 = vpack.c.b16 %v1557, %v1549
    %v1990 = vpack.c.b16 %v1558, %v1550
    %v1991 = vpack.c.b16 %v1559, %v1551
    %v1992 = vpack.c.b16 %v1560, %v1552
    %v1993 = vpack.c.b16 %v1561, %v1553
    %v1994 = vpack.c.b16 %v1562, %v1554
    %v1995 = vpack.c.b16 %v1563, %v1555
    %v1996 = vpack.c.b16 %v1564, %v1556
    %v1997 = vpack.c.b16 %v1573, %v1565
    %v1998 = vpack.c.b16 %v1574, %v1566
    %v1999 = vpack.c.b16 %v1575, %v1567
    %v2000 = vpack.c.b16 %v1576, %v1568
    %v2001 = vpack.c.b16 %v1577, %v1569
    %v2002 = vpack.c.b16 %v1578, %v1570
    %v2003 = vpack.c.b16 %v1579, %v1571
    %v2004 = vpack.c.b16 %v1580, %v1572
    %v2005 = vpack.c.b16 %v1589, %v1581
    %v2006 = vpack.c.b16 %v1590, %v1582
    %v2007 = vpack.c.b16 %v1591, %v1583
    %v2008 = vpack.c.b16 %v1592, %v1584
    %v2009 = vpack.c.b16 %v1593, %v1585
    %v2010 = vpack.c.b16 %v1594, %v1586
    %v2011 = vpack.c.b16 %v1595, %v1587
    %v2012 = vpack.c.b16 %v1596, %v1588
    %v2013 = vpack.c.b16 %v1605, %v1597
    %v2014 = vpack.c.b16 %v1606, %v1598
    %v2015 = vpack.c.b16 %v1607, %v1599
    %v2016 = vpack.c.b16 %v1608, %v1600
    %v2017 = vpack.c.b16 %v1609, %v1601
    %v2018 = vpack.c.b16 %v1610, %v1602
    %v2019 = vpack.c.b16 %v1611, %v1603
    %v2020 = vpack.c.b16 %v1612, %v1604
    %v2021 = vpack.c.b16 %v1621, %v1613
    %v2022 = vpack.c.b16 %v1622, %v1614
    %v2023 = vpack.c.b16 %v1623, %v1615
    %v2024 = vpack.c.b16 %v1624, %v1616
    %v2025 = vpack.c.b16 %v1625, %v1617
    %v2026 = vpack.c.b16 %v1626, %v1618
    %v2027 = vpack.c.b16 %v1627, %v1619
    %v2028 = vpack.c.b16 %v1628, %v1620
    %v2029 = vpack.c.b16 %v1637, %v1629
    %v2030 = vpack.c.b16 %v1638, %v1630
    %v2031 = vpack.c.b16 %v1639, %v1631
    %v2032 = vpack.c.b16 %v1640, %v1632
    %v2033 = vpack.c.b16 %v1641, %v1633
    %v2034 = vpack.c.b16 %v1642, %v1634
    %v2035 = vpack.c.b16 %v1643, %v1635
    %v2036 = vpack.c.b16 %v1644, %v1636
    %v2037 = vpack.c.b16 %v1653, %v1645
    %v2038 = vpack.c.b16 %v1654, %v1646
    %v2039 = vpack.c.b16 %v1655, %v1647
    %v2040 = vpack.c.b16 %v1656, %v1648
    %v2041 = vpack.c.b16 %v1657, %v1649
    %v2042 = vpack.c.b16 %v1658, %v1650
    %v2043 = vpack.c.b16 %v1659, %v1651
    %v2044 = vpack.c.b16 %v1660, %v1652
    %v2045 = vpack.c.b16 %v1669, %v1661
    %v2046 = vpack.c.b16 %v1670, %v1662
    %v2047 = vpack.c.b16 %v1671, %v1663
    %v2048 = vpack.c.b16 %v1672, %v1664
    %v2049 = vpack.c.b16 %v1673, %v1665
    %v2050 = vpack.c.b16 %v1674, %v1666
    %v2051 = vpack.c.b16 %v1675, %v1667
    %v2052 = vpack.c.b16 %v1676, %v1668
    %v2053 = vpack.c.b16 %v1685, %v1677
    %v2054 = vpack.c.b16 %v1686, %v1678
    %v2055 = vpack.c.b16 %v1687, %v1679
    %v2056 = vpack.c.b16 %v1688, %v1680
    %v2057 = vpack.c.b16 %v1689, %v1681
    %v2058 = vpack.c.b16 %v1690, %v1682
    %v2059 = vpack.c.b16 %v1691, %v1683
    %v2060 = vpack.c.b16 %v1692, %v1684
    %v2061 = vpack.c.b16 %v1701, %v1693
    %v2062 = vpack.c.b16 %v1702, %v1694
    %v2063 = vpack.c.b16 %v1703, %v1695
    %v2064 = vpack.c.b16 %v1704, %v1696
    %v2065 = vpack.c.b16 %v1705, %v1697
    %v2066 = vpack.c.b16 %v1706, %v1698
    %v2067 = vpack.c.b16 %v1707, %v1699
    %v2068 = vpack.c.b16 %v1708, %v1700
    %v2069 = vpack.c.b16 %v1717, %v1709
    %v2070 = vpack.c.b16 %v1718, %v1710
    %v2071 = vpack.c.b16 %v1719, %v1711
    %v2072 = vpack.c.b16 %v1720, %v1712
    %v2073 = vpack.c.b16 %v1721, %v1713
    %v2074 = vpack.c.b16 %v1722, %v1714
    %v2075 = vpack.c.b16 %v1723, %v1715
    %v2076 = vpack.c.b16 %v1724, %v1716
    %v2077 = vpack.c.b16 %v1733, %v1725
    %v2078 = vpack.c.b16 %v1734, %v1726
    %v2079 = vpack.c.b16 %v1735, %v1727
    %v2080 = vpack.c.b16 %v1736, %v1728
    %v2081 = vpack.c.b16 %v1737, %v1729
    %v2082 = vpack.c.b16 %v1738, %v1730
    %v2083 = vpack.c.b16 %v1739, %v1731
    %v2084 = vpack.c.b16 %v1740, %v1732
    %v2085 = vpack.c.b16 %v1749, %v1741
    %v2086 = vpack.c.b16 %v1750, %v1742
    %v2087 = vpack.c.b16 %v1751, %v1743
    %v2088 = vpack.c.b16 %v1752, %v1744
    %v2089 = vpack.c.b16 %v1753, %v1745
    %v2090 = vpack.c.b16 %v1754, %v1746
    %v2091 = vpack.c.b16 %v1755, %v1747
    %v2092 = vpack.c.b16 %v1756, %v1748
    %v2093 = vpack.c.b16 %v1765, %v1757
    %v2094 = vpack.c.b16 %v1766, %v1758
    %v2095 = vpack.c.b16 %v1767, %v1759
    %v2096 = vpack.c.b16 %v1768, %v1760
    %v2097 = vpack.c.b16 %v1769, %v1761
    %v2098 = vpack.c.b16 %v1770, %v1762
    %v2099 = vpack.c.b16 %v1771, %v1763
    %v2100 = vpack.c.b16 %v1772, %v1764
    %v2101 = vpack.c.b16 %v1781, %v1773
    %v2102 = vpack.c.b16 %v1782, %v1774
    %v2103 = vpack.c.b16 %v1783, %v1775
    %v2104 = vpack.c.b16 %v1784, %v1776
    %v2105 = vpack.c.b16 %v1785, %v1777
    %v2106 = vpack.c.b16 %v1786, %v1778
    %v2107 = vpack.c.b16 %v1787, %v1779
    %v2108 = vpack.c.b16 %v1788, %v1780
    %v2109 = vpack.c.b16 %v1797, %v1789
    %v2110 = vpack.c.b16 %v1798, %v1790
    %v2111 = vpack.c.b16 %v1799, %v1791
    %v2112 = vpack.c.b16 %v1800, %v1792
    %v2113 = vpack.c.b16 %v1801, %v1793
    %v2114 = vpack.c.b16 %v1802, %v1794
    %v2115 = vpack.c.b16 %v1803, %v1795
    %v2116 = vpack.c.b16 %v1804, %v1796
    %v2117 = vpack.c.b16 %v1813, %v1805
    %v2118 = vpack.c.b16 %v1814, %v1806
    %v2119 = vpack.c.b16 %v1815, %v1807
    %v2120 = vpack.c.b16 %v1816, %v1808
    %v2121 = vpack.c.b16 %v1817, %v1809
    %v2122 = vpack.c.b16 %v1818, %v1810
    %v2123 = vpack.c.b16 %v1819, %v1811
    %v2124 = vpack.c.b16 %v1820, %v1812
    %v2125 = vpack.c.b16 %v1829, %v1821
    %v2126 = vpack.c.b16 %v1830, %v1822
    %v2127 = vpack.c.b16 %v1831, %v1823
    %v2128 = vpack.c.b16 %v1832, %v1824
    %v2129 = vpack.c.b16 %v1833, %v1825
    %v2130 = vpack.c.b16 %v1834, %v1826
    %v2131 = vpack.c.b16 %v1835, %v1827
    %v2132 = vpack.c.b16 %v1836, %v1828
    %v2133 = vpack.c.b16 %v1845, %v1837
    %v2134 = vpack.c.b16 %v1846, %v1838
    %v2135 = vpack.c.b16 %v1847, %v1839
    %v2136 = vpack.c.b16 %v1848, %v1840
    %v2137 = vpack.c.b16 %v1849, %v1841
    %v2138 = vpack.c.b16 %v1850, %v1842
    %v2139 = vpack.c.b16 %v1851, %v1843
    %v2140 = vpack.c.b16 %v1852, %v1844
    %v2141 = vpack.c.b16 %v1861, %v1853
    %v2142 = vpack.c.b16 %v1862, %v1854
    %v2143 = vpack.c.b16 %v1863, %v1855
    %v2144 = vpack.c.b16 %v1864, %v1856
    %v2145 = vpack.c.b16 %v1865, %v1857
    %v2146 = vpack.c.b16 %v1866, %v1858
    %v2147 = vpack.c.b16 %v1867, %v1859
    %v2148 = vpack.c.b16 %v1868, %v1860
    %v2149 = vpack.c.b16 %v1877, %v1869
    %v2150 = vpack.c.b16 %v1878, %v1870
    %v2151 = vpack.c.b16 %v1879, %v1871
    %v2152 = vpack.c.b16 %v1880, %v1872
    %v2153 = vpack.c.b16 %v1881, %v1873
    %v2154 = vpack.c.b16 %v1882, %v1874
    %v2155 = vpack.c.b16 %v1883, %v1875
    %v2156 = vpack.c.b16 %v1884, %v1876
    %v2157 = vpack.c.b16 %v1893, %v1885
    %v2158 = vpack.c.b16 %v1894, %v1886
    %v2159 = vpack.c.b16 %v1895, %v1887
    %v2160 = vpack.c.b16 %v1896, %v1888
    %v2161 = vpack.c.b16 %v1897, %v1889
    %v2162 = vpack.c.b16 %v1898, %v1890
    %v2163 = vpack.c.b16 %v1899, %v1891
    %v2164 = vpack.c.b16 %v1900, %v1892
    %v2165 = vpack.c.b16 %v1909, %v1901
    %v2166 = vpack.c.b16 %v1910, %v1902
    %v2167 = vpack.c.b16 %v1911, %v1903
    %v2168 = vpack.c.b16 %v1912, %v1904
    %v2169 = vpack.c.b16 %v1913, %v1905
    %v2170 = vpack.c.b16 %v1914, %v1906
    %v2171 = vpack.c.b16 %v1915, %v1907
    %v2172 = vpack.c.b16 %v1916, %v1908
    %2429 = vmatprep.subr.bf16.mxu0 %v1918
    %2430 = vmatpush1.bf16.msra.mxu0 %v1917
    %2431 = vmatprep.subr.bf16.mxu0 %v1926
    %2432 = vmatpush1.bf16.msra.mxu0 %v1925
    %2433 = vmatprep.subr.bf16.mxu0 %v1934
    %2434 = vmatpush1.bf16.msra.mxu0 %v1933
    %2435 = vmatprep.subr.bf16.mxu0 %v1942
    %2436 = vmatpush1.bf16.msra.mxu0 %v1941
    %2437 = vmatprep.subr.bf16.mxu0 %v1950
    %2438 = vmatpush1.bf16.msra.mxu0 %v1949
    %2439 = vmatprep.subr.bf16.mxu0 %v1958
    %2440 = vmatpush1.bf16.msra.mxu0 %v1957
    %2441 = vmatprep.subr.bf16.mxu0 %v1966
    %2442 = vmatpush1.bf16.msra.mxu0 %v1965
    %2443 = vmatprep.subr.bf16.mxu0 %v1974
    %2444 = vmatpush1.bf16.msra.mxu0 %v1973
    %2445 = vmatprep.subr.bf16.mxu0 %v1982
    %2446 = vmatpush1.bf16.msra.mxu0 %v1981
    %2447 = vmatprep.subr.bf16.mxu0 %v1990
    %2448 = vmatpush1.bf16.msra.mxu0 %v1989
    %2449 = vmatprep.subr.bf16.mxu0 %v1998
    %2450 = vmatpush1.bf16.msra.mxu0 %v1997
    %2451 = vmatprep.subr.bf16.mxu0 %v2006
    %2452 = vmatpush1.bf16.msra.mxu0 %v2005
    %2453 = vmatprep.subr.bf16.mxu0 %v2014
    %2454 = vmatpush1.bf16.msra.mxu0 %v2013
    %2455 = vmatprep.subr.bf16.mxu0 %v2022
    %2456 = vmatpush1.bf16.msra.mxu0 %v2021
    %2457 = vmatprep.subr.bf16.mxu0 %v2030
    %2458 = vmatpush1.bf16.msra.mxu0 %v2029
    %2459 = vmatprep.subr.bf16.mxu0 %v2038
    %2460 = vmatpush1.bf16.msra.mxu0 %v2037
    %2461 = vmatprep.mubr.bf16.mxu0 %v878
    %2462 = vmatmul.mubr.bf16.gmra.mrb[0].mxu0 %v877
    %v2463 = vpop.f32.mrb[0].mxu0
    %v2464 = vadd.f32 0.0, %v2463
    %v2465 = vpop.f32.mrb[0].mxu0
    %v2466 = vadd.f32 0.0, %v2465
    %v2467 = vpop.f32.mrb[0].mxu0
    %v2468 = vadd.f32 0.0, %v2467
    %v2469 = vpop.f32.mrb[0].mxu0
    %v2470 = vadd.f32 0.0, %v2469
    %2471 = vmatprep.mubr.bf16.mxu0 %v882
    %2472 = vmatmul.mubr.bf16.gmra.mrb[0].mxu0 %v881
    %v2473 = vpop.f32.mrb[0].mxu0
    %v2474 = vadd.f32 0.0, %v2473
    %v2475 = vpop.f32.mrb[0].mxu0
    %v2476 = vadd.f32 0.0, %v2475
    %v2477 = vpop.f32.mrb[0].mxu0
    %v2478 = vadd.f32 0.0, %v2477
    %v2479 = vpop.f32.mrb[0].mxu0
    %v2480 = vadd.f32 0.0, %v2479
    %2481 = vmatprep.mubr.bf16.mxu0 %v886
    %2482 = vmatmul.mubr.bf16.gmra.mrb[0].mxu0 %v885
    %v2483 = vpop.f32.mrb[0].mxu0
    %v2484 = vadd.f32 0.0, %v2483
    %v2485 = vpop.f32.mrb[0].mxu0
    %v2486 = vadd.f32 0.0, %v2485
    %v2487 = vpop.f32.mrb[0].mxu0
    %v2488 = vadd.f32 0.0, %v2487
    %v2489 = vpop.f32.mrb[0].mxu0
    %v2490 = vadd.f32 0.0, %v2489
    %2491 = vmatprep.mubr.bf16.mxu0 %v890
    %2492 = vmatmul.mubr.bf16.gmra.mrb[0].mxu0 %v889
    %v2493 = vpop.f32.mrb[0].mxu0
    %v2494 = vadd.f32 0.0, %v2493
    %v2495 = vpop.f32.mrb[0].mxu0
    %v2496 = vadd.f32 0.0, %v2495
    %v2497 = vpop.f32.mrb[0].mxu0
    %v2498 = vadd.f32 0.0, %v2497
    %v2499 = vpop.f32.mrb[0].mxu0
    %v2500 = vadd.f32 0.0, %v2499
    %2501 = vdwg.mxu0
    %2502 = vmatprep.subr.bf16.mxu0 %v2046
    %2503 = vmatpush1.bf16.msra.mxu0 %v2045
    %2504 = vmatprep.subr.bf16.mxu0 %v2054
    %2505 = vmatpush1.bf16.msra.mxu0 %v2053
    %2506 = vmatprep.subr.bf16.mxu0 %v2062
    %2507 = vmatpush1.bf16.msra.mxu0 %v2061
    %2508 = vmatprep.subr.bf16.mxu0 %v2070
    %2509 = vmatpush1.bf16.msra.mxu0 %v2069
    %2510 = vmatprep.subr.bf16.mxu0 %v2078
    %2511 = vmatpush1.bf16.msra.mxu0 %v2077
    %2512 = vmatprep.subr.bf16.mxu0 %v2086
    %2513 = vmatpush1.bf16.msra.mxu0 %v2085
    %2514 = vmatprep.subr.bf16.mxu0 %v2094
    %2515 = vmatpush1.bf16.msra.mxu0 %v2093
    %2516 = vmatprep.subr.bf16.mxu0 %v2102
    %2517 = vmatpush1.bf16.msra.mxu0 %v2101
    %2518 = vmatprep.subr.bf16.mxu0 %v2110
    %2519 = vmatpush1.bf16.msra.mxu0 %v2109
    %2520 = vmatprep.subr.bf16.mxu0 %v2118
    %2521 = vmatpush1.bf16.msra.mxu0 %v2117
    %2522 = vmatprep.subr.bf16.mxu0 %v2126
    %2523 = vmatpush1.bf16.msra.mxu0 %v2125
    %2524 = vmatprep.subr.bf16.mxu0 %v2134
    %2525 = vmatpush1.bf16.msra.mxu0 %v2133
    %2526 = vmatprep.subr.bf16.mxu0 %v2142
    %2527 = vmatpush1.bf16.msra.mxu0 %v2141
    %2528 = vmatprep.subr.bf16.mxu0 %v2150
    %2529 = vmatpush1.bf16.msra.mxu0 %v2149
    %2530 = vmatprep.subr.bf16.mxu0 %v2158
    %2531 = vmatpush1.bf16.msra.mxu0 %v2157
    %2532 = vmatprep.subr.bf16.mxu0 %v2166
    %2533 = vmatpush1.bf16.msra.mxu0 %v2165
    %2534 = vmatprep.mubr.bf16.mxu0 %v880
    %2535 = vmatmul.mubr.bf16.gmra.mrb[0].mxu0 %v879
    %v2536 = vpop.f32.mrb[0].mxu0
    %v2537 = vadd.f32 %v2464, %v2536
    %v2538 = vpop.f32.mrb[0].mxu0
    %v2539 = vadd.f32 %v2466, %v2538
    %v2540 = vpop.f32.mrb[0].mxu0
    %v2541 = vadd.f32 %v2468, %v2540
    %v2542 = vpop.f32.mrb[0].mxu0
    %v2543 = vadd.f32 %v2470, %v2542
    %2544 = vmatprep.mubr.bf16.mxu0 %v884
    %2545 = vmatmul.mubr.bf16.gmra.mrb[0].mxu0 %v883
    %v2546 = vpop.f32.mrb[0].mxu0
    %v2547 = vadd.f32 %v2474, %v2546
    %v2548 = vpop.f32.mrb[0].mxu0
    %v2549 = vadd.f32 %v2476, %v2548
    %v2550 = vpop.f32.mrb[0].mxu0
    %v2551 = vadd.f32 %v2478, %v2550
    %v2552 = vpop.f32.mrb[0].mxu0
    %v2553 = vadd.f32 %v2480, %v2552
    %2554 = vmatprep.mubr.bf16.mxu0 %v888
    %2555 = vmatmul.mubr.bf16.gmra.mrb[0].mxu0 %v887
    %v2556 = vpop.f32.mrb[0].mxu0
    %v2557 = vadd.f32 %v2484, %v2556
    %v2558 = vpop.f32.mrb[0].mxu0
    %v2559 = vadd.f32 %v2486, %v2558
    %v2560 = vpop.f32.mrb[0].mxu0
    %v2561 = vadd.f32 %v2488, %v2560
    %v2562 = vpop.f32.mrb[0].mxu0
    %v2563 = vadd.f32 %v2490, %v2562
    %2564 = vmatprep.mubr.bf16.mxu0 %v892
    %2565 = vmatmul.mubr.bf16.gmra.mrb[0].mxu0 %v891
    %v2566 = vpop.f32.mrb[0].mxu0
    %v2567 = vadd.f32 %v2494, %v2566
    %v2568 = vpop.f32.mrb[0].mxu0
    %v2569 = vadd.f32 %v2496, %v2568
    %v2570 = vpop.f32.mrb[0].mxu0
    %v2571 = vadd.f32 %v2498, %v2570
    %v2572 = vpop.f32.mrb[0].mxu0
    %v2573 = vadd.f32 %v2500, %v2572
    %2574 = vdwg.mxu0
    %2575 = vmatprep.subr.bf16.mxu0 %v1920
    %2576 = vmatpush1.bf16.msra.mxu0 %v1919
    %2577 = vmatprep.subr.bf16.mxu0 %v1928
    %2578 = vmatpush1.bf16.msra.mxu0 %v1927
    %2579 = vmatprep.subr.bf16.mxu0 %v1936
    %2580 = vmatpush1.bf16.msra.mxu0 %v1935
    %2581 = vmatprep.subr.bf16.mxu0 %v1944
    %2582 = vmatpush1.bf16.msra.mxu0 %v1943
    %2583 = vmatprep.subr.bf16.mxu0 %v1952
    %2584 = vmatpush1.bf16.msra.mxu0 %v1951
    %2585 = vmatprep.subr.bf16.mxu0 %v1960
    %2586 = vmatpush1.bf16.msra.mxu0 %v1959
    %2587 = vmatprep.subr.bf16.mxu0 %v1968
    %2588 = vmatpush1.bf16.msra.mxu0 %v1967
    %2589 = vmatprep.subr.bf16.mxu0 %v1976
    %2590 = vmatpush1.bf16.msra.mxu0 %v1975
    %2591 = vmatprep.subr.bf16.mxu0 %v1984
    %2592 = vmatpush1.bf16.msra.mxu0 %v1983
    %2593 = vmatprep.subr.bf16.mxu0 %v1992
    %2594 = vmatpush1.bf16.msra.mxu0 %v1991
    %2595 = vmatprep.subr.bf16.mxu0 %v2000
    %2596 = vmatpush1.bf16.msra.mxu0 %v1999
    %2597 = vmatprep.subr.bf16.mxu0 %v2008
    %2598 = vmatpush1.bf16.msra.mxu0 %v2007
    %2599 = vmatprep.subr.bf16.mxu0 %v2016
    %2600 = vmatpush1.bf16.msra.mxu0 %v2015
    %2601 = vmatprep.subr.bf16.mxu0 %v2024
    %2602 = vmatpush1.bf16.msra.mxu0 %v2023
    %2603 = vmatprep.subr.bf16.mxu0 %v2032
    %2604 = vmatpush1.bf16.msra.mxu0 %v2031
    %2605 = vmatprep.subr.bf16.mxu0 %v2040
    %2606 = vmatpush1.bf16.msra.mxu0 %v2039
    %2607 = vmatprep.mubr.bf16.mxu0 %v878
    %2608 = vmatmul.mubr.bf16.gmra.mrb[0].mxu0 %v877
    %v2609 = vpop.f32.mrb[0].mxu0
    %v2610 = vadd.f32 0.0, %v2609
    %v2611 = vpop.f32.mrb[0].mxu0
    %v2612 = vadd.f32 0.0, %v2611
    %v2613 = vpop.f32.mrb[0].mxu0
    %v2614 = vadd.f32 0.0, %v2613
    %v2615 = vpop.f32.mrb[0].mxu0
    %v2616 = vadd.f32 0.0, %v2615
    %2617 = vmatprep.mubr.bf16.mxu0 %v882
    %2618 = vmatmul.mubr.bf16.gmra.mrb[0].mxu0 %v881
    %v2619 = vpop.f32.mrb[0].mxu0
    %v2620 = vadd.f32 0.0, %v2619
    %v2621 = vpop.f32.mrb[0].mxu0
    %v2622 = vadd.f32 0.0, %v2621
    %v2623 = vpop.f32.mrb[0].mxu0
    %v2624 = vadd.f32 0.0, %v2623
    %v2625 = vpop.f32.mrb[0].mxu0
    %v2626 = vadd.f32 0.0, %v2625
    %2627 = vmatprep.mubr.bf16.mxu0 %v886
    %2628 = vmatmul.mubr.bf16.gmra.mrb[0].mxu0 %v885
    %v2629 = vpop.f32.mrb[0].mxu0
    %v2630 = vadd.f32 0.0, %v2629
    %v2631 = vpop.f32.mrb[0].mxu0
    %v2632 = vadd.f32 0.0, %v2631
    %v2633 = vpop.f32.mrb[0].mxu0
    %v2634 = vadd.f32 0.0, %v2633
    %v2635 = vpop.f32.mrb[0].mxu0
    %v2636 = vadd.f32 0.0, %v2635
    %2637 = vmatprep.mubr.bf16.mxu0 %v890
    %2638 = vmatmul.mubr.bf16.gmra.mrb[0].mxu0 %v889
    %v2639 = vpop.f32.mrb[0].mxu0
    %v2640 = vadd.f32 0.0, %v2639
    %v2641 = vpop.f32.mrb[0].mxu0
    %v2642 = vadd.f32 0.0, %v2641
    %v2643 = vpop.f32.mrb[0].mxu0
    %v2644 = vadd.f32 0.0, %v2643
    %v2645 = vpop.f32.mrb[0].mxu0
    %v2646 = vadd.f32 0.0, %v2645
    %2647 = vdwg.mxu0
    %2648 = vmatprep.subr.bf16.mxu0 %v2048
    %2649 = vmatpush1.bf16.msra.mxu0 %v2047
    %2650 = vmatprep.subr.bf16.mxu0 %v2056
    %2651 = vmatpush1.bf16.msra.mxu0 %v2055
    %2652 = vmatprep.subr.bf16.mxu0 %v2064
    %2653 = vmatpush1.bf16.msra.mxu0 %v2063
    %2654 = vmatprep.subr.bf16.mxu0 %v2072
    %2655 = vmatpush1.bf16.msra.mxu0 %v2071
    %2656 = vmatprep.subr.bf16.mxu0 %v2080
    %2657 = vmatpush1.bf16.msra.mxu0 %v2079
    %2658 = vmatprep.subr.bf16.mxu0 %v2088
    %2659 = vmatpush1.bf16.msra.mxu0 %v2087
    %2660 = vmatprep.subr.bf16.mxu0 %v2096
    %2661 = vmatpush1.bf16.msra.mxu0 %v2095
    %2662 = vmatprep.subr.bf16.mxu0 %v2104
    %2663 = vmatpush1.bf16.msra.mxu0 %v2103
    %2664 = vmatprep.subr.bf16.mxu0 %v2112
    %2665 = vmatpush1.bf16.msra.mxu0 %v2111
    %2666 = vmatprep.subr.bf16.mxu0 %v2120
    %2667 = vmatpush1.bf16.msra.mxu0 %v2119
    %2668 = vmatprep.subr.bf16.mxu0 %v2128
    %2669 = vmatpush1.bf16.msra.mxu0 %v2127
    %2670 = vmatprep.subr.bf16.mxu0 %v2136
    %2671 = vmatpush1.bf16.msra.mxu0 %v2135
    %2672 = vmatprep.subr.bf16.mxu0 %v2144
    %2673 = vmatpush1.bf16.msra.mxu0 %v2143
    %2674 = vmatprep.subr.bf16.mxu0 %v2152
    %2675 = vmatpush1.bf16.msra.mxu0 %v2151
    %2676 = vmatprep.subr.bf16.mxu0 %v2160
    %2677 = vmatpush1.bf16.msra.mxu0 %v2159
    %2678 = vmatprep.subr.bf16.mxu0 %v2168
    %2679 = vmatpush1.bf16.msra.mxu0 %v2167
    %2680 = vmatprep.mubr.bf16.mxu0 %v880
    %2681 = vmatmul.mubr.bf16.gmra.mrb[0].mxu0 %v879
    %v2682 = vpop.f32.mrb[0].mxu0
    %v2683 = vadd.f32 %v2610, %v2682
    %v2684 = vpop.f32.mrb[0].mxu0
    %v2685 = vadd.f32 %v2612, %v2684
    %v2686 = vpop.f32.mrb[0].mxu0
    %v2687 = vadd.f32 %v2614, %v2686
    %v2688 = vpop.f32.mrb[0].mxu0
    %v2689 = vadd.f32 %v2616, %v2688
    %2690 = vmatprep.mubr.bf16.mxu0 %v884
    %2691 = vmatmul.mubr.bf16.gmra.mrb[0].mxu0 %v883
    %v2692 = vpop.f32.mrb[0].mxu0
    %v2693 = vadd.f32 %v2620, %v2692
    %v2694 = vpop.f32.mrb[0].mxu0
    %v2695 = vadd.f32 %v2622, %v2694
    %v2696 = vpop.f32.mrb[0].mxu0
    %v2697 = vadd.f32 %v2624, %v2696
    %v2698 = vpop.f32.mrb[0].mxu0
    %v2699 = vadd.f32 %v2626, %v2698
    %2700 = vmatprep.mubr.bf16.mxu0 %v888
    %2701 = vmatmul.mubr.bf16.gmra.mrb[0].mxu0 %v887
    %v2702 = vpop.f32.mrb[0].mxu0
    %v2703 = vadd.f32 %v2630, %v2702
    %v2704 = vpop.f32.mrb[0].mxu0
    %v2705 = vadd.f32 %v2632, %v2704
    %v2706 = vpop.f32.mrb[0].mxu0
    %v2707 = vadd.f32 %v2634, %v2706
    %v2708 = vpop.f32.mrb[0].mxu0
    %v2709 = vadd.f32 %v2636, %v2708
    %2710 = vmatprep.mubr.bf16.mxu0 %v892
    %2711 = vmatmul.mubr.bf16.gmra.mrb[0].mxu0 %v891
    %v2712 = vpop.f32.mrb[0].mxu0
    %v2713 = vadd.f32 %v2640, %v2712
    %v2714 = vpop.f32.mrb[0].mxu0
    %v2715 = vadd.f32 %v2642, %v2714
    %v2716 = vpop.f32.mrb[0].mxu0
    %v2717 = vadd.f32 %v2644, %v2716
    %v2718 = vpop.f32.mrb[0].mxu0
    %v2719 = vadd.f32 %v2646, %v2718
    %2720 = vdwg.mxu0
    %2721 = vmatprep.subr.bf16.mxu0 %v1922
    %2722 = vmatpush1.bf16.msra.mxu0 %v1921
    %2723 = vmatprep.subr.bf16.mxu0 %v1930
    %2724 = vmatpush1.bf16.msra.mxu0 %v1929
    %2725 = vmatprep.subr.bf16.mxu0 %v1938
    %2726 = vmatpush1.bf16.msra.mxu0 %v1937
    %2727 = vmatprep.subr.bf16.mxu0 %v1946
    %2728 = vmatpush1.bf16.msra.mxu0 %v1945
    %2729 = vmatprep.subr.bf16.mxu0 %v1954
    %2730 = vmatpush1.bf16.msra.mxu0 %v1953
    %2731 = vmatprep.subr.bf16.mxu0 %v1962
    %2732 = vmatpush1.bf16.msra.mxu0 %v1961
    %2733 = vmatprep.subr.bf16.mxu0 %v1970
    %2734 = vmatpush1.bf16.msra.mxu0 %v1969
    %2735 = vmatprep.subr.bf16.mxu0 %v1978
    %2736 = vmatpush1.bf16.msra.mxu0 %v1977
    %2737 = vmatprep.subr.bf16.mxu0 %v1986
    %2738 = vmatpush1.bf16.msra.mxu0 %v1985
    %2739 = vmatprep.subr.bf16.mxu0 %v1994
    %2740 = vmatpush1.bf16.msra.mxu0 %v1993
    %2741 = vmatprep.subr.bf16.mxu0 %v2002
    %2742 = vmatpush1.bf16.msra.mxu0 %v2001
    %2743 = vmatprep.subr.bf16.mxu0 %v2010
    %2744 = vmatpush1.bf16.msra.mxu0 %v2009
    %2745 = vmatprep.subr.bf16.mxu0 %v2018
    %2746 = vmatpush1.bf16.msra.mxu0 %v2017
    %2747 = vmatprep.subr.bf16.mxu0 %v2026
    %2748 = vmatpush1.bf16.msra.mxu0 %v2025
    %2749 = vmatprep.subr.bf16.mxu0 %v2034
    %2750 = vmatpush1.bf16.msra.mxu0 %v2033
    %2751 = vmatprep.subr.bf16.mxu0 %v2042
    %2752 = vmatpush1.bf16.msra.mxu0 %v2041
    %2753 = vmatprep.mubr.bf16.mxu0 %v878
    %2754 = vmatmul.mubr.bf16.gmra.mrb[0].mxu0 %v877
    %v2755 = vpop.f32.mrb[0].mxu0
    %v2756 = vadd.f32 0.0, %v2755
    %v2757 = vpop.f32.mrb[0].mxu0
    %v2758 = vadd.f32 0.0, %v2757
    %v2759 = vpop.f32.mrb[0].mxu0
    %v2760 = vadd.f32 0.0, %v2759
    %v2761 = vpop.f32.mrb[0].mxu0
    %v2762 = vadd.f32 0.0, %v2761
    %2763 = vmatprep.mubr.bf16.mxu0 %v882
    %2764 = vmatmul.mubr.bf16.gmra.mrb[0].mxu0 %v881
    %v2765 = vpop.f32.mrb[0].mxu0
    %v2766 = vadd.f32 0.0, %v2765
    %v2767 = vpop.f32.mrb[0].mxu0
    %v2768 = vadd.f32 0.0, %v2767
    %v2769 = vpop.f32.mrb[0].mxu0
    %v2770 = vadd.f32 0.0, %v2769
    %v2771 = vpop.f32.mrb[0].mxu0
    %v2772 = vadd.f32 0.0, %v2771
    %2773 = vmatprep.mubr.bf16.mxu0 %v886
    %2774 = vmatmul.mubr.bf16.gmra.mrb[0].mxu0 %v885
    %v2775 = vpop.f32.mrb[0].mxu0
    %v2776 = vadd.f32 0.0, %v2775
    %v2777 = vpop.f32.mrb[0].mxu0
    %v2778 = vadd.f32 0.0, %v2777
    %v2779 = vpop.f32.mrb[0].mxu0
    %v2780 = vadd.f32 0.0, %v2779
    %v2781 = vpop.f32.mrb[0].mxu0
    %v2782 = vadd.f32 0.0, %v2781
    %2783 = vmatprep.mubr.bf16.mxu0 %v890
    %2784 = vmatmul.mubr.bf16.gmra.mrb[0].mxu0 %v889
    %v2785 = vpop.f32.mrb[0].mxu0
    %v2786 = vadd.f32 0.0, %v2785
    %v2787 = vpop.f32.mrb[0].mxu0
    %v2788 = vadd.f32 0.0, %v2787
    %v2789 = vpop.f32.mrb[0].mxu0
    %v2790 = vadd.f32 0.0, %v2789
    %v2791 = vpop.f32.mrb[0].mxu0
    %v2792 = vadd.f32 0.0, %v2791
    %2793 = vdwg.mxu0
    %2794 = vmatprep.subr.bf16.mxu0 %v2050
    %2795 = vmatpush1.bf16.msra.mxu0 %v2049
    %2796 = vmatprep.subr.bf16.mxu0 %v2058
    %2797 = vmatpush1.bf16.msra.mxu0 %v2057
    %2798 = vmatprep.subr.bf16.mxu0 %v2066
    %2799 = vmatpush1.bf16.msra.mxu0 %v2065
    %2800 = vmatprep.subr.bf16.mxu0 %v2074
    %2801 = vmatpush1.bf16.msra.mxu0 %v2073
    %2802 = vmatprep.subr.bf16.mxu0 %v2082
    %2803 = vmatpush1.bf16.msra.mxu0 %v2081
    %2804 = vmatprep.subr.bf16.mxu0 %v2090
    %2805 = vmatpush1.bf16.msra.mxu0 %v2089
    %2806 = vmatprep.subr.bf16.mxu0 %v2098
    %2807 = vmatpush1.bf16.msra.mxu0 %v2097
    %2808 = vmatprep.subr.bf16.mxu0 %v2106
    %2809 = vmatpush1.bf16.msra.mxu0 %v2105
    %2810 = vmatprep.subr.bf16.mxu0 %v2114
    %2811 = vmatpush1.bf16.msra.mxu0 %v2113
    %2812 = vmatprep.subr.bf16.mxu0 %v2122
    %2813 = vmatpush1.bf16.msra.mxu0 %v2121
    %2814 = vmatprep.subr.bf16.mxu0 %v2130
    %2815 = vmatpush1.bf16.msra.mxu0 %v2129
    %2816 = vmatprep.subr.bf16.mxu0 %v2138
    %2817 = vmatpush1.bf16.msra.mxu0 %v2137
    %2818 = vmatprep.subr.bf16.mxu0 %v2146
    %2819 = vmatpush1.bf16.msra.mxu0 %v2145
    %2820 = vmatprep.subr.bf16.mxu0 %v2154
    %2821 = vmatpush1.bf16.msra.mxu0 %v2153
    %2822 = vmatprep.subr.bf16.mxu0 %v2162
    %2823 = vmatpush1.bf16.msra.mxu0 %v2161
    %2824 = vmatprep.subr.bf16.mxu0 %v2170
    %2825 = vmatpush1.bf16.msra.mxu0 %v2169
    %2826 = vmatprep.mubr.bf16.mxu0 %v880
    %2827 = vmatmul.mubr.bf16.gmra.mrb[0].mxu0 %v879
    %v2828 = vpop.f32.mrb[0].mxu0
    %v2829 = vadd.f32 %v2756, %v2828
    %v2830 = vpop.f32.mrb[0].mxu0
    %v2831 = vadd.f32 %v2758, %v2830
    %v2832 = vpop.f32.mrb[0].mxu0
    %v2833 = vadd.f32 %v2760, %v2832
    %v2834 = vpop.f32.mrb[0].mxu0
    %v2835 = vadd.f32 %v2762, %v2834
    %2836 = vmatprep.mubr.bf16.mxu0 %v884
    %2837 = vmatmul.mubr.bf16.gmra.mrb[0].mxu0 %v883
    %v2838 = vpop.f32.mrb[0].mxu0
    %v2839 = vadd.f32 %v2766, %v2838
    %v2840 = vpop.f32.mrb[0].mxu0
    %v2841 = vadd.f32 %v2768, %v2840
    %v2842 = vpop.f32.mrb[0].mxu0
    %v2843 = vadd.f32 %v2770, %v2842
    %v2844 = vpop.f32.mrb[0].mxu0
    %v2845 = vadd.f32 %v2772, %v2844
    %2846 = vmatprep.mubr.bf16.mxu0 %v888
    %2847 = vmatmul.mubr.bf16.gmra.mrb[0].mxu0 %v887
    %v2848 = vpop.f32.mrb[0].mxu0
    %v2849 = vadd.f32 %v2776, %v2848
    %v2850 = vpop.f32.mrb[0].mxu0
    %v2851 = vadd.f32 %v2778, %v2850
    %v2852 = vpop.f32.mrb[0].mxu0
    %v2853 = vadd.f32 %v2780, %v2852
    %v2854 = vpop.f32.mrb[0].mxu0
    %v2855 = vadd.f32 %v2782, %v2854
    %2856 = vmatprep.mubr.bf16.mxu0 %v892
    %2857 = vmatmul.mubr.bf16.gmra.mrb[0].mxu0 %v891
    %v2858 = vpop.f32.mrb[0].mxu0
    %v2859 = vadd.f32 %v2786, %v2858
    %v2860 = vpop.f32.mrb[0].mxu0
    %v2861 = vadd.f32 %v2788, %v2860
    %v2862 = vpop.f32.mrb[0].mxu0
    %v2863 = vadd.f32 %v2790, %v2862
    %v2864 = vpop.f32.mrb[0].mxu0
    %v2865 = vadd.f32 %v2792, %v2864
    %2866 = vdwg.mxu0
    %2867 = vmatprep.subr.bf16.mxu0 %v1924
    %2868 = vmatpush1.bf16.msra.mxu0 %v1923
    %2869 = vmatprep.subr.bf16.mxu0 %v1932
    %2870 = vmatpush1.bf16.msra.mxu0 %v1931
    %2871 = vmatprep.subr.bf16.mxu0 %v1940
    %2872 = vmatpush1.bf16.msra.mxu0 %v1939
    %2873 = vmatprep.subr.bf16.mxu0 %v1948
    %2874 = vmatpush1.bf16.msra.mxu0 %v1947
    %2875 = vmatprep.subr.bf16.mxu0 %v1956
    %2876 = vmatpush1.bf16.msra.mxu0 %v1955
    %2877 = vmatprep.subr.bf16.mxu0 %v1964
    %2878 = vmatpush1.bf16.msra.mxu0 %v1963
    %2879 = vmatprep.subr.bf16.mxu0 %v1972
    %2880 = vmatpush1.bf16.msra.mxu0 %v1971
    %2881 = vmatprep.subr.bf16.mxu0 %v1980
    %2882 = vmatpush1.bf16.msra.mxu0 %v1979
    %2883 = vmatprep.subr.bf16.mxu0 %v1988
    %2884 = vmatpush1.bf16.msra.mxu0 %v1987
    %2885 = vmatprep.subr.bf16.mxu0 %v1996
    %2886 = vmatpush1.bf16.msra.mxu0 %v1995
    %2887 = vmatprep.subr.bf16.mxu0 %v2004
    %2888 = vmatpush1.bf16.msra.mxu0 %v2003
    %2889 = vmatprep.subr.bf16.mxu0 %v2012
    %2890 = vmatpush1.bf16.msra.mxu0 %v2011
    %2891 = vmatprep.subr.bf16.mxu0 %v2020
    %2892 = vmatpush1.bf16.msra.mxu0 %v2019
    %2893 = vmatprep.subr.bf16.mxu0 %v2028
    %2894 = vmatpush1.bf16.msra.mxu0 %v2027
    %2895 = vmatprep.subr.bf16.mxu0 %v2036
    %2896 = vmatpush1.bf16.msra.mxu0 %v2035
    %2897 = vmatprep.subr.bf16.mxu0 %v2044
    %2898 = vmatpush1.bf16.msra.mxu0 %v2043
    %2899 = vmatprep.mubr.bf16.mxu0 %v878
    %2900 = vmatmul.mubr.bf16.gmra.mrb[0].mxu0 %v877
    %v2901 = vpop.f32.mrb[0].mxu0
    %v2902 = vadd.f32 0.0, %v2901
    %v2903 = vpop.f32.mrb[0].mxu0
    %v2904 = vadd.f32 0.0, %v2903
    %v2905 = vpop.f32.mrb[0].mxu0
    %v2906 = vadd.f32 0.0, %v2905
    %v2907 = vpop.f32.mrb[0].mxu0
    %v2908 = vadd.f32 0.0, %v2907
    %2909 = vmatprep.mubr.bf16.mxu0 %v882
    %2910 = vmatmul.mubr.bf16.gmra.mrb[0].mxu0 %v881
    %v2911 = vpop.f32.mrb[0].mxu0
    %v2912 = vadd.f32 0.0, %v2911
    %v2913 = vpop.f32.mrb[0].mxu0
    %v2914 = vadd.f32 0.0, %v2913
    %v2915 = vpop.f32.mrb[0].mxu0
    %v2916 = vadd.f32 0.0, %v2915
    %v2917 = vpop.f32.mrb[0].mxu0
    %v2918 = vadd.f32 0.0, %v2917
    %2919 = vmatprep.mubr.bf16.mxu0 %v886
    %2920 = vmatmul.mubr.bf16.gmra.mrb[0].mxu0 %v885
    %v2921 = vpop.f32.mrb[0].mxu0
    %v2922 = vadd.f32 0.0, %v2921
    %v2923 = vpop.f32.mrb[0].mxu0
    %v2924 = vadd.f32 0.0, %v2923
    %v2925 = vpop.f32.mrb[0].mxu0
    %v2926 = vadd.f32 0.0, %v2925
    %v2927 = vpop.f32.mrb[0].mxu0
    %v2928 = vadd.f32 0.0, %v2927
    %2929 = vmatprep.mubr.bf16.mxu0 %v890
    %2930 = vmatmul.mubr.bf16.gmra.mrb[0].mxu0 %v889
    %v2931 = vpop.f32.mrb[0].mxu0
    %v2932 = vadd.f32 0.0, %v2931
    %v2933 = vpop.f32.mrb[0].mxu0
    %v2934 = vadd.f32 0.0, %v2933
    %v2935 = vpop.f32.mrb[0].mxu0
    %v2936 = vadd.f32 0.0, %v2935
    %v2937 = vpop.f32.mrb[0].mxu0
    %v2938 = vadd.f32 0.0, %v2937
    %2939 = vdwg.mxu0
    %2940 = vmatprep.subr.bf16.mxu0 %v2052
    %2941 = vmatpush1.bf16.msra.mxu0 %v2051
    %2942 = vmatprep.subr.bf16.mxu0 %v2060
    %2943 = vmatpush1.bf16.msra.mxu0 %v2059
    %2944 = vmatprep.subr.bf16.mxu0 %v2068
    %2945 = vmatpush1.bf16.msra.mxu0 %v2067
    %2946 = vmatprep.subr.bf16.mxu0 %v2076
    %2947 = vmatpush1.bf16.msra.mxu0 %v2075
    %2948 = vmatprep.subr.bf16.mxu0 %v2084
    %2949 = vmatpush1.bf16.msra.mxu0 %v2083
    %2950 = vmatprep.subr.bf16.mxu0 %v2092
    %2951 = vmatpush1.bf16.msra.mxu0 %v2091
    %2952 = vmatprep.subr.bf16.mxu0 %v2100
    %2953 = vmatpush1.bf16.msra.mxu0 %v2099
    %2954 = vmatprep.subr.bf16.mxu0 %v2108
    %2955 = vmatpush1.bf16.msra.mxu0 %v2107
    %2956 = vmatprep.subr.bf16.mxu0 %v2116
    %2957 = vmatpush1.bf16.msra.mxu0 %v2115
    %2958 = vmatprep.subr.bf16.mxu0 %v2124
    %2959 = vmatpush1.bf16.msra.mxu0 %v2123
    %2960 = vmatprep.subr.bf16.mxu0 %v2132
    %2961 = vmatpush1.bf16.msra.mxu0 %v2131
    %2962 = vmatprep.subr.bf16.mxu0 %v2140
    %2963 = vmatpush1.bf16.msra.mxu0 %v2139
    %2964 = vmatprep.subr.bf16.mxu0 %v2148
    %2965 = vmatpush1.bf16.msra.mxu0 %v2147
    %2966 = vmatprep.subr.bf16.mxu0 %v2156
    %2967 = vmatpush1.bf16.msra.mxu0 %v2155
    %2968 = vmatprep.subr.bf16.mxu0 %v2164
    %2969 = vmatpush1.bf16.msra.mxu0 %v2163
    %2970 = vmatprep.subr.bf16.mxu0 %v2172
    %2971 = vmatpush1.bf16.msra.mxu0 %v2171
    %2972 = vmatprep.mubr.bf16.mxu0 %v880
    %2973 = vmatmul.mubr.bf16.gmra.mrb[0].mxu0 %v879
    %v2974 = vpop.f32.mrb[0].mxu0
    %v2975 = vadd.f32 %v2902, %v2974
    %v2976 = vpop.f32.mrb[0].mxu0
    %v2977 = vadd.f32 %v2904, %v2976
    %v2978 = vpop.f32.mrb[0].mxu0
    %v2979 = vadd.f32 %v2906, %v2978
    %v2980 = vpop.f32.mrb[0].mxu0
    %v2981 = vadd.f32 %v2908, %v2980
    %2982 = vmatprep.mubr.bf16.mxu0 %v884
    %2983 = vmatmul.mubr.bf16.gmra.mrb[0].mxu0 %v883
    %v2984 = vpop.f32.mrb[0].mxu0
    %v2985 = vadd.f32 %v2912, %v2984
    %v2986 = vpop.f32.mrb[0].mxu0
    %v2987 = vadd.f32 %v2914, %v2986
    %v2988 = vpop.f32.mrb[0].mxu0
    %v2989 = vadd.f32 %v2916, %v2988
    %v2990 = vpop.f32.mrb[0].mxu0
    %v2991 = vadd.f32 %v2918, %v2990
    %2992 = vmatprep.mubr.bf16.mxu0 %v888
    %2993 = vmatmul.mubr.bf16.gmra.mrb[0].mxu0 %v887
    %v2994 = vpop.f32.mrb[0].mxu0
    %v2995 = vadd.f32 %v2922, %v2994
    %v2996 = vpop.f32.mrb[0].mxu0
    %v2997 = vadd.f32 %v2924, %v2996
    %v2998 = vpop.f32.mrb[0].mxu0
    %v2999 = vadd.f32 %v2926, %v2998
    %v3000 = vpop.f32.mrb[0].mxu0
    %v3001 = vadd.f32 %v2928, %v3000
    %3002 = vmatprep.mubr.bf16.mxu0 %v892
    %3003 = vmatmul.mubr.bf16.gmra.mrb[0].mxu0 %v891
    %v3004 = vpop.f32.mrb[0].mxu0
    %v3005 = vadd.f32 %v2932, %v3004
    %v3006 = vpop.f32.mrb[0].mxu0
    %v3007 = vadd.f32 %v2934, %v3006
    %v3008 = vpop.f32.mrb[0].mxu0
    %v3009 = vadd.f32 %v2936, %v3008
    %v3010 = vpop.f32.mrb[0].mxu0
    %v3011 = vadd.f32 %v2938, %v3010
    %3012 = vdwg.mxu0
    %v3013 = vmax.f32 %v2537, 0.0
    %v3014 = vmax.f32 %v2539, 0.0
    %v3015 = vmax.f32 %v2683, 0.0
    %v3016 = vmax.f32 %v2685, 0.0
    %v3017 = vmax.f32 %v2829, 0.0
    %v3018 = vmax.f32 %v2831, 0.0
    %v3019 = vmax.f32 %v2975, 0.0
    %v3020 = vmax.f32 %v2977, 0.0
    %v3021 = vmax.f32 %v2541, 0.0
    %v3022 = vmax.f32 %v2543, 0.0
    %v3023 = vmax.f32 %v2687, 0.0
    %v3024 = vmax.f32 %v2689, 0.0
    %v3025 = vmax.f32 %v2833, 0.0
    %v3026 = vmax.f32 %v2835, 0.0
    %v3027 = vmax.f32 %v2979, 0.0
    %v3028 = vmax.f32 %v2981, 0.0
    %v3029 = vmax.f32 %v2547, 0.0
    %v3030 = vmax.f32 %v2549, 0.0
    %v3031 = vmax.f32 %v2693, 0.0
    %v3032 = vmax.f32 %v2695, 0.0
    %v3033 = vmax.f32 %v2839, 0.0
    %v3034 = vmax.f32 %v2841, 0.0
    %v3035 = vmax.f32 %v2985, 0.0
    %v3036 = vmax.f32 %v2987, 0.0
    %v3037 = vmax.f32 %v2551, 0.0
    %v3038 = vmax.f32 %v2553, 0.0
    %v3039 = vmax.f32 %v2697, 0.0
    %v3040 = vmax.f32 %v2699, 0.0
    %v3041 = vmax.f32 %v2843, 0.0
    %v3042 = vmax.f32 %v2845, 0.0
    %v3043 = vmax.f32 %v2989, 0.0
    %v3044 = vmax.f32 %v2991, 0.0
    %v3045 = vmax.f32 %v2557, 0.0
    %v3046 = vmax.f32 %v2559, 0.0
    %v3047 = vmax.f32 %v2703, 0.0
    %v3048 = vmax.f32 %v2705, 0.0
    %v3049 = vmax.f32 %v2849, 0.0
    %v3050 = vmax.f32 %v2851, 0.0
    %v3051 = vmax.f32 %v2995, 0.0
    %v3052 = vmax.f32 %v2997, 0.0
    %v3053 = vmax.f32 %v2561, 0.0
    %v3054 = vmax.f32 %v2563, 0.0
    %v3055 = vmax.f32 %v2707, 0.0
    %v3056 = vmax.f32 %v2709, 0.0
    %v3057 = vmax.f32 %v2853, 0.0
    %v3058 = vmax.f32 %v2855, 0.0
    %v3059 = vmax.f32 %v2999, 0.0
    %v3060 = vmax.f32 %v3001, 0.0
    %v3061 = vmax.f32 %v2567, 0.0
    %v3062 = vmax.f32 %v2569, 0.0
    %v3063 = vmax.f32 %v2713, 0.0
    %v3064 = vmax.f32 %v2715, 0.0
    %v3065 = vmax.f32 %v2859, 0.0
    %v3066 = vmax.f32 %v2861, 0.0
    %v3067 = vmax.f32 %v3005, 0.0
    %v3068 = vmax.f32 %v3007, 0.0
    %v3069 = vmax.f32 %v2571, 0.0
    %v3070 = vmax.f32 %v2573, 0.0
    %v3071 = vmax.f32 %v2717, 0.0
    %v3072 = vmax.f32 %v2719, 0.0
    %v3073 = vmax.f32 %v2863, 0.0
    %v3074 = vmax.f32 %v2865, 0.0
    %v3075 = vmax.f32 %v3009, 0.0
    %v3076 = vmax.f32 %v3011, 0.0
    %v3077 = vpack.c.bf16 %v3021, %v3013
    %v3078 = vpack.c.bf16 %v3022, %v3014
    %v3079 = vpack.c.bf16 %v3023, %v3015
    %v3080 = vpack.c.bf16 %v3024, %v3016
    %v3081 = vpack.c.bf16 %v3025, %v3017
    %v3082 = vpack.c.bf16 %v3026, %v3018
    %v3083 = vpack.c.bf16 %v3027, %v3019
    %v3084 = vpack.c.bf16 %v3028, %v3020
    %v3085 = vpack.c.bf16 %v3037, %v3029
    %v3086 = vpack.c.bf16 %v3038, %v3030
    %v3087 = vpack.c.bf16 %v3039, %v3031
    %v3088 = vpack.c.bf16 %v3040, %v3032
    %v3089 = vpack.c.bf16 %v3041, %v3033
    %v3090 = vpack.c.bf16 %v3042, %v3034
    %v3091 = vpack.c.bf16 %v3043, %v3035
    %v3092 = vpack.c.bf16 %v3044, %v3036
    %v3093 = vpack.c.bf16 %v3053, %v3045
    %v3094 = vpack.c.bf16 %v3054, %v3046
    %v3095 = vpack.c.bf16 %v3055, %v3047
    %v3096 = vpack.c.bf16 %v3056, %v3048
    %v3097 = vpack.c.bf16 %v3057, %v3049
    %v3098 = vpack.c.bf16 %v3058, %v3050
    %v3099 = vpack.c.bf16 %v3059, %v3051
    %v3100 = vpack.c.bf16 %v3060, %v3052
    %v3101 = vpack.c.bf16 %v3069, %v3061
    %v3102 = vpack.c.bf16 %v3070, %v3062
    %v3103 = vpack.c.bf16 %v3071, %v3063
    %v3104 = vpack.c.bf16 %v3072, %v3064
    %v3105 = vpack.c.bf16 %v3073, %v3065
    %v3106 = vpack.c.bf16 %v3074, %v3066
    %v3107 = vpack.c.bf16 %v3075, %v3067
    %v3108 = vpack.c.bf16 %v3076, %v3068
    %v3109 = vld [vmem:[#allocation10] sm:$0xff]
    %v3110 = vld [vmem:[#allocation10 + $0x8] sm:$0xff]
    %v3111 = vld [vmem:[#allocation10 + $0x10] sm:$0xff]
    %v3112 = vld [vmem:[#allocation10 + $0x18] sm:$0xf]
    %v3113 = vld [vmem:[#allocation10 + $0x1c] sm:$0xff]
    %v3114 = vld [vmem:[#allocation10 + $0x24] sm:$0xff]
    %v3115 = vld [vmem:[#allocation10 + $0x2c] sm:$0xff]
    %v3116 = vld [vmem:[#allocation10 + $0x34] sm:$0xf]
    %v3117 = vld [vmem:[#allocation10 + $0x38] sm:$0xff]
    %v3118 = vld [vmem:[#allocation10 + $0x40] sm:$0xff]
    %v3119 = vld [vmem:[#allocation10 + $0x48] sm:$0xff]
    %v3120 = vld [vmem:[#allocation10 + $0x50] sm:$0xf]
    %v3121 = vld [vmem:[#allocation10 + $0x54] sm:$0xff]
    %v3122 = vld [vmem:[#allocation10 + $0x5c] sm:$0xff]
    %v3123 = vld [vmem:[#allocation10 + $0x64] sm:$0xff]
    %v3124 = vld [vmem:[#allocation10 + $0x6c] sm:$0xf]
    %v3125 = vld [vmem:[#allocation10 + $0x70] sm:$0xff]
    %v3126 = vld [vmem:[#allocation10 + $0x78] sm:$0xff]
    %v3127 = vld [vmem:[#allocation10 + $0x80] sm:$0xff]
    %v3128 = vld [vmem:[#allocation10 + $0x88] sm:$0xf]
    %v3129 = vld [vmem:[#allocation10 + $0x8c] sm:$0xff]
    %v3130 = vld [vmem:[#allocation10 + $0x94] sm:$0xff]
    %v3131 = vld [vmem:[#allocation10 + $0x9c] sm:$0xff]
    %v3132 = vld [vmem:[#allocation10 + $0xa4] sm:$0xf]
    %v3133 = vld [vmem:[#allocation10 + $0xa8] sm:$0xff]
    %v3134 = vld [vmem:[#allocation10 + $0xb0] sm:$0xff]
    %v3135 = vld [vmem:[#allocation10 + $0xb8] sm:$0xff]
    %v3136 = vld [vmem:[#allocation10 + $0xc0] sm:$0xf]
    %v3137 = vld [vmem:[#allocation10 + $0xc4] sm:$0xff]
    %v3138 = vld [vmem:[#allocation10 + $0xcc] sm:$0xff]
    %v3139 = vld [vmem:[#allocation10 + $0xd4] sm:$0xff]
    %v3140 = vld [vmem:[#allocation10 + $0xdc] sm:$0xf]
    %v3141 = vld [vmem:[#allocation10 + $0xe0] sm:$0xff]
    %v3142 = vld [vmem:[#allocation10 + $0xe8] sm:$0xff]
    %v3143 = vld [vmem:[#allocation10 + $0xf0] sm:$0xff]
    %v3144 = vld [vmem:[#allocation10 + $0xf8] sm:$0xf]
    %v3145 = vld [vmem:[#allocation10 + $0xfc] sm:$0xff]
    %v3146 = vld [vmem:[#allocation10 + $0x104] sm:$0xff]
    %v3147 = vld [vmem:[#allocation10 + $0x10c] sm:$0xff]
    %v3148 = vld [vmem:[#allocation10 + $0x114] sm:$0xf]
    %v3149 = vld [vmem:[#allocation10 + $0x118] sm:$0xff]
    %v3150 = vld [vmem:[#allocation10 + $0x120] sm:$0xff]
    %v3151 = vld [vmem:[#allocation10 + $0x128] sm:$0xff]
    %v3152 = vld [vmem:[#allocation10 + $0x130] sm:$0xf]
    %v3153 = vld [vmem:[#allocation10 + $0x134] sm:$0xff]
    %v3154 = vld [vmem:[#allocation10 + $0x13c] sm:$0xff]
    %v3155 = vld [vmem:[#allocation10 + $0x144] sm:$0xff]
    %v3156 = vld [vmem:[#allocation10 + $0x14c] sm:$0xf]
    %v3157 = vld [vmem:[#allocation10 + $0x150] sm:$0xff]
    %v3158 = vld [vmem:[#allocation10 + $0x158] sm:$0xff]
    %v3159 = vld [vmem:[#allocation10 + $0x160] sm:$0xff]
    %v3160 = vld [vmem:[#allocation10 + $0x168] sm:$0xf]
    %v3161 = vld [vmem:[#allocation10 + $0x16c] sm:$0xff]
    %v3162 = vld [vmem:[#allocation10 + $0x174] sm:$0xff]
    %v3163 = vld [vmem:[#allocation10 + $0x17c] sm:$0xff]
    %v3164 = vld [vmem:[#allocation10 + $0x184] sm:$0xf]
    %v3165 = vld [vmem:[#allocation10 + $0x188] sm:$0xff]
    %v3166 = vld [vmem:[#allocation10 + $0x190] sm:$0xff]
    %v3167 = vld [vmem:[#allocation10 + $0x198] sm:$0xff]
    %v3168 = vld [vmem:[#allocation10 + $0x1a0] sm:$0xf]
    %v3169 = vld [vmem:[#allocation10 + $0x1a4] sm:$0xff]
    %v3170 = vld [vmem:[#allocation10 + $0x1ac] sm:$0xff]
    %v3171 = vld [vmem:[#allocation10 + $0x1b4] sm:$0xff]
    %v3172 = vld [vmem:[#allocation10 + $0x1bc] sm:$0xf]
    %v3173 = vld [vmem:[#allocation10 + $0x1c0] sm:$0xff]
    %v3174 = vld [vmem:[#allocation10 + $0x1c8] sm:$0xff]
    %v3175 = vld [vmem:[#allocation10 + $0x1d0] sm:$0xff]
    %v3176 = vld [vmem:[#allocation10 + $0x1d8] sm:$0xf]
    %v3177 = vld [vmem:[#allocation10 + $0x1dc] sm:$0xff]
    %v3178 = vld [vmem:[#allocation10 + $0x1e4] sm:$0xff]
    %v3179 = vld [vmem:[#allocation10 + $0x1ec] sm:$0xff]
    %v3180 = vld [vmem:[#allocation10 + $0x1f4] sm:$0xf]
    %v3181 = vld [vmem:[#allocation10 + $0x1f8] sm:$0xff]
    %v3182 = vld [vmem:[#allocation10 + $0x200] sm:$0xff]
    %v3183 = vld [vmem:[#allocation10 + $0x208] sm:$0xff]
    %v3184 = vld [vmem:[#allocation10 + $0x210] sm:$0xf]
    %v3185 = vld [vmem:[#allocation10 + $0x214] sm:$0xff]
    %v3186 = vld [vmem:[#allocation10 + $0x21c] sm:$0xff]
    %v3187 = vld [vmem:[#allocation10 + $0x224] sm:$0xff]
    %v3188 = vld [vmem:[#allocation10 + $0x22c] sm:$0xf]
    %v3189 = vld [vmem:[#allocation10 + $0x230] sm:$0xff]
    %v3190 = vld [vmem:[#allocation10 + $0x238] sm:$0xff]
    %v3191 = vld [vmem:[#allocation10 + $0x240] sm:$0xff]
    %v3192 = vld [vmem:[#allocation10 + $0x248] sm:$0xf]
    %v3193 = vld [vmem:[#allocation10 + $0x24c] sm:$0xff]
    %v3194 = vld [vmem:[#allocation10 + $0x254] sm:$0xff]
    %v3195 = vld [vmem:[#allocation10 + $0x25c] sm:$0xff]
    %v3196 = vld [vmem:[#allocation10 + $0x264] sm:$0xf]
    %v3197 = vld [vmem:[#allocation10 + $0x268] sm:$0xff]
    %v3198 = vld [vmem:[#allocation10 + $0x270] sm:$0xff]
    %v3199 = vld [vmem:[#allocation10 + $0x278] sm:$0xff]
    %v3200 = vld [vmem:[#allocation10 + $0x280] sm:$0xf]
    %v3201 = vld [vmem:[#allocation10 + $0x284] sm:$0xff]
    %v3202 = vld [vmem:[#allocation10 + $0x28c] sm:$0xff]
    %v3203 = vld [vmem:[#allocation10 + $0x294] sm:$0xff]
    %v3204 = vld [vmem:[#allocation10 + $0x29c] sm:$0xf]
    %v3205 = vld [vmem:[#allocation10 + $0x2a0] sm:$0xff]
    %v3206 = vld [vmem:[#allocation10 + $0x2a8] sm:$0xff]
    %v3207 = vld [vmem:[#allocation10 + $0x2b0] sm:$0xff]
    %v3208 = vld [vmem:[#allocation10 + $0x2b8] sm:$0xf]
    %v3209 = vld [vmem:[#allocation10 + $0x2bc] sm:$0xff]
    %v3210 = vld [vmem:[#allocation10 + $0x2c4] sm:$0xff]
    %v3211 = vld [vmem:[#allocation10 + $0x2cc] sm:$0xff]
    %v3212 = vld [vmem:[#allocation10 + $0x2d4] sm:$0xf]
    %v3213 = vld [vmem:[#allocation10 + $0x2d8] sm:$0xff]
    %v3214 = vld [vmem:[#allocation10 + $0x2e0] sm:$0xff]
    %v3215 = vld [vmem:[#allocation10 + $0x2e8] sm:$0xff]
    %v3216 = vld [vmem:[#allocation10 + $0x2f0] sm:$0xf]
    %v3217 = vld [vmem:[#allocation10 + $0x2f4] sm:$0xff]
    %v3218 = vld [vmem:[#allocation10 + $0x2fc] sm:$0xff]
    %v3219 = vld [vmem:[#allocation10 + $0x304] sm:$0xff]
    %v3220 = vld [vmem:[#allocation10 + $0x30c] sm:$0xf]
    %v3221 = vld [vmem:[#allocation10 + $0x310] sm:$0xff]
    %v3222 = vld [vmem:[#allocation10 + $0x318] sm:$0xff]
    %v3223 = vld [vmem:[#allocation10 + $0x320] sm:$0xff]
    %v3224 = vld [vmem:[#allocation10 + $0x328] sm:$0xf]
    %v3225 = vld [vmem:[#allocation10 + $0x32c] sm:$0xff]
    %v3226 = vld [vmem:[#allocation10 + $0x334] sm:$0xff]
    %v3227 = vld [vmem:[#allocation10 + $0x33c] sm:$0xff]
    %v3228 = vld [vmem:[#allocation10 + $0x344] sm:$0xf]
    %v3229 = vld [vmem:[#allocation10 + $0x348] sm:$0xff]
    %v3230 = vld [vmem:[#allocation10 + $0x350] sm:$0xff]
    %v3231 = vld [vmem:[#allocation10 + $0x358] sm:$0xff]
    %v3232 = vld [vmem:[#allocation10 + $0x360] sm:$0xf]
    %v3233 = vld [vmem:[#allocation10 + $0x364] sm:$0xff]
    %v3234 = vld [vmem:[#allocation10 + $0x36c] sm:$0xff]
    %v3235 = vld [vmem:[#allocation10 + $0x374] sm:$0xff]
    %v3236 = vld [vmem:[#allocation10 + $0x37c] sm:$0xf]
    %v3237 = vld [vmem:[#allocation10 + $0x380] sm:$0xff]
    %v3238 = vld [vmem:[#allocation10 + $0x388] sm:$0xff]
    %v3239 = vld [vmem:[#allocation10 + $0x390] sm:$0xff]
    %v3240 = vld [vmem:[#allocation10 + $0x398] sm:$0xf]
    %v3241 = vld [vmem:[#allocation10 + $0x39c] sm:$0xff]
    %v3242 = vld [vmem:[#allocation10 + $0x3a4] sm:$0xff]
    %v3243 = vld [vmem:[#allocation10 + $0x3ac] sm:$0xff]
    %v3244 = vld [vmem:[#allocation10 + $0x3b4] sm:$0xf]
    %v3245 = vld [vmem:[#allocation10 + $0x3b8] sm:$0xff]
    %v3246 = vld [vmem:[#allocation10 + $0x3c0] sm:$0xff]
    %v3247 = vld [vmem:[#allocation10 + $0x3c8] sm:$0xff]
    %v3248 = vld [vmem:[#allocation10 + $0x3d0] sm:$0xf]
    %v3249 = vld [vmem:[#allocation10 + $0x3d4] sm:$0xff]
    %v3250 = vld [vmem:[#allocation10 + $0x3dc] sm:$0xff]
    %v3251 = vld [vmem:[#allocation10 + $0x3e4] sm:$0xff]
    %v3252 = vld [vmem:[#allocation10 + $0x3ec] sm:$0xf]
    %v3253 = vld [vmem:[#allocation10 + $0x3f0] sm:$0xff]
    %v3254 = vld [vmem:[#allocation10 + $0x3f8] sm:$0xff]
    %v3255 = vld [vmem:[#allocation10 + $0x400] sm:$0xff]
    %v3256 = vld [vmem:[#allocation10 + $0x408] sm:$0xf]
    %v3257 = vld [vmem:[#allocation10 + $0x40c] sm:$0xff]
    %v3258 = vld [vmem:[#allocation10 + $0x414] sm:$0xff]
    %v3259 = vld [vmem:[#allocation10 + $0x41c] sm:$0xff]
    %v3260 = vld [vmem:[#allocation10 + $0x424] sm:$0xf]
    %v3261 = vld [vmem:[#allocation10 + $0x428] sm:$0xff]
    %v3262 = vld [vmem:[#allocation10 + $0x430] sm:$0xff]
    %v3263 = vld [vmem:[#allocation10 + $0x438] sm:$0xff]
    %v3264 = vld [vmem:[#allocation10 + $0x440] sm:$0xf]
    %v3265 = vld [vmem:[#allocation10 + $0x444] sm:$0xff]
    %v3266 = vld [vmem:[#allocation10 + $0x44c] sm:$0xff]
    %v3267 = vld [vmem:[#allocation10 + $0x454] sm:$0xff]
    %v3268 = vld [vmem:[#allocation10 + $0x45c] sm:$0xf]
    %v3269 = vld [vmem:[#allocation10 + $0x460] sm:$0xff]
    %v3270 = vld [vmem:[#allocation10 + $0x468] sm:$0xff]
    %v3271 = vld [vmem:[#allocation10 + $0x470] sm:$0xff]
    %v3272 = vld [vmem:[#allocation10 + $0x478] sm:$0xf]
    %v3273 = vld [vmem:[#allocation10 + $0x47c] sm:$0xff]
    %v3274 = vld [vmem:[#allocation10 + $0x484] sm:$0xff]
    %v3275 = vld [vmem:[#allocation10 + $0x48c] sm:$0xff]
    %v3276 = vld [vmem:[#allocation10 + $0x494] sm:$0xf]
    %v3277 = vld [vmem:[#allocation10 + $0x498] sm:$0xff]
    %v3278 = vld [vmem:[#allocation10 + $0x4a0] sm:$0xff]
    %v3279 = vld [vmem:[#allocation10 + $0x4a8] sm:$0xff]
    %v3280 = vld [vmem:[#allocation10 + $0x4b0] sm:$0xf]
    %v3281 = vld [vmem:[#allocation10 + $0x4b4] sm:$0xff]
    %v3282 = vld [vmem:[#allocation10 + $0x4bc] sm:$0xff]
    %v3283 = vld [vmem:[#allocation10 + $0x4c4] sm:$0xff]
    %v3284 = vld [vmem:[#allocation10 + $0x4cc] sm:$0xf]
    %v3285 = vld [vmem:[#allocation10 + $0x4d0] sm:$0xff]
    %v3286 = vld [vmem:[#allocation10 + $0x4d8] sm:$0xff]
    %v3287 = vld [vmem:[#allocation10 + $0x4e0] sm:$0xff]
    %v3288 = vld [vmem:[#allocation10 + $0x4e8] sm:$0xf]
    %v3289 = vld [vmem:[#allocation10 + $0x4ec] sm:$0xff]
    %v3290 = vld [vmem:[#allocation10 + $0x4f4] sm:$0xff]
    %v3291 = vld [vmem:[#allocation10 + $0x4fc] sm:$0xff]
    %v3292 = vld [vmem:[#allocation10 + $0x504] sm:$0xf]
    %v3293 = vld [vmem:[#allocation10 + $0x508] sm:$0xff]
    %v3294 = vld [vmem:[#allocation10 + $0x510] sm:$0xff]
    %v3295 = vld [vmem:[#allocation10 + $0x518] sm:$0xff]
    %v3296 = vld [vmem:[#allocation10 + $0x520] sm:$0xf]
    %v3297 = vld [vmem:[#allocation10 + $0x524] sm:$0xff]
    %v3298 = vld [vmem:[#allocation10 + $0x52c] sm:$0xff]
    %v3299 = vld [vmem:[#allocation10 + $0x534] sm:$0xff]
    %v3300 = vld [vmem:[#allocation10 + $0x53c] sm:$0xf]
    %v3301 = vld [vmem:[#allocation10 + $0x540] sm:$0xff]
    %v3302 = vld [vmem:[#allocation10 + $0x548] sm:$0xff]
    %v3303 = vld [vmem:[#allocation10 + $0x550] sm:$0xff]
    %v3304 = vld [vmem:[#allocation10 + $0x558] sm:$0xf]
    %v3305 = vld [vmem:[#allocation10 + $0x55c] sm:$0xff]
    %v3306 = vld [vmem:[#allocation10 + $0x564] sm:$0xff]
    %v3307 = vld [vmem:[#allocation10 + $0x56c] sm:$0xff]
    %v3308 = vld [vmem:[#allocation10 + $0x574] sm:$0xf]
    %v3309 = vld [vmem:[#allocation10 + $0x578] sm:$0xff]
    %v3310 = vld [vmem:[#allocation10 + $0x580] sm:$0xff]
    %v3311 = vld [vmem:[#allocation10 + $0x588] sm:$0xff]
    %v3312 = vld [vmem:[#allocation10 + $0x590] sm:$0xf]
    %v3313 = vld [vmem:[#allocation10 + $0x594] sm:$0xff]
    %v3314 = vld [vmem:[#allocation10 + $0x59c] sm:$0xff]
    %v3315 = vld [vmem:[#allocation10 + $0x5a4] sm:$0xff]
    %v3316 = vld [vmem:[#allocation10 + $0x5ac] sm:$0xf]
    %v3317 = vld [vmem:[#allocation10 + $0x5b0] sm:$0xff]
    %v3318 = vld [vmem:[#allocation10 + $0x5b8] sm:$0xff]
    %v3319 = vld [vmem:[#allocation10 + $0x5c0] sm:$0xff]
    %v3320 = vld [vmem:[#allocation10 + $0x5c8] sm:$0xf]
    %v3321 = vld [vmem:[#allocation10 + $0x5cc] sm:$0xff]
    %v3322 = vld [vmem:[#allocation10 + $0x5d4] sm:$0xff]
    %v3323 = vld [vmem:[#allocation10 + $0x5dc] sm:$0xff]
    %v3324 = vld [vmem:[#allocation10 + $0x5e4] sm:$0xf]
    %v3325 = vld [vmem:[#allocation10 + $0x5e8] sm:$0xff]
    %v3326 = vld [vmem:[#allocation10 + $0x5f0] sm:$0xff]
    %v3327 = vld [vmem:[#allocation10 + $0x5f8] sm:$0xff]
    %v3328 = vld [vmem:[#allocation10 + $0x600] sm:$0xf]
    %v3329 = vld [vmem:[#allocation10 + $0x604] sm:$0xff]
    %v3330 = vld [vmem:[#allocation10 + $0x60c] sm:$0xff]
    %v3331 = vld [vmem:[#allocation10 + $0x614] sm:$0xff]
    %v3332 = vld [vmem:[#allocation10 + $0x61c] sm:$0xf]
    %v3333 = vld [vmem:[#allocation10 + $0x620] sm:$0xff]
    %v3334 = vld [vmem:[#allocation10 + $0x628] sm:$0xff]
    %v3335 = vld [vmem:[#allocation10 + $0x630] sm:$0xff]
    %v3336 = vld [vmem:[#allocation10 + $0x638] sm:$0xf]
    %v3337 = vld [vmem:[#allocation10 + $0x63c] sm:$0xff]
    %v3338 = vld [vmem:[#allocation10 + $0x644] sm:$0xff]
    %v3339 = vld [vmem:[#allocation10 + $0x64c] sm:$0xff]
    %v3340 = vld [vmem:[#allocation10 + $0x654] sm:$0xf]
    %v3341 = vld [vmem:[#allocation10 + $0x658] sm:$0xff]
    %v3342 = vld [vmem:[#allocation10 + $0x660] sm:$0xff]
    %v3343 = vld [vmem:[#allocation10 + $0x668] sm:$0xff]
    %v3344 = vld [vmem:[#allocation10 + $0x670] sm:$0xf]
    %v3345 = vld [vmem:[#allocation10 + $0x674] sm:$0xff]
    %v3346 = vld [vmem:[#allocation10 + $0x67c] sm:$0xff]
    %v3347 = vld [vmem:[#allocation10 + $0x684] sm:$0xff]
    %v3348 = vld [vmem:[#allocation10 + $0x68c] sm:$0xf]
    %v3349 = vld [vmem:[#allocation10 + $0x690] sm:$0xff]
    %v3350 = vld [vmem:[#allocation10 + $0x698] sm:$0xff]
    %v3351 = vld [vmem:[#allocation10 + $0x6a0] sm:$0xff]
    %v3352 = vld [vmem:[#allocation10 + $0x6a8] sm:$0xf]
    %v3353 = vld [vmem:[#allocation10 + $0x6ac] sm:$0xff]
    %v3354 = vld [vmem:[#allocation10 + $0x6b4] sm:$0xff]
    %v3355 = vld [vmem:[#allocation10 + $0x6bc] sm:$0xff]
    %v3356 = vld [vmem:[#allocation10 + $0x6c4] sm:$0xf]
    %v3357 = vld [vmem:[#allocation10 + $0x6c8] sm:$0xff]
    %v3358 = vld [vmem:[#allocation10 + $0x6d0] sm:$0xff]
    %v3359 = vld [vmem:[#allocation10 + $0x6d8] sm:$0xff]
    %v3360 = vld [vmem:[#allocation10 + $0x6e0] sm:$0xf]
    %v3361 = vld [vmem:[#allocation10 + $0x6e4] sm:$0xff]
    %v3362 = vld [vmem:[#allocation10 + $0x6ec] sm:$0xff]
    %v3363 = vld [vmem:[#allocation10 + $0x6f4] sm:$0xff]
    %v3364 = vld [vmem:[#allocation10 + $0x6fc] sm:$0xf]
    %v3365 = vld [vmem:[#allocation10 + $0x700] sm:$0xff]
    %v3366 = vld [vmem:[#allocation10 + $0x708] sm:$0xff]
    %v3367 = vld [vmem:[#allocation10 + $0x710] sm:$0xff]
    %v3368 = vld [vmem:[#allocation10 + $0x718] sm:$0xf]
    %v3369 = vld [vmem:[#allocation10 + $0x71c] sm:$0xff]
    %v3370 = vld [vmem:[#allocation10 + $0x724] sm:$0xff]
    %v3371 = vld [vmem:[#allocation10 + $0x72c] sm:$0xff]
    %v3372 = vld [vmem:[#allocation10 + $0x734] sm:$0xf]
    %v3373 = vld [vmem:[#allocation10 + $0x738] sm:$0xff]
    %v3374 = vld [vmem:[#allocation10 + $0x740] sm:$0xff]
    %v3375 = vld [vmem:[#allocation10 + $0x748] sm:$0xff]
    %v3376 = vld [vmem:[#allocation10 + $0x750] sm:$0xf]
    %v3377 = vld [vmem:[#allocation10 + $0x754] sm:$0xff]
    %v3378 = vld [vmem:[#allocation10 + $0x75c] sm:$0xff]
    %v3379 = vld [vmem:[#allocation10 + $0x764] sm:$0xff]
    %v3380 = vld [vmem:[#allocation10 + $0x76c] sm:$0xf]
    %v3381 = vld [vmem:[#allocation10 + $0x770] sm:$0xff]
    %v3382 = vld [vmem:[#allocation10 + $0x778] sm:$0xff]
    %v3383 = vld [vmem:[#allocation10 + $0x780] sm:$0xff]
    %v3384 = vld [vmem:[#allocation10 + $0x788] sm:$0xf]
    %v3385 = vld [vmem:[#allocation10 + $0x78c] sm:$0xff]
    %v3386 = vld [vmem:[#allocation10 + $0x794] sm:$0xff]
    %v3387 = vld [vmem:[#allocation10 + $0x79c] sm:$0xff]
    %v3388 = vld [vmem:[#allocation10 + $0x7a4] sm:$0xf]
    %v3389 = vld [vmem:[#allocation10 + $0x7a8] sm:$0xff]
    %v3390 = vld [vmem:[#allocation10 + $0x7b0] sm:$0xff]
    %v3391 = vld [vmem:[#allocation10 + $0x7b8] sm:$0xff]
    %v3392 = vld [vmem:[#allocation10 + $0x7c0] sm:$0xf]
    %v3393 = vld [vmem:[#allocation10 + $0x7c4] sm:$0xff]
    %v3394 = vld [vmem:[#allocation10 + $0x7cc] sm:$0xff]
    %v3395 = vld [vmem:[#allocation10 + $0x7d4] sm:$0xff]
    %v3396 = vld [vmem:[#allocation10 + $0x7dc] sm:$0xf]
    %v3397 = vld [vmem:[#allocation10 + $0x7e0] sm:$0xff]
    %v3398 = vld [vmem:[#allocation10 + $0x7e8] sm:$0xff]
    %v3399 = vld [vmem:[#allocation10 + $0x7f0] sm:$0xff]
    %v3400 = vld [vmem:[#allocation10 + $0x7f8] sm:$0xf]
    %v3401 = vld [vmem:[#allocation10 + $0x7fc] sm:$0xff]
    %v3402 = vld [vmem:[#allocation10 + $0x804] sm:$0xff]
    %v3403 = vld [vmem:[#allocation10 + $0x80c] sm:$0xff]
    %v3404 = vld [vmem:[#allocation10 + $0x814] sm:$0xf]
    %v3405 = vld [vmem:[#allocation10 + $0x818] sm:$0xff]
    %v3406 = vld [vmem:[#allocation10 + $0x820] sm:$0xff]
    %v3407 = vld [vmem:[#allocation10 + $0x828] sm:$0xff]
    %v3408 = vld [vmem:[#allocation10 + $0x830] sm:$0xf]
    %v3409 = vld [vmem:[#allocation10 + $0x834] sm:$0xff]
    %v3410 = vld [vmem:[#allocation10 + $0x83c] sm:$0xff]
    %v3411 = vld [vmem:[#allocation10 + $0x844] sm:$0xff]
    %v3412 = vld [vmem:[#allocation10 + $0x84c] sm:$0xf]
    %v3413 = vld [vmem:[#allocation10 + $0x850] sm:$0xff]
    %v3414 = vld [vmem:[#allocation10 + $0x858] sm:$0xff]
    %v3415 = vld [vmem:[#allocation10 + $0x860] sm:$0xff]
    %v3416 = vld [vmem:[#allocation10 + $0x868] sm:$0xf]
    %v3417 = vld [vmem:[#allocation10 + $0x86c] sm:$0xff]
    %v3418 = vld [vmem:[#allocation10 + $0x874] sm:$0xff]
    %v3419 = vld [vmem:[#allocation10 + $0x87c] sm:$0xff]
    %v3420 = vld [vmem:[#allocation10 + $0x884] sm:$0xf]
    %v3421 = vld [vmem:[#allocation10 + $0x888] sm:$0xff]
    %v3422 = vld [vmem:[#allocation10 + $0x890] sm:$0xff]
    %v3423 = vld [vmem:[#allocation10 + $0x898] sm:$0xff]
    %v3424 = vld [vmem:[#allocation10 + $0x8a0] sm:$0xf]
    %v3425 = vld [vmem:[#allocation10 + $0x8a4] sm:$0xff]
    %v3426 = vld [vmem:[#allocation10 + $0x8ac] sm:$0xff]
    %v3427 = vld [vmem:[#allocation10 + $0x8b4] sm:$0xff]
    %v3428 = vld [vmem:[#allocation10 + $0x8bc] sm:$0xf]
    %v3429 = vld [vmem:[#allocation10 + $0x8c0] sm:$0xff]
    %v3430 = vld [vmem:[#allocation10 + $0x8c8] sm:$0xff]
    %v3431 = vld [vmem:[#allocation10 + $0x8d0] sm:$0xff]
    %v3432 = vld [vmem:[#allocation10 + $0x8d8] sm:$0xf]
    %v3433 = vld [vmem:[#allocation10 + $0x8dc] sm:$0xff]
    %v3434 = vld [vmem:[#allocation10 + $0x8e4] sm:$0xff]
    %v3435 = vld [vmem:[#allocation10 + $0x8ec] sm:$0xff]
    %v3436 = vld [vmem:[#allocation10 + $0x8f4] sm:$0xf]
    %v3437 = vld [vmem:[#allocation10 + $0x8f8] sm:$0xff]
    %v3438 = vld [vmem:[#allocation10 + $0x900] sm:$0xff]
    %v3439 = vld [vmem:[#allocation10 + $0x908] sm:$0xff]
    %v3440 = vld [vmem:[#allocation10 + $0x910] sm:$0xf]
    %v3441 = vld [vmem:[#allocation10 + $0x914] sm:$0xff]
    %v3442 = vld [vmem:[#allocation10 + $0x91c] sm:$0xff]
    %v3443 = vld [vmem:[#allocation10 + $0x924] sm:$0xff]
    %v3444 = vld [vmem:[#allocation10 + $0x92c] sm:$0xf]
    %v3445 = vld [vmem:[#allocation10 + $0x930] sm:$0xff]
    %v3446 = vld [vmem:[#allocation10 + $0x938] sm:$0xff]
    %v3447 = vld [vmem:[#allocation10 + $0x940] sm:$0xff]
    %v3448 = vld [vmem:[#allocation10 + $0x948] sm:$0xf]
    %v3449 = vld [vmem:[#allocation10 + $0x94c] sm:$0xff]
    %v3450 = vld [vmem:[#allocation10 + $0x954] sm:$0xff]
    %v3451 = vld [vmem:[#allocation10 + $0x95c] sm:$0xff]
    %v3452 = vld [vmem:[#allocation10 + $0x964] sm:$0xf]
    %v3453 = vld [vmem:[#allocation10 + $0x968] sm:$0xff]
    %v3454 = vld [vmem:[#allocation10 + $0x970] sm:$0xff]
    %v3455 = vld [vmem:[#allocation10 + $0x978] sm:$0xff]
    %v3456 = vld [vmem:[#allocation10 + $0x980] sm:$0xf]
    %v3457 = vld [vmem:[#allocation10 + $0x984] sm:$0xff]
    %v3458 = vld [vmem:[#allocation10 + $0x98c] sm:$0xff]
    %v3459 = vld [vmem:[#allocation10 + $0x994] sm:$0xff]
    %v3460 = vld [vmem:[#allocation10 + $0x99c] sm:$0xf]
    %v3461 = vld [vmem:[#allocation10 + $0x9a0] sm:$0xff]
    %v3462 = vld [vmem:[#allocation10 + $0x9a8] sm:$0xff]
    %v3463 = vld [vmem:[#allocation10 + $0x9b0] sm:$0xff]
    %v3464 = vld [vmem:[#allocation10 + $0x9b8] sm:$0xf]
    %v3465 = vld [vmem:[#allocation10 + $0x9bc] sm:$0xff]
    %v3466 = vld [vmem:[#allocation10 + $0x9c4] sm:$0xff]
    %v3467 = vld [vmem:[#allocation10 + $0x9cc] sm:$0xff]
    %v3468 = vld [vmem:[#allocation10 + $0x9d4] sm:$0xf]
    %v3469 = vld [vmem:[#allocation10 + $0x9d8] sm:$0xff]
    %v3470 = vld [vmem:[#allocation10 + $0x9e0] sm:$0xff]
    %v3471 = vld [vmem:[#allocation10 + $0x9e8] sm:$0xff]
    %v3472 = vld [vmem:[#allocation10 + $0x9f0] sm:$0xf]
    %v3473 = vld [vmem:[#allocation10 + $0x9f4] sm:$0xff]
    %v3474 = vld [vmem:[#allocation10 + $0x9fc] sm:$0xff]
    %v3475 = vld [vmem:[#allocation10 + $0xa04] sm:$0xff]
    %v3476 = vld [vmem:[#allocation10 + $0xa0c] sm:$0xf]
    %v3477 = vld [vmem:[#allocation10 + $0xa10] sm:$0xff]
    %v3478 = vld [vmem:[#allocation10 + $0xa18] sm:$0xff]
    %v3479 = vld [vmem:[#allocation10 + $0xa20] sm:$0xff]
    %v3480 = vld [vmem:[#allocation10 + $0xa28] sm:$0xf]
    %v3481 = vld [vmem:[#allocation10 + $0xa2c] sm:$0xff]
    %v3482 = vld [vmem:[#allocation10 + $0xa34] sm:$0xff]
    %v3483 = vld [vmem:[#allocation10 + $0xa3c] sm:$0xff]
    %v3484 = vld [vmem:[#allocation10 + $0xa44] sm:$0xf]
    %v3485 = vld [vmem:[#allocation10 + $0xa48] sm:$0xff]
    %v3486 = vld [vmem:[#allocation10 + $0xa50] sm:$0xff]
    %v3487 = vld [vmem:[#allocation10 + $0xa58] sm:$0xff]
    %v3488 = vld [vmem:[#allocation10 + $0xa60] sm:$0xf]
    %v3489 = vld [vmem:[#allocation10 + $0xa64] sm:$0xff]
    %v3490 = vld [vmem:[#allocation10 + $0xa6c] sm:$0xff]
    %v3491 = vld [vmem:[#allocation10 + $0xa74] sm:$0xff]
    %v3492 = vld [vmem:[#allocation10 + $0xa7c] sm:$0xf]
    %v3493 = vld [vmem:[#allocation10 + $0xa80] sm:$0xff]
    %v3494 = vld [vmem:[#allocation10 + $0xa88] sm:$0xff]
    %v3495 = vld [vmem:[#allocation10 + $0xa90] sm:$0xff]
    %v3496 = vld [vmem:[#allocation10 + $0xa98] sm:$0xf]
    %v3497 = vld [vmem:[#allocation10 + $0xa9c] sm:$0xff]
    %v3498 = vld [vmem:[#allocation10 + $0xaa4] sm:$0xff]
    %v3499 = vld [vmem:[#allocation10 + $0xaac] sm:$0xff]
    %v3500 = vld [vmem:[#allocation10 + $0xab4] sm:$0xf]
    %v3501 = vld [vmem:[#allocation10 + $0xab8] sm:$0xff]
    %v3502 = vld [vmem:[#allocation10 + $0xac0] sm:$0xff]
    %v3503 = vld [vmem:[#allocation10 + $0xac8] sm:$0xff]
    %v3504 = vld [vmem:[#allocation10 + $0xad0] sm:$0xf]
    %v3505 = vld [vmem:[#allocation10 + $0xad4] sm:$0xff]
    %v3506 = vld [vmem:[#allocation10 + $0xadc] sm:$0xff]
    %v3507 = vld [vmem:[#allocation10 + $0xae4] sm:$0xff]
    %v3508 = vld [vmem:[#allocation10 + $0xaec] sm:$0xf]
    %v3509 = vld [vmem:[#allocation10 + $0xaf0] sm:$0xff]
    %v3510 = vld [vmem:[#allocation10 + $0xaf8] sm:$0xff]
    %v3511 = vld [vmem:[#allocation10 + $0xb00] sm:$0xff]
    %v3512 = vld [vmem:[#allocation10 + $0xb08] sm:$0xf]
    %v3513 = vld [vmem:[#allocation10 + $0xb0c] sm:$0xff]
    %v3514 = vld [vmem:[#allocation10 + $0xb14] sm:$0xff]
    %v3515 = vld [vmem:[#allocation10 + $0xb1c] sm:$0xff]
    %v3516 = vld [vmem:[#allocation10 + $0xb24] sm:$0xf]
    %v3517 = vld [vmem:[#allocation10 + $0xb28] sm:$0xff]
    %v3518 = vld [vmem:[#allocation10 + $0xb30] sm:$0xff]
    %v3519 = vld [vmem:[#allocation10 + $0xb38] sm:$0xff]
    %v3520 = vld [vmem:[#allocation10 + $0xb40] sm:$0xf]
    %v3521 = vld [vmem:[#allocation10 + $0xb44] sm:$0xff]
    %v3522 = vld [vmem:[#allocation10 + $0xb4c] sm:$0xff]
    %v3523 = vld [vmem:[#allocation10 + $0xb54] sm:$0xff]
    %v3524 = vld [vmem:[#allocation10 + $0xb5c] sm:$0xf]
    %v3525 = vld [vmem:[#allocation10 + $0xb60] sm:$0xff]
    %v3526 = vld [vmem:[#allocation10 + $0xb68] sm:$0xff]
    %v3527 = vld [vmem:[#allocation10 + $0xb70] sm:$0xff]
    %v3528 = vld [vmem:[#allocation10 + $0xb78] sm:$0xf]
    %v3529 = vld [vmem:[#allocation10 + $0xb7c] sm:$0xff]
    %v3530 = vld [vmem:[#allocation10 + $0xb84] sm:$0xff]
    %v3531 = vld [vmem:[#allocation10 + $0xb8c] sm:$0xff]
    %v3532 = vld [vmem:[#allocation10 + $0xb94] sm:$0xf]
    %v3533 = vld [vmem:[#allocation10 + $0xb98] sm:$0xff]
    %v3534 = vld [vmem:[#allocation10 + $0xba0] sm:$0xff]
    %v3535 = vld [vmem:[#allocation10 + $0xba8] sm:$0xff]
    %v3536 = vld [vmem:[#allocation10 + $0xbb0] sm:$0xf]
    %v3537 = vld [vmem:[#allocation10 + $0xbb4] sm:$0xff]
    %v3538 = vld [vmem:[#allocation10 + $0xbbc] sm:$0xff]
    %v3539 = vld [vmem:[#allocation10 + $0xbc4] sm:$0xff]
    %v3540 = vld [vmem:[#allocation10 + $0xbcc] sm:$0xf]
    %v3541 = vld [vmem:[#allocation10 + $0xbd0] sm:$0xff]
    %v3542 = vld [vmem:[#allocation10 + $0xbd8] sm:$0xff]
    %v3543 = vld [vmem:[#allocation10 + $0xbe0] sm:$0xff]
    %v3544 = vld [vmem:[#allocation10 + $0xbe8] sm:$0xf]
    %v3545 = vld [vmem:[#allocation10 + $0xbec] sm:$0xff]
    %v3546 = vld [vmem:[#allocation10 + $0xbf4] sm:$0xff]
    %v3547 = vld [vmem:[#allocation10 + $0xbfc] sm:$0xff]
    %v3548 = vld [vmem:[#allocation10 + $0xc04] sm:$0xf]
    %v3549 = vld [vmem:[#allocation10 + $0xc08] sm:$0xff]
    %v3550 = vld [vmem:[#allocation10 + $0xc10] sm:$0xff]
    %v3551 = vld [vmem:[#allocation10 + $0xc18] sm:$0xff]
    %v3552 = vld [vmem:[#allocation10 + $0xc20] sm:$0xf]
    %v3553 = vld [vmem:[#allocation10 + $0xc24] sm:$0xff]
    %v3554 = vld [vmem:[#allocation10 + $0xc2c] sm:$0xff]
    %v3555 = vld [vmem:[#allocation10 + $0xc34] sm:$0xff]
    %v3556 = vld [vmem:[#allocation10 + $0xc3c] sm:$0xf]
    %v3557 = vld [vmem:[#allocation10 + $0xc40] sm:$0xff]
    %v3558 = vld [vmem:[#allocation10 + $0xc48] sm:$0xff]
    %v3559 = vld [vmem:[#allocation10 + $0xc50] sm:$0xff]
    %v3560 = vld [vmem:[#allocation10 + $0xc58] sm:$0xf]
    %v3561 = vld [vmem:[#allocation10 + $0xc5c] sm:$0xff]
    %v3562 = vld [vmem:[#allocation10 + $0xc64] sm:$0xff]
    %v3563 = vld [vmem:[#allocation10 + $0xc6c] sm:$0xff]
    %v3564 = vld [vmem:[#allocation10 + $0xc74] sm:$0xf]
    %v3565 = vld [vmem:[#allocation10 + $0xc78] sm:$0xff]
    %v3566 = vld [vmem:[#allocation10 + $0xc80] sm:$0xff]
    %v3567 = vld [vmem:[#allocation10 + $0xc88] sm:$0xff]
    %v3568 = vld [vmem:[#allocation10 + $0xc90] sm:$0xf]
    %v3569 = vld [vmem:[#allocation10 + $0xc94] sm:$0xff]
    %v3570 = vld [vmem:[#allocation10 + $0xc9c] sm:$0xff]
    %v3571 = vld [vmem:[#allocation10 + $0xca4] sm:$0xff]
    %v3572 = vld [vmem:[#allocation10 + $0xcac] sm:$0xf]
    %v3573 = vld [vmem:[#allocation10 + $0xcb0] sm:$0xff]
    %v3574 = vld [vmem:[#allocation10 + $0xcb8] sm:$0xff]
    %v3575 = vld [vmem:[#allocation10 + $0xcc0] sm:$0xff]
    %v3576 = vld [vmem:[#allocation10 + $0xcc8] sm:$0xf]
    %v3577 = vld [vmem:[#allocation10 + $0xccc] sm:$0xff]
    %v3578 = vld [vmem:[#allocation10 + $0xcd4] sm:$0xff]
    %v3579 = vld [vmem:[#allocation10 + $0xcdc] sm:$0xff]
    %v3580 = vld [vmem:[#allocation10 + $0xce4] sm:$0xf]
    %v3581 = vld [vmem:[#allocation10 + $0xce8] sm:$0xff]
    %v3582 = vld [vmem:[#allocation10 + $0xcf0] sm:$0xff]
    %v3583 = vld [vmem:[#allocation10 + $0xcf8] sm:$0xff]
    %v3584 = vld [vmem:[#allocation10 + $0xd00] sm:$0xf]
    %v3585 = vld [vmem:[#allocation10 + $0xd04] sm:$0xff]
    %v3586 = vld [vmem:[#allocation10 + $0xd0c] sm:$0xff]
    %v3587 = vld [vmem:[#allocation10 + $0xd14] sm:$0xff]
    %v3588 = vld [vmem:[#allocation10 + $0xd1c] sm:$0xf]
    %v3589 = vld [vmem:[#allocation10 + $0xd20] sm:$0xff]
    %v3590 = vld [vmem:[#allocation10 + $0xd28] sm:$0xff]
    %v3591 = vld [vmem:[#allocation10 + $0xd30] sm:$0xff]
    %v3592 = vld [vmem:[#allocation10 + $0xd38] sm:$0xf]
    %v3593 = vld [vmem:[#allocation10 + $0xd3c] sm:$0xff]
    %v3594 = vld [vmem:[#allocation10 + $0xd44] sm:$0xff]
    %v3595 = vld [vmem:[#allocation10 + $0xd4c] sm:$0xff]
    %v3596 = vld [vmem:[#allocation10 + $0xd54] sm:$0xf]
    %v3597 = vld [vmem:[#allocation10 + $0xd58] sm:$0xff]
    %v3598 = vld [vmem:[#allocation10 + $0xd60] sm:$0xff]
    %v3599 = vld [vmem:[#allocation10 + $0xd68] sm:$0xff]
    %v3600 = vld [vmem:[#allocation10 + $0xd70] sm:$0xf]
    %v3601 = vld [vmem:[#allocation10 + $0xd74] sm:$0xff]
    %v3602 = vld [vmem:[#allocation10 + $0xd7c] sm:$0xff]
    %v3603 = vld [vmem:[#allocation10 + $0xd84] sm:$0xff]
    %v3604 = vld [vmem:[#allocation10 + $0xd8c] sm:$0xf]
    %v3605 = vld [vmem:[#allocation10 + $0xd90] sm:$0xff]
    %v3606 = vld [vmem:[#allocation10 + $0xd98] sm:$0xff]
    %v3607 = vld [vmem:[#allocation10 + $0xda0] sm:$0xff]
    %v3608 = vld [vmem:[#allocation10 + $0xda8] sm:$0xf]
    %v3609 = vld [vmem:[#allocation10 + $0xdac] sm:$0xff]
    %v3610 = vld [vmem:[#allocation10 + $0xdb4] sm:$0xff]
    %v3611 = vld [vmem:[#allocation10 + $0xdbc] sm:$0xff]
    %v3612 = vld [vmem:[#allocation10 + $0xdc4] sm:$0xf]
    %v3613 = vld [vmem:[#allocation10 + $0xdc8] sm:$0xff]
    %v3614 = vld [vmem:[#allocation10 + $0xdd0] sm:$0xff]
    %v3615 = vld [vmem:[#allocation10 + $0xdd8] sm:$0xff]
    %v3616 = vld [vmem:[#allocation10 + $0xde0] sm:$0xf]
    %v3617 = vld [vmem:[#allocation10 + $0xde4] sm:$0xff]
    %v3618 = vld [vmem:[#allocation10 + $0xdec] sm:$0xff]
    %v3619 = vld [vmem:[#allocation10 + $0xdf4] sm:$0xff]
    %v3620 = vld [vmem:[#allocation10 + $0xdfc] sm:$0xf]
    %v4133 = vunpack.c.l.b16 %v3109
    %v4134 = vunpack.c.h.b16 %v3109
    %v4135 = vunpack.c.l.b16 %v3110
    %v4136 = vunpack.c.h.b16 %v3110
    %v4137 = vunpack.c.l.b16 %v3111
    %v4138 = vunpack.c.h.b16 %v3111
    %v4139 = vunpack.c.l.b16 %v3112
    %v4140 = vunpack.c.l.b16 %v3113
    %v4141 = vunpack.c.h.b16 %v3113
    %v4142 = vunpack.c.l.b16 %v3114
    %v4143 = vunpack.c.h.b16 %v3114
    %v4144 = vunpack.c.l.b16 %v3115
    %v4145 = vunpack.c.h.b16 %v3115
    %v4146 = vunpack.c.l.b16 %v3116
    %v4147 = vunpack.c.l.b16 %v3117
    %v4148 = vunpack.c.h.b16 %v3117
    %v4149 = vunpack.c.l.b16 %v3118
    %v4150 = vunpack.c.h.b16 %v3118
    %v4151 = vunpack.c.l.b16 %v3119
    %v4152 = vunpack.c.h.b16 %v3119
    %v4153 = vunpack.c.l.b16 %v3120
    %v4154 = vunpack.c.l.b16 %v3121
    %v4155 = vunpack.c.h.b16 %v3121
    %v4156 = vunpack.c.l.b16 %v3122
    %v4157 = vunpack.c.h.b16 %v3122
    %v4158 = vunpack.c.l.b16 %v3123
    %v4159 = vunpack.c.h.b16 %v3123
    %v4160 = vunpack.c.l.b16 %v3124
    %v4161 = vunpack.c.l.b16 %v3125
    %v4162 = vunpack.c.h.b16 %v3125
    %v4163 = vunpack.c.l.b16 %v3126
    %v4164 = vunpack.c.h.b16 %v3126
    %v4165 = vunpack.c.l.b16 %v3127
    %v4166 = vunpack.c.h.b16 %v3127
    %v4167 = vunpack.c.l.b16 %v3128
    %v4168 = vunpack.c.l.b16 %v3129
    %v4169 = vunpack.c.h.b16 %v3129
    %v4170 = vunpack.c.l.b16 %v3130
    %v4171 = vunpack.c.h.b16 %v3130
    %v4172 = vunpack.c.l.b16 %v3131
    %v4173 = vunpack.c.h.b16 %v3131
    %v4174 = vunpack.c.l.b16 %v3132
    %v4175 = vunpack.c.l.b16 %v3133
    %v4176 = vunpack.c.h.b16 %v3133
    %v4177 = vunpack.c.l.b16 %v3134
    %v4178 = vunpack.c.h.b16 %v3134
    %v4179 = vunpack.c.l.b16 %v3135
    %v4180 = vunpack.c.h.b16 %v3135
    %v4181 = vunpack.c.l.b16 %v3136
    %v4182 = vunpack.c.l.b16 %v3137
    %v4183 = vunpack.c.h.b16 %v3137
    %v4184 = vunpack.c.l.b16 %v3138
    %v4185 = vunpack.c.h.b16 %v3138
    %v4186 = vunpack.c.l.b16 %v3139
    %v4187 = vunpack.c.h.b16 %v3139
    %v4188 = vunpack.c.l.b16 %v3140
    %v4189 = vunpack.c.l.b16 %v3141
    %v4190 = vunpack.c.h.b16 %v3141
    %v4191 = vunpack.c.l.b16 %v3142
    %v4192 = vunpack.c.h.b16 %v3142
    %v4193 = vunpack.c.l.b16 %v3143
    %v4194 = vunpack.c.h.b16 %v3143
    %v4195 = vunpack.c.l.b16 %v3144
    %v4196 = vunpack.c.l.b16 %v3145
    %v4197 = vunpack.c.h.b16 %v3145
    %v4198 = vunpack.c.l.b16 %v3146
    %v4199 = vunpack.c.h.b16 %v3146
    %v4200 = vunpack.c.l.b16 %v3147
    %v4201 = vunpack.c.h.b16 %v3147
    %v4202 = vunpack.c.l.b16 %v3148
    %v4203 = vunpack.c.l.b16 %v3149
    %v4204 = vunpack.c.h.b16 %v3149
    %v4205 = vunpack.c.l.b16 %v3150
    %v4206 = vunpack.c.h.b16 %v3150
    %v4207 = vunpack.c.l.b16 %v3151
    %v4208 = vunpack.c.h.b16 %v3151
    %v4209 = vunpack.c.l.b16 %v3152
    %v4210 = vunpack.c.l.b16 %v3153
    %v4211 = vunpack.c.h.b16 %v3153
    %v4212 = vunpack.c.l.b16 %v3154
    %v4213 = vunpack.c.h.b16 %v3154
    %v4214 = vunpack.c.l.b16 %v3155
    %v4215 = vunpack.c.h.b16 %v3155
    %v4216 = vunpack.c.l.b16 %v3156
    %v4217 = vunpack.c.l.b16 %v3157
    %v4218 = vunpack.c.h.b16 %v3157
    %v4219 = vunpack.c.l.b16 %v3158
    %v4220 = vunpack.c.h.b16 %v3158
    %v4221 = vunpack.c.l.b16 %v3159
    %v4222 = vunpack.c.h.b16 %v3159
    %v4223 = vunpack.c.l.b16 %v3160
    %v4224 = vunpack.c.l.b16 %v3161
    %v4225 = vunpack.c.h.b16 %v3161
    %v4226 = vunpack.c.l.b16 %v3162
    %v4227 = vunpack.c.h.b16 %v3162
    %v4228 = vunpack.c.l.b16 %v3163
    %v4229 = vunpack.c.h.b16 %v3163
    %v4230 = vunpack.c.l.b16 %v3164
    %v4231 = vunpack.c.l.b16 %v3165
    %v4232 = vunpack.c.h.b16 %v3165
    %v4233 = vunpack.c.l.b16 %v3166
    %v4234 = vunpack.c.h.b16 %v3166
    %v4235 = vunpack.c.l.b16 %v3167
    %v4236 = vunpack.c.h.b16 %v3167
    %v4237 = vunpack.c.l.b16 %v3168
    %v4238 = vunpack.c.l.b16 %v3169
    %v4239 = vunpack.c.h.b16 %v3169
    %v4240 = vunpack.c.l.b16 %v3170
    %v4241 = vunpack.c.h.b16 %v3170
    %v4242 = vunpack.c.l.b16 %v3171
    %v4243 = vunpack.c.h.b16 %v3171
    %v4244 = vunpack.c.l.b16 %v3172
    %v4245 = vunpack.c.l.b16 %v3173
    %v4246 = vunpack.c.h.b16 %v3173
    %v4247 = vunpack.c.l.b16 %v3174
    %v4248 = vunpack.c.h.b16 %v3174
    %v4249 = vunpack.c.l.b16 %v3175
    %v4250 = vunpack.c.h.b16 %v3175
    %v4251 = vunpack.c.l.b16 %v3176
    %v4252 = vunpack.c.l.b16 %v3177
    %v4253 = vunpack.c.h.b16 %v3177
    %v4254 = vunpack.c.l.b16 %v3178
    %v4255 = vunpack.c.h.b16 %v3178
    %v4256 = vunpack.c.l.b16 %v3179
    %v4257 = vunpack.c.h.b16 %v3179
    %v4258 = vunpack.c.l.b16 %v3180
    %v4259 = vunpack.c.l.b16 %v3181
    %v4260 = vunpack.c.h.b16 %v3181
    %v4261 = vunpack.c.l.b16 %v3182
    %v4262 = vunpack.c.h.b16 %v3182
    %v4263 = vunpack.c.l.b16 %v3183
    %v4264 = vunpack.c.h.b16 %v3183
    %v4265 = vunpack.c.l.b16 %v3184
    %v4266 = vunpack.c.l.b16 %v3185
    %v4267 = vunpack.c.h.b16 %v3185
    %v4268 = vunpack.c.l.b16 %v3186
    %v4269 = vunpack.c.h.b16 %v3186
    %v4270 = vunpack.c.l.b16 %v3187
    %v4271 = vunpack.c.h.b16 %v3187
    %v4272 = vunpack.c.l.b16 %v3188
    %v4273 = vunpack.c.l.b16 %v3189
    %v4274 = vunpack.c.h.b16 %v3189
    %v4275 = vunpack.c.l.b16 %v3190
    %v4276 = vunpack.c.h.b16 %v3190
    %v4277 = vunpack.c.l.b16 %v3191
    %v4278 = vunpack.c.h.b16 %v3191
    %v4279 = vunpack.c.l.b16 %v3192
    %v4280 = vunpack.c.l.b16 %v3193
    %v4281 = vunpack.c.h.b16 %v3193
    %v4282 = vunpack.c.l.b16 %v3194
    %v4283 = vunpack.c.h.b16 %v3194
    %v4284 = vunpack.c.l.b16 %v3195
    %v4285 = vunpack.c.h.b16 %v3195
    %v4286 = vunpack.c.l.b16 %v3196
    %v4287 = vunpack.c.l.b16 %v3197
    %v4288 = vunpack.c.h.b16 %v3197
    %v4289 = vunpack.c.l.b16 %v3198
    %v4290 = vunpack.c.h.b16 %v3198
    %v4291 = vunpack.c.l.b16 %v3199
    %v4292 = vunpack.c.h.b16 %v3199
    %v4293 = vunpack.c.l.b16 %v3200
    %v4294 = vunpack.c.l.b16 %v3201
    %v4295 = vunpack.c.h.b16 %v3201
    %v4296 = vunpack.c.l.b16 %v3202
    %v4297 = vunpack.c.h.b16 %v3202
    %v4298 = vunpack.c.l.b16 %v3203
    %v4299 = vunpack.c.h.b16 %v3203
    %v4300 = vunpack.c.l.b16 %v3204
    %v4301 = vunpack.c.l.b16 %v3205
    %v4302 = vunpack.c.h.b16 %v3205
    %v4303 = vunpack.c.l.b16 %v3206
    %v4304 = vunpack.c.h.b16 %v3206
    %v4305 = vunpack.c.l.b16 %v3207
    %v4306 = vunpack.c.h.b16 %v3207
    %v4307 = vunpack.c.l.b16 %v3208
    %v4308 = vunpack.c.l.b16 %v3209
    %v4309 = vunpack.c.h.b16 %v3209
    %v4310 = vunpack.c.l.b16 %v3210
    %v4311 = vunpack.c.h.b16 %v3210
    %v4312 = vunpack.c.l.b16 %v3211
    %v4313 = vunpack.c.h.b16 %v3211
    %v4314 = vunpack.c.l.b16 %v3212
    %v4315 = vunpack.c.l.b16 %v3213
    %v4316 = vunpack.c.h.b16 %v3213
    %v4317 = vunpack.c.l.b16 %v3214
    %v4318 = vunpack.c.h.b16 %v3214
    %v4319 = vunpack.c.l.b16 %v3215
    %v4320 = vunpack.c.h.b16 %v3215
    %v4321 = vunpack.c.l.b16 %v3216
    %v4322 = vunpack.c.l.b16 %v3217
    %v4323 = vunpack.c.h.b16 %v3217
    %v4324 = vunpack.c.l.b16 %v3218
    %v4325 = vunpack.c.h.b16 %v3218
    %v4326 = vunpack.c.l.b16 %v3219
    %v4327 = vunpack.c.h.b16 %v3219
    %v4328 = vunpack.c.l.b16 %v3220
    %v4329 = vunpack.c.l.b16 %v3221
    %v4330 = vunpack.c.h.b16 %v3221
    %v4331 = vunpack.c.l.b16 %v3222
    %v4332 = vunpack.c.h.b16 %v3222
    %v4333 = vunpack.c.l.b16 %v3223
    %v4334 = vunpack.c.h.b16 %v3223
    %v4335 = vunpack.c.l.b16 %v3224
    %v4336 = vunpack.c.l.b16 %v3225
    %v4337 = vunpack.c.h.b16 %v3225
    %v4338 = vunpack.c.l.b16 %v3226
    %v4339 = vunpack.c.h.b16 %v3226
    %v4340 = vunpack.c.l.b16 %v3227
    %v4341 = vunpack.c.h.b16 %v3227
    %v4342 = vunpack.c.l.b16 %v3228
    %v4343 = vunpack.c.l.b16 %v3229
    %v4344 = vunpack.c.h.b16 %v3229
    %v4345 = vunpack.c.l.b16 %v3230
    %v4346 = vunpack.c.h.b16 %v3230
    %v4347 = vunpack.c.l.b16 %v3231
    %v4348 = vunpack.c.h.b16 %v3231
    %v4349 = vunpack.c.l.b16 %v3232
    %v4350 = vunpack.c.l.b16 %v3233
    %v4351 = vunpack.c.h.b16 %v3233
    %v4352 = vunpack.c.l.b16 %v3234
    %v4353 = vunpack.c.h.b16 %v3234
    %v4354 = vunpack.c.l.b16 %v3235
    %v4355 = vunpack.c.h.b16 %v3235
    %v4356 = vunpack.c.l.b16 %v3236
    %v4357 = vunpack.c.l.b16 %v3237
    %v4358 = vunpack.c.h.b16 %v3237
    %v4359 = vunpack.c.l.b16 %v3238
    %v4360 = vunpack.c.h.b16 %v3238
    %v4361 = vunpack.c.l.b16 %v3239
    %v4362 = vunpack.c.h.b16 %v3239
    %v4363 = vunpack.c.l.b16 %v3240
    %v4364 = vunpack.c.l.b16 %v3241
    %v4365 = vunpack.c.h.b16 %v3241
    %v4366 = vunpack.c.l.b16 %v3242
    %v4367 = vunpack.c.h.b16 %v3242
    %v4368 = vunpack.c.l.b16 %v3243
    %v4369 = vunpack.c.h.b16 %v3243
    %v4370 = vunpack.c.l.b16 %v3244
    %v4371 = vunpack.c.l.b16 %v3245
    %v4372 = vunpack.c.h.b16 %v3245
    %v4373 = vunpack.c.l.b16 %v3246
    %v4374 = vunpack.c.h.b16 %v3246
    %v4375 = vunpack.c.l.b16 %v3247
    %v4376 = vunpack.c.h.b16 %v3247
    %v4377 = vunpack.c.l.b16 %v3248
    %v4378 = vunpack.c.l.b16 %v3249
    %v4379 = vunpack.c.h.b16 %v3249
    %v4380 = vunpack.c.l.b16 %v3250
    %v4381 = vunpack.c.h.b16 %v3250
    %v4382 = vunpack.c.l.b16 %v3251
    %v4383 = vunpack.c.h.b16 %v3251
    %v4384 = vunpack.c.l.b16 %v3252
    %v4385 = vunpack.c.l.b16 %v3253
    %v4386 = vunpack.c.h.b16 %v3253
    %v4387 = vunpack.c.l.b16 %v3254
    %v4388 = vunpack.c.h.b16 %v3254
    %v4389 = vunpack.c.l.b16 %v3255
    %v4390 = vunpack.c.h.b16 %v3255
    %v4391 = vunpack.c.l.b16 %v3256
    %v4392 = vunpack.c.l.b16 %v3257
    %v4393 = vunpack.c.h.b16 %v3257
    %v4394 = vunpack.c.l.b16 %v3258
    %v4395 = vunpack.c.h.b16 %v3258
    %v4396 = vunpack.c.l.b16 %v3259
    %v4397 = vunpack.c.h.b16 %v3259
    %v4398 = vunpack.c.l.b16 %v3260
    %v4399 = vunpack.c.l.b16 %v3261
    %v4400 = vunpack.c.h.b16 %v3261
    %v4401 = vunpack.c.l.b16 %v3262
    %v4402 = vunpack.c.h.b16 %v3262
    %v4403 = vunpack.c.l.b16 %v3263
    %v4404 = vunpack.c.h.b16 %v3263
    %v4405 = vunpack.c.l.b16 %v3264
    %v4406 = vunpack.c.l.b16 %v3265
    %v4407 = vunpack.c.h.b16 %v3265
    %v4408 = vunpack.c.l.b16 %v3266
    %v4409 = vunpack.c.h.b16 %v3266
    %v4410 = vunpack.c.l.b16 %v3267
    %v4411 = vunpack.c.h.b16 %v3267
    %v4412 = vunpack.c.l.b16 %v3268
    %v4413 = vunpack.c.l.b16 %v3269
    %v4414 = vunpack.c.h.b16 %v3269
    %v4415 = vunpack.c.l.b16 %v3270
    %v4416 = vunpack.c.h.b16 %v3270
    %v4417 = vunpack.c.l.b16 %v3271
    %v4418 = vunpack.c.h.b16 %v3271
    %v4419 = vunpack.c.l.b16 %v3272
    %v4420 = vunpack.c.l.b16 %v3273
    %v4421 = vunpack.c.h.b16 %v3273
    %v4422 = vunpack.c.l.b16 %v3274
    %v4423 = vunpack.c.h.b16 %v3274
    %v4424 = vunpack.c.l.b16 %v3275
    %v4425 = vunpack.c.h.b16 %v3275
    %v4426 = vunpack.c.l.b16 %v3276
    %v4427 = vunpack.c.l.b16 %v3277
    %v4428 = vunpack.c.h.b16 %v3277
    %v4429 = vunpack.c.l.b16 %v3278
    %v4430 = vunpack.c.h.b16 %v3278
    %v4431 = vunpack.c.l.b16 %v3279
    %v4432 = vunpack.c.h.b16 %v3279
    %v4433 = vunpack.c.l.b16 %v3280
    %v4434 = vunpack.c.l.b16 %v3281
    %v4435 = vunpack.c.h.b16 %v3281
    %v4436 = vunpack.c.l.b16 %v3282
    %v4437 = vunpack.c.h.b16 %v3282
    %v4438 = vunpack.c.l.b16 %v3283
    %v4439 = vunpack.c.h.b16 %v3283
    %v4440 = vunpack.c.l.b16 %v3284
    %v4441 = vunpack.c.l.b16 %v3285
    %v4442 = vunpack.c.h.b16 %v3285
    %v4443 = vunpack.c.l.b16 %v3286
    %v4444 = vunpack.c.h.b16 %v3286
    %v4445 = vunpack.c.l.b16 %v3287
    %v4446 = vunpack.c.h.b16 %v3287
    %v4447 = vunpack.c.l.b16 %v3288
    %v4448 = vunpack.c.l.b16 %v3289
    %v4449 = vunpack.c.h.b16 %v3289
    %v4450 = vunpack.c.l.b16 %v3290
    %v4451 = vunpack.c.h.b16 %v3290
    %v4452 = vunpack.c.l.b16 %v3291
    %v4453 = vunpack.c.h.b16 %v3291
    %v4454 = vunpack.c.l.b16 %v3292
    %v4455 = vunpack.c.l.b16 %v3293
    %v4456 = vunpack.c.h.b16 %v3293
    %v4457 = vunpack.c.l.b16 %v3294
    %v4458 = vunpack.c.h.b16 %v3294
    %v4459 = vunpack.c.l.b16 %v3295
    %v4460 = vunpack.c.h.b16 %v3295
    %v4461 = vunpack.c.l.b16 %v3296
    %v4462 = vunpack.c.l.b16 %v3297
    %v4463 = vunpack.c.h.b16 %v3297
    %v4464 = vunpack.c.l.b16 %v3298
    %v4465 = vunpack.c.h.b16 %v3298
    %v4466 = vunpack.c.l.b16 %v3299
    %v4467 = vunpack.c.h.b16 %v3299
    %v4468 = vunpack.c.l.b16 %v3300
    %v4469 = vunpack.c.l.b16 %v3301
    %v4470 = vunpack.c.h.b16 %v3301
    %v4471 = vunpack.c.l.b16 %v3302
    %v4472 = vunpack.c.h.b16 %v3302
    %v4473 = vunpack.c.l.b16 %v3303
    %v4474 = vunpack.c.h.b16 %v3303
    %v4475 = vunpack.c.l.b16 %v3304
    %v4476 = vunpack.c.l.b16 %v3305
    %v4477 = vunpack.c.h.b16 %v3305
    %v4478 = vunpack.c.l.b16 %v3306
    %v4479 = vunpack.c.h.b16 %v3306
    %v4480 = vunpack.c.l.b16 %v3307
    %v4481 = vunpack.c.h.b16 %v3307
    %v4482 = vunpack.c.l.b16 %v3308
    %v4483 = vunpack.c.l.b16 %v3309
    %v4484 = vunpack.c.h.b16 %v3309
    %v4485 = vunpack.c.l.b16 %v3310
    %v4486 = vunpack.c.h.b16 %v3310
    %v4487 = vunpack.c.l.b16 %v3311
    %v4488 = vunpack.c.h.b16 %v3311
    %v4489 = vunpack.c.l.b16 %v3312
    %v4490 = vunpack.c.l.b16 %v3313
    %v4491 = vunpack.c.h.b16 %v3313
    %v4492 = vunpack.c.l.b16 %v3314
    %v4493 = vunpack.c.h.b16 %v3314
    %v4494 = vunpack.c.l.b16 %v3315
    %v4495 = vunpack.c.h.b16 %v3315
    %v4496 = vunpack.c.l.b16 %v3316
    %v4497 = vunpack.c.l.b16 %v3317
    %v4498 = vunpack.c.h.b16 %v3317
    %v4499 = vunpack.c.l.b16 %v3318
    %v4500 = vunpack.c.h.b16 %v3318
    %v4501 = vunpack.c.l.b16 %v3319
    %v4502 = vunpack.c.h.b16 %v3319
    %v4503 = vunpack.c.l.b16 %v3320
    %v4504 = vunpack.c.l.b16 %v3321
    %v4505 = vunpack.c.h.b16 %v3321
    %v4506 = vunpack.c.l.b16 %v3322
    %v4507 = vunpack.c.h.b16 %v3322
    %v4508 = vunpack.c.l.b16 %v3323
    %v4509 = vunpack.c.h.b16 %v3323
    %v4510 = vunpack.c.l.b16 %v3324
    %v4511 = vunpack.c.l.b16 %v3325
    %v4512 = vunpack.c.h.b16 %v3325
    %v4513 = vunpack.c.l.b16 %v3326
    %v4514 = vunpack.c.h.b16 %v3326
    %v4515 = vunpack.c.l.b16 %v3327
    %v4516 = vunpack.c.h.b16 %v3327
    %v4517 = vunpack.c.l.b16 %v3328
    %v4518 = vunpack.c.l.b16 %v3329
    %v4519 = vunpack.c.h.b16 %v3329
    %v4520 = vunpack.c.l.b16 %v3330
    %v4521 = vunpack.c.h.b16 %v3330
    %v4522 = vunpack.c.l.b16 %v3331
    %v4523 = vunpack.c.h.b16 %v3331
    %v4524 = vunpack.c.l.b16 %v3332
    %v4525 = vunpack.c.l.b16 %v3333
    %v4526 = vunpack.c.h.b16 %v3333
    %v4527 = vunpack.c.l.b16 %v3334
    %v4528 = vunpack.c.h.b16 %v3334
    %v4529 = vunpack.c.l.b16 %v3335
    %v4530 = vunpack.c.h.b16 %v3335
    %v4531 = vunpack.c.l.b16 %v3336
    %v4532 = vunpack.c.l.b16 %v3337
    %v4533 = vunpack.c.h.b16 %v3337
    %v4534 = vunpack.c.l.b16 %v3338
    %v4535 = vunpack.c.h.b16 %v3338
    %v4536 = vunpack.c.l.b16 %v3339
    %v4537 = vunpack.c.h.b16 %v3339
    %v4538 = vunpack.c.l.b16 %v3340
    %v4539 = vunpack.c.l.b16 %v3341
    %v4540 = vunpack.c.h.b16 %v3341
    %v4541 = vunpack.c.l.b16 %v3342
    %v4542 = vunpack.c.h.b16 %v3342
    %v4543 = vunpack.c.l.b16 %v3343
    %v4544 = vunpack.c.h.b16 %v3343
    %v4545 = vunpack.c.l.b16 %v3344
    %v4546 = vunpack.c.l.b16 %v3345
    %v4547 = vunpack.c.h.b16 %v3345
    %v4548 = vunpack.c.l.b16 %v3346
    %v4549 = vunpack.c.h.b16 %v3346
    %v4550 = vunpack.c.l.b16 %v3347
    %v4551 = vunpack.c.h.b16 %v3347
    %v4552 = vunpack.c.l.b16 %v3348
    %v4553 = vunpack.c.l.b16 %v3349
    %v4554 = vunpack.c.h.b16 %v3349
    %v4555 = vunpack.c.l.b16 %v3350
    %v4556 = vunpack.c.h.b16 %v3350
    %v4557 = vunpack.c.l.b16 %v3351
    %v4558 = vunpack.c.h.b16 %v3351
    %v4559 = vunpack.c.l.b16 %v3352
    %v4560 = vunpack.c.l.b16 %v3353
    %v4561 = vunpack.c.h.b16 %v3353
    %v4562 = vunpack.c.l.b16 %v3354
    %v4563 = vunpack.c.h.b16 %v3354
    %v4564 = vunpack.c.l.b16 %v3355
    %v4565 = vunpack.c.h.b16 %v3355
    %v4566 = vunpack.c.l.b16 %v3356
    %v4567 = vunpack.c.l.b16 %v3357
    %v4568 = vunpack.c.h.b16 %v3357
    %v4569 = vunpack.c.l.b16 %v3358
    %v4570 = vunpack.c.h.b16 %v3358
    %v4571 = vunpack.c.l.b16 %v3359
    %v4572 = vunpack.c.h.b16 %v3359
    %v4573 = vunpack.c.l.b16 %v3360
    %v4574 = vunpack.c.l.b16 %v3361
    %v4575 = vunpack.c.h.b16 %v3361
    %v4576 = vunpack.c.l.b16 %v3362
    %v4577 = vunpack.c.h.b16 %v3362
    %v4578 = vunpack.c.l.b16 %v3363
    %v4579 = vunpack.c.h.b16 %v3363
    %v4580 = vunpack.c.l.b16 %v3364
    %v4581 = vunpack.c.l.b16 %v3365
    %v4582 = vunpack.c.h.b16 %v3365
    %v4583 = vunpack.c.l.b16 %v3366
    %v4584 = vunpack.c.h.b16 %v3366
    %v4585 = vunpack.c.l.b16 %v3367
    %v4586 = vunpack.c.h.b16 %v3367
    %v4587 = vunpack.c.l.b16 %v3368
    %v4588 = vunpack.c.l.b16 %v3369
    %v4589 = vunpack.c.h.b16 %v3369
    %v4590 = vunpack.c.l.b16 %v3370
    %v4591 = vunpack.c.h.b16 %v3370
    %v4592 = vunpack.c.l.b16 %v3371
    %v4593 = vunpack.c.h.b16 %v3371
    %v4594 = vunpack.c.l.b16 %v3372
    %v4595 = vunpack.c.l.b16 %v3373
    %v4596 = vunpack.c.h.b16 %v3373
    %v4597 = vunpack.c.l.b16 %v3374
    %v4598 = vunpack.c.h.b16 %v3374
    %v4599 = vunpack.c.l.b16 %v3375
    %v4600 = vunpack.c.h.b16 %v3375
    %v4601 = vunpack.c.l.b16 %v3376
    %v4602 = vunpack.c.l.b16 %v3377
    %v4603 = vunpack.c.h.b16 %v3377
    %v4604 = vunpack.c.l.b16 %v3378
    %v4605 = vunpack.c.h.b16 %v3378
    %v4606 = vunpack.c.l.b16 %v3379
    %v4607 = vunpack.c.h.b16 %v3379
    %v4608 = vunpack.c.l.b16 %v3380
    %v4609 = vunpack.c.l.b16 %v3381
    %v4610 = vunpack.c.h.b16 %v3381
    %v4611 = vunpack.c.l.b16 %v3382
    %v4612 = vunpack.c.h.b16 %v3382
    %v4613 = vunpack.c.l.b16 %v3383
    %v4614 = vunpack.c.h.b16 %v3383
    %v4615 = vunpack.c.l.b16 %v3384
    %v4616 = vunpack.c.l.b16 %v3385
    %v4617 = vunpack.c.h.b16 %v3385
    %v4618 = vunpack.c.l.b16 %v3386
    %v4619 = vunpack.c.h.b16 %v3386
    %v4620 = vunpack.c.l.b16 %v3387
    %v4621 = vunpack.c.h.b16 %v3387
    %v4622 = vunpack.c.l.b16 %v3388
    %v4623 = vunpack.c.l.b16 %v3389
    %v4624 = vunpack.c.h.b16 %v3389
    %v4625 = vunpack.c.l.b16 %v3390
    %v4626 = vunpack.c.h.b16 %v3390
    %v4627 = vunpack.c.l.b16 %v3391
    %v4628 = vunpack.c.h.b16 %v3391
    %v4629 = vunpack.c.l.b16 %v3392
    %v4630 = vunpack.c.l.b16 %v3393
    %v4631 = vunpack.c.h.b16 %v3393
    %v4632 = vunpack.c.l.b16 %v3394
    %v4633 = vunpack.c.h.b16 %v3394
    %v4634 = vunpack.c.l.b16 %v3395
    %v4635 = vunpack.c.h.b16 %v3395
    %v4636 = vunpack.c.l.b16 %v3396
    %v4637 = vunpack.c.l.b16 %v3397
    %v4638 = vunpack.c.h.b16 %v3397
    %v4639 = vunpack.c.l.b16 %v3398
    %v4640 = vunpack.c.h.b16 %v3398
    %v4641 = vunpack.c.l.b16 %v3399
    %v4642 = vunpack.c.h.b16 %v3399
    %v4643 = vunpack.c.l.b16 %v3400
    %v4644 = vunpack.c.l.b16 %v3401
    %v4645 = vunpack.c.h.b16 %v3401
    %v4646 = vunpack.c.l.b16 %v3402
    %v4647 = vunpack.c.h.b16 %v3402
    %v4648 = vunpack.c.l.b16 %v3403
    %v4649 = vunpack.c.h.b16 %v3403
    %v4650 = vunpack.c.l.b16 %v3404
    %v4651 = vunpack.c.l.b16 %v3405
    %v4652 = vunpack.c.h.b16 %v3405
    %v4653 = vunpack.c.l.b16 %v3406
    %v4654 = vunpack.c.h.b16 %v3406
    %v4655 = vunpack.c.l.b16 %v3407
    %v4656 = vunpack.c.h.b16 %v3407
    %v4657 = vunpack.c.l.b16 %v3408
    %v4658 = vunpack.c.l.b16 %v3409
    %v4659 = vunpack.c.h.b16 %v3409
    %v4660 = vunpack.c.l.b16 %v3410
    %v4661 = vunpack.c.h.b16 %v3410
    %v4662 = vunpack.c.l.b16 %v3411
    %v4663 = vunpack.c.h.b16 %v3411
    %v4664 = vunpack.c.l.b16 %v3412
    %v4665 = vunpack.c.l.b16 %v3413
    %v4666 = vunpack.c.h.b16 %v3413
    %v4667 = vunpack.c.l.b16 %v3414
    %v4668 = vunpack.c.h.b16 %v3414
    %v4669 = vunpack.c.l.b16 %v3415
    %v4670 = vunpack.c.h.b16 %v3415
    %v4671 = vunpack.c.l.b16 %v3416
    %v4672 = vunpack.c.l.b16 %v3417
    %v4673 = vunpack.c.h.b16 %v3417
    %v4674 = vunpack.c.l.b16 %v3418
    %v4675 = vunpack.c.h.b16 %v3418
    %v4676 = vunpack.c.l.b16 %v3419
    %v4677 = vunpack.c.h.b16 %v3419
    %v4678 = vunpack.c.l.b16 %v3420
    %v4679 = vunpack.c.l.b16 %v3421
    %v4680 = vunpack.c.h.b16 %v3421
    %v4681 = vunpack.c.l.b16 %v3422
    %v4682 = vunpack.c.h.b16 %v3422
    %v4683 = vunpack.c.l.b16 %v3423
    %v4684 = vunpack.c.h.b16 %v3423
    %v4685 = vunpack.c.l.b16 %v3424
    %v4686 = vunpack.c.l.b16 %v3425
    %v4687 = vunpack.c.h.b16 %v3425
    %v4688 = vunpack.c.l.b16 %v3426
    %v4689 = vunpack.c.h.b16 %v3426
    %v4690 = vunpack.c.l.b16 %v3427
    %v4691 = vunpack.c.h.b16 %v3427
    %v4692 = vunpack.c.l.b16 %v3428
    %v4693 = vunpack.c.l.b16 %v3429
    %v4694 = vunpack.c.h.b16 %v3429
    %v4695 = vunpack.c.l.b16 %v3430
    %v4696 = vunpack.c.h.b16 %v3430
    %v4697 = vunpack.c.l.b16 %v3431
    %v4698 = vunpack.c.h.b16 %v3431
    %v4699 = vunpack.c.l.b16 %v3432
    %v4700 = vunpack.c.l.b16 %v3433
    %v4701 = vunpack.c.h.b16 %v3433
    %v4702 = vunpack.c.l.b16 %v3434
    %v4703 = vunpack.c.h.b16 %v3434
    %v4704 = vunpack.c.l.b16 %v3435
    %v4705 = vunpack.c.h.b16 %v3435
    %v4706 = vunpack.c.l.b16 %v3436
    %v4707 = vunpack.c.l.b16 %v3437
    %v4708 = vunpack.c.h.b16 %v3437
    %v4709 = vunpack.c.l.b16 %v3438
    %v4710 = vunpack.c.h.b16 %v3438
    %v4711 = vunpack.c.l.b16 %v3439
    %v4712 = vunpack.c.h.b16 %v3439
    %v4713 = vunpack.c.l.b16 %v3440
    %v4714 = vunpack.c.l.b16 %v3441
    %v4715 = vunpack.c.h.b16 %v3441
    %v4716 = vunpack.c.l.b16 %v3442
    %v4717 = vunpack.c.h.b16 %v3442
    %v4718 = vunpack.c.l.b16 %v3443
    %v4719 = vunpack.c.h.b16 %v3443
    %v4720 = vunpack.c.l.b16 %v3444
    %v4721 = vunpack.c.l.b16 %v3445
    %v4722 = vunpack.c.h.b16 %v3445
    %v4723 = vunpack.c.l.b16 %v3446
    %v4724 = vunpack.c.h.b16 %v3446
    %v4725 = vunpack.c.l.b16 %v3447
    %v4726 = vunpack.c.h.b16 %v3447
    %v4727 = vunpack.c.l.b16 %v3448
    %v4728 = vunpack.c.l.b16 %v3449
    %v4729 = vunpack.c.h.b16 %v3449
    %v4730 = vunpack.c.l.b16 %v3450
    %v4731 = vunpack.c.h.b16 %v3450
    %v4732 = vunpack.c.l.b16 %v3451
    %v4733 = vunpack.c.h.b16 %v3451
    %v4734 = vunpack.c.l.b16 %v3452
    %v4735 = vunpack.c.l.b16 %v3453
    %v4736 = vunpack.c.h.b16 %v3453
    %v4737 = vunpack.c.l.b16 %v3454
    %v4738 = vunpack.c.h.b16 %v3454
    %v4739 = vunpack.c.l.b16 %v3455
    %v4740 = vunpack.c.h.b16 %v3455
    %v4741 = vunpack.c.l.b16 %v3456
    %v4742 = vunpack.c.l.b16 %v3457
    %v4743 = vunpack.c.h.b16 %v3457
    %v4744 = vunpack.c.l.b16 %v3458
    %v4745 = vunpack.c.h.b16 %v3458
    %v4746 = vunpack.c.l.b16 %v3459
    %v4747 = vunpack.c.h.b16 %v3459
    %v4748 = vunpack.c.l.b16 %v3460
    %v4749 = vunpack.c.l.b16 %v3461
    %v4750 = vunpack.c.h.b16 %v3461
    %v4751 = vunpack.c.l.b16 %v3462
    %v4752 = vunpack.c.h.b16 %v3462
    %v4753 = vunpack.c.l.b16 %v3463
    %v4754 = vunpack.c.h.b16 %v3463
    %v4755 = vunpack.c.l.b16 %v3464
    %v4756 = vunpack.c.l.b16 %v3465
    %v4757 = vunpack.c.h.b16 %v3465
    %v4758 = vunpack.c.l.b16 %v3466
    %v4759 = vunpack.c.h.b16 %v3466
    %v4760 = vunpack.c.l.b16 %v3467
    %v4761 = vunpack.c.h.b16 %v3467
    %v4762 = vunpack.c.l.b16 %v3468
    %v4763 = vunpack.c.l.b16 %v3469
    %v4764 = vunpack.c.h.b16 %v3469
    %v4765 = vunpack.c.l.b16 %v3470
    %v4766 = vunpack.c.h.b16 %v3470
    %v4767 = vunpack.c.l.b16 %v3471
    %v4768 = vunpack.c.h.b16 %v3471
    %v4769 = vunpack.c.l.b16 %v3472
    %v4770 = vunpack.c.l.b16 %v3473
    %v4771 = vunpack.c.h.b16 %v3473
    %v4772 = vunpack.c.l.b16 %v3474
    %v4773 = vunpack.c.h.b16 %v3474
    %v4774 = vunpack.c.l.b16 %v3475
    %v4775 = vunpack.c.h.b16 %v3475
    %v4776 = vunpack.c.l.b16 %v3476
    %v4777 = vunpack.c.l.b16 %v3477
    %v4778 = vunpack.c.h.b16 %v3477
    %v4779 = vunpack.c.l.b16 %v3478
    %v4780 = vunpack.c.h.b16 %v3478
    %v4781 = vunpack.c.l.b16 %v3479
    %v4782 = vunpack.c.h.b16 %v3479
    %v4783 = vunpack.c.l.b16 %v3480
    %v4784 = vunpack.c.l.b16 %v3481
    %v4785 = vunpack.c.h.b16 %v3481
    %v4786 = vunpack.c.l.b16 %v3482
    %v4787 = vunpack.c.h.b16 %v3482
    %v4788 = vunpack.c.l.b16 %v3483
    %v4789 = vunpack.c.h.b16 %v3483
    %v4790 = vunpack.c.l.b16 %v3484
    %v4791 = vunpack.c.l.b16 %v3485
    %v4792 = vunpack.c.h.b16 %v3485
    %v4793 = vunpack.c.l.b16 %v3486
    %v4794 = vunpack.c.h.b16 %v3486
    %v4795 = vunpack.c.l.b16 %v3487
    %v4796 = vunpack.c.h.b16 %v3487
    %v4797 = vunpack.c.l.b16 %v3488
    %v4798 = vunpack.c.l.b16 %v3489
    %v4799 = vunpack.c.h.b16 %v3489
    %v4800 = vunpack.c.l.b16 %v3490
    %v4801 = vunpack.c.h.b16 %v3490
    %v4802 = vunpack.c.l.b16 %v3491
    %v4803 = vunpack.c.h.b16 %v3491
    %v4804 = vunpack.c.l.b16 %v3492
    %v4805 = vunpack.c.l.b16 %v3493
    %v4806 = vunpack.c.h.b16 %v3493
    %v4807 = vunpack.c.l.b16 %v3494
    %v4808 = vunpack.c.h.b16 %v3494
    %v4809 = vunpack.c.l.b16 %v3495
    %v4810 = vunpack.c.h.b16 %v3495
    %v4811 = vunpack.c.l.b16 %v3496
    %v4812 = vunpack.c.l.b16 %v3497
    %v4813 = vunpack.c.h.b16 %v3497
    %v4814 = vunpack.c.l.b16 %v3498
    %v4815 = vunpack.c.h.b16 %v3498
    %v4816 = vunpack.c.l.b16 %v3499
    %v4817 = vunpack.c.h.b16 %v3499
    %v4818 = vunpack.c.l.b16 %v3500
    %v4819 = vunpack.c.l.b16 %v3501
    %v4820 = vunpack.c.h.b16 %v3501
    %v4821 = vunpack.c.l.b16 %v3502
    %v4822 = vunpack.c.h.b16 %v3502
    %v4823 = vunpack.c.l.b16 %v3503
    %v4824 = vunpack.c.h.b16 %v3503
    %v4825 = vunpack.c.l.b16 %v3504
    %v4826 = vunpack.c.l.b16 %v3505
    %v4827 = vunpack.c.h.b16 %v3505
    %v4828 = vunpack.c.l.b16 %v3506
    %v4829 = vunpack.c.h.b16 %v3506
    %v4830 = vunpack.c.l.b16 %v3507
    %v4831 = vunpack.c.h.b16 %v3507
    %v4832 = vunpack.c.l.b16 %v3508
    %v4833 = vunpack.c.l.b16 %v3509
    %v4834 = vunpack.c.h.b16 %v3509
    %v4835 = vunpack.c.l.b16 %v3510
    %v4836 = vunpack.c.h.b16 %v3510
    %v4837 = vunpack.c.l.b16 %v3511
    %v4838 = vunpack.c.h.b16 %v3511
    %v4839 = vunpack.c.l.b16 %v3512
    %v4840 = vunpack.c.l.b16 %v3513
    %v4841 = vunpack.c.h.b16 %v3513
    %v4842 = vunpack.c.l.b16 %v3514
    %v4843 = vunpack.c.h.b16 %v3514
    %v4844 = vunpack.c.l.b16 %v3515
    %v4845 = vunpack.c.h.b16 %v3515
    %v4846 = vunpack.c.l.b16 %v3516
    %v4847 = vunpack.c.l.b16 %v3517
    %v4848 = vunpack.c.h.b16 %v3517
    %v4849 = vunpack.c.l.b16 %v3518
    %v4850 = vunpack.c.h.b16 %v3518
    %v4851 = vunpack.c.l.b16 %v3519
    %v4852 = vunpack.c.h.b16 %v3519
    %v4853 = vunpack.c.l.b16 %v3520
    %v4854 = vunpack.c.l.b16 %v3521
    %v4855 = vunpack.c.h.b16 %v3521
    %v4856 = vunpack.c.l.b16 %v3522
    %v4857 = vunpack.c.h.b16 %v3522
    %v4858 = vunpack.c.l.b16 %v3523
    %v4859 = vunpack.c.h.b16 %v3523
    %v4860 = vunpack.c.l.b16 %v3524
    %v4861 = vunpack.c.l.b16 %v3525
    %v4862 = vunpack.c.h.b16 %v3525
    %v4863 = vunpack.c.l.b16 %v3526
    %v4864 = vunpack.c.h.b16 %v3526
    %v4865 = vunpack.c.l.b16 %v3527
    %v4866 = vunpack.c.h.b16 %v3527
    %v4867 = vunpack.c.l.b16 %v3528
    %v4868 = vunpack.c.l.b16 %v3529
    %v4869 = vunpack.c.h.b16 %v3529
    %v4870 = vunpack.c.l.b16 %v3530
    %v4871 = vunpack.c.h.b16 %v3530
    %v4872 = vunpack.c.l.b16 %v3531
    %v4873 = vunpack.c.h.b16 %v3531
    %v4874 = vunpack.c.l.b16 %v3532
    %v4875 = vunpack.c.l.b16 %v3533
    %v4876 = vunpack.c.h.b16 %v3533
    %v4877 = vunpack.c.l.b16 %v3534
    %v4878 = vunpack.c.h.b16 %v3534
    %v4879 = vunpack.c.l.b16 %v3535
    %v4880 = vunpack.c.h.b16 %v3535
    %v4881 = vunpack.c.l.b16 %v3536
    %v4882 = vunpack.c.l.b16 %v3537
    %v4883 = vunpack.c.h.b16 %v3537
    %v4884 = vunpack.c.l.b16 %v3538
    %v4885 = vunpack.c.h.b16 %v3538
    %v4886 = vunpack.c.l.b16 %v3539
    %v4887 = vunpack.c.h.b16 %v3539
    %v4888 = vunpack.c.l.b16 %v3540
    %v4889 = vunpack.c.l.b16 %v3541
    %v4890 = vunpack.c.h.b16 %v3541
    %v4891 = vunpack.c.l.b16 %v3542
    %v4892 = vunpack.c.h.b16 %v3542
    %v4893 = vunpack.c.l.b16 %v3543
    %v4894 = vunpack.c.h.b16 %v3543
    %v4895 = vunpack.c.l.b16 %v3544
    %v4896 = vunpack.c.l.b16 %v3545
    %v4897 = vunpack.c.h.b16 %v3545
    %v4898 = vunpack.c.l.b16 %v3546
    %v4899 = vunpack.c.h.b16 %v3546
    %v4900 = vunpack.c.l.b16 %v3547
    %v4901 = vunpack.c.h.b16 %v3547
    %v4902 = vunpack.c.l.b16 %v3548
    %v4903 = vunpack.c.l.b16 %v3549
    %v4904 = vunpack.c.h.b16 %v3549
    %v4905 = vunpack.c.l.b16 %v3550
    %v4906 = vunpack.c.h.b16 %v3550
    %v4907 = vunpack.c.l.b16 %v3551
    %v4908 = vunpack.c.h.b16 %v3551
    %v4909 = vunpack.c.l.b16 %v3552
    %v4910 = vunpack.c.l.b16 %v3553
    %v4911 = vunpack.c.h.b16 %v3553
    %v4912 = vunpack.c.l.b16 %v3554
    %v4913 = vunpack.c.h.b16 %v3554
    %v4914 = vunpack.c.l.b16 %v3555
    %v4915 = vunpack.c.h.b16 %v3555
    %v4916 = vunpack.c.l.b16 %v3556
    %v4917 = vunpack.c.l.b16 %v3557
    %v4918 = vunpack.c.h.b16 %v3557
    %v4919 = vunpack.c.l.b16 %v3558
    %v4920 = vunpack.c.h.b16 %v3558
    %v4921 = vunpack.c.l.b16 %v3559
    %v4922 = vunpack.c.h.b16 %v3559
    %v4923 = vunpack.c.l.b16 %v3560
    %v4924 = vunpack.c.l.b16 %v3561
    %v4925 = vunpack.c.h.b16 %v3561
    %v4926 = vunpack.c.l.b16 %v3562
    %v4927 = vunpack.c.h.b16 %v3562
    %v4928 = vunpack.c.l.b16 %v3563
    %v4929 = vunpack.c.h.b16 %v3563
    %v4930 = vunpack.c.l.b16 %v3564
    %v4931 = vunpack.c.l.b16 %v3565
    %v4932 = vunpack.c.h.b16 %v3565
    %v4933 = vunpack.c.l.b16 %v3566
    %v4934 = vunpack.c.h.b16 %v3566
    %v4935 = vunpack.c.l.b16 %v3567
    %v4936 = vunpack.c.h.b16 %v3567
    %v4937 = vunpack.c.l.b16 %v3568
    %v4938 = vunpack.c.l.b16 %v3569
    %v4939 = vunpack.c.h.b16 %v3569
    %v4940 = vunpack.c.l.b16 %v3570
    %v4941 = vunpack.c.h.b16 %v3570
    %v4942 = vunpack.c.l.b16 %v3571
    %v4943 = vunpack.c.h.b16 %v3571
    %v4944 = vunpack.c.l.b16 %v3572
    %v4945 = vunpack.c.l.b16 %v3573
    %v4946 = vunpack.c.h.b16 %v3573
    %v4947 = vunpack.c.l.b16 %v3574
    %v4948 = vunpack.c.h.b16 %v3574
    %v4949 = vunpack.c.l.b16 %v3575
    %v4950 = vunpack.c.h.b16 %v3575
    %v4951 = vunpack.c.l.b16 %v3576
    %v4952 = vunpack.c.l.b16 %v3577
    %v4953 = vunpack.c.h.b16 %v3577
    %v4954 = vunpack.c.l.b16 %v3578
    %v4955 = vunpack.c.h.b16 %v3578
    %v4956 = vunpack.c.l.b16 %v3579
    %v4957 = vunpack.c.h.b16 %v3579
    %v4958 = vunpack.c.l.b16 %v3580
    %v4959 = vunpack.c.l.b16 %v3581
    %v4960 = vunpack.c.h.b16 %v3581
    %v4961 = vunpack.c.l.b16 %v3582
    %v4962 = vunpack.c.h.b16 %v3582
    %v4963 = vunpack.c.l.b16 %v3583
    %v4964 = vunpack.c.h.b16 %v3583
    %v4965 = vunpack.c.l.b16 %v3584
    %v4966 = vunpack.c.l.b16 %v3585
    %v4967 = vunpack.c.h.b16 %v3585
    %v4968 = vunpack.c.l.b16 %v3586
    %v4969 = vunpack.c.h.b16 %v3586
    %v4970 = vunpack.c.l.b16 %v3587
    %v4971 = vunpack.c.h.b16 %v3587
    %v4972 = vunpack.c.l.b16 %v3588
    %v4973 = vunpack.c.l.b16 %v3589
    %v4974 = vunpack.c.h.b16 %v3589
    %v4975 = vunpack.c.l.b16 %v3590
    %v4976 = vunpack.c.h.b16 %v3590
    %v4977 = vunpack.c.l.b16 %v3591
    %v4978 = vunpack.c.h.b16 %v3591
    %v4979 = vunpack.c.l.b16 %v3592
    %v4980 = vunpack.c.l.b16 %v3593
    %v4981 = vunpack.c.h.b16 %v3593
    %v4982 = vunpack.c.l.b16 %v3594
    %v4983 = vunpack.c.h.b16 %v3594
    %v4984 = vunpack.c.l.b16 %v3595
    %v4985 = vunpack.c.h.b16 %v3595
    %v4986 = vunpack.c.l.b16 %v3596
    %v4987 = vunpack.c.l.b16 %v3597
    %v4988 = vunpack.c.h.b16 %v3597
    %v4989 = vunpack.c.l.b16 %v3598
    %v4990 = vunpack.c.h.b16 %v3598
    %v4991 = vunpack.c.l.b16 %v3599
    %v4992 = vunpack.c.h.b16 %v3599
    %v4993 = vunpack.c.l.b16 %v3600
    %v4994 = vunpack.c.l.b16 %v3601
    %v4995 = vunpack.c.h.b16 %v3601
    %v4996 = vunpack.c.l.b16 %v3602
    %v4997 = vunpack.c.h.b16 %v3602
    %v4998 = vunpack.c.l.b16 %v3603
    %v4999 = vunpack.c.h.b16 %v3603
    %v5000 = vunpack.c.l.b16 %v3604
    %v5001 = vunpack.c.l.b16 %v3605
    %v5002 = vunpack.c.h.b16 %v3605
    %v5003 = vunpack.c.l.b16 %v3606
    %v5004 = vunpack.c.h.b16 %v3606
    %v5005 = vunpack.c.l.b16 %v3607
    %v5006 = vunpack.c.h.b16 %v3607
    %v5007 = vunpack.c.l.b16 %v3608
    %v5008 = vunpack.c.l.b16 %v3609
    %v5009 = vunpack.c.h.b16 %v3609
    %v5010 = vunpack.c.l.b16 %v3610
    %v5011 = vunpack.c.h.b16 %v3610
    %v5012 = vunpack.c.l.b16 %v3611
    %v5013 = vunpack.c.h.b16 %v3611
    %v5014 = vunpack.c.l.b16 %v3612
    %v5015 = vunpack.c.l.b16 %v3613
    %v5016 = vunpack.c.h.b16 %v3613
    %v5017 = vunpack.c.l.b16 %v3614
    %v5018 = vunpack.c.h.b16 %v3614
    %v5019 = vunpack.c.l.b16 %v3615
    %v5020 = vunpack.c.h.b16 %v3615
    %v5021 = vunpack.c.l.b16 %v3616
    %v5022 = vunpack.c.l.b16 %v3617
    %v5023 = vunpack.c.h.b16 %v3617
    %v5024 = vunpack.c.l.b16 %v3618
    %v5025 = vunpack.c.h.b16 %v3618
    %v5026 = vunpack.c.l.b16 %v3619
    %v5027 = vunpack.c.h.b16 %v3619
    %v5028 = vunpack.c.l.b16 %v3620
    %v5029 = vpack.c.b16 %v4140, %v4133
    %v5030 = vpack.c.b16 %v4141, %v4134
    %v5031 = vpack.c.b16 %v4142, %v4135
    %v5032 = vpack.c.b16 %v4143, %v4136
    %v5033 = vpack.c.b16 %v4144, %v4137
    %v5034 = vpack.c.b16 %v4145, %v4138
    %v5035 = vpack.c.b16 %v4146, %v4139
    %v5036 = vpack.c.b16 %v4154, %v4147
    %v5037 = vpack.c.b16 %v4155, %v4148
    %v5038 = vpack.c.b16 %v4156, %v4149
    %v5039 = vpack.c.b16 %v4157, %v4150
    %v5040 = vpack.c.b16 %v4158, %v4151
    %v5041 = vpack.c.b16 %v4159, %v4152
    %v5042 = vpack.c.b16 %v4160, %v4153
    %v5043 = vpack.c.b16 %v4168, %v4161
    %v5044 = vpack.c.b16 %v4169, %v4162
    %v5045 = vpack.c.b16 %v4170, %v4163
    %v5046 = vpack.c.b16 %v4171, %v4164
    %v5047 = vpack.c.b16 %v4172, %v4165
    %v5048 = vpack.c.b16 %v4173, %v4166
    %v5049 = vpack.c.b16 %v4174, %v4167
    %v5050 = vpack.c.b16 %v4182, %v4175
    %v5051 = vpack.c.b16 %v4183, %v4176
    %v5052 = vpack.c.b16 %v4184, %v4177
    %v5053 = vpack.c.b16 %v4185, %v4178
    %v5054 = vpack.c.b16 %v4186, %v4179
    %v5055 = vpack.c.b16 %v4187, %v4180
    %v5056 = vpack.c.b16 %v4188, %v4181
    %v5057 = vpack.c.b16 %v4196, %v4189
    %v5058 = vpack.c.b16 %v4197, %v4190
    %v5059 = vpack.c.b16 %v4198, %v4191
    %v5060 = vpack.c.b16 %v4199, %v4192
    %v5061 = vpack.c.b16 %v4200, %v4193
    %v5062 = vpack.c.b16 %v4201, %v4194
    %v5063 = vpack.c.b16 %v4202, %v4195
    %v5064 = vpack.c.b16 %v4210, %v4203
    %v5065 = vpack.c.b16 %v4211, %v4204
    %v5066 = vpack.c.b16 %v4212, %v4205
    %v5067 = vpack.c.b16 %v4213, %v4206
    %v5068 = vpack.c.b16 %v4214, %v4207
    %v5069 = vpack.c.b16 %v4215, %v4208
    %v5070 = vpack.c.b16 %v4216, %v4209
    %v5071 = vpack.c.b16 %v4224, %v4217
    %v5072 = vpack.c.b16 %v4225, %v4218
    %v5073 = vpack.c.b16 %v4226, %v4219
    %v5074 = vpack.c.b16 %v4227, %v4220
    %v5075 = vpack.c.b16 %v4228, %v4221
    %v5076 = vpack.c.b16 %v4229, %v4222
    %v5077 = vpack.c.b16 %v4230, %v4223
    %v5078 = vpack.c.b16 %v4238, %v4231
    %v5079 = vpack.c.b16 %v4239, %v4232
    %v5080 = vpack.c.b16 %v4240, %v4233
    %v5081 = vpack.c.b16 %v4241, %v4234
    %v5082 = vpack.c.b16 %v4242, %v4235
    %v5083 = vpack.c.b16 %v4243, %v4236
    %v5084 = vpack.c.b16 %v4244, %v4237
    %v5085 = vpack.c.b16 %v4252, %v4245
    %v5086 = vpack.c.b16 %v4253, %v4246
    %v5087 = vpack.c.b16 %v4254, %v4247
    %v5088 = vpack.c.b16 %v4255, %v4248
    %v5089 = vpack.c.b16 %v4256, %v4249
    %v5090 = vpack.c.b16 %v4257, %v4250
    %v5091 = vpack.c.b16 %v4258, %v4251
    %v5092 = vpack.c.b16 %v4266, %v4259
    %v5093 = vpack.c.b16 %v4267, %v4260
    %v5094 = vpack.c.b16 %v4268, %v4261
    %v5095 = vpack.c.b16 %v4269, %v4262
    %v5096 = vpack.c.b16 %v4270, %v4263
    %v5097 = vpack.c.b16 %v4271, %v4264
    %v5098 = vpack.c.b16 %v4272, %v4265
    %v5099 = vpack.c.b16 %v4280, %v4273
    %v5100 = vpack.c.b16 %v4281, %v4274
    %v5101 = vpack.c.b16 %v4282, %v4275
    %v5102 = vpack.c.b16 %v4283, %v4276
    %v5103 = vpack.c.b16 %v4284, %v4277
    %v5104 = vpack.c.b16 %v4285, %v4278
    %v5105 = vpack.c.b16 %v4286, %v4279
    %v5106 = vpack.c.b16 %v4294, %v4287
    %v5107 = vpack.c.b16 %v4295, %v4288
    %v5108 = vpack.c.b16 %v4296, %v4289
    %v5109 = vpack.c.b16 %v4297, %v4290
    %v5110 = vpack.c.b16 %v4298, %v4291
    %v5111 = vpack.c.b16 %v4299, %v4292
    %v5112 = vpack.c.b16 %v4300, %v4293
    %v5113 = vpack.c.b16 %v4308, %v4301
    %v5114 = vpack.c.b16 %v4309, %v4302
    %v5115 = vpack.c.b16 %v4310, %v4303
    %v5116 = vpack.c.b16 %v4311, %v4304
    %v5117 = vpack.c.b16 %v4312, %v4305
    %v5118 = vpack.c.b16 %v4313, %v4306
    %v5119 = vpack.c.b16 %v4314, %v4307
    %v5120 = vpack.c.b16 %v4322, %v4315
    %v5121 = vpack.c.b16 %v4323, %v4316
    %v5122 = vpack.c.b16 %v4324, %v4317
    %v5123 = vpack.c.b16 %v4325, %v4318
    %v5124 = vpack.c.b16 %v4326, %v4319
    %v5125 = vpack.c.b16 %v4327, %v4320
    %v5126 = vpack.c.b16 %v4328, %v4321
    %v5127 = vpack.c.b16 %v4336, %v4329
    %v5128 = vpack.c.b16 %v4337, %v4330
    %v5129 = vpack.c.b16 %v4338, %v4331
    %v5130 = vpack.c.b16 %v4339, %v4332
    %v5131 = vpack.c.b16 %v4340, %v4333
    %v5132 = vpack.c.b16 %v4341, %v4334
    %v5133 = vpack.c.b16 %v4342, %v4335
    %v5134 = vpack.c.b16 %v4350, %v4343
    %v5135 = vpack.c.b16 %v4351, %v4344
    %v5136 = vpack.c.b16 %v4352, %v4345
    %v5137 = vpack.c.b16 %v4353, %v4346
    %v5138 = vpack.c.b16 %v4354, %v4347
    %v5139 = vpack.c.b16 %v4355, %v4348
    %v5140 = vpack.c.b16 %v4356, %v4349
    %v5141 = vpack.c.b16 %v4364, %v4357
    %v5142 = vpack.c.b16 %v4365, %v4358
    %v5143 = vpack.c.b16 %v4366, %v4359
    %v5144 = vpack.c.b16 %v4367, %v4360
    %v5145 = vpack.c.b16 %v4368, %v4361
    %v5146 = vpack.c.b16 %v4369, %v4362
    %v5147 = vpack.c.b16 %v4370, %v4363
    %v5148 = vpack.c.b16 %v4378, %v4371
    %v5149 = vpack.c.b16 %v4379, %v4372
    %v5150 = vpack.c.b16 %v4380, %v4373
    %v5151 = vpack.c.b16 %v4381, %v4374
    %v5152 = vpack.c.b16 %v4382, %v4375
    %v5153 = vpack.c.b16 %v4383, %v4376
    %v5154 = vpack.c.b16 %v4384, %v4377
    %v5155 = vpack.c.b16 %v4392, %v4385
    %v5156 = vpack.c.b16 %v4393, %v4386
    %v5157 = vpack.c.b16 %v4394, %v4387
    %v5158 = vpack.c.b16 %v4395, %v4388
    %v5159 = vpack.c.b16 %v4396, %v4389
    %v5160 = vpack.c.b16 %v4397, %v4390
    %v5161 = vpack.c.b16 %v4398, %v4391
    %v5162 = vpack.c.b16 %v4406, %v4399
    %v5163 = vpack.c.b16 %v4407, %v4400
    %v5164 = vpack.c.b16 %v4408, %v4401
    %v5165 = vpack.c.b16 %v4409, %v4402
    %v5166 = vpack.c.b16 %v4410, %v4403
    %v5167 = vpack.c.b16 %v4411, %v4404
    %v5168 = vpack.c.b16 %v4412, %v4405
    %v5169 = vpack.c.b16 %v4420, %v4413
    %v5170 = vpack.c.b16 %v4421, %v4414
    %v5171 = vpack.c.b16 %v4422, %v4415
    %v5172 = vpack.c.b16 %v4423, %v4416
    %v5173 = vpack.c.b16 %v4424, %v4417
    %v5174 = vpack.c.b16 %v4425, %v4418
    %v5175 = vpack.c.b16 %v4426, %v4419
    %v5176 = vpack.c.b16 %v4434, %v4427
    %v5177 = vpack.c.b16 %v4435, %v4428
    %v5178 = vpack.c.b16 %v4436, %v4429
    %v5179 = vpack.c.b16 %v4437, %v4430
    %v5180 = vpack.c.b16 %v4438, %v4431
    %v5181 = vpack.c.b16 %v4439, %v4432
    %v5182 = vpack.c.b16 %v4440, %v4433
    %v5183 = vpack.c.b16 %v4448, %v4441
    %v5184 = vpack.c.b16 %v4449, %v4442
    %v5185 = vpack.c.b16 %v4450, %v4443
    %v5186 = vpack.c.b16 %v4451, %v4444
    %v5187 = vpack.c.b16 %v4452, %v4445
    %v5188 = vpack.c.b16 %v4453, %v4446
    %v5189 = vpack.c.b16 %v4454, %v4447
    %v5190 = vpack.c.b16 %v4462, %v4455
    %v5191 = vpack.c.b16 %v4463, %v4456
    %v5192 = vpack.c.b16 %v4464, %v4457
    %v5193 = vpack.c.b16 %v4465, %v4458
    %v5194 = vpack.c.b16 %v4466, %v4459
    %v5195 = vpack.c.b16 %v4467, %v4460
    %v5196 = vpack.c.b16 %v4468, %v4461
    %v5197 = vpack.c.b16 %v4476, %v4469
    %v5198 = vpack.c.b16 %v4477, %v4470
    %v5199 = vpack.c.b16 %v4478, %v4471
    %v5200 = vpack.c.b16 %v4479, %v4472
    %v5201 = vpack.c.b16 %v4480, %v4473
    %v5202 = vpack.c.b16 %v4481, %v4474
    %v5203 = vpack.c.b16 %v4482, %v4475
    %v5204 = vpack.c.b16 %v4490, %v4483
    %v5205 = vpack.c.b16 %v4491, %v4484
    %v5206 = vpack.c.b16 %v4492, %v4485
    %v5207 = vpack.c.b16 %v4493, %v4486
    %v5208 = vpack.c.b16 %v4494, %v4487
    %v5209 = vpack.c.b16 %v4495, %v4488
    %v5210 = vpack.c.b16 %v4496, %v4489
    %v5211 = vpack.c.b16 %v4504, %v4497
    %v5212 = vpack.c.b16 %v4505, %v4498
    %v5213 = vpack.c.b16 %v4506, %v4499
    %v5214 = vpack.c.b16 %v4507, %v4500
    %v5215 = vpack.c.b16 %v4508, %v4501
    %v5216 = vpack.c.b16 %v4509, %v4502
    %v5217 = vpack.c.b16 %v4510, %v4503
    %v5218 = vpack.c.b16 %v4518, %v4511
    %v5219 = vpack.c.b16 %v4519, %v4512
    %v5220 = vpack.c.b16 %v4520, %v4513
    %v5221 = vpack.c.b16 %v4521, %v4514
    %v5222 = vpack.c.b16 %v4522, %v4515
    %v5223 = vpack.c.b16 %v4523, %v4516
    %v5224 = vpack.c.b16 %v4524, %v4517
    %v5225 = vpack.c.b16 %v4532, %v4525
    %v5226 = vpack.c.b16 %v4533, %v4526
    %v5227 = vpack.c.b16 %v4534, %v4527
    %v5228 = vpack.c.b16 %v4535, %v4528
    %v5229 = vpack.c.b16 %v4536, %v4529
    %v5230 = vpack.c.b16 %v4537, %v4530
    %v5231 = vpack.c.b16 %v4538, %v4531
    %v5232 = vpack.c.b16 %v4546, %v4539
    %v5233 = vpack.c.b16 %v4547, %v4540
    %v5234 = vpack.c.b16 %v4548, %v4541
    %v5235 = vpack.c.b16 %v4549, %v4542
    %v5236 = vpack.c.b16 %v4550, %v4543
    %v5237 = vpack.c.b16 %v4551, %v4544
    %v5238 = vpack.c.b16 %v4552, %v4545
    %v5239 = vpack.c.b16 %v4560, %v4553
    %v5240 = vpack.c.b16 %v4561, %v4554
    %v5241 = vpack.c.b16 %v4562, %v4555
    %v5242 = vpack.c.b16 %v4563, %v4556
    %v5243 = vpack.c.b16 %v4564, %v4557
    %v5244 = vpack.c.b16 %v4565, %v4558
    %v5245 = vpack.c.b16 %v4566, %v4559
    %v5246 = vpack.c.b16 %v4574, %v4567
    %v5247 = vpack.c.b16 %v4575, %v4568
    %v5248 = vpack.c.b16 %v4576, %v4569
    %v5249 = vpack.c.b16 %v4577, %v4570
    %v5250 = vpack.c.b16 %v4578, %v4571
    %v5251 = vpack.c.b16 %v4579, %v4572
    %v5252 = vpack.c.b16 %v4580, %v4573
    %v5253 = vpack.c.b16 %v4588, %v4581
    %v5254 = vpack.c.b16 %v4589, %v4582
    %v5255 = vpack.c.b16 %v4590, %v4583
    %v5256 = vpack.c.b16 %v4591, %v4584
    %v5257 = vpack.c.b16 %v4592, %v4585
    %v5258 = vpack.c.b16 %v4593, %v4586
    %v5259 = vpack.c.b16 %v4594, %v4587
    %v5260 = vpack.c.b16 %v4602, %v4595
    %v5261 = vpack.c.b16 %v4603, %v4596
    %v5262 = vpack.c.b16 %v4604, %v4597
    %v5263 = vpack.c.b16 %v4605, %v4598
    %v5264 = vpack.c.b16 %v4606, %v4599
    %v5265 = vpack.c.b16 %v4607, %v4600
    %v5266 = vpack.c.b16 %v4608, %v4601
    %v5267 = vpack.c.b16 %v4616, %v4609
    %v5268 = vpack.c.b16 %v4617, %v4610
    %v5269 = vpack.c.b16 %v4618, %v4611
    %v5270 = vpack.c.b16 %v4619, %v4612
    %v5271 = vpack.c.b16 %v4620, %v4613
    %v5272 = vpack.c.b16 %v4621, %v4614
    %v5273 = vpack.c.b16 %v4622, %v4615
    %v5274 = vpack.c.b16 %v4630, %v4623
    %v5275 = vpack.c.b16 %v4631, %v4624
    %v5276 = vpack.c.b16 %v4632, %v4625
    %v5277 = vpack.c.b16 %v4633, %v4626
    %v5278 = vpack.c.b16 %v4634, %v4627
    %v5279 = vpack.c.b16 %v4635, %v4628
    %v5280 = vpack.c.b16 %v4636, %v4629
    %v5281 = vpack.c.b16 %v4644, %v4637
    %v5282 = vpack.c.b16 %v4645, %v4638
    %v5283 = vpack.c.b16 %v4646, %v4639
    %v5284 = vpack.c.b16 %v4647, %v4640
    %v5285 = vpack.c.b16 %v4648, %v4641
    %v5286 = vpack.c.b16 %v4649, %v4642
    %v5287 = vpack.c.b16 %v4650, %v4643
    %v5288 = vpack.c.b16 %v4658, %v4651
    %v5289 = vpack.c.b16 %v4659, %v4652
    %v5290 = vpack.c.b16 %v4660, %v4653
    %v5291 = vpack.c.b16 %v4661, %v4654
    %v5292 = vpack.c.b16 %v4662, %v4655
    %v5293 = vpack.c.b16 %v4663, %v4656
    %v5294 = vpack.c.b16 %v4664, %v4657
    %v5295 = vpack.c.b16 %v4672, %v4665
    %v5296 = vpack.c.b16 %v4673, %v4666
    %v5297 = vpack.c.b16 %v4674, %v4667
    %v5298 = vpack.c.b16 %v4675, %v4668
    %v5299 = vpack.c.b16 %v4676, %v4669
    %v5300 = vpack.c.b16 %v4677, %v4670
    %v5301 = vpack.c.b16 %v4678, %v4671
    %v5302 = vpack.c.b16 %v4686, %v4679
    %v5303 = vpack.c.b16 %v4687, %v4680
    %v5304 = vpack.c.b16 %v4688, %v4681
    %v5305 = vpack.c.b16 %v4689, %v4682
    %v5306 = vpack.c.b16 %v4690, %v4683
    %v5307 = vpack.c.b16 %v4691, %v4684
    %v5308 = vpack.c.b16 %v4692, %v4685
    %v5309 = vpack.c.b16 %v4700, %v4693
    %v5310 = vpack.c.b16 %v4701, %v4694
    %v5311 = vpack.c.b16 %v4702, %v4695
    %v5312 = vpack.c.b16 %v4703, %v4696
    %v5313 = vpack.c.b16 %v4704, %v4697
    %v5314 = vpack.c.b16 %v4705, %v4698
    %v5315 = vpack.c.b16 %v4706, %v4699
    %v5316 = vpack.c.b16 %v4714, %v4707
    %v5317 = vpack.c.b16 %v4715, %v4708
    %v5318 = vpack.c.b16 %v4716, %v4709
    %v5319 = vpack.c.b16 %v4717, %v4710
    %v5320 = vpack.c.b16 %v4718, %v4711
    %v5321 = vpack.c.b16 %v4719, %v4712
    %v5322 = vpack.c.b16 %v4720, %v4713
    %v5323 = vpack.c.b16 %v4728, %v4721
    %v5324 = vpack.c.b16 %v4729, %v4722
    %v5325 = vpack.c.b16 %v4730, %v4723
    %v5326 = vpack.c.b16 %v4731, %v4724
    %v5327 = vpack.c.b16 %v4732, %v4725
    %v5328 = vpack.c.b16 %v4733, %v4726
    %v5329 = vpack.c.b16 %v4734, %v4727
    %v5330 = vpack.c.b16 %v4742, %v4735
    %v5331 = vpack.c.b16 %v4743, %v4736
    %v5332 = vpack.c.b16 %v4744, %v4737
    %v5333 = vpack.c.b16 %v4745, %v4738
    %v5334 = vpack.c.b16 %v4746, %v4739
    %v5335 = vpack.c.b16 %v4747, %v4740
    %v5336 = vpack.c.b16 %v4748, %v4741
    %v5337 = vpack.c.b16 %v4756, %v4749
    %v5338 = vpack.c.b16 %v4757, %v4750
    %v5339 = vpack.c.b16 %v4758, %v4751
    %v5340 = vpack.c.b16 %v4759, %v4752
    %v5341 = vpack.c.b16 %v4760, %v4753
    %v5342 = vpack.c.b16 %v4761, %v4754
    %v5343 = vpack.c.b16 %v4762, %v4755
    %v5344 = vpack.c.b16 %v4770, %v4763
    %v5345 = vpack.c.b16 %v4771, %v4764
    %v5346 = vpack.c.b16 %v4772, %v4765
    %v5347 = vpack.c.b16 %v4773, %v4766
    %v5348 = vpack.c.b16 %v4774, %v4767
    %v5349 = vpack.c.b16 %v4775, %v4768
    %v5350 = vpack.c.b16 %v4776, %v4769
    %v5351 = vpack.c.b16 %v4784, %v4777
    %v5352 = vpack.c.b16 %v4785, %v4778
    %v5353 = vpack.c.b16 %v4786, %v4779
    %v5354 = vpack.c.b16 %v4787, %v4780
    %v5355 = vpack.c.b16 %v4788, %v4781
    %v5356 = vpack.c.b16 %v4789, %v4782
    %v5357 = vpack.c.b16 %v4790, %v4783
    %v5358 = vpack.c.b16 %v4798, %v4791
    %v5359 = vpack.c.b16 %v4799, %v4792
    %v5360 = vpack.c.b16 %v4800, %v4793
    %v5361 = vpack.c.b16 %v4801, %v4794
    %v5362 = vpack.c.b16 %v4802, %v4795
    %v5363 = vpack.c.b16 %v4803, %v4796
    %v5364 = vpack.c.b16 %v4804, %v4797
    %v5365 = vpack.c.b16 %v4812, %v4805
    %v5366 = vpack.c.b16 %v4813, %v4806
    %v5367 = vpack.c.b16 %v4814, %v4807
    %v5368 = vpack.c.b16 %v4815, %v4808
    %v5369 = vpack.c.b16 %v4816, %v4809
    %v5370 = vpack.c.b16 %v4817, %v4810
    %v5371 = vpack.c.b16 %v4818, %v4811
    %v5372 = vpack.c.b16 %v4826, %v4819
    %v5373 = vpack.c.b16 %v4827, %v4820
    %v5374 = vpack.c.b16 %v4828, %v4821
    %v5375 = vpack.c.b16 %v4829, %v4822
    %v5376 = vpack.c.b16 %v4830, %v4823
    %v5377 = vpack.c.b16 %v4831, %v4824
    %v5378 = vpack.c.b16 %v4832, %v4825
    %v5379 = vpack.c.b16 %v4840, %v4833
    %v5380 = vpack.c.b16 %v4841, %v4834
    %v5381 = vpack.c.b16 %v4842, %v4835
    %v5382 = vpack.c.b16 %v4843, %v4836
    %v5383 = vpack.c.b16 %v4844, %v4837
    %v5384 = vpack.c.b16 %v4845, %v4838
    %v5385 = vpack.c.b16 %v4846, %v4839
    %v5386 = vpack.c.b16 %v4854, %v4847
    %v5387 = vpack.c.b16 %v4855, %v4848
    %v5388 = vpack.c.b16 %v4856, %v4849
    %v5389 = vpack.c.b16 %v4857, %v4850
    %v5390 = vpack.c.b16 %v4858, %v4851
    %v5391 = vpack.c.b16 %v4859, %v4852
    %v5392 = vpack.c.b16 %v4860, %v4853
    %v5393 = vpack.c.b16 %v4868, %v4861
    %v5394 = vpack.c.b16 %v4869, %v4862
    %v5395 = vpack.c.b16 %v4870, %v4863
    %v5396 = vpack.c.b16 %v4871, %v4864
    %v5397 = vpack.c.b16 %v4872, %v4865
    %v5398 = vpack.c.b16 %v4873, %v4866
    %v5399 = vpack.c.b16 %v4874, %v4867
    %v5400 = vpack.c.b16 %v4882, %v4875
    %v5401 = vpack.c.b16 %v4883, %v4876
    %v5402 = vpack.c.b16 %v4884, %v4877
    %v5403 = vpack.c.b16 %v4885, %v4878
    %v5404 = vpack.c.b16 %v4886, %v4879
    %v5405 = vpack.c.b16 %v4887, %v4880
    %v5406 = vpack.c.b16 %v4888, %v4881
    %v5407 = vpack.c.b16 %v4896, %v4889
    %v5408 = vpack.c.b16 %v4897, %v4890
    %v5409 = vpack.c.b16 %v4898, %v4891
    %v5410 = vpack.c.b16 %v4899, %v4892
    %v5411 = vpack.c.b16 %v4900, %v4893
    %v5412 = vpack.c.b16 %v4901, %v4894
    %v5413 = vpack.c.b16 %v4902, %v4895
    %v5414 = vpack.c.b16 %v4910, %v4903
    %v5415 = vpack.c.b16 %v4911, %v4904
    %v5416 = vpack.c.b16 %v4912, %v4905
    %v5417 = vpack.c.b16 %v4913, %v4906
    %v5418 = vpack.c.b16 %v4914, %v4907
    %v5419 = vpack.c.b16 %v4915, %v4908
    %v5420 = vpack.c.b16 %v4916, %v4909
    %v5421 = vpack.c.b16 %v4924, %v4917
    %v5422 = vpack.c.b16 %v4925, %v4918
    %v5423 = vpack.c.b16 %v4926, %v4919
    %v5424 = vpack.c.b16 %v4927, %v4920
    %v5425 = vpack.c.b16 %v4928, %v4921
    %v5426 = vpack.c.b16 %v4929, %v4922
    %v5427 = vpack.c.b16 %v4930, %v4923
    %v5428 = vpack.c.b16 %v4938, %v4931
    %v5429 = vpack.c.b16 %v4939, %v4932
    %v5430 = vpack.c.b16 %v4940, %v4933
    %v5431 = vpack.c.b16 %v4941, %v4934
    %v5432 = vpack.c.b16 %v4942, %v4935
    %v5433 = vpack.c.b16 %v4943, %v4936
    %v5434 = vpack.c.b16 %v4944, %v4937
    %v5435 = vpack.c.b16 %v4952, %v4945
    %v5436 = vpack.c.b16 %v4953, %v4946
    %v5437 = vpack.c.b16 %v4954, %v4947
    %v5438 = vpack.c.b16 %v4955, %v4948
    %v5439 = vpack.c.b16 %v4956, %v4949
    %v5440 = vpack.c.b16 %v4957, %v4950
    %v5441 = vpack.c.b16 %v4958, %v4951
    %v5442 = vpack.c.b16 %v4966, %v4959
    %v5443 = vpack.c.b16 %v4967, %v4960
    %v5444 = vpack.c.b16 %v4968, %v4961
    %v5445 = vpack.c.b16 %v4969, %v4962
    %v5446 = vpack.c.b16 %v4970, %v4963
    %v5447 = vpack.c.b16 %v4971, %v4964
    %v5448 = vpack.c.b16 %v4972, %v4965
    %v5449 = vpack.c.b16 %v4980, %v4973
    %v5450 = vpack.c.b16 %v4981, %v4974
    %v5451 = vpack.c.b16 %v4982, %v4975
    %v5452 = vpack.c.b16 %v4983, %v4976
    %v5453 = vpack.c.b16 %v4984, %v4977
    %v5454 = vpack.c.b16 %v4985, %v4978
    %v5455 = vpack.c.b16 %v4986, %v4979
    %v5456 = vpack.c.b16 %v4994, %v4987
    %v5457 = vpack.c.b16 %v4995, %v4988
    %v5458 = vpack.c.b16 %v4996, %v4989
    %v5459 = vpack.c.b16 %v4997, %v4990
    %v5460 = vpack.c.b16 %v4998, %v4991
    %v5461 = vpack.c.b16 %v4999, %v4992
    %v5462 = vpack.c.b16 %v5000, %v4993
    %v5463 = vpack.c.b16 %v5008, %v5001
    %v5464 = vpack.c.b16 %v5009, %v5002
    %v5465 = vpack.c.b16 %v5010, %v5003
    %v5466 = vpack.c.b16 %v5011, %v5004
    %v5467 = vpack.c.b16 %v5012, %v5005
    %v5468 = vpack.c.b16 %v5013, %v5006
    %v5469 = vpack.c.b16 %v5014, %v5007
    %v5470 = vpack.c.b16 %v5022, %v5015
    %v5471 = vpack.c.b16 %v5023, %v5016
    %v5472 = vpack.c.b16 %v5024, %v5017
    %v5473 = vpack.c.b16 %v5025, %v5018
    %v5474 = vpack.c.b16 %v5026, %v5019
    %v5475 = vpack.c.b16 %v5027, %v5020
    %v5476 = vpack.c.b16 %v5028, %v5021
    %5925 = vmatprep.subr.bf16.mxu0 %v5030
    %5926 = vmatpush1.bf16.msra.mxu0 %v5029
    %5927 = vmatprep.subr.bf16.mxu0 %v5037
    %5928 = vmatpush1.bf16.msra.mxu0 %v5036
    %5929 = vmatprep.subr.bf16.mxu0 %v5044
    %5930 = vmatpush1.bf16.msra.mxu0 %v5043
    %5931 = vmatprep.subr.bf16.mxu0 %v5051
    %5932 = vmatpush1.bf16.msra.mxu0 %v5050
    %5933 = vmatprep.subr.bf16.mxu0 %v5058
    %5934 = vmatpush1.bf16.msra.mxu0 %v5057
    %5935 = vmatprep.subr.bf16.mxu0 %v5065
    %5936 = vmatpush1.bf16.msra.mxu0 %v5064
    %5937 = vmatprep.subr.bf16.mxu0 %v5072
    %5938 = vmatpush1.bf16.msra.mxu0 %v5071
    %5939 = vmatprep.subr.bf16.mxu0 %v5079
    %5940 = vmatpush1.bf16.msra.mxu0 %v5078
    %5941 = vmatprep.subr.bf16.mxu0 %v5086
    %5942 = vmatpush1.bf16.msra.mxu0 %v5085
    %5943 = vmatprep.subr.bf16.mxu0 %v5093
    %5944 = vmatpush1.bf16.msra.mxu0 %v5092
    %5945 = vmatprep.subr.bf16.mxu0 %v5100
    %5946 = vmatpush1.bf16.msra.mxu0 %v5099
    %5947 = vmatprep.subr.bf16.mxu0 %v5107
    %5948 = vmatpush1.bf16.msra.mxu0 %v5106
    %5949 = vmatprep.subr.bf16.mxu0 %v5114
    %5950 = vmatpush1.bf16.msra.mxu0 %v5113
    %5951 = vmatprep.subr.bf16.mxu0 %v5121
    %5952 = vmatpush1.bf16.msra.mxu0 %v5120
    %5953 = vmatprep.subr.bf16.mxu0 %v5128
    %5954 = vmatpush1.bf16.msra.mxu0 %v5127
    %5955 = vmatprep.subr.bf16.mxu0 %v5135
    %5956 = vmatpush1.bf16.msra.mxu0 %v5134
    %5957 = vmatprep.mubr.bf16.mxu0 %v3078
    %5958 = vmatmul.mubr.bf16.gmra.mrb[0].mxu0 %v3077
    %v5959 = vpop.f32.mrb[0].mxu0
    %v5960 = vadd.f32 0.0, %v5959
    %v5961 = vpop.f32.mrb[0].mxu0
    %v5962 = vadd.f32 0.0, %v5961
    %v5963 = vpop.f32.mrb[0].mxu0
    %v5964 = vadd.f32 0.0, %v5963
    %v5965 = vpop.f32.mrb[0].mxu0
    %v5966 = vadd.f32 0.0, %v5965
    %5967 = vmatprep.mubr.bf16.mxu0 %v3086
    %5968 = vmatmul.mubr.bf16.gmra.mrb[0].mxu0 %v3085
    %v5969 = vpop.f32.mrb[0].mxu0
    %v5970 = vadd.f32 0.0, %v5969
    %v5971 = vpop.f32.mrb[0].mxu0
    %v5972 = vadd.f32 0.0, %v5971
    %v5973 = vpop.f32.mrb[0].mxu0
    %v5974 = vadd.f32 0.0, %v5973
    %v5975 = vpop.f32.mrb[0].mxu0
    %v5976 = vadd.f32 0.0, %v5975
    %5977 = vmatprep.mubr.bf16.mxu0 %v3094
    %5978 = vmatmul.mubr.bf16.gmra.mrb[0].mxu0 %v3093
    %v5979 = vpop.f32.mrb[0].mxu0
    %v5980 = vadd.f32 0.0, %v5979
    %v5981 = vpop.f32.mrb[0].mxu0
    %v5982 = vadd.f32 0.0, %v5981
    %v5983 = vpop.f32.mrb[0].mxu0
    %v5984 = vadd.f32 0.0, %v5983
    %v5985 = vpop.f32.mrb[0].mxu0
    %v5986 = vadd.f32 0.0, %v5985
    %5987 = vmatprep.mubr.bf16.mxu0 %v3102
    %5988 = vmatmul.mubr.bf16.gmra.mrb[0].mxu0 %v3101
    %v5989 = vpop.f32.mrb[0].mxu0
    %v5990 = vadd.f32 0.0, %v5989
    %v5991 = vpop.f32.mrb[0].mxu0
    %v5992 = vadd.f32 0.0, %v5991
    %v5993 = vpop.f32.mrb[0].mxu0
    %v5994 = vadd.f32 0.0, %v5993
    %v5995 = vpop.f32.mrb[0].mxu0
    %v5996 = vadd.f32 0.0, %v5995
    %5997 = vdwg.mxu0
    %5998 = vmatprep.subr.bf16.mxu0 %v5142
    %5999 = vmatpush1.bf16.msra.mxu0 %v5141
    %6000 = vmatprep.subr.bf16.mxu0 %v5149
    %6001 = vmatpush1.bf16.msra.mxu0 %v5148
    %6002 = vmatprep.subr.bf16.mxu0 %v5156
    %6003 = vmatpush1.bf16.msra.mxu0 %v5155
    %6004 = vmatprep.subr.bf16.mxu0 %v5163
    %6005 = vmatpush1.bf16.msra.mxu0 %v5162
    %6006 = vmatprep.subr.bf16.mxu0 %v5170
    %6007 = vmatpush1.bf16.msra.mxu0 %v5169
    %6008 = vmatprep.subr.bf16.mxu0 %v5177
    %6009 = vmatpush1.bf16.msra.mxu0 %v5176
    %6010 = vmatprep.subr.bf16.mxu0 %v5184
    %6011 = vmatpush1.bf16.msra.mxu0 %v5183
    %6012 = vmatprep.subr.bf16.mxu0 %v5191
    %6013 = vmatpush1.bf16.msra.mxu0 %v5190
    %6014 = vmatprep.subr.bf16.mxu0 %v5198
    %6015 = vmatpush1.bf16.msra.mxu0 %v5197
    %6016 = vmatprep.subr.bf16.mxu0 %v5205
    %6017 = vmatpush1.bf16.msra.mxu0 %v5204
    %6018 = vmatprep.subr.bf16.mxu0 %v5212
    %6019 = vmatpush1.bf16.msra.mxu0 %v5211
    %6020 = vmatprep.subr.bf16.mxu0 %v5219
    %6021 = vmatpush1.bf16.msra.mxu0 %v5218
    %6022 = vmatprep.subr.bf16.mxu0 %v5226
    %6023 = vmatpush1.bf16.msra.mxu0 %v5225
    %6024 = vmatprep.subr.bf16.mxu0 %v5233
    %6025 = vmatpush1.bf16.msra.mxu0 %v5232
    %6026 = vmatprep.subr.bf16.mxu0 %v5240
    %6027 = vmatpush1.bf16.msra.mxu0 %v5239
    %6028 = vmatprep.subr.bf16.mxu0 %v5247
    %6029 = vmatpush1.bf16.msra.mxu0 %v5246
    %6030 = vmatprep.mubr.bf16.mxu0 %v3080
    %6031 = vmatmul.mubr.bf16.gmra.mrb[0].mxu0 %v3079
    %v6032 = vpop.f32.mrb[0].mxu0
    %v6033 = vadd.f32 %v5960, %v6032
    %v6034 = vpop.f32.mrb[0].mxu0
    %v6035 = vadd.f32 %v5962, %v6034
    %v6036 = vpop.f32.mrb[0].mxu0
    %v6037 = vadd.f32 %v5964, %v6036
    %v6038 = vpop.f32.mrb[0].mxu0
    %v6039 = vadd.f32 %v5966, %v6038
    %6040 = vmatprep.mubr.bf16.mxu0 %v3088
    %6041 = vmatmul.mubr.bf16.gmra.mrb[0].mxu0 %v3087
    %v6042 = vpop.f32.mrb[0].mxu0
    %v6043 = vadd.f32 %v5970, %v6042
    %v6044 = vpop.f32.mrb[0].mxu0
    %v6045 = vadd.f32 %v5972, %v6044
    %v6046 = vpop.f32.mrb[0].mxu0
    %v6047 = vadd.f32 %v5974, %v6046
    %v6048 = vpop.f32.mrb[0].mxu0
    %v6049 = vadd.f32 %v5976, %v6048
    %6050 = vmatprep.mubr.bf16.mxu0 %v3096
    %6051 = vmatmul.mubr.bf16.gmra.mrb[0].mxu0 %v3095
    %v6052 = vpop.f32.mrb[0].mxu0
    %v6053 = vadd.f32 %v5980, %v6052
    %v6054 = vpop.f32.mrb[0].mxu0
    %v6055 = vadd.f32 %v5982, %v6054
    %v6056 = vpop.f32.mrb[0].mxu0
    %v6057 = vadd.f32 %v5984, %v6056
    %v6058 = vpop.f32.mrb[0].mxu0
    %v6059 = vadd.f32 %v5986, %v6058
    %6060 = vmatprep.mubr.bf16.mxu0 %v3104
    %6061 = vmatmul.mubr.bf16.gmra.mrb[0].mxu0 %v3103
    %v6062 = vpop.f32.mrb[0].mxu0
    %v6063 = vadd.f32 %v5990, %v6062
    %v6064 = vpop.f32.mrb[0].mxu0
    %v6065 = vadd.f32 %v5992, %v6064
    %v6066 = vpop.f32.mrb[0].mxu0
    %v6067 = vadd.f32 %v5994, %v6066
    %v6068 = vpop.f32.mrb[0].mxu0
    %v6069 = vadd.f32 %v5996, %v6068
    %6070 = vdwg.mxu0
    %6071 = vmatprep.subr.bf16.mxu0 %v5254
    %6072 = vmatpush1.bf16.msra.mxu0 %v5253
    %6073 = vmatprep.subr.bf16.mxu0 %v5261
    %6074 = vmatpush1.bf16.msra.mxu0 %v5260
    %6075 = vmatprep.subr.bf16.mxu0 %v5268
    %6076 = vmatpush1.bf16.msra.mxu0 %v5267
    %6077 = vmatprep.subr.bf16.mxu0 %v5275
    %6078 = vmatpush1.bf16.msra.mxu0 %v5274
    %6079 = vmatprep.subr.bf16.mxu0 %v5282
    %6080 = vmatpush1.bf16.msra.mxu0 %v5281
    %6081 = vmatprep.subr.bf16.mxu0 %v5289
    %6082 = vmatpush1.bf16.msra.mxu0 %v5288
    %6083 = vmatprep.subr.bf16.mxu0 %v5296
    %6084 = vmatpush1.bf16.msra.mxu0 %v5295
    %6085 = vmatprep.subr.bf16.mxu0 %v5303
    %6086 = vmatpush1.bf16.msra.mxu0 %v5302
    %6087 = vmatprep.subr.bf16.mxu0 %v5310
    %6088 = vmatpush1.bf16.msra.mxu0 %v5309
    %6089 = vmatprep.subr.bf16.mxu0 %v5317
    %6090 = vmatpush1.bf16.msra.mxu0 %v5316
    %6091 = vmatprep.subr.bf16.mxu0 %v5324
    %6092 = vmatpush1.bf16.msra.mxu0 %v5323
    %6093 = vmatprep.subr.bf16.mxu0 %v5331
    %6094 = vmatpush1.bf16.msra.mxu0 %v5330
    %6095 = vmatprep.subr.bf16.mxu0 %v5338
    %6096 = vmatpush1.bf16.msra.mxu0 %v5337
    %6097 = vmatprep.subr.bf16.mxu0 %v5345
    %6098 = vmatpush1.bf16.msra.mxu0 %v5344
    %6099 = vmatprep.subr.bf16.mxu0 %v5352
    %6100 = vmatpush1.bf16.msra.mxu0 %v5351
    %6101 = vmatprep.subr.bf16.mxu0 %v5359
    %6102 = vmatpush1.bf16.msra.mxu0 %v5358
    %6103 = vmatprep.mubr.bf16.mxu0 %v3082
    %6104 = vmatmul.mubr.bf16.gmra.mrb[0].mxu0 %v3081
    %v6105 = vpop.f32.mrb[0].mxu0
    %v6106 = vadd.f32 %v6033, %v6105
    %v6107 = vpop.f32.mrb[0].mxu0
    %v6108 = vadd.f32 %v6035, %v6107
    %v6109 = vpop.f32.mrb[0].mxu0
    %v6110 = vadd.f32 %v6037, %v6109
    %v6111 = vpop.f32.mrb[0].mxu0
    %v6112 = vadd.f32 %v6039, %v6111
    %6113 = vmatprep.mubr.bf16.mxu0 %v3090
    %6114 = vmatmul.mubr.bf16.gmra.mrb[0].mxu0 %v3089
    %v6115 = vpop.f32.mrb[0].mxu0
    %v6116 = vadd.f32 %v6043, %v6115
    %v6117 = vpop.f32.mrb[0].mxu0
    %v6118 = vadd.f32 %v6045, %v6117
    %v6119 = vpop.f32.mrb[0].mxu0
    %v6120 = vadd.f32 %v6047, %v6119
    %v6121 = vpop.f32.mrb[0].mxu0
    %v6122 = vadd.f32 %v6049, %v6121
    %6123 = vmatprep.mubr.bf16.mxu0 %v3098
    %6124 = vmatmul.mubr.bf16.gmra.mrb[0].mxu0 %v3097
    %v6125 = vpop.f32.mrb[0].mxu0
    %v6126 = vadd.f32 %v6053, %v6125
    %v6127 = vpop.f32.mrb[0].mxu0
    %v6128 = vadd.f32 %v6055, %v6127
    %v6129 = vpop.f32.mrb[0].mxu0
    %v6130 = vadd.f32 %v6057, %v6129
    %v6131 = vpop.f32.mrb[0].mxu0
    %v6132 = vadd.f32 %v6059, %v6131
    %6133 = vmatprep.mubr.bf16.mxu0 %v3106
    %6134 = vmatmul.mubr.bf16.gmra.mrb[0].mxu0 %v3105
    %v6135 = vpop.f32.mrb[0].mxu0
    %v6136 = vadd.f32 %v6063, %v6135
    %v6137 = vpop.f32.mrb[0].mxu0
    %v6138 = vadd.f32 %v6065, %v6137
    %v6139 = vpop.f32.mrb[0].mxu0
    %v6140 = vadd.f32 %v6067, %v6139
    %v6141 = vpop.f32.mrb[0].mxu0
    %v6142 = vadd.f32 %v6069, %v6141
    %6143 = vdwg.mxu0
    %6144 = vmatprep.subr.bf16.mxu0 %v5366
    %6145 = vmatpush1.bf16.msra.mxu0 %v5365
    %6146 = vmatprep.subr.bf16.mxu0 %v5373
    %6147 = vmatpush1.bf16.msra.mxu0 %v5372
    %6148 = vmatprep.subr.bf16.mxu0 %v5380
    %6149 = vmatpush1.bf16.msra.mxu0 %v5379
    %6150 = vmatprep.subr.bf16.mxu0 %v5387
    %6151 = vmatpush1.bf16.msra.mxu0 %v5386
    %6152 = vmatprep.subr.bf16.mxu0 %v5394
    %6153 = vmatpush1.bf16.msra.mxu0 %v5393
    %6154 = vmatprep.subr.bf16.mxu0 %v5401
    %6155 = vmatpush1.bf16.msra.mxu0 %v5400
    %6156 = vmatprep.subr.bf16.mxu0 %v5408
    %6157 = vmatpush1.bf16.msra.mxu0 %v5407
    %6158 = vmatprep.subr.bf16.mxu0 %v5415
    %6159 = vmatpush1.bf16.msra.mxu0 %v5414
    %6160 = vmatprep.subr.bf16.mxu0 %v5422
    %6161 = vmatpush1.bf16.msra.mxu0 %v5421
    %6162 = vmatprep.subr.bf16.mxu0 %v5429
    %6163 = vmatpush1.bf16.msra.mxu0 %v5428
    %6164 = vmatprep.subr.bf16.mxu0 %v5436
    %6165 = vmatpush1.bf16.msra.mxu0 %v5435
    %6166 = vmatprep.subr.bf16.mxu0 %v5443
    %6167 = vmatpush1.bf16.msra.mxu0 %v5442
    %6168 = vmatprep.subr.bf16.mxu0 %v5450
    %6169 = vmatpush1.bf16.msra.mxu0 %v5449
    %6170 = vmatprep.subr.bf16.mxu0 %v5457
    %6171 = vmatpush1.bf16.msra.mxu0 %v5456
    %6172 = vmatprep.subr.bf16.mxu0 %v5464
    %6173 = vmatpush1.bf16.msra.mxu0 %v5463
    %6174 = vmatprep.subr.bf16.mxu0 %v5471
    %6175 = vmatpush1.bf16.msra.mxu0 %v5470
    %6176 = vmatprep.mubr.bf16.mxu0 %v3084
    %6177 = vmatmul.mubr.bf16.gmra.mrb[0].mxu0 %v3083
    %v6178 = vpop.f32.mrb[0].mxu0
    %v6179 = vadd.f32 %v6106, %v6178
    %v6180 = vpop.f32.mrb[0].mxu0
    %v6181 = vadd.f32 %v6108, %v6180
    %v6182 = vpop.f32.mrb[0].mxu0
    %v6183 = vadd.f32 %v6110, %v6182
    %v6184 = vpop.f32.mrb[0].mxu0
    %v6185 = vadd.f32 %v6112, %v6184
    %6186 = vmatprep.mubr.bf16.mxu0 %v3092
    %6187 = vmatmul.mubr.bf16.gmra.mrb[0].mxu0 %v3091
    %v6188 = vpop.f32.mrb[0].mxu0
    %v6189 = vadd.f32 %v6116, %v6188
    %v6190 = vpop.f32.mrb[0].mxu0
    %v6191 = vadd.f32 %v6118, %v6190
    %v6192 = vpop.f32.mrb[0].mxu0
    %v6193 = vadd.f32 %v6120, %v6192
    %v6194 = vpop.f32.mrb[0].mxu0
    %v6195 = vadd.f32 %v6122, %v6194
    %6196 = vmatprep.mubr.bf16.mxu0 %v3100
    %6197 = vmatmul.mubr.bf16.gmra.mrb[0].mxu0 %v3099
    %v6198 = vpop.f32.mrb[0].mxu0
    %v6199 = vadd.f32 %v6126, %v6198
    %v6200 = vpop.f32.mrb[0].mxu0
    %v6201 = vadd.f32 %v6128, %v6200
    %v6202 = vpop.f32.mrb[0].mxu0
    %v6203 = vadd.f32 %v6130, %v6202
    %v6204 = vpop.f32.mrb[0].mxu0
    %v6205 = vadd.f32 %v6132, %v6204
    %6206 = vmatprep.mubr.bf16.mxu0 %v3108
    %6207 = vmatmul.mubr.bf16.gmra.mrb[0].mxu0 %v3107
    %v6208 = vpop.f32.mrb[0].mxu0
    %v6209 = vadd.f32 %v6136, %v6208
    %v6210 = vpop.f32.mrb[0].mxu0
    %v6211 = vadd.f32 %v6138, %v6210
    %v6212 = vpop.f32.mrb[0].mxu0
    %v6213 = vadd.f32 %v6140, %v6212
    %v6214 = vpop.f32.mrb[0].mxu0
    %v6215 = vadd.f32 %v6142, %v6214
    %6216 = vdwg.mxu0
    %6217 = vmatprep.subr.bf16.mxu0 %v5032
    %6218 = vmatpush1.bf16.msra.mxu0 %v5031
    %6219 = vmatprep.subr.bf16.mxu0 %v5039
    %6220 = vmatpush1.bf16.msra.mxu0 %v5038
    %6221 = vmatprep.subr.bf16.mxu0 %v5046
    %6222 = vmatpush1.bf16.msra.mxu0 %v5045
    %6223 = vmatprep.subr.bf16.mxu0 %v5053
    %6224 = vmatpush1.bf16.msra.mxu0 %v5052
    %6225 = vmatprep.subr.bf16.mxu0 %v5060
    %6226 = vmatpush1.bf16.msra.mxu0 %v5059
    %6227 = vmatprep.subr.bf16.mxu0 %v5067
    %6228 = vmatpush1.bf16.msra.mxu0 %v5066
    %6229 = vmatprep.subr.bf16.mxu0 %v5074
    %6230 = vmatpush1.bf16.msra.mxu0 %v5073
    %6231 = vmatprep.subr.bf16.mxu0 %v5081
    %6232 = vmatpush1.bf16.msra.mxu0 %v5080
    %6233 = vmatprep.subr.bf16.mxu0 %v5088
    %6234 = vmatpush1.bf16.msra.mxu0 %v5087
    %6235 = vmatprep.subr.bf16.mxu0 %v5095
    %6236 = vmatpush1.bf16.msra.mxu0 %v5094
    %6237 = vmatprep.subr.bf16.mxu0 %v5102
    %6238 = vmatpush1.bf16.msra.mxu0 %v5101
    %6239 = vmatprep.subr.bf16.mxu0 %v5109
    %6240 = vmatpush1.bf16.msra.mxu0 %v5108
    %6241 = vmatprep.subr.bf16.mxu0 %v5116
    %6242 = vmatpush1.bf16.msra.mxu0 %v5115
    %6243 = vmatprep.subr.bf16.mxu0 %v5123
    %6244 = vmatpush1.bf16.msra.mxu0 %v5122
    %6245 = vmatprep.subr.bf16.mxu0 %v5130
    %6246 = vmatpush1.bf16.msra.mxu0 %v5129
    %6247 = vmatprep.subr.bf16.mxu0 %v5137
    %6248 = vmatpush1.bf16.msra.mxu0 %v5136
    %6249 = vmatprep.mubr.bf16.mxu0 %v3078
    %6250 = vmatmul.mubr.bf16.gmra.mrb[0].mxu0 %v3077
    %v6251 = vpop.f32.mrb[0].mxu0
    %v6252 = vadd.f32 0.0, %v6251
    %v6253 = vpop.f32.mrb[0].mxu0
    %v6254 = vadd.f32 0.0, %v6253
    %v6255 = vpop.f32.mrb[0].mxu0
    %v6256 = vadd.f32 0.0, %v6255
    %v6257 = vpop.f32.mrb[0].mxu0
    %v6258 = vadd.f32 0.0, %v6257
    %6259 = vmatprep.mubr.bf16.mxu0 %v3086
    %6260 = vmatmul.mubr.bf16.gmra.mrb[0].mxu0 %v3085
    %v6261 = vpop.f32.mrb[0].mxu0
    %v6262 = vadd.f32 0.0, %v6261
    %v6263 = vpop.f32.mrb[0].mxu0
    %v6264 = vadd.f32 0.0, %v6263
    %v6265 = vpop.f32.mrb[0].mxu0
    %v6266 = vadd.f32 0.0, %v6265
    %v6267 = vpop.f32.mrb[0].mxu0
    %v6268 = vadd.f32 0.0, %v6267
    %6269 = vmatprep.mubr.bf16.mxu0 %v3094
    %6270 = vmatmul.mubr.bf16.gmra.mrb[0].mxu0 %v3093
    %v6271 = vpop.f32.mrb[0].mxu0
    %v6272 = vadd.f32 0.0, %v6271
    %v6273 = vpop.f32.mrb[0].mxu0
    %v6274 = vadd.f32 0.0, %v6273
    %v6275 = vpop.f32.mrb[0].mxu0
    %v6276 = vadd.f32 0.0, %v6275
    %v6277 = vpop.f32.mrb[0].mxu0
    %v6278 = vadd.f32 0.0, %v6277
    %6279 = vmatprep.mubr.bf16.mxu0 %v3102
    %6280 = vmatmul.mubr.bf16.gmra.mrb[0].mxu0 %v3101
    %v6281 = vpop.f32.mrb[0].mxu0
    %v6282 = vadd.f32 0.0, %v6281
    %v6283 = vpop.f32.mrb[0].mxu0
    %v6284 = vadd.f32 0.0, %v6283
    %v6285 = vpop.f32.mrb[0].mxu0
    %v6286 = vadd.f32 0.0, %v6285
    %v6287 = vpop.f32.mrb[0].mxu0
    %v6288 = vadd.f32 0.0, %v6287
    %6289 = vdwg.mxu0
    %6290 = vmatprep.subr.bf16.mxu0 %v5144
    %6291 = vmatpush1.bf16.msra.mxu0 %v5143
    %6292 = vmatprep.subr.bf16.mxu0 %v5151
    %6293 = vmatpush1.bf16.msra.mxu0 %v5150
    %6294 = vmatprep.subr.bf16.mxu0 %v5158
    %6295 = vmatpush1.bf16.msra.mxu0 %v5157
    %6296 = vmatprep.subr.bf16.mxu0 %v5165
    %6297 = vmatpush1.bf16.msra.mxu0 %v5164
    %6298 = vmatprep.subr.bf16.mxu0 %v5172
    %6299 = vmatpush1.bf16.msra.mxu0 %v5171
    %6300 = vmatprep.subr.bf16.mxu0 %v5179
    %6301 = vmatpush1.bf16.msra.mxu0 %v5178
    %6302 = vmatprep.subr.bf16.mxu0 %v5186
    %6303 = vmatpush1.bf16.msra.mxu0 %v5185
    %6304 = vmatprep.subr.bf16.mxu0 %v5193
    %6305 = vmatpush1.bf16.msra.mxu0 %v5192
    %6306 = vmatprep.subr.bf16.mxu0 %v5200
    %6307 = vmatpush1.bf16.msra.mxu0 %v5199
    %6308 = vmatprep.subr.bf16.mxu0 %v5207
    %6309 = vmatpush1.bf16.msra.mxu0 %v5206
    %6310 = vmatprep.subr.bf16.mxu0 %v5214
    %6311 = vmatpush1.bf16.msra.mxu0 %v5213
    %6312 = vmatprep.subr.bf16.mxu0 %v5221
    %6313 = vmatpush1.bf16.msra.mxu0 %v5220
    %6314 = vmatprep.subr.bf16.mxu0 %v5228
    %6315 = vmatpush1.bf16.msra.mxu0 %v5227
    %6316 = vmatprep.subr.bf16.mxu0 %v5235
    %6317 = vmatpush1.bf16.msra.mxu0 %v5234
    %6318 = vmatprep.subr.bf16.mxu0 %v5242
    %6319 = vmatpush1.bf16.msra.mxu0 %v5241
    %6320 = vmatprep.subr.bf16.mxu0 %v5249
    %6321 = vmatpush1.bf16.msra.mxu0 %v5248
    %6322 = vmatprep.mubr.bf16.mxu0 %v3080
    %6323 = vmatmul.mubr.bf16.gmra.mrb[0].mxu0 %v3079
    %v6324 = vpop.f32.mrb[0].mxu0
    %v6325 = vadd.f32 %v6252, %v6324
    %v6326 = vpop.f32.mrb[0].mxu0
    %v6327 = vadd.f32 %v6254, %v6326
    %v6328 = vpop.f32.mrb[0].mxu0
    %v6329 = vadd.f32 %v6256, %v6328
    %v6330 = vpop.f32.mrb[0].mxu0
    %v6331 = vadd.f32 %v6258, %v6330
    %6332 = vmatprep.mubr.bf16.mxu0 %v3088
    %6333 = vmatmul.mubr.bf16.gmra.mrb[0].mxu0 %v3087
    %v6334 = vpop.f32.mrb[0].mxu0
    %v6335 = vadd.f32 %v6262, %v6334
    %v6336 = vpop.f32.mrb[0].mxu0
    %v6337 = vadd.f32 %v6264, %v6336
    %v6338 = vpop.f32.mrb[0].mxu0
    %v6339 = vadd.f32 %v6266, %v6338
    %v6340 = vpop.f32.mrb[0].mxu0
    %v6341 = vadd.f32 %v6268, %v6340
    %6342 = vmatprep.mubr.bf16.mxu0 %v3096
    %6343 = vmatmul.mubr.bf16.gmra.mrb[0].mxu0 %v3095
    %v6344 = vpop.f32.mrb[0].mxu0
    %v6345 = vadd.f32 %v6272, %v6344
    %v6346 = vpop.f32.mrb[0].mxu0
    %v6347 = vadd.f32 %v6274, %v6346
    %v6348 = vpop.f32.mrb[0].mxu0
    %v6349 = vadd.f32 %v6276, %v6348
    %v6350 = vpop.f32.mrb[0].mxu0
    %v6351 = vadd.f32 %v6278, %v6350
    %6352 = vmatprep.mubr.bf16.mxu0 %v3104
    %6353 = vmatmul.mubr.bf16.gmra.mrb[0].mxu0 %v3103
    %v6354 = vpop.f32.mrb[0].mxu0
    %v6355 = vadd.f32 %v6282, %v6354
    %v6356 = vpop.f32.mrb[0].mxu0
    %v6357 = vadd.f32 %v6284, %v6356
    %v6358 = vpop.f32.mrb[0].mxu0
    %v6359 = vadd.f32 %v6286, %v6358
    %v6360 = vpop.f32.mrb[0].mxu0
    %v6361 = vadd.f32 %v6288, %v6360
    %6362 = vdwg.mxu0
    %6363 = vmatprep.subr.bf16.mxu0 %v5256
    %6364 = vmatpush1.bf16.msra.mxu0 %v5255
    %6365 = vmatprep.subr.bf16.mxu0 %v5263
    %6366 = vmatpush1.bf16.msra.mxu0 %v5262
    %6367 = vmatprep.subr.bf16.mxu0 %v5270
    %6368 = vmatpush1.bf16.msra.mxu0 %v5269
    %6369 = vmatprep.subr.bf16.mxu0 %v5277
    %6370 = vmatpush1.bf16.msra.mxu0 %v5276
    %6371 = vmatprep.subr.bf16.mxu0 %v5284
    %6372 = vmatpush1.bf16.msra.mxu0 %v5283
    %6373 = vmatprep.subr.bf16.mxu0 %v5291
    %6374 = vmatpush1.bf16.msra.mxu0 %v5290
    %6375 = vmatprep.subr.bf16.mxu0 %v5298
    %6376 = vmatpush1.bf16.msra.mxu0 %v5297
    %6377 = vmatprep.subr.bf16.mxu0 %v5305
    %6378 = vmatpush1.bf16.msra.mxu0 %v5304
    %6379 = vmatprep.subr.bf16.mxu0 %v5312
    %6380 = vmatpush1.bf16.msra.mxu0 %v5311
    %6381 = vmatprep.subr.bf16.mxu0 %v5319
    %6382 = vmatpush1.bf16.msra.mxu0 %v5318
    %6383 = vmatprep.subr.bf16.mxu0 %v5326
    %6384 = vmatpush1.bf16.msra.mxu0 %v5325
    %6385 = vmatprep.subr.bf16.mxu0 %v5333
    %6386 = vmatpush1.bf16.msra.mxu0 %v5332
    %6387 = vmatprep.subr.bf16.mxu0 %v5340
    %6388 = vmatpush1.bf16.msra.mxu0 %v5339
    %6389 = vmatprep.subr.bf16.mxu0 %v5347
    %6390 = vmatpush1.bf16.msra.mxu0 %v5346
    %6391 = vmatprep.subr.bf16.mxu0 %v5354
    %6392 = vmatpush1.bf16.msra.mxu0 %v5353
    %6393 = vmatprep.subr.bf16.mxu0 %v5361
    %6394 = vmatpush1.bf16.msra.mxu0 %v5360
    %6395 = vmatprep.mubr.bf16.mxu0 %v3082
    %6396 = vmatmul.mubr.bf16.gmra.mrb[0].mxu0 %v3081
    %v6397 = vpop.f32.mrb[0].mxu0
    %v6398 = vadd.f32 %v6325, %v6397
    %v6399 = vpop.f32.mrb[0].mxu0
    %v6400 = vadd.f32 %v6327, %v6399
    %v6401 = vpop.f32.mrb[0].mxu0
    %v6402 = vadd.f32 %v6329, %v6401
    %v6403 = vpop.f32.mrb[0].mxu0
    %v6404 = vadd.f32 %v6331, %v6403
    %6405 = vmatprep.mubr.bf16.mxu0 %v3090
    %6406 = vmatmul.mubr.bf16.gmra.mrb[0].mxu0 %v3089
    %v6407 = vpop.f32.mrb[0].mxu0
    %v6408 = vadd.f32 %v6335, %v6407
    %v6409 = vpop.f32.mrb[0].mxu0
    %v6410 = vadd.f32 %v6337, %v6409
    %v6411 = vpop.f32.mrb[0].mxu0
    %v6412 = vadd.f32 %v6339, %v6411
    %v6413 = vpop.f32.mrb[0].mxu0
    %v6414 = vadd.f32 %v6341, %v6413
    %6415 = vmatprep.mubr.bf16.mxu0 %v3098
    %6416 = vmatmul.mubr.bf16.gmra.mrb[0].mxu0 %v3097
    %v6417 = vpop.f32.mrb[0].mxu0
    %v6418 = vadd.f32 %v6345, %v6417
    %v6419 = vpop.f32.mrb[0].mxu0
    %v6420 = vadd.f32 %v6347, %v6419
    %v6421 = vpop.f32.mrb[0].mxu0
    %v6422 = vadd.f32 %v6349, %v6421
    %v6423 = vpop.f32.mrb[0].mxu0
    %v6424 = vadd.f32 %v6351, %v6423
    %6425 = vmatprep.mubr.bf16.mxu0 %v3106
    %6426 = vmatmul.mubr.bf16.gmra.mrb[0].mxu0 %v3105
    %v6427 = vpop.f32.mrb[0].mxu0
    %v6428 = vadd.f32 %v6355, %v6427
    %v6429 = vpop.f32.mrb[0].mxu0
    %v6430 = vadd.f32 %v6357, %v6429
    %v6431 = vpop.f32.mrb[0].mxu0
    %v6432 = vadd.f32 %v6359, %v6431
    %v6433 = vpop.f32.mrb[0].mxu0
    %v6434 = vadd.f32 %v6361, %v6433
    %6435 = vdwg.mxu0
    %6436 = vmatprep.subr.bf16.mxu0 %v5368
    %6437 = vmatpush1.bf16.msra.mxu0 %v5367
    %6438 = vmatprep.subr.bf16.mxu0 %v5375
    %6439 = vmatpush1.bf16.msra.mxu0 %v5374
    %6440 = vmatprep.subr.bf16.mxu0 %v5382
    %6441 = vmatpush1.bf16.msra.mxu0 %v5381
    %6442 = vmatprep.subr.bf16.mxu0 %v5389
    %6443 = vmatpush1.bf16.msra.mxu0 %v5388
    %6444 = vmatprep.subr.bf16.mxu0 %v5396
    %6445 = vmatpush1.bf16.msra.mxu0 %v5395
    %6446 = vmatprep.subr.bf16.mxu0 %v5403
    %6447 = vmatpush1.bf16.msra.mxu0 %v5402
    %6448 = vmatprep.subr.bf16.mxu0 %v5410
    %6449 = vmatpush1.bf16.msra.mxu0 %v5409
    %6450 = vmatprep.subr.bf16.mxu0 %v5417
    %6451 = vmatpush1.bf16.msra.mxu0 %v5416
    %6452 = vmatprep.subr.bf16.mxu0 %v5424
    %6453 = vmatpush1.bf16.msra.mxu0 %v5423
    %6454 = vmatprep.subr.bf16.mxu0 %v5431
    %6455 = vmatpush1.bf16.msra.mxu0 %v5430
    %6456 = vmatprep.subr.bf16.mxu0 %v5438
    %6457 = vmatpush1.bf16.msra.mxu0 %v5437
    %6458 = vmatprep.subr.bf16.mxu0 %v5445
    %6459 = vmatpush1.bf16.msra.mxu0 %v5444
    %6460 = vmatprep.subr.bf16.mxu0 %v5452
    %6461 = vmatpush1.bf16.msra.mxu0 %v5451
    %6462 = vmatprep.subr.bf16.mxu0 %v5459
    %6463 = vmatpush1.bf16.msra.mxu0 %v5458
    %6464 = vmatprep.subr.bf16.mxu0 %v5466
    %6465 = vmatpush1.bf16.msra.mxu0 %v5465
    %6466 = vmatprep.subr.bf16.mxu0 %v5473
    %6467 = vmatpush1.bf16.msra.mxu0 %v5472
    %6468 = vmatprep.mubr.bf16.mxu0 %v3084
    %6469 = vmatmul.mubr.bf16.gmra.mrb[0].mxu0 %v3083
    %v6470 = vpop.f32.mrb[0].mxu0
    %v6471 = vadd.f32 %v6398, %v6470
    %v6472 = vpop.f32.mrb[0].mxu0
    %v6473 = vadd.f32 %v6400, %v6472
    %v6474 = vpop.f32.mrb[0].mxu0
    %v6475 = vadd.f32 %v6402, %v6474
    %v6476 = vpop.f32.mrb[0].mxu0
    %v6477 = vadd.f32 %v6404, %v6476
    %6478 = vmatprep.mubr.bf16.mxu0 %v3092
    %6479 = vmatmul.mubr.bf16.gmra.mrb[0].mxu0 %v3091
    %v6480 = vpop.f32.mrb[0].mxu0
    %v6481 = vadd.f32 %v6408, %v6480
    %v6482 = vpop.f32.mrb[0].mxu0
    %v6483 = vadd.f32 %v6410, %v6482
    %v6484 = vpop.f32.mrb[0].mxu0
    %v6485 = vadd.f32 %v6412, %v6484
    %v6486 = vpop.f32.mrb[0].mxu0
    %v6487 = vadd.f32 %v6414, %v6486
    %6488 = vmatprep.mubr.bf16.mxu0 %v3100
    %6489 = vmatmul.mubr.bf16.gmra.mrb[0].mxu0 %v3099
    %v6490 = vpop.f32.mrb[0].mxu0
    %v6491 = vadd.f32 %v6418, %v6490
    %v6492 = vpop.f32.mrb[0].mxu0
    %v6493 = vadd.f32 %v6420, %v6492
    %v6494 = vpop.f32.mrb[0].mxu0
    %v6495 = vadd.f32 %v6422, %v6494
    %v6496 = vpop.f32.mrb[0].mxu0
    %v6497 = vadd.f32 %v6424, %v6496
    %6498 = vmatprep.mubr.bf16.mxu0 %v3108
    %6499 = vmatmul.mubr.bf16.gmra.mrb[0].mxu0 %v3107
    %v6500 = vpop.f32.mrb[0].mxu0
    %v6501 = vadd.f32 %v6428, %v6500
    %v6502 = vpop.f32.mrb[0].mxu0
    %v6503 = vadd.f32 %v6430, %v6502
    %v6504 = vpop.f32.mrb[0].mxu0
    %v6505 = vadd.f32 %v6432, %v6504
    %v6506 = vpop.f32.mrb[0].mxu0
    %v6507 = vadd.f32 %v6434, %v6506
    %6508 = vdwg.mxu0
    %6509 = vmatprep.subr.bf16.mxu0 %v5034
    %6510 = vmatpush1.bf16.msra.mxu0 %v5033
    %6511 = vmatprep.subr.bf16.mxu0 %v5041
    %6512 = vmatpush1.bf16.msra.mxu0 %v5040
    %6513 = vmatprep.subr.bf16.mxu0 %v5048
    %6514 = vmatpush1.bf16.msra.mxu0 %v5047
    %6515 = vmatprep.subr.bf16.mxu0 %v5055
    %6516 = vmatpush1.bf16.msra.mxu0 %v5054
    %6517 = vmatprep.subr.bf16.mxu0 %v5062
    %6518 = vmatpush1.bf16.msra.mxu0 %v5061
    %6519 = vmatprep.subr.bf16.mxu0 %v5069
    %6520 = vmatpush1.bf16.msra.mxu0 %v5068
    %6521 = vmatprep.subr.bf16.mxu0 %v5076
    %6522 = vmatpush1.bf16.msra.mxu0 %v5075
    %6523 = vmatprep.subr.bf16.mxu0 %v5083
    %6524 = vmatpush1.bf16.msra.mxu0 %v5082
    %6525 = vmatprep.subr.bf16.mxu0 %v5090
    %6526 = vmatpush1.bf16.msra.mxu0 %v5089
    %6527 = vmatprep.subr.bf16.mxu0 %v5097
    %6528 = vmatpush1.bf16.msra.mxu0 %v5096
    %6529 = vmatprep.subr.bf16.mxu0 %v5104
    %6530 = vmatpush1.bf16.msra.mxu0 %v5103
    %6531 = vmatprep.subr.bf16.mxu0 %v5111
    %6532 = vmatpush1.bf16.msra.mxu0 %v5110
    %6533 = vmatprep.subr.bf16.mxu0 %v5118
    %6534 = vmatpush1.bf16.msra.mxu0 %v5117
    %6535 = vmatprep.subr.bf16.mxu0 %v5125
    %6536 = vmatpush1.bf16.msra.mxu0 %v5124
    %6537 = vmatprep.subr.bf16.mxu0 %v5132
    %6538 = vmatpush1.bf16.msra.mxu0 %v5131
    %6539 = vmatprep.subr.bf16.mxu0 %v5139
    %6540 = vmatpush1.bf16.msra.mxu0 %v5138
    %6541 = vmatprep.mubr.bf16.mxu0 %v3078
    %6542 = vmatmul.mubr.bf16.gmra.mrb[0].mxu0 %v3077
    %v6543 = vpop.f32.mrb[0].mxu0
    %v6544 = vadd.f32 0.0, %v6543
    %v6545 = vpop.f32.mrb[0].mxu0
    %v6546 = vadd.f32 0.0, %v6545
    %v6547 = vpop.f32.mrb[0].mxu0
    %v6548 = vadd.f32 0.0, %v6547
    %v6549 = vpop.f32.mrb[0].mxu0
    %v6550 = vadd.f32 0.0, %v6549
    %6551 = vmatprep.mubr.bf16.mxu0 %v3086
    %6552 = vmatmul.mubr.bf16.gmra.mrb[0].mxu0 %v3085
    %v6553 = vpop.f32.mrb[0].mxu0
    %v6554 = vadd.f32 0.0, %v6553
    %v6555 = vpop.f32.mrb[0].mxu0
    %v6556 = vadd.f32 0.0, %v6555
    %v6557 = vpop.f32.mrb[0].mxu0
    %v6558 = vadd.f32 0.0, %v6557
    %v6559 = vpop.f32.mrb[0].mxu0
    %v6560 = vadd.f32 0.0, %v6559
    %6561 = vmatprep.mubr.bf16.mxu0 %v3094
    %6562 = vmatmul.mubr.bf16.gmra.mrb[0].mxu0 %v3093
    %v6563 = vpop.f32.mrb[0].mxu0
    %v6564 = vadd.f32 0.0, %v6563
    %v6565 = vpop.f32.mrb[0].mxu0
    %v6566 = vadd.f32 0.0, %v6565
    %v6567 = vpop.f32.mrb[0].mxu0
    %v6568 = vadd.f32 0.0, %v6567
    %v6569 = vpop.f32.mrb[0].mxu0
    %v6570 = vadd.f32 0.0, %v6569
    %6571 = vmatprep.mubr.bf16.mxu0 %v3102
    %6572 = vmatmul.mubr.bf16.gmra.mrb[0].mxu0 %v3101
    %v6573 = vpop.f32.mrb[0].mxu0
    %v6574 = vadd.f32 0.0, %v6573
    %v6575 = vpop.f32.mrb[0].mxu0
    %v6576 = vadd.f32 0.0, %v6575
    %v6577 = vpop.f32.mrb[0].mxu0
    %v6578 = vadd.f32 0.0, %v6577
    %v6579 = vpop.f32.mrb[0].mxu0
    %v6580 = vadd.f32 0.0, %v6579
    %6581 = vdwg.mxu0
    %6582 = vmatprep.subr.bf16.mxu0 %v5146
    %6583 = vmatpush1.bf16.msra.mxu0 %v5145
    %6584 = vmatprep.subr.bf16.mxu0 %v5153
    %6585 = vmatpush1.bf16.msra.mxu0 %v5152
    %6586 = vmatprep.subr.bf16.mxu0 %v5160
    %6587 = vmatpush1.bf16.msra.mxu0 %v5159
    %6588 = vmatprep.subr.bf16.mxu0 %v5167
    %6589 = vmatpush1.bf16.msra.mxu0 %v5166
    %6590 = vmatprep.subr.bf16.mxu0 %v5174
    %6591 = vmatpush1.bf16.msra.mxu0 %v5173
    %6592 = vmatprep.subr.bf16.mxu0 %v5181
    %6593 = vmatpush1.bf16.msra.mxu0 %v5180
    %6594 = vmatprep.subr.bf16.mxu0 %v5188
    %6595 = vmatpush1.bf16.msra.mxu0 %v5187
    %6596 = vmatprep.subr.bf16.mxu0 %v5195
    %6597 = vmatpush1.bf16.msra.mxu0 %v5194
    %6598 = vmatprep.subr.bf16.mxu0 %v5202
    %6599 = vmatpush1.bf16.msra.mxu0 %v5201
    %6600 = vmatprep.subr.bf16.mxu0 %v5209
    %6601 = vmatpush1.bf16.msra.mxu0 %v5208
    %6602 = vmatprep.subr.bf16.mxu0 %v5216
    %6603 = vmatpush1.bf16.msra.mxu0 %v5215
    %6604 = vmatprep.subr.bf16.mxu0 %v5223
    %6605 = vmatpush1.bf16.msra.mxu0 %v5222
    %6606 = vmatprep.subr.bf16.mxu0 %v5230
    %6607 = vmatpush1.bf16.msra.mxu0 %v5229
    %6608 = vmatprep.subr.bf16.mxu0 %v5237
    %6609 = vmatpush1.bf16.msra.mxu0 %v5236
    %6610 = vmatprep.subr.bf16.mxu0 %v5244
    %6611 = vmatpush1.bf16.msra.mxu0 %v5243
    %6612 = vmatprep.subr.bf16.mxu0 %v5251
    %6613 = vmatpush1.bf16.msra.mxu0 %v5250
    %6614 = vmatprep.mubr.bf16.mxu0 %v3080
    %6615 = vmatmul.mubr.bf16.gmra.mrb[0].mxu0 %v3079
    %v6616 = vpop.f32.mrb[0].mxu0
    %v6617 = vadd.f32 %v6544, %v6616
    %v6618 = vpop.f32.mrb[0].mxu0
    %v6619 = vadd.f32 %v6546, %v6618
    %v6620 = vpop.f32.mrb[0].mxu0
    %v6621 = vadd.f32 %v6548, %v6620
    %v6622 = vpop.f32.mrb[0].mxu0
    %v6623 = vadd.f32 %v6550, %v6622
    %6624 = vmatprep.mubr.bf16.mxu0 %v3088
    %6625 = vmatmul.mubr.bf16.gmra.mrb[0].mxu0 %v3087
    %v6626 = vpop.f32.mrb[0].mxu0
    %v6627 = vadd.f32 %v6554, %v6626
    %v6628 = vpop.f32.mrb[0].mxu0
    %v6629 = vadd.f32 %v6556, %v6628
    %v6630 = vpop.f32.mrb[0].mxu0
    %v6631 = vadd.f32 %v6558, %v6630
    %v6632 = vpop.f32.mrb[0].mxu0
    %v6633 = vadd.f32 %v6560, %v6632
    %6634 = vmatprep.mubr.bf16.mxu0 %v3096
    %6635 = vmatmul.mubr.bf16.gmra.mrb[0].mxu0 %v3095
    %v6636 = vpop.f32.mrb[0].mxu0
    %v6637 = vadd.f32 %v6564, %v6636
    %v6638 = vpop.f32.mrb[0].mxu0
    %v6639 = vadd.f32 %v6566, %v6638
    %v6640 = vpop.f32.mrb[0].mxu0
    %v6641 = vadd.f32 %v6568, %v6640
    %v6642 = vpop.f32.mrb[0].mxu0
    %v6643 = vadd.f32 %v6570, %v6642
    %6644 = vmatprep.mubr.bf16.mxu0 %v3104
    %6645 = vmatmul.mubr.bf16.gmra.mrb[0].mxu0 %v3103
    %v6646 = vpop.f32.mrb[0].mxu0
    %v6647 = vadd.f32 %v6574, %v6646
    %v6648 = vpop.f32.mrb[0].mxu0
    %v6649 = vadd.f32 %v6576, %v6648
    %v6650 = vpop.f32.mrb[0].mxu0
    %v6651 = vadd.f32 %v6578, %v6650
    %v6652 = vpop.f32.mrb[0].mxu0
    %v6653 = vadd.f32 %v6580, %v6652
    %6654 = vdwg.mxu0
    %6655 = vmatprep.subr.bf16.mxu0 %v5258
    %6656 = vmatpush1.bf16.msra.mxu0 %v5257
    %6657 = vmatprep.subr.bf16.mxu0 %v5265
    %6658 = vmatpush1.bf16.msra.mxu0 %v5264
    %6659 = vmatprep.subr.bf16.mxu0 %v5272
    %6660 = vmatpush1.bf16.msra.mxu0 %v5271
    %6661 = vmatprep.subr.bf16.mxu0 %v5279
    %6662 = vmatpush1.bf16.msra.mxu0 %v5278
    %6663 = vmatprep.subr.bf16.mxu0 %v5286
    %6664 = vmatpush1.bf16.msra.mxu0 %v5285
    %6665 = vmatprep.subr.bf16.mxu0 %v5293
    %6666 = vmatpush1.bf16.msra.mxu0 %v5292
    %6667 = vmatprep.subr.bf16.mxu0 %v5300
    %6668 = vmatpush1.bf16.msra.mxu0 %v5299
    %6669 = vmatprep.subr.bf16.mxu0 %v5307
    %6670 = vmatpush1.bf16.msra.mxu0 %v5306
    %6671 = vmatprep.subr.bf16.mxu0 %v5314
    %6672 = vmatpush1.bf16.msra.mxu0 %v5313
    %6673 = vmatprep.subr.bf16.mxu0 %v5321
    %6674 = vmatpush1.bf16.msra.mxu0 %v5320
    %6675 = vmatprep.subr.bf16.mxu0 %v5328
    %6676 = vmatpush1.bf16.msra.mxu0 %v5327
    %6677 = vmatprep.subr.bf16.mxu0 %v5335
    %6678 = vmatpush1.bf16.msra.mxu0 %v5334
    %6679 = vmatprep.subr.bf16.mxu0 %v5342
    %6680 = vmatpush1.bf16.msra.mxu0 %v5341
    %6681 = vmatprep.subr.bf16.mxu0 %v5349
    %6682 = vmatpush1.bf16.msra.mxu0 %v5348
    %6683 = vmatprep.subr.bf16.mxu0 %v5356
    %6684 = vmatpush1.bf16.msra.mxu0 %v5355
    %6685 = vmatprep.subr.bf16.mxu0 %v5363
    %6686 = vmatpush1.bf16.msra.mxu0 %v5362
    %6687 = vmatprep.mubr.bf16.mxu0 %v3082
    %6688 = vmatmul.mubr.bf16.gmra.mrb[0].mxu0 %v3081
    %v6689 = vpop.f32.mrb[0].mxu0
    %v6690 = vadd.f32 %v6617, %v6689
    %v6691 = vpop.f32.mrb[0].mxu0
    %v6692 = vadd.f32 %v6619, %v6691
    %v6693 = vpop.f32.mrb[0].mxu0
    %v6694 = vadd.f32 %v6621, %v6693
    %v6695 = vpop.f32.mrb[0].mxu0
    %v6696 = vadd.f32 %v6623, %v6695
    %6697 = vmatprep.mubr.bf16.mxu0 %v3090
    %6698 = vmatmul.mubr.bf16.gmra.mrb[0].mxu0 %v3089
    %v6699 = vpop.f32.mrb[0].mxu0
    %v6700 = vadd.f32 %v6627, %v6699
    %v6701 = vpop.f32.mrb[0].mxu0
    %v6702 = vadd.f32 %v6629, %v6701
    %v6703 = vpop.f32.mrb[0].mxu0
    %v6704 = vadd.f32 %v6631, %v6703
    %v6705 = vpop.f32.mrb[0].mxu0
    %v6706 = vadd.f32 %v6633, %v6705
    %6707 = vmatprep.mubr.bf16.mxu0 %v3098
    %6708 = vmatmul.mubr.bf16.gmra.mrb[0].mxu0 %v3097
    %v6709 = vpop.f32.mrb[0].mxu0
    %v6710 = vadd.f32 %v6637, %v6709
    %v6711 = vpop.f32.mrb[0].mxu0
    %v6712 = vadd.f32 %v6639, %v6711
    %v6713 = vpop.f32.mrb[0].mxu0
    %v6714 = vadd.f32 %v6641, %v6713
    %v6715 = vpop.f32.mrb[0].mxu0
    %v6716 = vadd.f32 %v6643, %v6715
    %6717 = vmatprep.mubr.bf16.mxu0 %v3106
    %6718 = vmatmul.mubr.bf16.gmra.mrb[0].mxu0 %v3105
    %v6719 = vpop.f32.mrb[0].mxu0
    %v6720 = vadd.f32 %v6647, %v6719
    %v6721 = vpop.f32.mrb[0].mxu0
    %v6722 = vadd.f32 %v6649, %v6721
    %v6723 = vpop.f32.mrb[0].mxu0
    %v6724 = vadd.f32 %v6651, %v6723
    %v6725 = vpop.f32.mrb[0].mxu0
    %v6726 = vadd.f32 %v6653, %v6725
    %6727 = vdwg.mxu0
    %6728 = vmatprep.subr.bf16.mxu0 %v5370
    %6729 = vmatpush1.bf16.msra.mxu0 %v5369
    %6730 = vmatprep.subr.bf16.mxu0 %v5377
    %6731 = vmatpush1.bf16.msra.mxu0 %v5376
    %6732 = vmatprep.subr.bf16.mxu0 %v5384
    %6733 = vmatpush1.bf16.msra.mxu0 %v5383
    %6734 = vmatprep.subr.bf16.mxu0 %v5391
    %6735 = vmatpush1.bf16.msra.mxu0 %v5390
    %6736 = vmatprep.subr.bf16.mxu0 %v5398
    %6737 = vmatpush1.bf16.msra.mxu0 %v5397
    %6738 = vmatprep.subr.bf16.mxu0 %v5405
    %6739 = vmatpush1.bf16.msra.mxu0 %v5404
    %6740 = vmatprep.subr.bf16.mxu0 %v5412
    %6741 = vmatpush1.bf16.msra.mxu0 %v5411
    %6742 = vmatprep.subr.bf16.mxu0 %v5419
    %6743 = vmatpush1.bf16.msra.mxu0 %v5418
    %6744 = vmatprep.subr.bf16.mxu0 %v5426
    %6745 = vmatpush1.bf16.msra.mxu0 %v5425
    %6746 = vmatprep.subr.bf16.mxu0 %v5433
    %6747 = vmatpush1.bf16.msra.mxu0 %v5432
    %6748 = vmatprep.subr.bf16.mxu0 %v5440
    %6749 = vmatpush1.bf16.msra.mxu0 %v5439
    %6750 = vmatprep.subr.bf16.mxu0 %v5447
    %6751 = vmatpush1.bf16.msra.mxu0 %v5446
    %6752 = vmatprep.subr.bf16.mxu0 %v5454
    %6753 = vmatpush1.bf16.msra.mxu0 %v5453
    %6754 = vmatprep.subr.bf16.mxu0 %v5461
    %6755 = vmatpush1.bf16.msra.mxu0 %v5460
    %6756 = vmatprep.subr.bf16.mxu0 %v5468
    %6757 = vmatpush1.bf16.msra.mxu0 %v5467
    %6758 = vmatprep.subr.bf16.mxu0 %v5475
    %6759 = vmatpush1.bf16.msra.mxu0 %v5474
    %6760 = vmatprep.mubr.bf16.mxu0 %v3084
    %6761 = vmatmul.mubr.bf16.gmra.mrb[0].mxu0 %v3083
    %v6762 = vpop.f32.mrb[0].mxu0
    %v6763 = vadd.f32 %v6690, %v6762
    %v6764 = vpop.f32.mrb[0].mxu0
    %v6765 = vadd.f32 %v6692, %v6764
    %v6766 = vpop.f32.mrb[0].mxu0
    %v6767 = vadd.f32 %v6694, %v6766
    %v6768 = vpop.f32.mrb[0].mxu0
    %v6769 = vadd.f32 %v6696, %v6768
    %6770 = vmatprep.mubr.bf16.mxu0 %v3092
    %6771 = vmatmul.mubr.bf16.gmra.mrb[0].mxu0 %v3091
    %v6772 = vpop.f32.mrb[0].mxu0
    %v6773 = vadd.f32 %v6700, %v6772
    %v6774 = vpop.f32.mrb[0].mxu0
    %v6775 = vadd.f32 %v6702, %v6774
    %v6776 = vpop.f32.mrb[0].mxu0
    %v6777 = vadd.f32 %v6704, %v6776
    %v6778 = vpop.f32.mrb[0].mxu0
    %v6779 = vadd.f32 %v6706, %v6778
    %6780 = vmatprep.mubr.bf16.mxu0 %v3100
    %6781 = vmatmul.mubr.bf16.gmra.mrb[0].mxu0 %v3099
    %v6782 = vpop.f32.mrb[0].mxu0
    %v6783 = vadd.f32 %v6710, %v6782
    %v6784 = vpop.f32.mrb[0].mxu0
    %v6785 = vadd.f32 %v6712, %v6784
    %v6786 = vpop.f32.mrb[0].mxu0
    %v6787 = vadd.f32 %v6714, %v6786
    %v6788 = vpop.f32.mrb[0].mxu0
    %v6789 = vadd.f32 %v6716, %v6788
    %6790 = vmatprep.mubr.bf16.mxu0 %v3108
    %6791 = vmatmul.mubr.bf16.gmra.mrb[0].mxu0 %v3107
    %v6792 = vpop.f32.mrb[0].mxu0
    %v6793 = vadd.f32 %v6720, %v6792
    %v6794 = vpop.f32.mrb[0].mxu0
    %v6795 = vadd.f32 %v6722, %v6794
    %v6796 = vpop.f32.mrb[0].mxu0
    %v6797 = vadd.f32 %v6724, %v6796
    %v6798 = vpop.f32.mrb[0].mxu0
    %v6799 = vadd.f32 %v6726, %v6798
    %6800 = vdwg.mxu0
    %6801 = vmatprep.subr.bf16.mxu0 0
    %6802 = vmatpush1.bf16.msra.mxu0 %v5035
    %6803 = vmatprep.subr.bf16.mxu0 0
    %6804 = vmatpush1.bf16.msra.mxu0 %v5042
    %6805 = vmatprep.subr.bf16.mxu0 0
    %6806 = vmatpush1.bf16.msra.mxu0 %v5049
    %6807 = vmatprep.subr.bf16.mxu0 0
    %6808 = vmatpush1.bf16.msra.mxu0 %v5056
    %6809 = vmatprep.subr.bf16.mxu0 0
    %6810 = vmatpush1.bf16.msra.mxu0 %v5063
    %6811 = vmatprep.subr.bf16.mxu0 0
    %6812 = vmatpush1.bf16.msra.mxu0 %v5070
    %6813 = vmatprep.subr.bf16.mxu0 0
    %6814 = vmatpush1.bf16.msra.mxu0 %v5077
    %6815 = vmatprep.subr.bf16.mxu0 0
    %6816 = vmatpush1.bf16.msra.mxu0 %v5084
    %6817 = vmatprep.subr.bf16.mxu0 0
    %6818 = vmatpush1.bf16.msra.mxu0 %v5091
    %6819 = vmatprep.subr.bf16.mxu0 0
    %6820 = vmatpush1.bf16.msra.mxu0 %v5098
    %6821 = vmatprep.subr.bf16.mxu0 0
    %6822 = vmatpush1.bf16.msra.mxu0 %v5105
    %6823 = vmatprep.subr.bf16.mxu0 0
    %6824 = vmatpush1.bf16.msra.mxu0 %v5112
    %6825 = vmatprep.subr.bf16.mxu0 0
    %6826 = vmatpush1.bf16.msra.mxu0 %v5119
    %6827 = vmatprep.subr.bf16.mxu0 0
    %6828 = vmatpush1.bf16.msra.mxu0 %v5126
    %6829 = vmatprep.subr.bf16.mxu0 0
    %6830 = vmatpush1.bf16.msra.mxu0 %v5133
    %6831 = vmatprep.subr.bf16.mxu0 0
    %6832 = vmatpush1.bf16.msra.mxu0 %v5140
    %6833 = vmatprep.mubr.bf16.mxu0 %v3078
    %6834 = vmatmul.mubr.bf16.gmra.mrb[0].mxu0 %v3077
    %v6835 = vpop.f32.mrb[0].mxu0
    %v6836 = vadd.f32 0.0, %v6835
    %v6837 = vpop.f32.mrb[0].mxu0
    %v6838 = vpop.f32.mrb[0].mxu0
    %v6839 = vadd.f32 0.0, %v6838
    %v6840 = vpop.f32.mrb[0].mxu0
    %6841 = vmatprep.mubr.bf16.mxu0 %v3086
    %6842 = vmatmul.mubr.bf16.gmra.mrb[0].mxu0 %v3085
    %v6843 = vpop.f32.mrb[0].mxu0
    %v6844 = vadd.f32 0.0, %v6843
    %v6845 = vpop.f32.mrb[0].mxu0
    %v6846 = vpop.f32.mrb[0].mxu0
    %v6847 = vadd.f32 0.0, %v6846
    %v6848 = vpop.f32.mrb[0].mxu0
    %6849 = vmatprep.mubr.bf16.mxu0 %v3094
    %6850 = vmatmul.mubr.bf16.gmra.mrb[0].mxu0 %v3093
    %v6851 = vpop.f32.mrb[0].mxu0
    %v6852 = vadd.f32 0.0, %v6851
    %v6853 = vpop.f32.mrb[0].mxu0
    %v6854 = vpop.f32.mrb[0].mxu0
    %v6855 = vadd.f32 0.0, %v6854
    %v6856 = vpop.f32.mrb[0].mxu0
    %6857 = vmatprep.mubr.bf16.mxu0 %v3102
    %6858 = vmatmul.mubr.bf16.gmra.mrb[0].mxu0 %v3101
    %v6859 = vpop.f32.mrb[0].mxu0
    %v6860 = vadd.f32 0.0, %v6859
    %v6861 = vpop.f32.mrb[0].mxu0
    %v6862 = vpop.f32.mrb[0].mxu0
    %v6863 = vadd.f32 0.0, %v6862
    %v6864 = vpop.f32.mrb[0].mxu0
    %6865 = vdwg.mxu0
    %6866 = vmatprep.subr.bf16.mxu0 0
    %6867 = vmatpush1.bf16.msra.mxu0 %v5147
    %6868 = vmatprep.subr.bf16.mxu0 0
    %6869 = vmatpush1.bf16.msra.mxu0 %v5154
    %6870 = vmatprep.subr.bf16.mxu0 0
    %6871 = vmatpush1.bf16.msra.mxu0 %v5161
    %6872 = vmatprep.subr.bf16.mxu0 0
    %6873 = vmatpush1.bf16.msra.mxu0 %v5168
    %6874 = vmatprep.subr.bf16.mxu0 0
    %6875 = vmatpush1.bf16.msra.mxu0 %v5175
    %6876 = vmatprep.subr.bf16.mxu0 0
    %6877 = vmatpush1.bf16.msra.mxu0 %v5182
    %6878 = vmatprep.subr.bf16.mxu0 0
    %6879 = vmatpush1.bf16.msra.mxu0 %v5189
    %6880 = vmatprep.subr.bf16.mxu0 0
    %6881 = vmatpush1.bf16.msra.mxu0 %v5196
    %6882 = vmatprep.subr.bf16.mxu0 0
    %6883 = vmatpush1.bf16.msra.mxu0 %v5203
    %6884 = vmatprep.subr.bf16.mxu0 0
    %6885 = vmatpush1.bf16.msra.mxu0 %v5210
    %6886 = vmatprep.subr.bf16.mxu0 0
    %6887 = vmatpush1.bf16.msra.mxu0 %v5217
    %6888 = vmatprep.subr.bf16.mxu0 0
    %6889 = vmatpush1.bf16.msra.mxu0 %v5224
    %6890 = vmatprep.subr.bf16.mxu0 0
    %6891 = vmatpush1.bf16.msra.mxu0 %v5231
    %6892 = vmatprep.subr.bf16.mxu0 0
    %6893 = vmatpush1.bf16.msra.mxu0 %v5238
    %6894 = vmatprep.subr.bf16.mxu0 0
    %6895 = vmatpush1.bf16.msra.mxu0 %v5245
    %6896 = vmatprep.subr.bf16.mxu0 0
    %6897 = vmatpush1.bf16.msra.mxu0 %v5252
    %6898 = vmatprep.mubr.bf16.mxu0 %v3080
    %6899 = vmatmul.mubr.bf16.gmra.mrb[0].mxu0 %v3079
    %v6900 = vpop.f32.mrb[0].mxu0
    %v6901 = vadd.f32 %v6836, %v6900
    %v6902 = vpop.f32.mrb[0].mxu0
    %v6903 = vpop.f32.mrb[0].mxu0
    %v6904 = vadd.f32 %v6839, %v6903
    %v6905 = vpop.f32.mrb[0].mxu0
    %6906 = vmatprep.mubr.bf16.mxu0 %v3088
    %6907 = vmatmul.mubr.bf16.gmra.mrb[0].mxu0 %v3087
    %v6908 = vpop.f32.mrb[0].mxu0
    %v6909 = vadd.f32 %v6844, %v6908
    %v6910 = vpop.f32.mrb[0].mxu0
    %v6911 = vpop.f32.mrb[0].mxu0
    %v6912 = vadd.f32 %v6847, %v6911
    %v6913 = vpop.f32.mrb[0].mxu0
    %6914 = vmatprep.mubr.bf16.mxu0 %v3096
    %6915 = vmatmul.mubr.bf16.gmra.mrb[0].mxu0 %v3095
    %v6916 = vpop.f32.mrb[0].mxu0
    %v6917 = vadd.f32 %v6852, %v6916
    %v6918 = vpop.f32.mrb[0].mxu0
    %v6919 = vpop.f32.mrb[0].mxu0
    %v6920 = vadd.f32 %v6855, %v6919
    %v6921 = vpop.f32.mrb[0].mxu0
    %6922 = vmatprep.mubr.bf16.mxu0 %v3104
    %6923 = vmatmul.mubr.bf16.gmra.mrb[0].mxu0 %v3103
    %v6924 = vpop.f32.mrb[0].mxu0
    %v6925 = vadd.f32 %v6860, %v6924
    %v6926 = vpop.f32.mrb[0].mxu0
    %v6927 = vpop.f32.mrb[0].mxu0
    %v6928 = vadd.f32 %v6863, %v6927
    %v6929 = vpop.f32.mrb[0].mxu0
    %6930 = vdwg.mxu0
    %6931 = vmatprep.subr.bf16.mxu0 0
    %6932 = vmatpush1.bf16.msra.mxu0 %v5259
    %6933 = vmatprep.subr.bf16.mxu0 0
    %6934 = vmatpush1.bf16.msra.mxu0 %v5266
    %6935 = vmatprep.subr.bf16.mxu0 0
    %6936 = vmatpush1.bf16.msra.mxu0 %v5273
    %6937 = vmatprep.subr.bf16.mxu0 0
    %6938 = vmatpush1.bf16.msra.mxu0 %v5280
    %6939 = vmatprep.subr.bf16.mxu0 0
    %6940 = vmatpush1.bf16.msra.mxu0 %v5287
    %6941 = vmatprep.subr.bf16.mxu0 0
    %6942 = vmatpush1.bf16.msra.mxu0 %v5294
    %6943 = vmatprep.subr.bf16.mxu0 0
    %6944 = vmatpush1.bf16.msra.mxu0 %v5301
    %6945 = vmatprep.subr.bf16.mxu0 0
    %6946 = vmatpush1.bf16.msra.mxu0 %v5308
    %6947 = vmatprep.subr.bf16.mxu0 0
    %6948 = vmatpush1.bf16.msra.mxu0 %v5315
    %6949 = vmatprep.subr.bf16.mxu0 0
    %6950 = vmatpush1.bf16.msra.mxu0 %v5322
    %6951 = vmatprep.subr.bf16.mxu0 0
    %6952 = vmatpush1.bf16.msra.mxu0 %v5329
    %6953 = vmatprep.subr.bf16.mxu0 0
    %6954 = vmatpush1.bf16.msra.mxu0 %v5336
    %6955 = vmatprep.subr.bf16.mxu0 0
    %6956 = vmatpush1.bf16.msra.mxu0 %v5343
    %6957 = vmatprep.subr.bf16.mxu0 0
    %6958 = vmatpush1.bf16.msra.mxu0 %v5350
    %6959 = vmatprep.subr.bf16.mxu0 0
    %6960 = vmatpush1.bf16.msra.mxu0 %v5357
    %6961 = vmatprep.subr.bf16.mxu0 0
    %6962 = vmatpush1.bf16.msra.mxu0 %v5364
    %6963 = vmatprep.mubr.bf16.mxu0 %v3082
    %6964 = vmatmul.mubr.bf16.gmra.mrb[0].mxu0 %v3081
    %v6965 = vpop.f32.mrb[0].mxu0
    %v6966 = vadd.f32 %v6901, %v6965
    %v6967 = vpop.f32.mrb[0].mxu0
    %v6968 = vpop.f32.mrb[0].mxu0
    %v6969 = vadd.f32 %v6904, %v6968
    %v6970 = vpop.f32.mrb[0].mxu0
    %6971 = vmatprep.mubr.bf16.mxu0 %v3090
    %6972 = vmatmul.mubr.bf16.gmra.mrb[0].mxu0 %v3089
    %v6973 = vpop.f32.mrb[0].mxu0
    %v6974 = vadd.f32 %v6909, %v6973
    %v6975 = vpop.f32.mrb[0].mxu0
    %v6976 = vpop.f32.mrb[0].mxu0
    %v6977 = vadd.f32 %v6912, %v6976
    %v6978 = vpop.f32.mrb[0].mxu0
    %6979 = vmatprep.mubr.bf16.mxu0 %v3098
    %6980 = vmatmul.mubr.bf16.gmra.mrb[0].mxu0 %v3097
    %v6981 = vpop.f32.mrb[0].mxu0
    %v6982 = vadd.f32 %v6917, %v6981
    %v6983 = vpop.f32.mrb[0].mxu0
    %v6984 = vpop.f32.mrb[0].mxu0
    %v6985 = vadd.f32 %v6920, %v6984
    %v6986 = vpop.f32.mrb[0].mxu0
    %6987 = vmatprep.mubr.bf16.mxu0 %v3106
    %6988 = vmatmul.mubr.bf16.gmra.mrb[0].mxu0 %v3105
    %v6989 = vpop.f32.mrb[0].mxu0
    %v6990 = vadd.f32 %v6925, %v6989
    %v6991 = vpop.f32.mrb[0].mxu0
    %v6992 = vpop.f32.mrb[0].mxu0
    %v6993 = vadd.f32 %v6928, %v6992
    %v6994 = vpop.f32.mrb[0].mxu0
    %6995 = vdwg.mxu0
    %6996 = vmatprep.subr.bf16.mxu0 0
    %6997 = vmatpush1.bf16.msra.mxu0 %v5371
    %6998 = vmatprep.subr.bf16.mxu0 0
    %6999 = vmatpush1.bf16.msra.mxu0 %v5378
    %7000 = vmatprep.subr.bf16.mxu0 0
    %7001 = vmatpush1.bf16.msra.mxu0 %v5385
    %7002 = vmatprep.subr.bf16.mxu0 0
    %7003 = vmatpush1.bf16.msra.mxu0 %v5392
    %7004 = vmatprep.subr.bf16.mxu0 0
    %7005 = vmatpush1.bf16.msra.mxu0 %v5399
    %7006 = vmatprep.subr.bf16.mxu0 0
    %7007 = vmatpush1.bf16.msra.mxu0 %v5406
    %7008 = vmatprep.subr.bf16.mxu0 0
    %7009 = vmatpush1.bf16.msra.mxu0 %v5413
    %7010 = vmatprep.subr.bf16.mxu0 0
    %7011 = vmatpush1.bf16.msra.mxu0 %v5420
    %7012 = vmatprep.subr.bf16.mxu0 0
    %7013 = vmatpush1.bf16.msra.mxu0 %v5427
    %7014 = vmatprep.subr.bf16.mxu0 0
    %7015 = vmatpush1.bf16.msra.mxu0 %v5434
    %7016 = vmatprep.subr.bf16.mxu0 0
    %7017 = vmatpush1.bf16.msra.mxu0 %v5441
    %7018 = vmatprep.subr.bf16.mxu0 0
    %7019 = vmatpush1.bf16.msra.mxu0 %v5448
    %7020 = vmatprep.subr.bf16.mxu0 0
    %7021 = vmatpush1.bf16.msra.mxu0 %v5455
    %7022 = vmatprep.subr.bf16.mxu0 0
    %7023 = vmatpush1.bf16.msra.mxu0 %v5462
    %7024 = vmatprep.subr.bf16.mxu0 0
    %7025 = vmatpush1.bf16.msra.mxu0 %v5469
    %7026 = vmatprep.subr.bf16.mxu0 0
    %7027 = vmatpush1.bf16.msra.mxu0 %v5476
    %7028 = vmatprep.mubr.bf16.mxu0 %v3084
    %7029 = vmatmul.mubr.bf16.gmra.mrb[0].mxu0 %v3083
    %v7030 = vpop.f32.mrb[0].mxu0
    %v7031 = vadd.f32 %v6966, %v7030
    %v7032 = vpop.f32.mrb[0].mxu0
    %v7033 = vpop.f32.mrb[0].mxu0
    %v7034 = vadd.f32 %v6969, %v7033
    %v7035 = vpop.f32.mrb[0].mxu0
    %7036 = vmatprep.mubr.bf16.mxu0 %v3092
    %7037 = vmatmul.mubr.bf16.gmra.mrb[0].mxu0 %v3091
    %v7038 = vpop.f32.mrb[0].mxu0
    %v7039 = vadd.f32 %v6974, %v7038
    %v7040 = vpop.f32.mrb[0].mxu0
    %v7041 = vpop.f32.mrb[0].mxu0
    %v7042 = vadd.f32 %v6977, %v7041
    %v7043 = vpop.f32.mrb[0].mxu0
    %7044 = vmatprep.mubr.bf16.mxu0 %v3100
    %7045 = vmatmul.mubr.bf16.gmra.mrb[0].mxu0 %v3099
    %v7046 = vpop.f32.mrb[0].mxu0
    %v7047 = vadd.f32 %v6982, %v7046
    %v7048 = vpop.f32.mrb[0].mxu0
    %v7049 = vpop.f32.mrb[0].mxu0
    %v7050 = vadd.f32 %v6985, %v7049
    %v7051 = vpop.f32.mrb[0].mxu0
    %7052 = vmatprep.mubr.bf16.mxu0 %v3108
    %7053 = vmatmul.mubr.bf16.gmra.mrb[0].mxu0 %v3107
    %v7054 = vpop.f32.mrb[0].mxu0
    %v7055 = vadd.f32 %v6990, %v7054
    %v7056 = vpop.f32.mrb[0].mxu0
    %v7057 = vpop.f32.mrb[0].mxu0
    %v7058 = vadd.f32 %v6993, %v7057
    %v7059 = vpop.f32.mrb[0].mxu0
    %7060 = vdwg.mxu0
    %v7061 = vtanh.pop %v6179
    %v7062 = vtanh.pop %v6181
    %v7063 = vtanh.pop %v6471
    %v7064 = vtanh.pop %v6473
    %v7065 = vtanh.pop %v6763
    %v7066 = vtanh.pop %v6765
    %v7067 = vtanh.pop %v7031
    %v7068 = vtanh.pop %v6183
    %v7069 = vtanh.pop %v6185
    %v7070 = vtanh.pop %v6475
    %v7071 = vtanh.pop %v6477
    %v7072 = vtanh.pop %v6767
    %v7073 = vtanh.pop %v6769
    %v7074 = vtanh.pop %v7034
    %v7075 = vtanh.pop %v6189
    %v7076 = vtanh.pop %v6191
    %v7077 = vtanh.pop %v6481
    %v7078 = vtanh.pop %v6483
    %v7079 = vtanh.pop %v6773
    %v7080 = vtanh.pop %v6775
    %v7081 = vtanh.pop %v7039
    %v7082 = vtanh.pop %v6193
    %v7083 = vtanh.pop %v6195
    %v7084 = vtanh.pop %v6485
    %v7085 = vtanh.pop %v6487
    %v7086 = vtanh.pop %v6777
    %v7087 = vtanh.pop %v6779
    %v7088 = vtanh.pop %v7042
    %v7089 = vtanh.pop %v6199
    %v7090 = vtanh.pop %v6201
    %v7091 = vtanh.pop %v6491
    %v7092 = vtanh.pop %v6493
    %v7093 = vtanh.pop %v6783
    %v7094 = vtanh.pop %v6785
    %v7095 = vtanh.pop %v7047
    %v7096 = vtanh.pop %v6203
    %v7097 = vtanh.pop %v6205
    %v7098 = vtanh.pop %v6495
    %v7099 = vtanh.pop %v6497
    %v7100 = vtanh.pop %v6787
    %v7101 = vtanh.pop %v6789
    %v7102 = vtanh.pop %v7050
    %v7103 = vtanh.pop %v6209
    %v7104 = vtanh.pop %v6211
    %v7105 = vtanh.pop %v6501
    %v7106 = vtanh.pop %v6503
    %v7107 = vtanh.pop %v6793
    %v7108 = vtanh.pop %v6795
    %v7109 = vtanh.pop %v7055
    %v7110 = vtanh.pop %v6213
    %v7111 = vtanh.pop %v6215
    %v7112 = vtanh.pop %v6505
    %v7113 = vtanh.pop %v6507
    %v7114 = vtanh.pop %v6797
    %v7115 = vtanh.pop %v6799
    %v7116 = vtanh.pop %v7058
    %7117 = vst [vmem:[#allocation11] sm:$0xff] %v7061
    %7118 = vst [vmem:[#allocation11 + $0x8] sm:$0xff] %v7062
    %7119 = vst [vmem:[#allocation11 + $0x10] sm:$0xff] %v7063
    %7120 = vst [vmem:[#allocation11 + $0x18] sm:$0xff] %v7064
    %7121 = vst [vmem:[#allocation11 + $0x20] sm:$0xff] %v7065
    %7122 = vst [vmem:[#allocation11 + $0x28] sm:$0xff] %v7066
    %7123 = vst [vmem:[#allocation11 + $0x30] sm:$0xff] %v7067
    %7124 = vst [vmem:[#allocation11 + $0x38] sm:$0xff] %v7068
    %7125 = vst [vmem:[#allocation11 + $0x40] sm:$0xff] %v7069
    %7126 = vst [vmem:[#allocation11 + $0x48] sm:$0xff] %v7070
    %7127 = vst [vmem:[#allocation11 + $0x50] sm:$0xff] %v7071
    %7128 = vst [vmem:[#allocation11 + $0x58] sm:$0xff] %v7072
    %7129 = vst [vmem:[#allocation11 + $0x60] sm:$0xff] %v7073
    %7130 = vst [vmem:[#allocation11 + $0x68] sm:$0xff] %v7074
    %7131 = vst [vmem:[#allocation11 + $0x70] sm:$0xff] %v7075
    %7132 = vst [vmem:[#allocation11 + $0x78] sm:$0xff] %v7076
    %7133 = vst [vmem:[#allocation11 + $0x80] sm:$0xff] %v7077
    %7134 = vst [vmem:[#allocation11 + $0x88] sm:$0xff] %v7078
    %7135 = vst [vmem:[#allocation11 + $0x90] sm:$0xff] %v7079
    %7136 = vst [vmem:[#allocation11 + $0x98] sm:$0xff] %v7080
    %7137 = vst [vmem:[#allocation11 + $0xa0] sm:$0xff] %v7081
    %7138 = vst [vmem:[#allocation11 + $0xa8] sm:$0xff] %v7082
    %7139 = vst [vmem:[#allocation11 + $0xb0] sm:$0xff] %v7083
    %7140 = vst [vmem:[#allocation11 + $0xb8] sm:$0xff] %v7084
    %7141 = vst [vmem:[#allocation11 + $0xc0] sm:$0xff] %v7085
    %7142 = vst [vmem:[#allocation11 + $0xc8] sm:$0xff] %v7086
    %7143 = vst [vmem:[#allocation11 + $0xd0] sm:$0xff] %v7087
    %7144 = vst [vmem:[#allocation11 + $0xd8] sm:$0xff] %v7088
    %7145 = vst [vmem:[#allocation11 + $0xe0] sm:$0xff] %v7089
    %7146 = vst [vmem:[#allocation11 + $0xe8] sm:$0xff] %v7090
    %7147 = vst [vmem:[#allocation11 + $0xf0] sm:$0xff] %v7091
    %7148 = vst [vmem:[#allocation11 + $0xf8] sm:$0xff] %v7092
    %7149 = vst [vmem:[#allocation11 + $0x100] sm:$0xff] %v7093
    %7150 = vst [vmem:[#allocation11 + $0x108] sm:$0xff] %v7094
    %7151 = vst [vmem:[#allocation11 + $0x110] sm:$0xff] %v7095
    %7152 = vst [vmem:[#allocation11 + $0x118] sm:$0xff] %v7096
    %7153 = vst [vmem:[#allocation11 + $0x120] sm:$0xff] %v7097
    %7154 = vst [vmem:[#allocation11 + $0x128] sm:$0xff] %v7098
    %7155 = vst [vmem:[#allocation11 + $0x130] sm:$0xff] %v7099
    %7156 = vst [vmem:[#allocation11 + $0x138] sm:$0xff] %v7100
    %7157 = vst [vmem:[#allocation11 + $0x140] sm:$0xff] %v7101
    %7158 = vst [vmem:[#allocation11 + $0x148] sm:$0xff] %v7102
    %7159 = vst [vmem:[#allocation11 + $0x150] sm:$0xff] %v7103
    %7160 = vst [vmem:[#allocation11 + $0x158] sm:$0xff] %v7104
    %7161 = vst [vmem:[#allocation11 + $0x160] sm:$0xff] %v7105
    %7162 = vst [vmem:[#allocation11 + $0x168] sm:$0xff] %v7106
    %7163 = vst [vmem:[#allocation11 + $0x170] sm:$0xff] %v7107
    %7164 = vst [vmem:[#allocation11 + $0x178] sm:$0xff] %v7108
    %7165 = vst [vmem:[#allocation11 + $0x180] sm:$0xff] %v7109
    %7166 = vst [vmem:[#allocation11 + $0x188] sm:$0xff] %v7110
    %7167 = vst [vmem:[#allocation11 + $0x190] sm:$0xff] %v7111
    %7168 = vst [vmem:[#allocation11 + $0x198] sm:$0xff] %v7112
    %7169 = vst [vmem:[#allocation11 + $0x1a0] sm:$0xff] %v7113
    %7170 = vst [vmem:[#allocation11 + $0x1a8] sm:$0xff] %v7114
    %7171 = vst [vmem:[#allocation11 + $0x1b0] sm:$0xff] %v7115
    %7172 = vst [vmem:[#allocation11 + $0x1b8] sm:$0xff] %v7116
    // Predicated region
    $region42: #{tpu_custom_call.1} parent=1 // pred_check
      _
    $region43: #{tpu_custom_call.1} parent=1 // pred_check_branch
      %7174 = sbr.rel (0) target = $region45
    $region44: #{tpu_custom_call.1} parent=1 // pred_region
      %s7176 = ssub.s32 7168, 7168
      %7177 = vsyncadd [#allocation4], %s7176
      %s7178 = sshll.u32 [#allocation11], 4
      %s7179 = int_to_ptr.vmem [resolvable:$true] %s7178
      %7184 = dma.vmem_to_hbm [thread:$0]  %s7179, 7168, %s5, [#allocation4], 896, 896, 56
    $region45: #{tpu_custom_call.1} parent=1 // pred_fallthru
      _
    // Predicated region
    $region46: #{tpu_custom_call.1} parent=1 // pred_check
      _
    $region47: #{tpu_custom_call.1} parent=1 // pred_check_branch
      %7186 = sbr.rel (0) target = $region49
    $region48: #{tpu_custom_call.1} parent=1 // pred_region
      %7187 = dma.done [#allocation4], 7168
    $region49: #{tpu_custom_call.1} parent=1 // pred_fallthru
      _
    %7188 = vsyncpa [#allocation3], 1
    %7189 = vsyncpa [#allocation6], 1
    %7190 = vsyncpa [#allocation9], 1
    %7191 = vsyncpa [#allocation4], 1

</llo_original>
